<compile_context>
chip_gen: v7x
topology: tpu7x:2x2x1
jax: 0.10.0
libtpu: 0.0.40
codegen_flags: <defaults>
</compile_context>

<pallas_src>
import jax
import jax.numpy as jnp
from jax.experimental import pallas as pl
from jax.experimental.pallas import tpu as pltpu

PS = 8                       # patch size / stride of the stand-in stem conv
IMG = 56                     # image size -> 7x7 feature map (AvgPool2d(7))
GRID = IMG // PS             # 7
NP = GRID * GRID             # 49 spatial positions per view
P = 3 * PS * PS              # 192 patch features, ordered (c, ph, pw)
CF = 1024                    # densenet121 feature channels == fc_16 in_features
NVIEW = 2                    # (left image, right image)
F16 = 16                     # fc_16 out features
NOUT = 2                     # fc_classify out features
NPAD = 128                   # lane-dense padded logits width
NGROUPS = NVIEW * NP         # 98 feature-map rows (view-major)
CHUNK = 7                    # feature-map rows per in-kernel stem matmul
NCHUNK = NGROUPS // CHUNK    # 14 chunks; chunks 0..6 are view 0, 7..13 view 1


def healnet_kernel(patches_ref, wstem_ref, bstem_ref, weff1_ref, weff2_ref,
                   beff_ref, out_ref):
    """Fused HealNet forward for one batch tile.

    patches_ref : (NGROUPS, bt, P) bf16 im2col patches, leading dim ordered
                  (view, gh, gw) so a chunk of 7 rows never spans views.
    weff*_ref   : (CF, NPAD) f32, fc_16 @ fc_classify[view] fused offline with
                  the 1/49 AvgPool scale folded in; zero-padded to 128 lanes.
    """
    bt = out_ref.shape[0]
    wstem = wstem_ref[...]                       # (P, CF) bf16, VMEM-resident
    bstem = bstem_ref[...]                       # (1, CF) f32

    u = [None] * NVIEW                           # per-view pooled sums (bt, CF)
    for c in range(NCHUNK):
        view = c // (NCHUNK // NVIEW)
        chunk = patches_ref[c * CHUNK:(c + 1) * CHUNK]     # (CHUNK, bt, P) bf16
        rows = chunk.reshape(CHUNK * bt, P)                # layout no-op (bt % 16 == 0)
        # Stand-in backbone: patchify-conv matmul (bf16 in, f32 acc) + bias + ReLU
        # as one fused epilogue sweep over the small per-chunk f32 accumulator.
        feat = jnp.dot(rows, wstem, preferred_element_type=jnp.float32)
        feat = jnp.maximum(feat + bstem, 0.0)              # (CHUNK*bt, CF) f32
        # AvgPool2d(7): running sum over the 7x7 positions (1/49 lives in weff).
        acc = feat[:bt]
        for j in range(1, CHUNK):
            acc = acc + feat[j * bt:(j + 1) * bt]
        u[view] = acc if u[view] is None else u[view] + acc

    # fc_classify(cat(fc_16(u1), fc_16(u2))) with both Linears fused offline:
    # logits = u1 @ Weff1 + u2 @ Weff2 + beff, written lane-dense (128 wide).
    out_ref[...] = (jnp.dot(u[0], weff1_ref[...], preferred_element_type=jnp.float32)
                    + jnp.dot(u[1], weff2_ref[...], preferred_element_type=jnp.float32)
                    + beff_ref[...])


def im2col(x):
    """x: (B, NVIEW, 3, IMG, IMG) -> (NVIEW*NP, B, P).

    Leading dim ordered (view, gh, gw); patch vector ordered (c, ph, pw)."""
    b = x.shape[0]
    xr = x.reshape(b, NVIEW, 3, GRID, PS, GRID, PS)
    xr = xr.transpose(1, 3, 5, 0, 2, 4, 6)       # (view, gh, gw, B, c, ph, pw)
    return xr.reshape(NVIEW * NP, b, P)


def _batch_tile(pb):
    """pb is the padded batch (multiple of 16).  Prefer the largest tile <= 64
    (keeps a step ~12 MB of VMEM, safe under v7x's 64 MiB / v5e's scoped limit)
    that still yields >= 2 grid steps so the 'parallel' batch axis can shard
    across both v7x TensorCores; otherwise run the whole batch in one step."""
    for cand in (64, 48, 32, 16):
        if pb % cand == 0 and pb // cand >= 2:
            return cand
    return pb


def healnet_forward(x, params):
    """x: (B, NVIEW, 3, IMG, IMG) float32 -> logits (B, 2)."""
    wstem, bstem, w16, b16, wcls, bcls = params
    batch = x.shape[0]
    pb = ((batch + 15) // 16) * 16               # bf16 sublane-tile alignment
    bt = _batch_tile(pb)
    steps = pb // bt

    # TODO(synk): this im2col transpose is the one remaining XLA-side data
    # movement; the spatial patch gather cannot be removed by a weight-row
    # permutation or a plain reshape of NCHW.  It runs in bf16 to halve bytes.
    patches = im2col(x.astype(jnp.bfloat16))     # (98, B, P) bf16
    if pb != batch:
        patches = jnp.pad(patches, ((0, 0), (0, pb - batch), (0, 0)))

    # Fuse fc_16 + fc_classify (+ the 1/49 AvgPool mean) into per-view
    # effective weights; pad the 2-wide logits axis to 128 lanes with zeros so
    # the kernel's output store is unmasked and lane-dense.
    weff1 = (w16 @ wcls[:F16, :]) / NP           # (CF, NOUT)
    weff2 = (w16 @ wcls[F16:, :]) / NP
    beff = b16 @ wcls[:F16, :] + b16 @ wcls[F16:, :] + bcls
    weff1p = jnp.zeros((CF, NPAD), jnp.float32).at[:, :NOUT].set(weff1)
    weff2p = jnp.zeros((CF, NPAD), jnp.float32).at[:, :NOUT].set(weff2)
    beffp = jnp.zeros((1, NPAD), jnp.float32).at[:, :NOUT].set(beff)

    const = lambda i: (0, 0)                     # weights resident across steps
    flops = 2 * NGROUPS * pb * P * CF + 2 * NVIEW * pb * CF * NPAD
    bytes_accessed = (NGROUPS * pb * P * 2 + P * CF * 2 + CF * 4
                      + 2 * CF * NPAD * 4 + NPAD * 4 + pb * NPAD * 4)

    out = pl.pallas_call(
        healnet_kernel,
        out_shape=jax.ShapeDtypeStruct((pb, NPAD), jnp.float32),
        grid=(steps,),
        in_specs=[
            pl.BlockSpec((NGROUPS, bt, P), lambda i: (0, i, 0)),  # patches (batch-tiled)
            pl.BlockSpec((P, CF), const),                         # stem weight (bf16)
            pl.BlockSpec((1, CF), const),                         # stem bias
            pl.BlockSpec((CF, NPAD), const),                      # fused classifier, view 0
            pl.BlockSpec((CF, NPAD), const),                      # fused classifier, view 1
            pl.BlockSpec((1, NPAD), const),                       # fused classifier bias
        ],
        out_specs=pl.BlockSpec((bt, NPAD), lambda i: (i, 0)),
        compiler_params=pltpu.CompilerParams(
            dimension_semantics=("parallel",),
            vmem_limit_bytes=32 * 1024 * 1024),
        cost_estimate=pl.CostEstimate(flops=flops, transcendentals=0,
                                      bytes_accessed=bytes_accessed),
    )(patches, wstem, bstem, weff1p, weff2p, beffp)

    return out[:batch, :NOUT]


def healnet_reference(x, params):
    """Pure-JAX f32 reference of the original (unfused) forward."""
    wstem, bstem, w16, b16, wcls, bcls = params
    ws = wstem.astype(jnp.float32)

    def encode(img):                             # img: (B, 3, IMG, IMG)
        b = img.shape[0]
        pr = img.reshape(b, 3, GRID, PS, GRID, PS).transpose(0, 2, 4, 1, 3, 5)
        pr = pr.reshape(b, NP, P)
        pr = pr.astype(jnp.bfloat16).astype(jnp.float32)   # mirror kernel's bf16 patches
        feat = jax.nn.relu(jnp.einsum('bnp,pc->bnc', pr, ws) + bstem)
        u = feat.mean(axis=1)                    # AvgPool2d(7) on a 7x7 map
        return u @ w16 + b16                     # fc_16

    u1 = encode(x[:, 0])
    u2 = encode(x[:, 1])
    return jnp.concatenate([u1, u2], axis=1) @ wcls + bcls   # fc_classify


def make_params():
    key = jax.random.PRNGKey(0)
    ks = jax.random.split(key, 6)
    scale = 0.05
    # Weights stored (in_features, out_features), i.e. transposed vs torch.nn.Linear.
    # The big stem weight lives in bf16 (MXU-native, halves its DMA); the reference
    # upcasts it so both paths use identical weight values.
    wstem = (scale * jax.random.normal(ks[0], (P, CF), jnp.float32)).astype(jnp.bfloat16)
    bstem = scale * jax.random.normal(ks[1], (1, CF), jnp.float32)
    w16 = scale * jax.random.normal(ks[2], (CF, F16), jnp.float32)
    b16 = scale * jax.random.normal(ks[3], (1, F16), jnp.float32)
    wcls = scale * jax.random.normal(ks[4], (2 * F16, NOUT), jnp.float32)
    bcls = scale * jax.random.normal(ks[5], (1, NOUT), jnp.float32)
    return wstem, bstem, w16, b16, wcls, bcls


if __name__ == "__main__":
    params = make_params()
    # BS x 2 x 3 x H x W, small H=W=56 so the backbone stand-in emits a 7x7 map.
    x = jax.random.normal(jax.random.PRNGKey(0), (2, NVIEW, 3, IMG, IMG), jnp.float32)

    out = jax.block_until_ready(healnet_forward(x, params))

    with jax.default_matmul_precision("highest"):
        ref = jax.block_until_ready(healnet_reference(x, params))

    assert out.shape == (2, NOUT), out.shape
    assert jnp.allclose(out, ref, atol=1e-2, rtol=5e-2), (out, ref)
    print("KERNEL_OK")
</pallas_src>

<mosaic_0001>
module attributes {stable_mosaic.version = 11 : i64} {
  func.func @healnet_kernel(%arg0: i32, %arg1: memref<98x16x192xbf16, #tpu.memory_space<vmem>>, %arg2: memref<192x1024xbf16, #tpu.memory_space<vmem>>, %arg3: memref<1x1024xf32, #tpu.memory_space<vmem>>, %arg4: memref<1024x128xf32, #tpu.memory_space<vmem>>, %arg5: memref<1024x128xf32, #tpu.memory_space<vmem>>, %arg6: memref<1x128xf32, #tpu.memory_space<vmem>>, %arg7: memref<16x128xf32, #tpu.memory_space<vmem>>) attributes {dimension_semantics = [#tpu.dimension_semantics<parallel>], iteration_bounds = array<i64: 1>, scalar_prefetch = 0 : i64, scratch_operands = 0 : i64, tpu.core_type = #tpu.core_type<tc>, window_params = [{transform_indices = @transform_0, window_bounds = array<i64: 98, 16, 192>}, {pipeline_mode = #tpu.pipeline_mode<synchronous>, transform_indices = @transform_1, window_bounds = array<i64: 192, 1024>}, {pipeline_mode = #tpu.pipeline_mode<synchronous>, transform_indices = @transform_2, window_bounds = array<i64: 1, 1024>}, {pipeline_mode = #tpu.pipeline_mode<synchronous>, transform_indices = @transform_3, window_bounds = array<i64: 1024, 128>}, {pipeline_mode = #tpu.pipeline_mode<synchronous>, transform_indices = @transform_4, window_bounds = array<i64: 1024, 128>}, {pipeline_mode = #tpu.pipeline_mode<synchronous>, transform_indices = @transform_5, window_bounds = array<i64: 1, 128>}, {transform_indices = @transform_6, window_bounds = array<i64: 16, 128>}]} {
    %c0 = arith.constant 0 : index
    %c0_0 = arith.constant 0 : index
    %0 = vector.load %arg2[%c0, %c0_0] : memref<192x1024xbf16, #tpu.memory_space<vmem>>, vector<192x1024xbf16>
    %c0_1 = arith.constant 0 : index
    %c0_2 = arith.constant 0 : index
    %1 = vector.load %arg3[%c0_1, %c0_2] : memref<1x1024xf32, #tpu.memory_space<vmem>>, vector<1x1024xf32>
    %c0_3 = arith.constant 0 : index
    %c0_4 = arith.constant 0 : index
    %c0_5 = arith.constant 0 : index
    %2 = vector.load %arg1[%c0_3, %c0_4, %c0_5] : memref<98x16x192xbf16, #tpu.memory_space<vmem>>, vector<7x16x192xbf16>
    %3 = vector.shape_cast %2 : vector<7x16x192xbf16> to vector<112x192xbf16>
    %cst = arith.constant dense<0.000000e+00> : vector<112x1024xf32>
    %4 = tpu.matmul %3, %0, %cst {dimension_numbers = #tpu.dot_dimension_numbers<[1], [0], [0], [1], [0, 0, 1, 1], [], []>} : vector<112x192xbf16>, vector<192x1024xbf16>, vector<112x1024xf32> -> vector<112x1024xf32>
    %5 = vector.broadcast %1 : vector<1x1024xf32> to vector<112x1024xf32>
    %6 = arith.addf %4, %5 : vector<112x1024xf32>
    %cst_6 = arith.constant 0.000000e+00 : f32
    %7 = vector.broadcast %cst_6 : f32 to vector<112x1024xf32>
    %8 = arith.maximumf %6, %7 : vector<112x1024xf32>
    %9 = vector.extract_strided_slice %8 {offsets = [0, 0], sizes = [16, 1024], strides = [1, 1]} : vector<112x1024xf32> to vector<16x1024xf32>
    %10 = vector.extract_strided_slice %8 {offsets = [16, 0], sizes = [16, 1024], strides = [1, 1]} : vector<112x1024xf32> to vector<16x1024xf32>
    %11 = arith.addf %9, %10 : vector<16x1024xf32>
    %12 = vector.extract_strided_slice %8 {offsets = [32, 0], sizes = [16, 1024], strides = [1, 1]} : vector<112x1024xf32> to vector<16x1024xf32>
    %13 = arith.addf %11, %12 : vector<16x1024xf32>
    %14 = vector.extract_strided_slice %8 {offsets = [48, 0], sizes = [16, 1024], strides = [1, 1]} : vector<112x1024xf32> to vector<16x1024xf32>
    %15 = arith.addf %13, %14 : vector<16x1024xf32>
    %16 = vector.extract_strided_slice %8 {offsets = [64, 0], sizes = [16, 1024], strides = [1, 1]} : vector<112x1024xf32> to vector<16x1024xf32>
    %17 = arith.addf %15, %16 : vector<16x1024xf32>
    %18 = vector.extract_strided_slice %8 {offsets = [80, 0], sizes = [16, 1024], strides = [1, 1]} : vector<112x1024xf32> to vector<16x1024xf32>
    %19 = arith.addf %17, %18 : vector<16x1024xf32>
    %20 = vector.extract_strided_slice %8 {offsets = [96, 0], sizes = [16, 1024], strides = [1, 1]} : vector<112x1024xf32> to vector<16x1024xf32>
    %21 = arith.addf %19, %20 : vector<16x1024xf32>
    %c7 = arith.constant 7 : index
    %c0_7 = arith.constant 0 : index
    %c0_8 = arith.constant 0 : index
    %22 = vector.load %arg1[%c7, %c0_7, %c0_8] : memref<98x16x192xbf16, #tpu.memory_space<vmem>>, vector<7x16x192xbf16>
    %23 = vector.shape_cast %22 : vector<7x16x192xbf16> to vector<112x192xbf16>
    %cst_9 = arith.constant dense<0.000000e+00> : vector<112x1024xf32>
    %24 = tpu.matmul %23, %0, %cst_9 {dimension_numbers = #tpu.dot_dimension_numbers<[1], [0], [0], [1], [0, 0, 1, 1], [], []>} : vector<112x192xbf16>, vector<192x1024xbf16>, vector<112x1024xf32> -> vector<112x1024xf32>
    %25 = vector.broadcast %1 : vector<1x1024xf32> to vector<112x1024xf32>
    %26 = arith.addf %24, %25 : vector<112x1024xf32>
    %cst_10 = arith.constant 0.000000e+00 : f32
    %27 = vector.broadcast %cst_10 : f32 to vector<112x1024xf32>
    %28 = arith.maximumf %26, %27 : vector<112x1024xf32>
    %29 = vector.extract_strided_slice %28 {offsets = [0, 0], sizes = [16, 1024], strides = [1, 1]} : vector<112x1024xf32> to vector<16x1024xf32>
    %30 = vector.extract_strided_slice %28 {offsets = [16, 0], sizes = [16, 1024], strides = [1, 1]} : vector<112x1024xf32> to vector<16x1024xf32>
    %31 = arith.addf %29, %30 : vector<16x1024xf32>
    %32 = vector.extract_strided_slice %28 {offsets = [32, 0], sizes = [16, 1024], strides = [1, 1]} : vector<112x1024xf32> to vector<16x1024xf32>
    %33 = arith.addf %31, %32 : vector<16x1024xf32>
    %34 = vector.extract_strided_slice %28 {offsets = [48, 0], sizes = [16, 1024], strides = [1, 1]} : vector<112x1024xf32> to vector<16x1024xf32>
    %35 = arith.addf %33, %34 : vector<16x1024xf32>
    %36 = vector.extract_strided_slice %28 {offsets = [64, 0], sizes = [16, 1024], strides = [1, 1]} : vector<112x1024xf32> to vector<16x1024xf32>
    %37 = arith.addf %35, %36 : vector<16x1024xf32>
    %38 = vector.extract_strided_slice %28 {offsets = [80, 0], sizes = [16, 1024], strides = [1, 1]} : vector<112x1024xf32> to vector<16x1024xf32>
    %39 = arith.addf %37, %38 : vector<16x1024xf32>
    %40 = vector.extract_strided_slice %28 {offsets = [96, 0], sizes = [16, 1024], strides = [1, 1]} : vector<112x1024xf32> to vector<16x1024xf32>
    %41 = arith.addf %39, %40 : vector<16x1024xf32>
    %42 = arith.addf %21, %41 : vector<16x1024xf32>
    %c14 = arith.constant 14 : index
    %c0_11 = arith.constant 0 : index
    %c0_12 = arith.constant 0 : index
    %43 = vector.load %arg1[%c14, %c0_11, %c0_12] : memref<98x16x192xbf16, #tpu.memory_space<vmem>>, vector<7x16x192xbf16>
    %44 = vector.shape_cast %43 : vector<7x16x192xbf16> to vector<112x192xbf16>
    %cst_13 = arith.constant dense<0.000000e+00> : vector<112x1024xf32>
    %45 = tpu.matmul %44, %0, %cst_13 {dimension_numbers = #tpu.dot_dimension_numbers<[1], [0], [0], [1], [0, 0, 1, 1], [], []>} : vector<112x192xbf16>, vector<192x1024xbf16>, vector<112x1024xf32> -> vector<112x1024xf32>
    %46 = vector.broadcast %1 : vector<1x1024xf32> to vector<112x1024xf32>
    %47 = arith.addf %45, %46 : vector<112x1024xf32>
    %cst_14 = arith.constant 0.000000e+00 : f32
    %48 = vector.broadcast %cst_14 : f32 to vector<112x1024xf32>
    %49 = arith.maximumf %47, %48 : vector<112x1024xf32>
    %50 = vector.extract_strided_slice %49 {offsets = [0, 0], sizes = [16, 1024], strides = [1, 1]} : vector<112x1024xf32> to vector<16x1024xf32>
    %51 = vector.extract_strided_slice %49 {offsets = [16, 0], sizes = [16, 1024], strides = [1, 1]} : vector<112x1024xf32> to vector<16x1024xf32>
    %52 = arith.addf %50, %51 : vector<16x1024xf32>
    %53 = vector.extract_strided_slice %49 {offsets = [32, 0], sizes = [16, 1024], strides = [1, 1]} : vector<112x1024xf32> to vector<16x1024xf32>
    %54 = arith.addf %52, %53 : vector<16x1024xf32>
    %55 = vector.extract_strided_slice %49 {offsets = [48, 0], sizes = [16, 1024], strides = [1, 1]} : vector<112x1024xf32> to vector<16x1024xf32>
    %56 = arith.addf %54, %55 : vector<16x1024xf32>
    %57 = vector.extract_strided_slice %49 {offsets = [64, 0], sizes = [16, 1024], strides = [1, 1]} : vector<112x1024xf32> to vector<16x1024xf32>
    %58 = arith.addf %56, %57 : vector<16x1024xf32>
    %59 = vector.extract_strided_slice %49 {offsets = [80, 0], sizes = [16, 1024], strides = [1, 1]} : vector<112x1024xf32> to vector<16x1024xf32>
    %60 = arith.addf %58, %59 : vector<16x1024xf32>
    %61 = vector.extract_strided_slice %49 {offsets = [96, 0], sizes = [16, 1024], strides = [1, 1]} : vector<112x1024xf32> to vector<16x1024xf32>
    %62 = arith.addf %60, %61 : vector<16x1024xf32>
    %63 = arith.addf %42, %62 : vector<16x1024xf32>
    %c21 = arith.constant 21 : index
    %c0_15 = arith.constant 0 : index
    %c0_16 = arith.constant 0 : index
    %64 = vector.load %arg1[%c21, %c0_15, %c0_16] : memref<98x16x192xbf16, #tpu.memory_space<vmem>>, vector<7x16x192xbf16>
    %65 = vector.shape_cast %64 : vector<7x16x192xbf16> to vector<112x192xbf16>
    %cst_17 = arith.constant dense<0.000000e+00> : vector<112x1024xf32>
    %66 = tpu.matmul %65, %0, %cst_17 {dimension_numbers = #tpu.dot_dimension_numbers<[1], [0], [0], [1], [0, 0, 1, 1], [], []>} : vector<112x192xbf16>, vector<192x1024xbf16>, vector<112x1024xf32> -> vector<112x1024xf32>
    %67 = vector.broadcast %1 : vector<1x1024xf32> to vector<112x1024xf32>
    %68 = arith.addf %66, %67 : vector<112x1024xf32>
    %cst_18 = arith.constant 0.000000e+00 : f32
    %69 = vector.broadcast %cst_18 : f32 to vector<112x1024xf32>
    %70 = arith.maximumf %68, %69 : vector<112x1024xf32>
    %71 = vector.extract_strided_slice %70 {offsets = [0, 0], sizes = [16, 1024], strides = [1, 1]} : vector<112x1024xf32> to vector<16x1024xf32>
    %72 = vector.extract_strided_slice %70 {offsets = [16, 0], sizes = [16, 1024], strides = [1, 1]} : vector<112x1024xf32> to vector<16x1024xf32>
    %73 = arith.addf %71, %72 : vector<16x1024xf32>
    %74 = vector.extract_strided_slice %70 {offsets = [32, 0], sizes = [16, 1024], strides = [1, 1]} : vector<112x1024xf32> to vector<16x1024xf32>
    %75 = arith.addf %73, %74 : vector<16x1024xf32>
    %76 = vector.extract_strided_slice %70 {offsets = [48, 0], sizes = [16, 1024], strides = [1, 1]} : vector<112x1024xf32> to vector<16x1024xf32>
    %77 = arith.addf %75, %76 : vector<16x1024xf32>
    %78 = vector.extract_strided_slice %70 {offsets = [64, 0], sizes = [16, 1024], strides = [1, 1]} : vector<112x1024xf32> to vector<16x1024xf32>
    %79 = arith.addf %77, %78 : vector<16x1024xf32>
    %80 = vector.extract_strided_slice %70 {offsets = [80, 0], sizes = [16, 1024], strides = [1, 1]} : vector<112x1024xf32> to vector<16x1024xf32>
    %81 = arith.addf %79, %80 : vector<16x1024xf32>
    %82 = vector.extract_strided_slice %70 {offsets = [96, 0], sizes = [16, 1024], strides = [1, 1]} : vector<112x1024xf32> to vector<16x1024xf32>
    %83 = arith.addf %81, %82 : vector<16x1024xf32>
    %84 = arith.addf %63, %83 : vector<16x1024xf32>
    %c28 = arith.constant 28 : index
    %c0_19 = arith.constant 0 : index
    %c0_20 = arith.constant 0 : index
    %85 = vector.load %arg1[%c28, %c0_19, %c0_20] : memref<98x16x192xbf16, #tpu.memory_space<vmem>>, vector<7x16x192xbf16>
    %86 = vector.shape_cast %85 : vector<7x16x192xbf16> to vector<112x192xbf16>
    %cst_21 = arith.constant dense<0.000000e+00> : vector<112x1024xf32>
    %87 = tpu.matmul %86, %0, %cst_21 {dimension_numbers = #tpu.dot_dimension_numbers<[1], [0], [0], [1], [0, 0, 1, 1], [], []>} : vector<112x192xbf16>, vector<192x1024xbf16>, vector<112x1024xf32> -> vector<112x1024xf32>
    %88 = vector.broadcast %1 : vector<1x1024xf32> to vector<112x1024xf32>
    %89 = arith.addf %87, %88 : vector<112x1024xf32>
    %cst_22 = arith.constant 0.000000e+00 : f32
    %90 = vector.broadcast %cst_22 : f32 to vector<112x1024xf32>
    %91 = arith.maximumf %89, %90 : vector<112x1024xf32>
    %92 = vector.extract_strided_slice %91 {offsets = [0, 0], sizes = [16, 1024], strides = [1, 1]} : vector<112x1024xf32> to vector<16x1024xf32>
    %93 = vector.extract_strided_slice %91 {offsets = [16, 0], sizes = [16, 1024], strides = [1, 1]} : vector<112x1024xf32> to vector<16x1024xf32>
    %94 = arith.addf %92, %93 : vector<16x1024xf32>
    %95 = vector.extract_strided_slice %91 {offsets = [32, 0], sizes = [16, 1024], strides = [1, 1]} : vector<112x1024xf32> to vector<16x1024xf32>
    %96 = arith.addf %94, %95 : vector<16x1024xf32>
    %97 = vector.extract_strided_slice %91 {offsets = [48, 0], sizes = [16, 1024], strides = [1, 1]} : vector<112x1024xf32> to vector<16x1024xf32>
    %98 = arith.addf %96, %97 : vector<16x1024xf32>
    %99 = vector.extract_strided_slice %91 {offsets = [64, 0], sizes = [16, 1024], strides = [1, 1]} : vector<112x1024xf32> to vector<16x1024xf32>
    %100 = arith.addf %98, %99 : vector<16x1024xf32>
    %101 = vector.extract_strided_slice %91 {offsets = [80, 0], sizes = [16, 1024], strides = [1, 1]} : vector<112x1024xf32> to vector<16x1024xf32>
    %102 = arith.addf %100, %101 : vector<16x1024xf32>
    %103 = vector.extract_strided_slice %91 {offsets = [96, 0], sizes = [16, 1024], strides = [1, 1]} : vector<112x1024xf32> to vector<16x1024xf32>
    %104 = arith.addf %102, %103 : vector<16x1024xf32>
    %105 = arith.addf %84, %104 : vector<16x1024xf32>
    %c35 = arith.constant 35 : index
    %c0_23 = arith.constant 0 : index
    %c0_24 = arith.constant 0 : index
    %106 = vector.load %arg1[%c35, %c0_23, %c0_24] : memref<98x16x192xbf16, #tpu.memory_space<vmem>>, vector<7x16x192xbf16>
    %107 = vector.shape_cast %106 : vector<7x16x192xbf16> to vector<112x192xbf16>
    %cst_25 = arith.constant dense<0.000000e+00> : vector<112x1024xf32>
    %108 = tpu.matmul %107, %0, %cst_25 {dimension_numbers = #tpu.dot_dimension_numbers<[1], [0], [0], [1], [0, 0, 1, 1], [], []>} : vector<112x192xbf16>, vector<192x1024xbf16>, vector<112x1024xf32> -> vector<112x1024xf32>
    %109 = vector.broadcast %1 : vector<1x1024xf32> to vector<112x1024xf32>
    %110 = arith.addf %108, %109 : vector<112x1024xf32>
    %cst_26 = arith.constant 0.000000e+00 : f32
    %111 = vector.broadcast %cst_26 : f32 to vector<112x1024xf32>
    %112 = arith.maximumf %110, %111 : vector<112x1024xf32>
    %113 = vector.extract_strided_slice %112 {offsets = [0, 0], sizes = [16, 1024], strides = [1, 1]} : vector<112x1024xf32> to vector<16x1024xf32>
    %114 = vector.extract_strided_slice %112 {offsets = [16, 0], sizes = [16, 1024], strides = [1, 1]} : vector<112x1024xf32> to vector<16x1024xf32>
    %115 = arith.addf %113, %114 : vector<16x1024xf32>
    %116 = vector.extract_strided_slice %112 {offsets = [32, 0], sizes = [16, 1024], strides = [1, 1]} : vector<112x1024xf32> to vector<16x1024xf32>
    %117 = arith.addf %115, %116 : vector<16x1024xf32>
    %118 = vector.extract_strided_slice %112 {offsets = [48, 0], sizes = [16, 1024], strides = [1, 1]} : vector<112x1024xf32> to vector<16x1024xf32>
    %119 = arith.addf %117, %118 : vector<16x1024xf32>
    %120 = vector.extract_strided_slice %112 {offsets = [64, 0], sizes = [16, 1024], strides = [1, 1]} : vector<112x1024xf32> to vector<16x1024xf32>
    %121 = arith.addf %119, %120 : vector<16x1024xf32>
    %122 = vector.extract_strided_slice %112 {offsets = [80, 0], sizes = [16, 1024], strides = [1, 1]} : vector<112x1024xf32> to vector<16x1024xf32>
    %123 = arith.addf %121, %122 : vector<16x1024xf32>
    %124 = vector.extract_strided_slice %112 {offsets = [96, 0], sizes = [16, 1024], strides = [1, 1]} : vector<112x1024xf32> to vector<16x1024xf32>
    %125 = arith.addf %123, %124 : vector<16x1024xf32>
    %126 = arith.addf %105, %125 : vector<16x1024xf32>
    %c42 = arith.constant 42 : index
    %c0_27 = arith.constant 0 : index
    %c0_28 = arith.constant 0 : index
    %127 = vector.load %arg1[%c42, %c0_27, %c0_28] : memref<98x16x192xbf16, #tpu.memory_space<vmem>>, vector<7x16x192xbf16>
    %128 = vector.shape_cast %127 : vector<7x16x192xbf16> to vector<112x192xbf16>
    %cst_29 = arith.constant dense<0.000000e+00> : vector<112x1024xf32>
    %129 = tpu.matmul %128, %0, %cst_29 {dimension_numbers = #tpu.dot_dimension_numbers<[1], [0], [0], [1], [0, 0, 1, 1], [], []>} : vector<112x192xbf16>, vector<192x1024xbf16>, vector<112x1024xf32> -> vector<112x1024xf32>
    %130 = vector.broadcast %1 : vector<1x1024xf32> to vector<112x1024xf32>
    %131 = arith.addf %129, %130 : vector<112x1024xf32>
    %cst_30 = arith.constant 0.000000e+00 : f32
    %132 = vector.broadcast %cst_30 : f32 to vector<112x1024xf32>
    %133 = arith.maximumf %131, %132 : vector<112x1024xf32>
    %134 = vector.extract_strided_slice %133 {offsets = [0, 0], sizes = [16, 1024], strides = [1, 1]} : vector<112x1024xf32> to vector<16x1024xf32>
    %135 = vector.extract_strided_slice %133 {offsets = [16, 0], sizes = [16, 1024], strides = [1, 1]} : vector<112x1024xf32> to vector<16x1024xf32>
    %136 = arith.addf %134, %135 : vector<16x1024xf32>
    %137 = vector.extract_strided_slice %133 {offsets = [32, 0], sizes = [16, 1024], strides = [1, 1]} : vector<112x1024xf32> to vector<16x1024xf32>
    %138 = arith.addf %136, %137 : vector<16x1024xf32>
    %139 = vector.extract_strided_slice %133 {offsets = [48, 0], sizes = [16, 1024], strides = [1, 1]} : vector<112x1024xf32> to vector<16x1024xf32>
    %140 = arith.addf %138, %139 : vector<16x1024xf32>
    %141 = vector.extract_strided_slice %133 {offsets = [64, 0], sizes = [16, 1024], strides = [1, 1]} : vector<112x1024xf32> to vector<16x1024xf32>
    %142 = arith.addf %140, %141 : vector<16x1024xf32>
    %143 = vector.extract_strided_slice %133 {offsets = [80, 0], sizes = [16, 1024], strides = [1, 1]} : vector<112x1024xf32> to vector<16x1024xf32>
    %144 = arith.addf %142, %143 : vector<16x1024xf32>
    %145 = vector.extract_strided_slice %133 {offsets = [96, 0], sizes = [16, 1024], strides = [1, 1]} : vector<112x1024xf32> to vector<16x1024xf32>
    %146 = arith.addf %144, %145 : vector<16x1024xf32>
    %147 = arith.addf %126, %146 : vector<16x1024xf32>
    %c49 = arith.constant 49 : index
    %c0_31 = arith.constant 0 : index
    %c0_32 = arith.constant 0 : index
    %148 = vector.load %arg1[%c49, %c0_31, %c0_32] : memref<98x16x192xbf16, #tpu.memory_space<vmem>>, vector<7x16x192xbf16>
    %149 = vector.shape_cast %148 : vector<7x16x192xbf16> to vector<112x192xbf16>
    %cst_33 = arith.constant dense<0.000000e+00> : vector<112x1024xf32>
    %150 = tpu.matmul %149, %0, %cst_33 {dimension_numbers = #tpu.dot_dimension_numbers<[1], [0], [0], [1], [0, 0, 1, 1], [], []>} : vector<112x192xbf16>, vector<192x1024xbf16>, vector<112x1024xf32> -> vector<112x1024xf32>
    %151 = vector.broadcast %1 : vector<1x1024xf32> to vector<112x1024xf32>
    %152 = arith.addf %150, %151 : vector<112x1024xf32>
    %cst_34 = arith.constant 0.000000e+00 : f32
    %153 = vector.broadcast %cst_34 : f32 to vector<112x1024xf32>
    %154 = arith.maximumf %152, %153 : vector<112x1024xf32>
    %155 = vector.extract_strided_slice %154 {offsets = [0, 0], sizes = [16, 1024], strides = [1, 1]} : vector<112x1024xf32> to vector<16x1024xf32>
    %156 = vector.extract_strided_slice %154 {offsets = [16, 0], sizes = [16, 1024], strides = [1, 1]} : vector<112x1024xf32> to vector<16x1024xf32>
    %157 = arith.addf %155, %156 : vector<16x1024xf32>
    %158 = vector.extract_strided_slice %154 {offsets = [32, 0], sizes = [16, 1024], strides = [1, 1]} : vector<112x1024xf32> to vector<16x1024xf32>
    %159 = arith.addf %157, %158 : vector<16x1024xf32>
    %160 = vector.extract_strided_slice %154 {offsets = [48, 0], sizes = [16, 1024], strides = [1, 1]} : vector<112x1024xf32> to vector<16x1024xf32>
    %161 = arith.addf %159, %160 : vector<16x1024xf32>
    %162 = vector.extract_strided_slice %154 {offsets = [64, 0], sizes = [16, 1024], strides = [1, 1]} : vector<112x1024xf32> to vector<16x1024xf32>
    %163 = arith.addf %161, %162 : vector<16x1024xf32>
    %164 = vector.extract_strided_slice %154 {offsets = [80, 0], sizes = [16, 1024], strides = [1, 1]} : vector<112x1024xf32> to vector<16x1024xf32>
    %165 = arith.addf %163, %164 : vector<16x1024xf32>
    %166 = vector.extract_strided_slice %154 {offsets = [96, 0], sizes = [16, 1024], strides = [1, 1]} : vector<112x1024xf32> to vector<16x1024xf32>
    %167 = arith.addf %165, %166 : vector<16x1024xf32>
    %c56 = arith.constant 56 : index
    %c0_35 = arith.constant 0 : index
    %c0_36 = arith.constant 0 : index
    %168 = vector.load %arg1[%c56, %c0_35, %c0_36] : memref<98x16x192xbf16, #tpu.memory_space<vmem>>, vector<7x16x192xbf16>
    %169 = vector.shape_cast %168 : vector<7x16x192xbf16> to vector<112x192xbf16>
    %cst_37 = arith.constant dense<0.000000e+00> : vector<112x1024xf32>
    %170 = tpu.matmul %169, %0, %cst_37 {dimension_numbers = #tpu.dot_dimension_numbers<[1], [0], [0], [1], [0, 0, 1, 1], [], []>} : vector<112x192xbf16>, vector<192x1024xbf16>, vector<112x1024xf32> -> vector<112x1024xf32>
    %171 = vector.broadcast %1 : vector<1x1024xf32> to vector<112x1024xf32>
    %172 = arith.addf %170, %171 : vector<112x1024xf32>
    %cst_38 = arith.constant 0.000000e+00 : f32
    %173 = vector.broadcast %cst_38 : f32 to vector<112x1024xf32>
    %174 = arith.maximumf %172, %173 : vector<112x1024xf32>
    %175 = vector.extract_strided_slice %174 {offsets = [0, 0], sizes = [16, 1024], strides = [1, 1]} : vector<112x1024xf32> to vector<16x1024xf32>
    %176 = vector.extract_strided_slice %174 {offsets = [16, 0], sizes = [16, 1024], strides = [1, 1]} : vector<112x1024xf32> to vector<16x1024xf32>
    %177 = arith.addf %175, %176 : vector<16x1024xf32>
    %178 = vector.extract_strided_slice %174 {offsets = [32, 0], sizes = [16, 1024], strides = [1, 1]} : vector<112x1024xf32> to vector<16x1024xf32>
    %179 = arith.addf %177, %178 : vector<16x1024xf32>
    %180 = vector.extract_strided_slice %174 {offsets = [48, 0], sizes = [16, 1024], strides = [1, 1]} : vector<112x1024xf32> to vector<16x1024xf32>
    %181 = arith.addf %179, %180 : vector<16x1024xf32>
    %182 = vector.extract_strided_slice %174 {offsets = [64, 0], sizes = [16, 1024], strides = [1, 1]} : vector<112x1024xf32> to vector<16x1024xf32>
    %183 = arith.addf %181, %182 : vector<16x1024xf32>
    %184 = vector.extract_strided_slice %174 {offsets = [80, 0], sizes = [16, 1024], strides = [1, 1]} : vector<112x1024xf32> to vector<16x1024xf32>
    %185 = arith.addf %183, %184 : vector<16x1024xf32>
    %186 = vector.extract_strided_slice %174 {offsets = [96, 0], sizes = [16, 1024], strides = [1, 1]} : vector<112x1024xf32> to vector<16x1024xf32>
    %187 = arith.addf %185, %186 : vector<16x1024xf32>
    %188 = arith.addf %167, %187 : vector<16x1024xf32>
    %c63 = arith.constant 63 : index
    %c0_39 = arith.constant 0 : index
    %c0_40 = arith.constant 0 : index
    %189 = vector.load %arg1[%c63, %c0_39, %c0_40] : memref<98x16x192xbf16, #tpu.memory_space<vmem>>, vector<7x16x192xbf16>
    %190 = vector.shape_cast %189 : vector<7x16x192xbf16> to vector<112x192xbf16>
    %cst_41 = arith.constant dense<0.000000e+00> : vector<112x1024xf32>
    %191 = tpu.matmul %190, %0, %cst_41 {dimension_numbers = #tpu.dot_dimension_numbers<[1], [0], [0], [1], [0, 0, 1, 1], [], []>} : vector<112x192xbf16>, vector<192x1024xbf16>, vector<112x1024xf32> -> vector<112x1024xf32>
    %192 = vector.broadcast %1 : vector<1x1024xf32> to vector<112x1024xf32>
    %193 = arith.addf %191, %192 : vector<112x1024xf32>
    %cst_42 = arith.constant 0.000000e+00 : f32
    %194 = vector.broadcast %cst_42 : f32 to vector<112x1024xf32>
    %195 = arith.maximumf %193, %194 : vector<112x1024xf32>
    %196 = vector.extract_strided_slice %195 {offsets = [0, 0], sizes = [16, 1024], strides = [1, 1]} : vector<112x1024xf32> to vector<16x1024xf32>
    %197 = vector.extract_strided_slice %195 {offsets = [16, 0], sizes = [16, 1024], strides = [1, 1]} : vector<112x1024xf32> to vector<16x1024xf32>
    %198 = arith.addf %196, %197 : vector<16x1024xf32>
    %199 = vector.extract_strided_slice %195 {offsets = [32, 0], sizes = [16, 1024], strides = [1, 1]} : vector<112x1024xf32> to vector<16x1024xf32>
    %200 = arith.addf %198, %199 : vector<16x1024xf32>
    %201 = vector.extract_strided_slice %195 {offsets = [48, 0], sizes = [16, 1024], strides = [1, 1]} : vector<112x1024xf32> to vector<16x1024xf32>
    %202 = arith.addf %200, %201 : vector<16x1024xf32>
    %203 = vector.extract_strided_slice %195 {offsets = [64, 0], sizes = [16, 1024], strides = [1, 1]} : vector<112x1024xf32> to vector<16x1024xf32>
    %204 = arith.addf %202, %203 : vector<16x1024xf32>
    %205 = vector.extract_strided_slice %195 {offsets = [80, 0], sizes = [16, 1024], strides = [1, 1]} : vector<112x1024xf32> to vector<16x1024xf32>
    %206 = arith.addf %204, %205 : vector<16x1024xf32>
    %207 = vector.extract_strided_slice %195 {offsets = [96, 0], sizes = [16, 1024], strides = [1, 1]} : vector<112x1024xf32> to vector<16x1024xf32>
    %208 = arith.addf %206, %207 : vector<16x1024xf32>
    %209 = arith.addf %188, %208 : vector<16x1024xf32>
    %c70 = arith.constant 70 : index
    %c0_43 = arith.constant 0 : index
    %c0_44 = arith.constant 0 : index
    %210 = vector.load %arg1[%c70, %c0_43, %c0_44] : memref<98x16x192xbf16, #tpu.memory_space<vmem>>, vector<7x16x192xbf16>
    %211 = vector.shape_cast %210 : vector<7x16x192xbf16> to vector<112x192xbf16>
    %cst_45 = arith.constant dense<0.000000e+00> : vector<112x1024xf32>
    %212 = tpu.matmul %211, %0, %cst_45 {dimension_numbers = #tpu.dot_dimension_numbers<[1], [0], [0], [1], [0, 0, 1, 1], [], []>} : vector<112x192xbf16>, vector<192x1024xbf16>, vector<112x1024xf32> -> vector<112x1024xf32>
    %213 = vector.broadcast %1 : vector<1x1024xf32> to vector<112x1024xf32>
    %214 = arith.addf %212, %213 : vector<112x1024xf32>
    %cst_46 = arith.constant 0.000000e+00 : f32
    %215 = vector.broadcast %cst_46 : f32 to vector<112x1024xf32>
    %216 = arith.maximumf %214, %215 : vector<112x1024xf32>
    %217 = vector.extract_strided_slice %216 {offsets = [0, 0], sizes = [16, 1024], strides = [1, 1]} : vector<112x1024xf32> to vector<16x1024xf32>
    %218 = vector.extract_strided_slice %216 {offsets = [16, 0], sizes = [16, 1024], strides = [1, 1]} : vector<112x1024xf32> to vector<16x1024xf32>
    %219 = arith.addf %217, %218 : vector<16x1024xf32>
    %220 = vector.extract_strided_slice %216 {offsets = [32, 0], sizes = [16, 1024], strides = [1, 1]} : vector<112x1024xf32> to vector<16x1024xf32>
    %221 = arith.addf %219, %220 : vector<16x1024xf32>
    %222 = vector.extract_strided_slice %216 {offsets = [48, 0], sizes = [16, 1024], strides = [1, 1]} : vector<112x1024xf32> to vector<16x1024xf32>
    %223 = arith.addf %221, %222 : vector<16x1024xf32>
    %224 = vector.extract_strided_slice %216 {offsets = [64, 0], sizes = [16, 1024], strides = [1, 1]} : vector<112x1024xf32> to vector<16x1024xf32>
    %225 = arith.addf %223, %224 : vector<16x1024xf32>
    %226 = vector.extract_strided_slice %216 {offsets = [80, 0], sizes = [16, 1024], strides = [1, 1]} : vector<112x1024xf32> to vector<16x1024xf32>
    %227 = arith.addf %225, %226 : vector<16x1024xf32>
    %228 = vector.extract_strided_slice %216 {offsets = [96, 0], sizes = [16, 1024], strides = [1, 1]} : vector<112x1024xf32> to vector<16x1024xf32>
    %229 = arith.addf %227, %228 : vector<16x1024xf32>
    %230 = arith.addf %209, %229 : vector<16x1024xf32>
    %c77 = arith.constant 77 : index
    %c0_47 = arith.constant 0 : index
    %c0_48 = arith.constant 0 : index
    %231 = vector.load %arg1[%c77, %c0_47, %c0_48] : memref<98x16x192xbf16, #tpu.memory_space<vmem>>, vector<7x16x192xbf16>
    %232 = vector.shape_cast %231 : vector<7x16x192xbf16> to vector<112x192xbf16>
    %cst_49 = arith.constant dense<0.000000e+00> : vector<112x1024xf32>
    %233 = tpu.matmul %232, %0, %cst_49 {dimension_numbers = #tpu.dot_dimension_numbers<[1], [0], [0], [1], [0, 0, 1, 1], [], []>} : vector<112x192xbf16>, vector<192x1024xbf16>, vector<112x1024xf32> -> vector<112x1024xf32>
    %234 = vector.broadcast %1 : vector<1x1024xf32> to vector<112x1024xf32>
    %235 = arith.addf %233, %234 : vector<112x1024xf32>
    %cst_50 = arith.constant 0.000000e+00 : f32
    %236 = vector.broadcast %cst_50 : f32 to vector<112x1024xf32>
    %237 = arith.maximumf %235, %236 : vector<112x1024xf32>
    %238 = vector.extract_strided_slice %237 {offsets = [0, 0], sizes = [16, 1024], strides = [1, 1]} : vector<112x1024xf32> to vector<16x1024xf32>
    %239 = vector.extract_strided_slice %237 {offsets = [16, 0], sizes = [16, 1024], strides = [1, 1]} : vector<112x1024xf32> to vector<16x1024xf32>
    %240 = arith.addf %238, %239 : vector<16x1024xf32>
    %241 = vector.extract_strided_slice %237 {offsets = [32, 0], sizes = [16, 1024], strides = [1, 1]} : vector<112x1024xf32> to vector<16x1024xf32>
    %242 = arith.addf %240, %241 : vector<16x1024xf32>
    %243 = vector.extract_strided_slice %237 {offsets = [48, 0], sizes = [16, 1024], strides = [1, 1]} : vector<112x1024xf32> to vector<16x1024xf32>
    %244 = arith.addf %242, %243 : vector<16x1024xf32>
    %245 = vector.extract_strided_slice %237 {offsets = [64, 0], sizes = [16, 1024], strides = [1, 1]} : vector<112x1024xf32> to vector<16x1024xf32>
    %246 = arith.addf %244, %245 : vector<16x1024xf32>
    %247 = vector.extract_strided_slice %237 {offsets = [80, 0], sizes = [16, 1024], strides = [1, 1]} : vector<112x1024xf32> to vector<16x1024xf32>
    %248 = arith.addf %246, %247 : vector<16x1024xf32>
    %249 = vector.extract_strided_slice %237 {offsets = [96, 0], sizes = [16, 1024], strides = [1, 1]} : vector<112x1024xf32> to vector<16x1024xf32>
    %250 = arith.addf %248, %249 : vector<16x1024xf32>
    %251 = arith.addf %230, %250 : vector<16x1024xf32>
    %c84 = arith.constant 84 : index
    %c0_51 = arith.constant 0 : index
    %c0_52 = arith.constant 0 : index
    %252 = vector.load %arg1[%c84, %c0_51, %c0_52] : memref<98x16x192xbf16, #tpu.memory_space<vmem>>, vector<7x16x192xbf16>
    %253 = vector.shape_cast %252 : vector<7x16x192xbf16> to vector<112x192xbf16>
    %cst_53 = arith.constant dense<0.000000e+00> : vector<112x1024xf32>
    %254 = tpu.matmul %253, %0, %cst_53 {dimension_numbers = #tpu.dot_dimension_numbers<[1], [0], [0], [1], [0, 0, 1, 1], [], []>} : vector<112x192xbf16>, vector<192x1024xbf16>, vector<112x1024xf32> -> vector<112x1024xf32>
    %255 = vector.broadcast %1 : vector<1x1024xf32> to vector<112x1024xf32>
    %256 = arith.addf %254, %255 : vector<112x1024xf32>
    %cst_54 = arith.constant 0.000000e+00 : f32
    %257 = vector.broadcast %cst_54 : f32 to vector<112x1024xf32>
    %258 = arith.maximumf %256, %257 : vector<112x1024xf32>
    %259 = vector.extract_strided_slice %258 {offsets = [0, 0], sizes = [16, 1024], strides = [1, 1]} : vector<112x1024xf32> to vector<16x1024xf32>
    %260 = vector.extract_strided_slice %258 {offsets = [16, 0], sizes = [16, 1024], strides = [1, 1]} : vector<112x1024xf32> to vector<16x1024xf32>
    %261 = arith.addf %259, %260 : vector<16x1024xf32>
    %262 = vector.extract_strided_slice %258 {offsets = [32, 0], sizes = [16, 1024], strides = [1, 1]} : vector<112x1024xf32> to vector<16x1024xf32>
    %263 = arith.addf %261, %262 : vector<16x1024xf32>
    %264 = vector.extract_strided_slice %258 {offsets = [48, 0], sizes = [16, 1024], strides = [1, 1]} : vector<112x1024xf32> to vector<16x1024xf32>
    %265 = arith.addf %263, %264 : vector<16x1024xf32>
    %266 = vector.extract_strided_slice %258 {offsets = [64, 0], sizes = [16, 1024], strides = [1, 1]} : vector<112x1024xf32> to vector<16x1024xf32>
    %267 = arith.addf %265, %266 : vector<16x1024xf32>
    %268 = vector.extract_strided_slice %258 {offsets = [80, 0], sizes = [16, 1024], strides = [1, 1]} : vector<112x1024xf32> to vector<16x1024xf32>
    %269 = arith.addf %267, %268 : vector<16x1024xf32>
    %270 = vector.extract_strided_slice %258 {offsets = [96, 0], sizes = [16, 1024], strides = [1, 1]} : vector<112x1024xf32> to vector<16x1024xf32>
    %271 = arith.addf %269, %270 : vector<16x1024xf32>
    %272 = arith.addf %251, %271 : vector<16x1024xf32>
    %c91 = arith.constant 91 : index
    %c0_55 = arith.constant 0 : index
    %c0_56 = arith.constant 0 : index
    %273 = vector.load %arg1[%c91, %c0_55, %c0_56] : memref<98x16x192xbf16, #tpu.memory_space<vmem>>, vector<7x16x192xbf16>
    %274 = vector.shape_cast %273 : vector<7x16x192xbf16> to vector<112x192xbf16>
    %cst_57 = arith.constant dense<0.000000e+00> : vector<112x1024xf32>
    %275 = tpu.matmul %274, %0, %cst_57 {dimension_numbers = #tpu.dot_dimension_numbers<[1], [0], [0], [1], [0, 0, 1, 1], [], []>} : vector<112x192xbf16>, vector<192x1024xbf16>, vector<112x1024xf32> -> vector<112x1024xf32>
    %276 = vector.broadcast %1 : vector<1x1024xf32> to vector<112x1024xf32>
    %277 = arith.addf %275, %276 : vector<112x1024xf32>
    %cst_58 = arith.constant 0.000000e+00 : f32
    %278 = vector.broadcast %cst_58 : f32 to vector<112x1024xf32>
    %279 = arith.maximumf %277, %278 : vector<112x1024xf32>
    %280 = vector.extract_strided_slice %279 {offsets = [0, 0], sizes = [16, 1024], strides = [1, 1]} : vector<112x1024xf32> to vector<16x1024xf32>
    %281 = vector.extract_strided_slice %279 {offsets = [16, 0], sizes = [16, 1024], strides = [1, 1]} : vector<112x1024xf32> to vector<16x1024xf32>
    %282 = arith.addf %280, %281 : vector<16x1024xf32>
    %283 = vector.extract_strided_slice %279 {offsets = [32, 0], sizes = [16, 1024], strides = [1, 1]} : vector<112x1024xf32> to vector<16x1024xf32>
    %284 = arith.addf %282, %283 : vector<16x1024xf32>
    %285 = vector.extract_strided_slice %279 {offsets = [48, 0], sizes = [16, 1024], strides = [1, 1]} : vector<112x1024xf32> to vector<16x1024xf32>
    %286 = arith.addf %284, %285 : vector<16x1024xf32>
    %287 = vector.extract_strided_slice %279 {offsets = [64, 0], sizes = [16, 1024], strides = [1, 1]} : vector<112x1024xf32> to vector<16x1024xf32>
    %288 = arith.addf %286, %287 : vector<16x1024xf32>
    %289 = vector.extract_strided_slice %279 {offsets = [80, 0], sizes = [16, 1024], strides = [1, 1]} : vector<112x1024xf32> to vector<16x1024xf32>
    %290 = arith.addf %288, %289 : vector<16x1024xf32>
    %291 = vector.extract_strided_slice %279 {offsets = [96, 0], sizes = [16, 1024], strides = [1, 1]} : vector<112x1024xf32> to vector<16x1024xf32>
    %292 = arith.addf %290, %291 : vector<16x1024xf32>
    %293 = arith.addf %272, %292 : vector<16x1024xf32>
    %c0_59 = arith.constant 0 : index
    %c0_60 = arith.constant 0 : index
    %294 = vector.load %arg4[%c0_59, %c0_60] : memref<1024x128xf32, #tpu.memory_space<vmem>>, vector<1024x128xf32>
    %cst_61 = arith.constant dense<0.000000e+00> : vector<16x128xf32>
    %295 = tpu.matmul %147, %294, %cst_61 {dimension_numbers = #tpu.dot_dimension_numbers<[1], [0], [0], [1], [0, 0, 1, 1], [], []>} : vector<16x1024xf32>, vector<1024x128xf32>, vector<16x128xf32> -> vector<16x128xf32>
    %c0_62 = arith.constant 0 : index
    %c0_63 = arith.constant 0 : index
    %296 = vector.load %arg5[%c0_62, %c0_63] : memref<1024x128xf32, #tpu.memory_space<vmem>>, vector<1024x128xf32>
    %cst_64 = arith.constant dense<0.000000e+00> : vector<16x128xf32>
    %297 = tpu.matmul %293, %296, %cst_64 {dimension_numbers = #tpu.dot_dimension_numbers<[1], [0], [0], [1], [0, 0, 1, 1], [], []>} : vector<16x1024xf32>, vector<1024x128xf32>, vector<16x128xf32> -> vector<16x128xf32>
    %298 = arith.addf %295, %297 : vector<16x128xf32>
    %c0_65 = arith.constant 0 : index
    %c0_66 = arith.constant 0 : index
    %299 = vector.load %arg6[%c0_65, %c0_66] : memref<1x128xf32, #tpu.memory_space<vmem>>, vector<1x128xf32>
    %300 = vector.broadcast %299 : vector<1x128xf32> to vector<16x128xf32>
    %301 = arith.addf %298, %300 : vector<16x128xf32>
    %c0_67 = arith.constant 0 : index
    %c0_68 = arith.constant 0 : index
    %302 = vector.load %arg7[%c0_67, %c0_68] : memref<16x128xf32, #tpu.memory_space<vmem>>, vector<16x128xf32>
    tpu.vector_store %arg7[%c0_67, %c0_68], %301 {strides = array<i32>} : memref<16x128xf32, #tpu.memory_space<vmem>>, vector<16x128xf32>,
    return
  }
  func.func @transform_0(%arg0: i32) -> (i32, i32, i32) {
    %c0_i32 = arith.constant 0 : i32
    %c0_i32_0 = arith.constant 0 : i32
    %c0_i32_1 = arith.constant 0 : i32
    return %c0_i32, %arg0, %c0_i32_0 : i32, i32, i32
  }
  func.func @transform_1(%arg0: i32) -> (i32, i32) {
    %c0_i32 = arith.constant 0 : i32
    %c0_i32_0 = arith.constant 0 : i32
    %c0_i32_1 = arith.constant 0 : i32
    return %c0_i32, %c0_i32_0 : i32, i32
  }
  func.func @transform_2(%arg0: i32) -> (i32, i32) {
    %c0_i32 = arith.constant 0 : i32
    %c0_i32_0 = arith.constant 0 : i32
    %c0_i32_1 = arith.constant 0 : i32
    return %c0_i32, %c0_i32_0 : i32, i32
  }
  func.func @transform_3(%arg0: i32) -> (i32, i32) {
    %c0_i32 = arith.constant 0 : i32
    %c0_i32_0 = arith.constant 0 : i32
    %c0_i32_1 = arith.constant 0 : i32
    return %c0_i32, %c0_i32_0 : i32, i32
  }
  func.func @transform_4(%arg0: i32) -> (i32, i32) {
    %c0_i32 = arith.constant 0 : i32
    %c0_i32_0 = arith.constant 0 : i32
    %c0_i32_1 = arith.constant 0 : i32
    return %c0_i32, %c0_i32_0 : i32, i32
  }
  func.func @transform_5(%arg0: i32) -> (i32, i32) {
    %c0_i32 = arith.constant 0 : i32
    %c0_i32_0 = arith.constant 0 : i32
    %c0_i32_1 = arith.constant 0 : i32
    return %c0_i32, %c0_i32_0 : i32, i32
  }
  func.func @transform_6(%arg0: i32) -> (i32, i32) {
    %c0_i32 = arith.constant 0 : i32
    %c0_i32_0 = arith.constant 0 : i32
    return %arg0, %c0_i32 : i32, i32
  }
}

</mosaic_0001>

<llo_original>
// kernel: tpu_custom_call.1
$region0: #{tpu_custom_call.1}
  #allocation0 [shape = 'u32[]', space=smem, size = 0x4, offset = 0x4, fixed_abs, tag = 'smem constant byte address 0x4 - core index']
  #allocation1 [shape = 'u32[144,128]{1,0:T(1,128)}', space=vmem, size = 0x12000, scoped, tag = 'internal scratch']
  %s0 = inlined_call_operand.vmem [shape: bf16[98,16,192], index: 0, kind: input, shape index: {}]
  %s1 = inlined_call_operand.vmem [shape: bf16[192,1024], index: 1, kind: input, shape index: {}]
  %s2 = inlined_call_operand.vmem [shape: f32[1,1024], index: 2, kind: input, shape index: {}]
  %s3 = inlined_call_operand.vmem [shape: f32[1024,128], index: 3, kind: input, shape index: {}]
  %s4 = inlined_call_operand.vmem [shape: f32[1024,128], index: 4, kind: input, shape index: {}]
  %s5 = inlined_call_operand.vmem [shape: f32[1,128], index: 5, kind: input, shape index: {}]
  %s6 = inlined_call_operand.hbm [shape: f32[16,128], index: 6, kind: output, shape index: {}]
  %s7 = sld [smem:[#allocation0]]
  $region34: #{tpu_custom_call.1} parent=0
    _
  %s9 = ssub.s32 1, %s7
  %s10 = scalar_select 0, %s9, %s7
  $region1: #{tpu_custom_call.1} parent=0
    #allocation2 [shape = 'u8[8192]{0}', space=vmem, size = 0x2000, scoped, tag = 'output window, operand 0, single buffered']
    #allocation3 [shape = 's32[1]{0}', space=sflag, size = 0x4, scoped, tag = 'scoped memory for tpu_custom_call.1']
    %11 = vsyncpa [#allocation3], 0
    // Predicated region
    $region2: #{tpu_custom_call.1} parent=1 // pred_check
      _
    $region3: #{tpu_custom_call.1} parent=1 // pred_check_branch
      %13 = sbr.rel (0) target = $region5
    $region4: #{tpu_custom_call.1} parent=1 // pred_region
      _
    $region5: #{tpu_custom_call.1} parent=1 // pred_fallthru
      _
    // Predicated region
    $region6: #{tpu_custom_call.1} parent=1 // pred_check
      _
    $region7: #{tpu_custom_call.1} parent=1 // pred_check_branch
      %15 = sbr.rel (0) target = $region9
    $region8: #{tpu_custom_call.1} parent=1 // pred_region
      _
    $region9: #{tpu_custom_call.1} parent=1 // pred_fallthru
      _
    // Predicated region
    $region10: #{tpu_custom_call.1} parent=1 // pred_check
      _
    $region11: #{tpu_custom_call.1} parent=1 // pred_check_branch
      %17 = sbr.rel (0) target = $region13
    $region12: #{tpu_custom_call.1} parent=1 // pred_region
      _
    $region13: #{tpu_custom_call.1} parent=1 // pred_fallthru
      _
    // Predicated region
    $region14: #{tpu_custom_call.1} parent=1 // pred_check
      _
    $region15: #{tpu_custom_call.1} parent=1 // pred_check_branch
      %19 = sbr.rel (0) target = $region17
    $region16: #{tpu_custom_call.1} parent=1 // pred_region
      _
    $region17: #{tpu_custom_call.1} parent=1 // pred_fallthru
      _
    // Predicated region
    $region18: #{tpu_custom_call.1} parent=1 // pred_check
      _
    $region19: #{tpu_custom_call.1} parent=1 // pred_check_branch
      %21 = sbr.rel (0) target = $region21
    $region20: #{tpu_custom_call.1} parent=1 // pred_region
      _
    $region21: #{tpu_custom_call.1} parent=1 // pred_fallthru
      _
    // Predicated region
    $region22: #{tpu_custom_call.1} parent=1 // pred_check
      _
    $region23: #{tpu_custom_call.1} parent=1 // pred_check_branch
      %23 = sbr.rel (0) target = $region25
    $region24: #{tpu_custom_call.1} parent=1 // pred_region
      _
    $region25: #{tpu_custom_call.1} parent=1 // pred_fallthru
      _
    %v25 = vld [vmem:[%s1] sm:$0xff]
    %v26 = vld [vmem:[%s1 + $0x8] sm:$0xff]
    %v27 = vld [vmem:[%s1 + $0x10] sm:$0xff]
    %v28 = vld [vmem:[%s1 + $0x18] sm:$0xff]
    %v29 = vld [vmem:[%s1 + $0x20] sm:$0xff]
    %v30 = vld [vmem:[%s1 + $0x28] sm:$0xff]
    %v31 = vld [vmem:[%s1 + $0x30] sm:$0xff]
    %v32 = vld [vmem:[%s1 + $0x38] sm:$0xff]
    %v33 = vld [vmem:[%s1 + $0x40] sm:$0xff]
    %v34 = vld [vmem:[%s1 + $0x48] sm:$0xff]
    %v35 = vld [vmem:[%s1 + $0x50] sm:$0xff]
    %v36 = vld [vmem:[%s1 + $0x58] sm:$0xff]
    %v37 = vld [vmem:[%s1 + $0x60] sm:$0xff]
    %v38 = vld [vmem:[%s1 + $0x68] sm:$0xff]
    %v39 = vld [vmem:[%s1 + $0x70] sm:$0xff]
    %v40 = vld [vmem:[%s1 + $0x78] sm:$0xff]
    %v41 = vld [vmem:[%s1 + $0x80] sm:$0xff]
    %v42 = vld [vmem:[%s1 + $0x88] sm:$0xff]
    %v43 = vld [vmem:[%s1 + $0x90] sm:$0xff]
    %v44 = vld [vmem:[%s1 + $0x98] sm:$0xff]
    %v45 = vld [vmem:[%s1 + $0xa0] sm:$0xff]
    %v46 = vld [vmem:[%s1 + $0xa8] sm:$0xff]
    %v47 = vld [vmem:[%s1 + $0xb0] sm:$0xff]
    %v48 = vld [vmem:[%s1 + $0xb8] sm:$0xff]
    %v49 = vld [vmem:[%s1 + $0xc0] sm:$0xff]
    %v50 = vld [vmem:[%s1 + $0xc8] sm:$0xff]
    %v51 = vld [vmem:[%s1 + $0xd0] sm:$0xff]
    %v52 = vld [vmem:[%s1 + $0xd8] sm:$0xff]
    %v53 = vld [vmem:[%s1 + $0xe0] sm:$0xff]
    %v54 = vld [vmem:[%s1 + $0xe8] sm:$0xff]
    %v55 = vld [vmem:[%s1 + $0xf0] sm:$0xff]
    %v56 = vld [vmem:[%s1 + $0xf8] sm:$0xff]
    %v57 = vld [vmem:[%s1 + $0x100] sm:$0xff]
    %v58 = vld [vmem:[%s1 + $0x108] sm:$0xff]
    %v59 = vld [vmem:[%s1 + $0x110] sm:$0xff]
    %v60 = vld [vmem:[%s1 + $0x118] sm:$0xff]
    %v61 = vld [vmem:[%s1 + $0x120] sm:$0xff]
    %v62 = vld [vmem:[%s1 + $0x128] sm:$0xff]
    %v63 = vld [vmem:[%s1 + $0x130] sm:$0xff]
    %v64 = vld [vmem:[%s1 + $0x138] sm:$0xff]
    %v65 = vld [vmem:[%s1 + $0x140] sm:$0xff]
    %v66 = vld [vmem:[%s1 + $0x148] sm:$0xff]
    %v67 = vld [vmem:[%s1 + $0x150] sm:$0xff]
    %v68 = vld [vmem:[%s1 + $0x158] sm:$0xff]
    %v69 = vld [vmem:[%s1 + $0x160] sm:$0xff]
    %v70 = vld [vmem:[%s1 + $0x168] sm:$0xff]
    %v71 = vld [vmem:[%s1 + $0x170] sm:$0xff]
    %v72 = vld [vmem:[%s1 + $0x178] sm:$0xff]
    %v73 = vld [vmem:[%s1 + $0x180] sm:$0xff]
    %v74 = vld [vmem:[%s1 + $0x188] sm:$0xff]
    %v75 = vld [vmem:[%s1 + $0x190] sm:$0xff]
    %v76 = vld [vmem:[%s1 + $0x198] sm:$0xff]
    %v77 = vld [vmem:[%s1 + $0x1a0] sm:$0xff]
    %v78 = vld [vmem:[%s1 + $0x1a8] sm:$0xff]
    %v79 = vld [vmem:[%s1 + $0x1b0] sm:$0xff]
    %v80 = vld [vmem:[%s1 + $0x1b8] sm:$0xff]
    %v81 = vld [vmem:[%s1 + $0x1c0] sm:$0xff]
    %v82 = vld [vmem:[%s1 + $0x1c8] sm:$0xff]
    %v83 = vld [vmem:[%s1 + $0x1d0] sm:$0xff]
    %v84 = vld [vmem:[%s1 + $0x1d8] sm:$0xff]
    %v85 = vld [vmem:[%s1 + $0x1e0] sm:$0xff]
    %v86 = vld [vmem:[%s1 + $0x1e8] sm:$0xff]
    %v87 = vld [vmem:[%s1 + $0x1f0] sm:$0xff]
    %v88 = vld [vmem:[%s1 + $0x1f8] sm:$0xff]
    %v89 = vld [vmem:[%s1 + $0x200] sm:$0xff]
    %v90 = vld [vmem:[%s1 + $0x208] sm:$0xff]
    %v91 = vld [vmem:[%s1 + $0x210] sm:$0xff]
    %v92 = vld [vmem:[%s1 + $0x218] sm:$0xff]
    %v93 = vld [vmem:[%s1 + $0x220] sm:$0xff]
    %v94 = vld [vmem:[%s1 + $0x228] sm:$0xff]
    %v95 = vld [vmem:[%s1 + $0x230] sm:$0xff]
    %v96 = vld [vmem:[%s1 + $0x238] sm:$0xff]
    %v97 = vld [vmem:[%s1 + $0x240] sm:$0xff]
    %v98 = vld [vmem:[%s1 + $0x248] sm:$0xff]
    %v99 = vld [vmem:[%s1 + $0x250] sm:$0xff]
    %v100 = vld [vmem:[%s1 + $0x258] sm:$0xff]
    %v101 = vld [vmem:[%s1 + $0x260] sm:$0xff]
    %v102 = vld [vmem:[%s1 + $0x268] sm:$0xff]
    %v103 = vld [vmem:[%s1 + $0x270] sm:$0xff]
    %v104 = vld [vmem:[%s1 + $0x278] sm:$0xff]
    %v105 = vld [vmem:[%s1 + $0x280] sm:$0xff]
    %v106 = vld [vmem:[%s1 + $0x288] sm:$0xff]
    %v107 = vld [vmem:[%s1 + $0x290] sm:$0xff]
    %v108 = vld [vmem:[%s1 + $0x298] sm:$0xff]
    %v109 = vld [vmem:[%s1 + $0x2a0] sm:$0xff]
    %v110 = vld [vmem:[%s1 + $0x2a8] sm:$0xff]
    %v111 = vld [vmem:[%s1 + $0x2b0] sm:$0xff]
    %v112 = vld [vmem:[%s1 + $0x2b8] sm:$0xff]
    %v113 = vld [vmem:[%s1 + $0x2c0] sm:$0xff]
    %v114 = vld [vmem:[%s1 + $0x2c8] sm:$0xff]
    %v115 = vld [vmem:[%s1 + $0x2d0] sm:$0xff]
    %v116 = vld [vmem:[%s1 + $0x2d8] sm:$0xff]
    %v117 = vld [vmem:[%s1 + $0x2e0] sm:$0xff]
    %v118 = vld [vmem:[%s1 + $0x2e8] sm:$0xff]
    %v119 = vld [vmem:[%s1 + $0x2f0] sm:$0xff]
    %v120 = vld [vmem:[%s1 + $0x2f8] sm:$0xff]
    %v121 = vld [vmem:[%s2] sm:$0xff]
    %v122 = vld [vmem:[%s0] sm:$0xff]
    %v123 = vld [vmem:[%s0 + $0x8] sm:$0xff]
    %v124 = vld [vmem:[%s0 + $0x10] sm:$0xff]
    %v125 = vld [vmem:[%s0 + $0x18] sm:$0xff]
    %v126 = vld [vmem:[%s0 + $0x20] sm:$0xff]
    %v127 = vld [vmem:[%s0 + $0x28] sm:$0xff]
    %v128 = vld [vmem:[%s0 + $0x30] sm:$0xff]
    %v129 = vld [vmem:[%s0 + $0x38] sm:$0xff]
    %v130 = vld [vmem:[%s0 + $0x40] sm:$0xff]
    %v131 = vld [vmem:[%s0 + $0x48] sm:$0xff]
    %v132 = vld [vmem:[%s0 + $0x50] sm:$0xff]
    %v133 = vld [vmem:[%s0 + $0x58] sm:$0xff]
    %v134 = vld [vmem:[%s0 + $0x60] sm:$0xff]
    %v135 = vld [vmem:[%s0 + $0x68] sm:$0xff]
    %v137 = vlaneseq
    %v138 = vshrl.u32 %v137, 7
    %v139 = vsub.s32 0, %v138
    %v140 = vrot.slane %v121, %v139
    %v141 = vlaneseq
    %v142 = vshrl.u32 %v141, 7
    %v143 = vsub.s32 1, %v142
    %v144 = vrot.slane %v121, %v143
    %v145 = vlaneseq
    %v146 = vshrl.u32 %v145, 7
    %v147 = vsub.s32 2, %v146
    %v148 = vrot.slane %v121, %v147
    %v149 = vlaneseq
    %v150 = vshrl.u32 %v149, 7
    %v151 = vsub.s32 3, %v150
    %v152 = vrot.slane %v121, %v151
    %v153 = vlaneseq
    %v154 = vshrl.u32 %v153, 7
    %v155 = vsub.s32 4, %v154
    %v156 = vrot.slane %v121, %v155
    %v157 = vlaneseq
    %v158 = vshrl.u32 %v157, 7
    %v159 = vsub.s32 5, %v158
    %v160 = vrot.slane %v121, %v159
    %v161 = vlaneseq
    %v162 = vshrl.u32 %v161, 7
    %v163 = vsub.s32 6, %v162
    %v164 = vrot.slane %v121, %v163
    %v165 = vlaneseq
    %v166 = vshrl.u32 %v165, 7
    %v167 = vsub.s32 7, %v166
    %v168 = vrot.slane %v121, %v167
    %v191 = vunpack.c.l.b16 %v122
    %v192 = vunpack.c.h.b16 %v122
    %v193 = vunpack.c.l.b16 %v123
    %v194 = vunpack.c.h.b16 %v123
    %v195 = vunpack.c.l.b16 %v124
    %v196 = vunpack.c.h.b16 %v124
    %v197 = vunpack.c.l.b16 %v125
    %v198 = vunpack.c.h.b16 %v125
    %v199 = vunpack.c.l.b16 %v126
    %v200 = vunpack.c.h.b16 %v126
    %v201 = vunpack.c.l.b16 %v127
    %v202 = vunpack.c.h.b16 %v127
    %v203 = vunpack.c.l.b16 %v128
    %v204 = vunpack.c.h.b16 %v128
    %v205 = vunpack.c.l.b16 %v129
    %v206 = vunpack.c.h.b16 %v129
    %v207 = vunpack.c.l.b16 %v130
    %v208 = vunpack.c.h.b16 %v130
    %v209 = vunpack.c.l.b16 %v131
    %v210 = vunpack.c.h.b16 %v131
    %v211 = vunpack.c.l.b16 %v132
    %v212 = vunpack.c.h.b16 %v132
    %v213 = vunpack.c.l.b16 %v133
    %v214 = vunpack.c.h.b16 %v133
    %v215 = vunpack.c.l.b16 %v134
    %v216 = vunpack.c.h.b16 %v134
    %v217 = vunpack.c.l.b16 %v135
    %v218 = vunpack.c.h.b16 %v135
    %v219 = vpack.c.b16 %v193, %v191
    %v220 = vpack.c.b16 %v194, %v192
    %v221 = vpack.c.b16 %v197, %v195
    %v222 = vpack.c.b16 %v198, %v196
    %v223 = vpack.c.b16 %v201, %v199
    %v224 = vpack.c.b16 %v202, %v200
    %v225 = vpack.c.b16 %v205, %v203
    %v226 = vpack.c.b16 %v206, %v204
    %v227 = vpack.c.b16 %v209, %v207
    %v228 = vpack.c.b16 %v210, %v208
    %v229 = vpack.c.b16 %v213, %v211
    %v230 = vpack.c.b16 %v214, %v212
    %v231 = vpack.c.b16 %v217, %v215
    %v232 = vpack.c.b16 %v218, %v216
    %v336 = vunpack.c.l.b16 %v25
    %v337 = vunpack.c.h.b16 %v25
    %v338 = vunpack.c.l.b16 %v26
    %v339 = vunpack.c.h.b16 %v26
    %v340 = vunpack.c.l.b16 %v27
    %v341 = vunpack.c.h.b16 %v27
    %v342 = vunpack.c.l.b16 %v28
    %v343 = vunpack.c.h.b16 %v28
    %v344 = vunpack.c.l.b16 %v29
    %v345 = vunpack.c.h.b16 %v29
    %v346 = vunpack.c.l.b16 %v30
    %v347 = vunpack.c.h.b16 %v30
    %v348 = vunpack.c.l.b16 %v31
    %v349 = vunpack.c.h.b16 %v31
    %v350 = vunpack.c.l.b16 %v32
    %v351 = vunpack.c.h.b16 %v32
    %v352 = vunpack.c.l.b16 %v33
    %v353 = vunpack.c.h.b16 %v33
    %v354 = vunpack.c.l.b16 %v34
    %v355 = vunpack.c.h.b16 %v34
    %v356 = vunpack.c.l.b16 %v35
    %v357 = vunpack.c.h.b16 %v35
    %v358 = vunpack.c.l.b16 %v36
    %v359 = vunpack.c.h.b16 %v36
    %v360 = vunpack.c.l.b16 %v37
    %v361 = vunpack.c.h.b16 %v37
    %v362 = vunpack.c.l.b16 %v38
    %v363 = vunpack.c.h.b16 %v38
    %v364 = vunpack.c.l.b16 %v39
    %v365 = vunpack.c.h.b16 %v39
    %v366 = vunpack.c.l.b16 %v40
    %v367 = vunpack.c.h.b16 %v40
    %v368 = vunpack.c.l.b16 %v41
    %v369 = vunpack.c.h.b16 %v41
    %v370 = vunpack.c.l.b16 %v42
    %v371 = vunpack.c.h.b16 %v42
    %v372 = vunpack.c.l.b16 %v43
    %v373 = vunpack.c.h.b16 %v43
    %v374 = vunpack.c.l.b16 %v44
    %v375 = vunpack.c.h.b16 %v44
    %v376 = vunpack.c.l.b16 %v45
    %v377 = vunpack.c.h.b16 %v45
    %v378 = vunpack.c.l.b16 %v46
    %v379 = vunpack.c.h.b16 %v46
    %v380 = vunpack.c.l.b16 %v47
    %v381 = vunpack.c.h.b16 %v47
    %v382 = vunpack.c.l.b16 %v48
    %v383 = vunpack.c.h.b16 %v48
    %v384 = vunpack.c.l.b16 %v49
    %v385 = vunpack.c.h.b16 %v49
    %v386 = vunpack.c.l.b16 %v50
    %v387 = vunpack.c.h.b16 %v50
    %v388 = vunpack.c.l.b16 %v51
    %v389 = vunpack.c.h.b16 %v51
    %v390 = vunpack.c.l.b16 %v52
    %v391 = vunpack.c.h.b16 %v52
    %v392 = vunpack.c.l.b16 %v53
    %v393 = vunpack.c.h.b16 %v53
    %v394 = vunpack.c.l.b16 %v54
    %v395 = vunpack.c.h.b16 %v54
    %v396 = vunpack.c.l.b16 %v55
    %v397 = vunpack.c.h.b16 %v55
    %v398 = vunpack.c.l.b16 %v56
    %v399 = vunpack.c.h.b16 %v56
    %v400 = vunpack.c.l.b16 %v57
    %v401 = vunpack.c.h.b16 %v57
    %v402 = vunpack.c.l.b16 %v58
    %v403 = vunpack.c.h.b16 %v58
    %v404 = vunpack.c.l.b16 %v59
    %v405 = vunpack.c.h.b16 %v59
    %v406 = vunpack.c.l.b16 %v60
    %v407 = vunpack.c.h.b16 %v60
    %v408 = vunpack.c.l.b16 %v61
    %v409 = vunpack.c.h.b16 %v61
    %v410 = vunpack.c.l.b16 %v62
    %v411 = vunpack.c.h.b16 %v62
    %v412 = vunpack.c.l.b16 %v63
    %v413 = vunpack.c.h.b16 %v63
    %v414 = vunpack.c.l.b16 %v64
    %v415 = vunpack.c.h.b16 %v64
    %v416 = vunpack.c.l.b16 %v65
    %v417 = vunpack.c.h.b16 %v65
    %v418 = vunpack.c.l.b16 %v66
    %v419 = vunpack.c.h.b16 %v66
    %v420 = vunpack.c.l.b16 %v67
    %v421 = vunpack.c.h.b16 %v67
    %v422 = vunpack.c.l.b16 %v68
    %v423 = vunpack.c.h.b16 %v68
    %v424 = vunpack.c.l.b16 %v69
    %v425 = vunpack.c.h.b16 %v69
    %v426 = vunpack.c.l.b16 %v70
    %v427 = vunpack.c.h.b16 %v70
    %v428 = vunpack.c.l.b16 %v71
    %v429 = vunpack.c.h.b16 %v71
    %v430 = vunpack.c.l.b16 %v72
    %v431 = vunpack.c.h.b16 %v72
    %v432 = vunpack.c.l.b16 %v73
    %v433 = vunpack.c.h.b16 %v73
    %v434 = vunpack.c.l.b16 %v74
    %v435 = vunpack.c.h.b16 %v74
    %v436 = vunpack.c.l.b16 %v75
    %v437 = vunpack.c.h.b16 %v75
    %v438 = vunpack.c.l.b16 %v76
    %v439 = vunpack.c.h.b16 %v76
    %v440 = vunpack.c.l.b16 %v77
    %v441 = vunpack.c.h.b16 %v77
    %v442 = vunpack.c.l.b16 %v78
    %v443 = vunpack.c.h.b16 %v78
    %v444 = vunpack.c.l.b16 %v79
    %v445 = vunpack.c.h.b16 %v79
    %v446 = vunpack.c.l.b16 %v80
    %v447 = vunpack.c.h.b16 %v80
    %v448 = vunpack.c.l.b16 %v81
    %v449 = vunpack.c.h.b16 %v81
    %v450 = vunpack.c.l.b16 %v82
    %v451 = vunpack.c.h.b16 %v82
    %v452 = vunpack.c.l.b16 %v83
    %v453 = vunpack.c.h.b16 %v83
    %v454 = vunpack.c.l.b16 %v84
    %v455 = vunpack.c.h.b16 %v84
    %v456 = vunpack.c.l.b16 %v85
    %v457 = vunpack.c.h.b16 %v85
    %v458 = vunpack.c.l.b16 %v86
    %v459 = vunpack.c.h.b16 %v86
    %v460 = vunpack.c.l.b16 %v87
    %v461 = vunpack.c.h.b16 %v87
    %v462 = vunpack.c.l.b16 %v88
    %v463 = vunpack.c.h.b16 %v88
    %v464 = vunpack.c.l.b16 %v89
    %v465 = vunpack.c.h.b16 %v89
    %v466 = vunpack.c.l.b16 %v90
    %v467 = vunpack.c.h.b16 %v90
    %v468 = vunpack.c.l.b16 %v91
    %v469 = vunpack.c.h.b16 %v91
    %v470 = vunpack.c.l.b16 %v92
    %v471 = vunpack.c.h.b16 %v92
    %v472 = vunpack.c.l.b16 %v93
    %v473 = vunpack.c.h.b16 %v93
    %v474 = vunpack.c.l.b16 %v94
    %v475 = vunpack.c.h.b16 %v94
    %v476 = vunpack.c.l.b16 %v95
    %v477 = vunpack.c.h.b16 %v95
    %v478 = vunpack.c.l.b16 %v96
    %v479 = vunpack.c.h.b16 %v96
    %v480 = vunpack.c.l.b16 %v97
    %v481 = vunpack.c.h.b16 %v97
    %v482 = vunpack.c.l.b16 %v98
    %v483 = vunpack.c.h.b16 %v98
    %v484 = vunpack.c.l.b16 %v99
    %v485 = vunpack.c.h.b16 %v99
    %v486 = vunpack.c.l.b16 %v100
    %v487 = vunpack.c.h.b16 %v100
    %v488 = vunpack.c.l.b16 %v101
    %v489 = vunpack.c.h.b16 %v101
    %v490 = vunpack.c.l.b16 %v102
    %v491 = vunpack.c.h.b16 %v102
    %v492 = vunpack.c.l.b16 %v103
    %v493 = vunpack.c.h.b16 %v103
    %v494 = vunpack.c.l.b16 %v104
    %v495 = vunpack.c.h.b16 %v104
    %v496 = vunpack.c.l.b16 %v105
    %v497 = vunpack.c.h.b16 %v105
    %v498 = vunpack.c.l.b16 %v106
    %v499 = vunpack.c.h.b16 %v106
    %v500 = vunpack.c.l.b16 %v107
    %v501 = vunpack.c.h.b16 %v107
    %v502 = vunpack.c.l.b16 %v108
    %v503 = vunpack.c.h.b16 %v108
    %v504 = vunpack.c.l.b16 %v109
    %v505 = vunpack.c.h.b16 %v109
    %v506 = vunpack.c.l.b16 %v110
    %v507 = vunpack.c.h.b16 %v110
    %v508 = vunpack.c.l.b16 %v111
    %v509 = vunpack.c.h.b16 %v111
    %v510 = vunpack.c.l.b16 %v112
    %v511 = vunpack.c.h.b16 %v112
    %v512 = vunpack.c.l.b16 %v113
    %v513 = vunpack.c.h.b16 %v113
    %v514 = vunpack.c.l.b16 %v114
    %v515 = vunpack.c.h.b16 %v114
    %v516 = vunpack.c.l.b16 %v115
    %v517 = vunpack.c.h.b16 %v115
    %v518 = vunpack.c.l.b16 %v116
    %v519 = vunpack.c.h.b16 %v116
    %v520 = vunpack.c.l.b16 %v117
    %v521 = vunpack.c.h.b16 %v117
    %v522 = vunpack.c.l.b16 %v118
    %v523 = vunpack.c.h.b16 %v118
    %v524 = vunpack.c.l.b16 %v119
    %v525 = vunpack.c.h.b16 %v119
    %v526 = vunpack.c.l.b16 %v120
    %v527 = vunpack.c.h.b16 %v120
    %v528 = vpack.c.b16 %v344, %v336
    %v529 = vpack.c.b16 %v345, %v337
    %v530 = vpack.c.b16 %v346, %v338
    %v531 = vpack.c.b16 %v347, %v339
    %v532 = vpack.c.b16 %v348, %v340
    %v533 = vpack.c.b16 %v349, %v341
    %v534 = vpack.c.b16 %v350, %v342
    %v535 = vpack.c.b16 %v351, %v343
    %v536 = vpack.c.b16 %v360, %v352
    %v537 = vpack.c.b16 %v361, %v353
    %v538 = vpack.c.b16 %v362, %v354
    %v539 = vpack.c.b16 %v363, %v355
    %v540 = vpack.c.b16 %v364, %v356
    %v541 = vpack.c.b16 %v365, %v357
    %v542 = vpack.c.b16 %v366, %v358
    %v543 = vpack.c.b16 %v367, %v359
    %v544 = vpack.c.b16 %v376, %v368
    %v545 = vpack.c.b16 %v377, %v369
    %v546 = vpack.c.b16 %v378, %v370
    %v547 = vpack.c.b16 %v379, %v371
    %v548 = vpack.c.b16 %v380, %v372
    %v549 = vpack.c.b16 %v381, %v373
    %v550 = vpack.c.b16 %v382, %v374
    %v551 = vpack.c.b16 %v383, %v375
    %v552 = vpack.c.b16 %v392, %v384
    %v553 = vpack.c.b16 %v393, %v385
    %v554 = vpack.c.b16 %v394, %v386
    %v555 = vpack.c.b16 %v395, %v387
    %v556 = vpack.c.b16 %v396, %v388
    %v557 = vpack.c.b16 %v397, %v389
    %v558 = vpack.c.b16 %v398, %v390
    %v559 = vpack.c.b16 %v399, %v391
    %v560 = vpack.c.b16 %v408, %v400
    %v561 = vpack.c.b16 %v409, %v401
    %v562 = vpack.c.b16 %v410, %v402
    %v563 = vpack.c.b16 %v411, %v403
    %v564 = vpack.c.b16 %v412, %v404
    %v565 = vpack.c.b16 %v413, %v405
    %v566 = vpack.c.b16 %v414, %v406
    %v567 = vpack.c.b16 %v415, %v407
    %v568 = vpack.c.b16 %v424, %v416
    %v569 = vpack.c.b16 %v425, %v417
    %v570 = vpack.c.b16 %v426, %v418
    %v571 = vpack.c.b16 %v427, %v419
    %v572 = vpack.c.b16 %v428, %v420
    %v573 = vpack.c.b16 %v429, %v421
    %v574 = vpack.c.b16 %v430, %v422
    %v575 = vpack.c.b16 %v431, %v423
    %v576 = vpack.c.b16 %v440, %v432
    %v577 = vpack.c.b16 %v441, %v433
    %v578 = vpack.c.b16 %v442, %v434
    %v579 = vpack.c.b16 %v443, %v435
    %v580 = vpack.c.b16 %v444, %v436
    %v581 = vpack.c.b16 %v445, %v437
    %v582 = vpack.c.b16 %v446, %v438
    %v583 = vpack.c.b16 %v447, %v439
    %v584 = vpack.c.b16 %v456, %v448
    %v585 = vpack.c.b16 %v457, %v449
    %v586 = vpack.c.b16 %v458, %v450
    %v587 = vpack.c.b16 %v459, %v451
    %v588 = vpack.c.b16 %v460, %v452
    %v589 = vpack.c.b16 %v461, %v453
    %v590 = vpack.c.b16 %v462, %v454
    %v591 = vpack.c.b16 %v463, %v455
    %v592 = vpack.c.b16 %v472, %v464
    %v593 = vpack.c.b16 %v473, %v465
    %v594 = vpack.c.b16 %v474, %v466
    %v595 = vpack.c.b16 %v475, %v467
    %v596 = vpack.c.b16 %v476, %v468
    %v597 = vpack.c.b16 %v477, %v469
    %v598 = vpack.c.b16 %v478, %v470
    %v599 = vpack.c.b16 %v479, %v471
    %v600 = vpack.c.b16 %v488, %v480
    %v601 = vpack.c.b16 %v489, %v481
    %v602 = vpack.c.b16 %v490, %v482
    %v603 = vpack.c.b16 %v491, %v483
    %v604 = vpack.c.b16 %v492, %v484
    %v605 = vpack.c.b16 %v493, %v485
    %v606 = vpack.c.b16 %v494, %v486
    %v607 = vpack.c.b16 %v495, %v487
    %v608 = vpack.c.b16 %v504, %v496
    %v609 = vpack.c.b16 %v505, %v497
    %v610 = vpack.c.b16 %v506, %v498
    %v611 = vpack.c.b16 %v507, %v499
    %v612 = vpack.c.b16 %v508, %v500
    %v613 = vpack.c.b16 %v509, %v501
    %v614 = vpack.c.b16 %v510, %v502
    %v615 = vpack.c.b16 %v511, %v503
    %v616 = vpack.c.b16 %v520, %v512
    %v617 = vpack.c.b16 %v521, %v513
    %v618 = vpack.c.b16 %v522, %v514
    %v619 = vpack.c.b16 %v523, %v515
    %v620 = vpack.c.b16 %v524, %v516
    %v621 = vpack.c.b16 %v525, %v517
    %v622 = vpack.c.b16 %v526, %v518
    %v623 = vpack.c.b16 %v527, %v519
    %vm720 = vcmask 523264
    %v722 = vsel %vm720, %v220, 0
    %v725 = vsel %vm720, %v222, 0
    %v728 = vsel %vm720, %v224, 0
    %v731 = vsel %vm720, %v226, 0
    %v734 = vsel %vm720, %v228, 0
    %v737 = vsel %vm720, %v230, 0
    %v740 = vsel %vm720, %v232, 0
    %742 = vmatprep.subr.bf16.mxu0 %v529
    %743 = vmatpush1.bf16.msra.mxu0 %v528
    %744 = vmatprep.subr.bf16.mxu0 %v537
    %745 = vmatpush1.bf16.msra.mxu0 %v536
    %746 = vmatprep.subr.bf16.mxu0 %v545
    %747 = vmatpush1.bf16.msra.mxu0 %v544
    %748 = vmatprep.subr.bf16.mxu0 %v553
    %749 = vmatpush1.bf16.msra.mxu0 %v552
    %750 = vmatprep.subr.bf16.mxu0 %v561
    %751 = vmatpush1.bf16.msra.mxu0 %v560
    %752 = vmatprep.subr.bf16.mxu0 %v569
    %753 = vmatpush1.bf16.msra.mxu0 %v568
    %754 = vmatprep.subr.bf16.mxu0 %v577
    %755 = vmatpush1.bf16.msra.mxu0 %v576
    %756 = vmatprep.subr.bf16.mxu0 %v585
    %757 = vmatpush1.bf16.msra.mxu0 %v584
    %758 = vmatprep.subr.bf16.mxu0 %v593
    %759 = vmatpush1.bf16.msra.mxu0 %v592
    %760 = vmatprep.subr.bf16.mxu0 %v601
    %761 = vmatpush1.bf16.msra.mxu0 %v600
    %762 = vmatprep.subr.bf16.mxu0 %v609
    %763 = vmatpush1.bf16.msra.mxu0 %v608
    %764 = vmatprep.subr.bf16.mxu0 %v617
    %765 = vmatpush1.bf16.msra.mxu0 %v616
    %766 = vmatprep.subr.bf16.mxu0 0
    %767 = vmatpush1.bf16.msra.mxu0 0
    %768 = vmatprep.subr.bf16.mxu0 0
    %769 = vmatpush1.bf16.msra.mxu0 0
    %770 = vmatprep.subr.bf16.mxu0 0
    %771 = vmatpush1.bf16.msra.mxu0 0
    %772 = vmatprep.subr.bf16.mxu0 0
    %773 = vmatpush1.bf16.msra.mxu0 0
    %774 = vmatprep.mubr.bf16.mxu0 %v722
    %775 = vmatmul.mubr.bf16.gmra.mrb[0].mxu0 %v219
    %v776 = vpop.f32.mrb[0].mxu0
    %v777 = vadd.f32 %v140, %v776
    %v778 = vpop.f32.mrb[0].mxu0
    %v779 = vadd.f32 %v144, %v778
    %v780 = vpop.f32.mrb[0].mxu0
    %v781 = vadd.f32 %v140, %v780
    %v782 = vpop.f32.mrb[0].mxu0
    %v783 = vadd.f32 %v144, %v782
    %784 = vmatprep.mubr.bf16.mxu0 %v725
    %785 = vmatmul.mubr.bf16.gmra.mrb[0].mxu0 %v221
    %v786 = vpop.f32.mrb[0].mxu0
    %v787 = vadd.f32 %v140, %v786
    %v788 = vpop.f32.mrb[0].mxu0
    %v789 = vadd.f32 %v144, %v788
    %v790 = vpop.f32.mrb[0].mxu0
    %v791 = vadd.f32 %v140, %v790
    %v792 = vpop.f32.mrb[0].mxu0
    %v793 = vadd.f32 %v144, %v792
    %794 = vmatprep.mubr.bf16.mxu0 %v728
    %795 = vmatmul.mubr.bf16.gmra.mrb[0].mxu0 %v223
    %v796 = vpop.f32.mrb[0].mxu0
    %v797 = vadd.f32 %v140, %v796
    %v798 = vpop.f32.mrb[0].mxu0
    %v799 = vadd.f32 %v144, %v798
    %v800 = vpop.f32.mrb[0].mxu0
    %v801 = vadd.f32 %v140, %v800
    %v802 = vpop.f32.mrb[0].mxu0
    %v803 = vadd.f32 %v144, %v802
    %804 = vmatprep.mubr.bf16.mxu0 %v731
    %805 = vmatmul.mubr.bf16.gmra.mrb[0].mxu0 %v225
    %v806 = vpop.f32.mrb[0].mxu0
    %v807 = vadd.f32 %v140, %v806
    %v808 = vpop.f32.mrb[0].mxu0
    %v809 = vadd.f32 %v144, %v808
    %v810 = vpop.f32.mrb[0].mxu0
    %v811 = vadd.f32 %v140, %v810
    %v812 = vpop.f32.mrb[0].mxu0
    %v813 = vadd.f32 %v144, %v812
    %814 = vmatprep.mubr.bf16.mxu0 %v734
    %815 = vmatmul.mubr.bf16.gmra.mrb[0].mxu0 %v227
    %v816 = vpop.f32.mrb[0].mxu0
    %v817 = vadd.f32 %v140, %v816
    %v818 = vpop.f32.mrb[0].mxu0
    %v819 = vadd.f32 %v144, %v818
    %v820 = vpop.f32.mrb[0].mxu0
    %v821 = vadd.f32 %v140, %v820
    %v822 = vpop.f32.mrb[0].mxu0
    %v823 = vadd.f32 %v144, %v822
    %824 = vmatprep.mubr.bf16.mxu0 %v737
    %825 = vmatmul.mubr.bf16.gmra.mrb[0].mxu0 %v229
    %v826 = vpop.f32.mrb[0].mxu0
    %v827 = vadd.f32 %v140, %v826
    %v828 = vpop.f32.mrb[0].mxu0
    %v829 = vadd.f32 %v144, %v828
    %v830 = vpop.f32.mrb[0].mxu0
    %v831 = vadd.f32 %v140, %v830
    %v832 = vpop.f32.mrb[0].mxu0
    %v833 = vadd.f32 %v144, %v832
    %834 = vmatprep.mubr.bf16.mxu0 %v740
    %835 = vmatmul.mubr.bf16.gmra.mrb[0].mxu0 %v231
    %v836 = vpop.f32.mrb[0].mxu0
    %v837 = vadd.f32 %v140, %v836
    %v838 = vpop.f32.mrb[0].mxu0
    %v839 = vadd.f32 %v144, %v838
    %v840 = vpop.f32.mrb[0].mxu0
    %v841 = vadd.f32 %v140, %v840
    %v842 = vpop.f32.mrb[0].mxu0
    %v843 = vadd.f32 %v144, %v842
    %844 = vdwg.mxu0
    %845 = vmatprep.subr.bf16.mxu0 %v531
    %846 = vmatpush1.bf16.msra.mxu0 %v530
    %847 = vmatprep.subr.bf16.mxu0 %v539
    %848 = vmatpush1.bf16.msra.mxu0 %v538
    %849 = vmatprep.subr.bf16.mxu0 %v547
    %850 = vmatpush1.bf16.msra.mxu0 %v546
    %851 = vmatprep.subr.bf16.mxu0 %v555
    %852 = vmatpush1.bf16.msra.mxu0 %v554
    %853 = vmatprep.subr.bf16.mxu0 %v563
    %854 = vmatpush1.bf16.msra.mxu0 %v562
    %855 = vmatprep.subr.bf16.mxu0 %v571
    %856 = vmatpush1.bf16.msra.mxu0 %v570
    %857 = vmatprep.subr.bf16.mxu0 %v579
    %858 = vmatpush1.bf16.msra.mxu0 %v578
    %859 = vmatprep.subr.bf16.mxu0 %v587
    %860 = vmatpush1.bf16.msra.mxu0 %v586
    %861 = vmatprep.subr.bf16.mxu0 %v595
    %862 = vmatpush1.bf16.msra.mxu0 %v594
    %863 = vmatprep.subr.bf16.mxu0 %v603
    %864 = vmatpush1.bf16.msra.mxu0 %v602
    %865 = vmatprep.subr.bf16.mxu0 %v611
    %866 = vmatpush1.bf16.msra.mxu0 %v610
    %867 = vmatprep.subr.bf16.mxu0 %v619
    %868 = vmatpush1.bf16.msra.mxu0 %v618
    %869 = vmatprep.subr.bf16.mxu0 0
    %870 = vmatpush1.bf16.msra.mxu0 0
    %871 = vmatprep.subr.bf16.mxu0 0
    %872 = vmatpush1.bf16.msra.mxu0 0
    %873 = vmatprep.subr.bf16.mxu0 0
    %874 = vmatpush1.bf16.msra.mxu0 0
    %875 = vmatprep.subr.bf16.mxu0 0
    %876 = vmatpush1.bf16.msra.mxu0 0
    %877 = vmatprep.mubr.bf16.mxu0 %v722
    %878 = vmatmul.mubr.bf16.gmra.mrb[0].mxu0 %v219
    %v879 = vpop.f32.mrb[0].mxu0
    %v880 = vadd.f32 %v148, %v879
    %v881 = vpop.f32.mrb[0].mxu0
    %v882 = vadd.f32 %v152, %v881
    %v883 = vpop.f32.mrb[0].mxu0
    %v884 = vadd.f32 %v148, %v883
    %v885 = vpop.f32.mrb[0].mxu0
    %v886 = vadd.f32 %v152, %v885
    %887 = vmatprep.mubr.bf16.mxu0 %v725
    %888 = vmatmul.mubr.bf16.gmra.mrb[0].mxu0 %v221
    %v889 = vpop.f32.mrb[0].mxu0
    %v890 = vadd.f32 %v148, %v889
    %v891 = vpop.f32.mrb[0].mxu0
    %v892 = vadd.f32 %v152, %v891
    %v893 = vpop.f32.mrb[0].mxu0
    %v894 = vadd.f32 %v148, %v893
    %v895 = vpop.f32.mrb[0].mxu0
    %v896 = vadd.f32 %v152, %v895
    %897 = vmatprep.mubr.bf16.mxu0 %v728
    %898 = vmatmul.mubr.bf16.gmra.mrb[0].mxu0 %v223
    %v899 = vpop.f32.mrb[0].mxu0
    %v900 = vadd.f32 %v148, %v899
    %v901 = vpop.f32.mrb[0].mxu0
    %v902 = vadd.f32 %v152, %v901
    %v903 = vpop.f32.mrb[0].mxu0
    %v904 = vadd.f32 %v148, %v903
    %v905 = vpop.f32.mrb[0].mxu0
    %v906 = vadd.f32 %v152, %v905
    %907 = vmatprep.mubr.bf16.mxu0 %v731
    %908 = vmatmul.mubr.bf16.gmra.mrb[0].mxu0 %v225
    %v909 = vpop.f32.mrb[0].mxu0
    %v910 = vadd.f32 %v148, %v909
    %v911 = vpop.f32.mrb[0].mxu0
    %v912 = vadd.f32 %v152, %v911
    %v913 = vpop.f32.mrb[0].mxu0
    %v914 = vadd.f32 %v148, %v913
    %v915 = vpop.f32.mrb[0].mxu0
    %v916 = vadd.f32 %v152, %v915
    %917 = vmatprep.mubr.bf16.mxu0 %v734
    %918 = vmatmul.mubr.bf16.gmra.mrb[0].mxu0 %v227
    %v919 = vpop.f32.mrb[0].mxu0
    %v920 = vadd.f32 %v148, %v919
    %v921 = vpop.f32.mrb[0].mxu0
    %v922 = vadd.f32 %v152, %v921
    %v923 = vpop.f32.mrb[0].mxu0
    %v924 = vadd.f32 %v148, %v923
    %v925 = vpop.f32.mrb[0].mxu0
    %v926 = vadd.f32 %v152, %v925
    %927 = vmatprep.mubr.bf16.mxu0 %v737
    %928 = vmatmul.mubr.bf16.gmra.mrb[0].mxu0 %v229
    %v929 = vpop.f32.mrb[0].mxu0
    %v930 = vadd.f32 %v148, %v929
    %v931 = vpop.f32.mrb[0].mxu0
    %v932 = vadd.f32 %v152, %v931
    %v933 = vpop.f32.mrb[0].mxu0
    %v934 = vadd.f32 %v148, %v933
    %v935 = vpop.f32.mrb[0].mxu0
    %v936 = vadd.f32 %v152, %v935
    %937 = vmatprep.mubr.bf16.mxu0 %v740
    %938 = vmatmul.mubr.bf16.gmra.mrb[0].mxu0 %v231
    %v939 = vpop.f32.mrb[0].mxu0
    %v940 = vadd.f32 %v148, %v939
    %v941 = vpop.f32.mrb[0].mxu0
    %v942 = vadd.f32 %v152, %v941
    %v943 = vpop.f32.mrb[0].mxu0
    %v944 = vadd.f32 %v148, %v943
    %v945 = vpop.f32.mrb[0].mxu0
    %v946 = vadd.f32 %v152, %v945
    %947 = vdwg.mxu0
    %948 = vmatprep.subr.bf16.mxu0 %v533
    %949 = vmatpush1.bf16.msra.mxu0 %v532
    %950 = vmatprep.subr.bf16.mxu0 %v541
    %951 = vmatpush1.bf16.msra.mxu0 %v540
    %952 = vmatprep.subr.bf16.mxu0 %v549
    %953 = vmatpush1.bf16.msra.mxu0 %v548
    %954 = vmatprep.subr.bf16.mxu0 %v557
    %955 = vmatpush1.bf16.msra.mxu0 %v556
    %956 = vmatprep.subr.bf16.mxu0 %v565
    %957 = vmatpush1.bf16.msra.mxu0 %v564
    %958 = vmatprep.subr.bf16.mxu0 %v573
    %959 = vmatpush1.bf16.msra.mxu0 %v572
    %960 = vmatprep.subr.bf16.mxu0 %v581
    %961 = vmatpush1.bf16.msra.mxu0 %v580
    %962 = vmatprep.subr.bf16.mxu0 %v589
    %963 = vmatpush1.bf16.msra.mxu0 %v588
    %964 = vmatprep.subr.bf16.mxu0 %v597
    %965 = vmatpush1.bf16.msra.mxu0 %v596
    %966 = vmatprep.subr.bf16.mxu0 %v605
    %967 = vmatpush1.bf16.msra.mxu0 %v604
    %968 = vmatprep.subr.bf16.mxu0 %v613
    %969 = vmatpush1.bf16.msra.mxu0 %v612
    %970 = vmatprep.subr.bf16.mxu0 %v621
    %971 = vmatpush1.bf16.msra.mxu0 %v620
    %972 = vmatprep.subr.bf16.mxu0 0
    %973 = vmatpush1.bf16.msra.mxu0 0
    %974 = vmatprep.subr.bf16.mxu0 0
    %975 = vmatpush1.bf16.msra.mxu0 0
    %976 = vmatprep.subr.bf16.mxu0 0
    %977 = vmatpush1.bf16.msra.mxu0 0
    %978 = vmatprep.subr.bf16.mxu0 0
    %979 = vmatpush1.bf16.msra.mxu0 0
    %980 = vmatprep.mubr.bf16.mxu0 %v722
    %981 = vmatmul.mubr.bf16.gmra.mrb[0].mxu0 %v219
    %v982 = vpop.f32.mrb[0].mxu0
    %v983 = vadd.f32 %v156, %v982
    %v984 = vpop.f32.mrb[0].mxu0
    %v985 = vadd.f32 %v160, %v984
    %v986 = vpop.f32.mrb[0].mxu0
    %v987 = vadd.f32 %v156, %v986
    %v988 = vpop.f32.mrb[0].mxu0
    %v989 = vadd.f32 %v160, %v988
    %990 = vmatprep.mubr.bf16.mxu0 %v725
    %991 = vmatmul.mubr.bf16.gmra.mrb[0].mxu0 %v221
    %v992 = vpop.f32.mrb[0].mxu0
    %v993 = vadd.f32 %v156, %v992
    %v994 = vpop.f32.mrb[0].mxu0
    %v995 = vadd.f32 %v160, %v994
    %v996 = vpop.f32.mrb[0].mxu0
    %v997 = vadd.f32 %v156, %v996
    %v998 = vpop.f32.mrb[0].mxu0
    %v999 = vadd.f32 %v160, %v998
    %1000 = vmatprep.mubr.bf16.mxu0 %v728
    %1001 = vmatmul.mubr.bf16.gmra.mrb[0].mxu0 %v223
    %v1002 = vpop.f32.mrb[0].mxu0
    %v1003 = vadd.f32 %v156, %v1002
    %v1004 = vpop.f32.mrb[0].mxu0
    %v1005 = vadd.f32 %v160, %v1004
    %v1006 = vpop.f32.mrb[0].mxu0
    %v1007 = vadd.f32 %v156, %v1006
    %v1008 = vpop.f32.mrb[0].mxu0
    %v1009 = vadd.f32 %v160, %v1008
    %1010 = vmatprep.mubr.bf16.mxu0 %v731
    %1011 = vmatmul.mubr.bf16.gmra.mrb[0].mxu0 %v225
    %v1012 = vpop.f32.mrb[0].mxu0
    %v1013 = vadd.f32 %v156, %v1012
    %v1014 = vpop.f32.mrb[0].mxu0
    %v1015 = vadd.f32 %v160, %v1014
    %v1016 = vpop.f32.mrb[0].mxu0
    %v1017 = vadd.f32 %v156, %v1016
    %v1018 = vpop.f32.mrb[0].mxu0
    %v1019 = vadd.f32 %v160, %v1018
    %1020 = vmatprep.mubr.bf16.mxu0 %v734
    %1021 = vmatmul.mubr.bf16.gmra.mrb[0].mxu0 %v227
    %v1022 = vpop.f32.mrb[0].mxu0
    %v1023 = vadd.f32 %v156, %v1022
    %v1024 = vpop.f32.mrb[0].mxu0
    %v1025 = vadd.f32 %v160, %v1024
    %v1026 = vpop.f32.mrb[0].mxu0
    %v1027 = vadd.f32 %v156, %v1026
    %v1028 = vpop.f32.mrb[0].mxu0
    %v1029 = vadd.f32 %v160, %v1028
    %1030 = vmatprep.mubr.bf16.mxu0 %v737
    %1031 = vmatmul.mubr.bf16.gmra.mrb[0].mxu0 %v229
    %v1032 = vpop.f32.mrb[0].mxu0
    %v1033 = vadd.f32 %v156, %v1032
    %v1034 = vpop.f32.mrb[0].mxu0
    %v1035 = vadd.f32 %v160, %v1034
    %v1036 = vpop.f32.mrb[0].mxu0
    %v1037 = vadd.f32 %v156, %v1036
    %v1038 = vpop.f32.mrb[0].mxu0
    %v1039 = vadd.f32 %v160, %v1038
    %1040 = vmatprep.mubr.bf16.mxu0 %v740
    %1041 = vmatmul.mubr.bf16.gmra.mrb[0].mxu0 %v231
    %v1042 = vpop.f32.mrb[0].mxu0
    %v1043 = vadd.f32 %v156, %v1042
    %v1044 = vpop.f32.mrb[0].mxu0
    %v1045 = vadd.f32 %v160, %v1044
    %v1046 = vpop.f32.mrb[0].mxu0
    %v1047 = vadd.f32 %v156, %v1046
    %v1048 = vpop.f32.mrb[0].mxu0
    %v1049 = vadd.f32 %v160, %v1048
    %1050 = vdwg.mxu0
    %1051 = vmatprep.subr.bf16.mxu0 %v535
    %1052 = vmatpush1.bf16.msra.mxu0 %v534
    %1053 = vmatprep.subr.bf16.mxu0 %v543
    %1054 = vmatpush1.bf16.msra.mxu0 %v542
    %1055 = vmatprep.subr.bf16.mxu0 %v551
    %1056 = vmatpush1.bf16.msra.mxu0 %v550
    %1057 = vmatprep.subr.bf16.mxu0 %v559
    %1058 = vmatpush1.bf16.msra.mxu0 %v558
    %1059 = vmatprep.subr.bf16.mxu0 %v567
    %1060 = vmatpush1.bf16.msra.mxu0 %v566
    %1061 = vmatprep.subr.bf16.mxu0 %v575
    %1062 = vmatpush1.bf16.msra.mxu0 %v574
    %1063 = vmatprep.subr.bf16.mxu0 %v583
    %1064 = vmatpush1.bf16.msra.mxu0 %v582
    %1065 = vmatprep.subr.bf16.mxu0 %v591
    %1066 = vmatpush1.bf16.msra.mxu0 %v590
    %1067 = vmatprep.subr.bf16.mxu0 %v599
    %1068 = vmatpush1.bf16.msra.mxu0 %v598
    %1069 = vmatprep.subr.bf16.mxu0 %v607
    %1070 = vmatpush1.bf16.msra.mxu0 %v606
    %1071 = vmatprep.subr.bf16.mxu0 %v615
    %1072 = vmatpush1.bf16.msra.mxu0 %v614
    %1073 = vmatprep.subr.bf16.mxu0 %v623
    %1074 = vmatpush1.bf16.msra.mxu0 %v622
    %1075 = vmatprep.subr.bf16.mxu0 0
    %1076 = vmatpush1.bf16.msra.mxu0 0
    %1077 = vmatprep.subr.bf16.mxu0 0
    %1078 = vmatpush1.bf16.msra.mxu0 0
    %1079 = vmatprep.subr.bf16.mxu0 0
    %1080 = vmatpush1.bf16.msra.mxu0 0
    %1081 = vmatprep.subr.bf16.mxu0 0
    %1082 = vmatpush1.bf16.msra.mxu0 0
    %1083 = vmatprep.mubr.bf16.mxu0 %v722
    %1084 = vmatmul.mubr.bf16.gmra.mrb[0].mxu0 %v219
    %v1085 = vpop.f32.mrb[0].mxu0
    %v1086 = vadd.f32 %v164, %v1085
    %v1087 = vpop.f32.mrb[0].mxu0
    %v1088 = vadd.f32 %v168, %v1087
    %v1089 = vpop.f32.mrb[0].mxu0
    %v1090 = vadd.f32 %v164, %v1089
    %v1091 = vpop.f32.mrb[0].mxu0
    %v1092 = vadd.f32 %v168, %v1091
    %1093 = vmatprep.mubr.bf16.mxu0 %v725
    %1094 = vmatmul.mubr.bf16.gmra.mrb[0].mxu0 %v221
    %v1095 = vpop.f32.mrb[0].mxu0
    %v1096 = vadd.f32 %v164, %v1095
    %v1097 = vpop.f32.mrb[0].mxu0
    %v1098 = vadd.f32 %v168, %v1097
    %v1099 = vpop.f32.mrb[0].mxu0
    %v1100 = vadd.f32 %v164, %v1099
    %v1101 = vpop.f32.mrb[0].mxu0
    %v1102 = vadd.f32 %v168, %v1101
    %1103 = vmatprep.mubr.bf16.mxu0 %v728
    %1104 = vmatmul.mubr.bf16.gmra.mrb[0].mxu0 %v223
    %v1105 = vpop.f32.mrb[0].mxu0
    %v1106 = vadd.f32 %v164, %v1105
    %v1107 = vpop.f32.mrb[0].mxu0
    %v1108 = vadd.f32 %v168, %v1107
    %v1109 = vpop.f32.mrb[0].mxu0
    %v1110 = vadd.f32 %v164, %v1109
    %v1111 = vpop.f32.mrb[0].mxu0
    %v1112 = vadd.f32 %v168, %v1111
    %1113 = vmatprep.mubr.bf16.mxu0 %v731
    %1114 = vmatmul.mubr.bf16.gmra.mrb[0].mxu0 %v225
    %v1115 = vpop.f32.mrb[0].mxu0
    %v1116 = vadd.f32 %v164, %v1115
    %v1117 = vpop.f32.mrb[0].mxu0
    %v1118 = vadd.f32 %v168, %v1117
    %v1119 = vpop.f32.mrb[0].mxu0
    %v1120 = vadd.f32 %v164, %v1119
    %v1121 = vpop.f32.mrb[0].mxu0
    %v1122 = vadd.f32 %v168, %v1121
    %1123 = vmatprep.mubr.bf16.mxu0 %v734
    %1124 = vmatmul.mubr.bf16.gmra.mrb[0].mxu0 %v227
    %v1125 = vpop.f32.mrb[0].mxu0
    %v1126 = vadd.f32 %v164, %v1125
    %v1127 = vpop.f32.mrb[0].mxu0
    %v1128 = vadd.f32 %v168, %v1127
    %v1129 = vpop.f32.mrb[0].mxu0
    %v1130 = vadd.f32 %v164, %v1129
    %v1131 = vpop.f32.mrb[0].mxu0
    %v1132 = vadd.f32 %v168, %v1131
    %1133 = vmatprep.mubr.bf16.mxu0 %v737
    %1134 = vmatmul.mubr.bf16.gmra.mrb[0].mxu0 %v229
    %v1135 = vpop.f32.mrb[0].mxu0
    %v1136 = vadd.f32 %v164, %v1135
    %v1137 = vpop.f32.mrb[0].mxu0
    %v1138 = vadd.f32 %v168, %v1137
    %v1139 = vpop.f32.mrb[0].mxu0
    %v1140 = vadd.f32 %v164, %v1139
    %v1141 = vpop.f32.mrb[0].mxu0
    %v1142 = vadd.f32 %v168, %v1141
    %1143 = vmatprep.mubr.bf16.mxu0 %v740
    %1144 = vmatmul.mubr.bf16.gmra.mrb[0].mxu0 %v231
    %v1145 = vpop.f32.mrb[0].mxu0
    %v1146 = vadd.f32 %v164, %v1145
    %v1147 = vpop.f32.mrb[0].mxu0
    %v1148 = vadd.f32 %v168, %v1147
    %v1149 = vpop.f32.mrb[0].mxu0
    %v1150 = vadd.f32 %v164, %v1149
    %v1151 = vpop.f32.mrb[0].mxu0
    %v1152 = vadd.f32 %v168, %v1151
    %1153 = vdwg.mxu0
    %v1154 = vmax.f32 %v777, 0.0
    %v1155 = vmax.f32 %v779, 0.0
    %v1156 = vmax.f32 %v880, 0.0
    %v1157 = vmax.f32 %v882, 0.0
    %v1158 = vmax.f32 %v983, 0.0
    %v1159 = vmax.f32 %v985, 0.0
    %v1160 = vmax.f32 %v1086, 0.0
    %v1161 = vmax.f32 %v1088, 0.0
    %v1162 = vmax.f32 %v781, 0.0
    %v1163 = vmax.f32 %v783, 0.0
    %v1164 = vmax.f32 %v884, 0.0
    %v1165 = vmax.f32 %v886, 0.0
    %v1166 = vmax.f32 %v987, 0.0
    %v1167 = vmax.f32 %v989, 0.0
    %v1168 = vmax.f32 %v1090, 0.0
    %v1169 = vmax.f32 %v1092, 0.0
    %v1170 = vmax.f32 %v787, 0.0
    %v1171 = vmax.f32 %v789, 0.0
    %v1172 = vmax.f32 %v890, 0.0
    %v1173 = vmax.f32 %v892, 0.0
    %v1174 = vmax.f32 %v993, 0.0
    %v1175 = vmax.f32 %v995, 0.0
    %v1176 = vmax.f32 %v1096, 0.0
    %v1177 = vmax.f32 %v1098, 0.0
    %v1178 = vmax.f32 %v791, 0.0
    %v1179 = vmax.f32 %v793, 0.0
    %v1180 = vmax.f32 %v894, 0.0
    %v1181 = vmax.f32 %v896, 0.0
    %v1182 = vmax.f32 %v997, 0.0
    %v1183 = vmax.f32 %v999, 0.0
    %v1184 = vmax.f32 %v1100, 0.0
    %v1185 = vmax.f32 %v1102, 0.0
    %v1186 = vmax.f32 %v797, 0.0
    %v1187 = vmax.f32 %v799, 0.0
    %v1188 = vmax.f32 %v900, 0.0
    %v1189 = vmax.f32 %v902, 0.0
    %v1190 = vmax.f32 %v1003, 0.0
    %v1191 = vmax.f32 %v1005, 0.0
    %v1192 = vmax.f32 %v1106, 0.0
    %v1193 = vmax.f32 %v1108, 0.0
    %v1194 = vmax.f32 %v801, 0.0
    %v1195 = vmax.f32 %v803, 0.0
    %v1196 = vmax.f32 %v904, 0.0
    %v1197 = vmax.f32 %v906, 0.0
    %v1198 = vmax.f32 %v1007, 0.0
    %v1199 = vmax.f32 %v1009, 0.0
    %v1200 = vmax.f32 %v1110, 0.0
    %v1201 = vmax.f32 %v1112, 0.0
    %v1202 = vmax.f32 %v807, 0.0
    %v1203 = vmax.f32 %v809, 0.0
    %v1204 = vmax.f32 %v910, 0.0
    %v1205 = vmax.f32 %v912, 0.0
    %v1206 = vmax.f32 %v1013, 0.0
    %v1207 = vmax.f32 %v1015, 0.0
    %v1208 = vmax.f32 %v1116, 0.0
    %v1209 = vmax.f32 %v1118, 0.0
    %v1210 = vmax.f32 %v811, 0.0
    %v1211 = vmax.f32 %v813, 0.0
    %v1212 = vmax.f32 %v914, 0.0
    %v1213 = vmax.f32 %v916, 0.0
    %v1214 = vmax.f32 %v1017, 0.0
    %v1215 = vmax.f32 %v1019, 0.0
    %v1216 = vmax.f32 %v1120, 0.0
    %v1217 = vmax.f32 %v1122, 0.0
    %v1218 = vmax.f32 %v817, 0.0
    %v1219 = vmax.f32 %v819, 0.0
    %v1220 = vmax.f32 %v920, 0.0
    %v1221 = vmax.f32 %v922, 0.0
    %v1222 = vmax.f32 %v1023, 0.0
    %v1223 = vmax.f32 %v1025, 0.0
    %v1224 = vmax.f32 %v1126, 0.0
    %v1225 = vmax.f32 %v1128, 0.0
    %v1226 = vmax.f32 %v821, 0.0
    %v1227 = vmax.f32 %v823, 0.0
    %v1228 = vmax.f32 %v924, 0.0
    %v1229 = vmax.f32 %v926, 0.0
    %v1230 = vmax.f32 %v1027, 0.0
    %v1231 = vmax.f32 %v1029, 0.0
    %v1232 = vmax.f32 %v1130, 0.0
    %v1233 = vmax.f32 %v1132, 0.0
    %v1234 = vmax.f32 %v827, 0.0
    %v1235 = vmax.f32 %v829, 0.0
    %v1236 = vmax.f32 %v930, 0.0
    %v1237 = vmax.f32 %v932, 0.0
    %v1238 = vmax.f32 %v1033, 0.0
    %v1239 = vmax.f32 %v1035, 0.0
    %v1240 = vmax.f32 %v1136, 0.0
    %v1241 = vmax.f32 %v1138, 0.0
    %v1242 = vmax.f32 %v831, 0.0
    %v1243 = vmax.f32 %v833, 0.0
    %v1244 = vmax.f32 %v934, 0.0
    %v1245 = vmax.f32 %v936, 0.0
    %v1246 = vmax.f32 %v1037, 0.0
    %v1247 = vmax.f32 %v1039, 0.0
    %v1248 = vmax.f32 %v1140, 0.0
    %v1249 = vmax.f32 %v1142, 0.0
    %v1250 = vmax.f32 %v837, 0.0
    %v1251 = vmax.f32 %v839, 0.0
    %v1252 = vmax.f32 %v940, 0.0
    %v1253 = vmax.f32 %v942, 0.0
    %v1254 = vmax.f32 %v1043, 0.0
    %v1255 = vmax.f32 %v1045, 0.0
    %v1256 = vmax.f32 %v1146, 0.0
    %v1257 = vmax.f32 %v1148, 0.0
    %v1258 = vmax.f32 %v841, 0.0
    %v1259 = vmax.f32 %v843, 0.0
    %v1260 = vmax.f32 %v944, 0.0
    %v1261 = vmax.f32 %v946, 0.0
    %v1262 = vmax.f32 %v1047, 0.0
    %v1263 = vmax.f32 %v1049, 0.0
    %v1264 = vmax.f32 %v1150, 0.0
    %v1265 = vmax.f32 %v1152, 0.0
    %v1266 = vadd.f32 %v1154, %v1170
    %v1267 = vadd.f32 %v1155, %v1171
    %v1268 = vadd.f32 %v1156, %v1172
    %v1269 = vadd.f32 %v1157, %v1173
    %v1270 = vadd.f32 %v1158, %v1174
    %v1271 = vadd.f32 %v1159, %v1175
    %v1272 = vadd.f32 %v1160, %v1176
    %v1273 = vadd.f32 %v1161, %v1177
    %v1274 = vadd.f32 %v1162, %v1178
    %v1275 = vadd.f32 %v1163, %v1179
    %v1276 = vadd.f32 %v1164, %v1180
    %v1277 = vadd.f32 %v1165, %v1181
    %v1278 = vadd.f32 %v1166, %v1182
    %v1279 = vadd.f32 %v1167, %v1183
    %v1280 = vadd.f32 %v1168, %v1184
    %v1281 = vadd.f32 %v1169, %v1185
    %v1282 = vadd.f32 %v1266, %v1186
    %v1283 = vadd.f32 %v1267, %v1187
    %v1284 = vadd.f32 %v1268, %v1188
    %v1285 = vadd.f32 %v1269, %v1189
    %v1286 = vadd.f32 %v1270, %v1190
    %v1287 = vadd.f32 %v1271, %v1191
    %v1288 = vadd.f32 %v1272, %v1192
    %v1289 = vadd.f32 %v1273, %v1193
    %v1290 = vadd.f32 %v1274, %v1194
    %v1291 = vadd.f32 %v1275, %v1195
    %v1292 = vadd.f32 %v1276, %v1196
    %v1293 = vadd.f32 %v1277, %v1197
    %v1294 = vadd.f32 %v1278, %v1198
    %v1295 = vadd.f32 %v1279, %v1199
    %v1296 = vadd.f32 %v1280, %v1200
    %v1297 = vadd.f32 %v1281, %v1201
    %v1298 = vadd.f32 %v1282, %v1202
    %v1299 = vadd.f32 %v1283, %v1203
    %v1300 = vadd.f32 %v1284, %v1204
    %v1301 = vadd.f32 %v1285, %v1205
    %v1302 = vadd.f32 %v1286, %v1206
    %v1303 = vadd.f32 %v1287, %v1207
    %v1304 = vadd.f32 %v1288, %v1208
    %v1305 = vadd.f32 %v1289, %v1209
    %v1306 = vadd.f32 %v1290, %v1210
    %v1307 = vadd.f32 %v1291, %v1211
    %v1308 = vadd.f32 %v1292, %v1212
    %v1309 = vadd.f32 %v1293, %v1213
    %v1310 = vadd.f32 %v1294, %v1214
    %v1311 = vadd.f32 %v1295, %v1215
    %v1312 = vadd.f32 %v1296, %v1216
    %v1313 = vadd.f32 %v1297, %v1217
    %v1314 = vadd.f32 %v1298, %v1218
    %v1315 = vadd.f32 %v1299, %v1219
    %v1316 = vadd.f32 %v1300, %v1220
    %v1317 = vadd.f32 %v1301, %v1221
    %v1318 = vadd.f32 %v1302, %v1222
    %v1319 = vadd.f32 %v1303, %v1223
    %v1320 = vadd.f32 %v1304, %v1224
    %v1321 = vadd.f32 %v1305, %v1225
    %v1322 = vadd.f32 %v1306, %v1226
    %v1323 = vadd.f32 %v1307, %v1227
    %v1324 = vadd.f32 %v1308, %v1228
    %v1325 = vadd.f32 %v1309, %v1229
    %v1326 = vadd.f32 %v1310, %v1230
    %v1327 = vadd.f32 %v1311, %v1231
    %v1328 = vadd.f32 %v1312, %v1232
    %v1329 = vadd.f32 %v1313, %v1233
    %v1330 = vadd.f32 %v1314, %v1234
    %v1331 = vadd.f32 %v1315, %v1235
    %v1332 = vadd.f32 %v1316, %v1236
    %v1333 = vadd.f32 %v1317, %v1237
    %v1334 = vadd.f32 %v1318, %v1238
    %v1335 = vadd.f32 %v1319, %v1239
    %v1336 = vadd.f32 %v1320, %v1240
    %v1337 = vadd.f32 %v1321, %v1241
    %v1338 = vadd.f32 %v1322, %v1242
    %v1339 = vadd.f32 %v1323, %v1243
    %v1340 = vadd.f32 %v1324, %v1244
    %v1341 = vadd.f32 %v1325, %v1245
    %v1342 = vadd.f32 %v1326, %v1246
    %v1343 = vadd.f32 %v1327, %v1247
    %v1344 = vadd.f32 %v1328, %v1248
    %v1345 = vadd.f32 %v1329, %v1249
    %v1346 = vadd.f32 %v1330, %v1250
    %v1347 = vadd.f32 %v1331, %v1251
    %v1348 = vadd.f32 %v1332, %v1252
    %v1349 = vadd.f32 %v1333, %v1253
    %v1350 = vadd.f32 %v1334, %v1254
    %v1351 = vadd.f32 %v1335, %v1255
    %v1352 = vadd.f32 %v1336, %v1256
    %v1353 = vadd.f32 %v1337, %v1257
    %v1354 = vadd.f32 %v1338, %v1258
    %v1355 = vadd.f32 %v1339, %v1259
    %v1356 = vadd.f32 %v1340, %v1260
    %v1357 = vadd.f32 %v1341, %v1261
    %v1358 = vadd.f32 %v1342, %v1262
    %v1359 = vadd.f32 %v1343, %v1263
    %v1360 = vadd.f32 %v1344, %v1264
    %v1361 = vadd.f32 %v1345, %v1265
    %s1362 = scalar_lea.vmem %s0, 112
    %v1363 = vld [vmem:[%s1362] sm:$0xff]
    %v1364 = vld [vmem:[%s1362 + $0x8] sm:$0xff]
    %v1365 = vld [vmem:[%s1362 + $0x10] sm:$0xff]
    %v1366 = vld [vmem:[%s1362 + $0x18] sm:$0xff]
    %v1367 = vld [vmem:[%s1362 + $0x20] sm:$0xff]
    %v1368 = vld [vmem:[%s1362 + $0x28] sm:$0xff]
    %v1369 = vld [vmem:[%s1362 + $0x30] sm:$0xff]
    %v1370 = vld [vmem:[%s1362 + $0x38] sm:$0xff]
    %v1371 = vld [vmem:[%s1362 + $0x40] sm:$0xff]
    %v1372 = vld [vmem:[%s1362 + $0x48] sm:$0xff]
    %v1373 = vld [vmem:[%s1362 + $0x50] sm:$0xff]
    %v1374 = vld [vmem:[%s1362 + $0x58] sm:$0xff]
    %v1375 = vld [vmem:[%s1362 + $0x60] sm:$0xff]
    %v1376 = vld [vmem:[%s1362 + $0x68] sm:$0xff]
    %v1391 = vunpack.c.l.b16 %v1363
    %v1392 = vunpack.c.h.b16 %v1363
    %v1393 = vunpack.c.l.b16 %v1364
    %v1394 = vunpack.c.h.b16 %v1364
    %v1395 = vunpack.c.l.b16 %v1365
    %v1396 = vunpack.c.h.b16 %v1365
    %v1397 = vunpack.c.l.b16 %v1366
    %v1398 = vunpack.c.h.b16 %v1366
    %v1399 = vunpack.c.l.b16 %v1367
    %v1400 = vunpack.c.h.b16 %v1367
    %v1401 = vunpack.c.l.b16 %v1368
    %v1402 = vunpack.c.h.b16 %v1368
    %v1403 = vunpack.c.l.b16 %v1369
    %v1404 = vunpack.c.h.b16 %v1369
    %v1405 = vunpack.c.l.b16 %v1370
    %v1406 = vunpack.c.h.b16 %v1370
    %v1407 = vunpack.c.l.b16 %v1371
    %v1408 = vunpack.c.h.b16 %v1371
    %v1409 = vunpack.c.l.b16 %v1372
    %v1410 = vunpack.c.h.b16 %v1372
    %v1411 = vunpack.c.l.b16 %v1373
    %v1412 = vunpack.c.h.b16 %v1373
    %v1413 = vunpack.c.l.b16 %v1374
    %v1414 = vunpack.c.h.b16 %v1374
    %v1415 = vunpack.c.l.b16 %v1375
    %v1416 = vunpack.c.h.b16 %v1375
    %v1417 = vunpack.c.l.b16 %v1376
    %v1418 = vunpack.c.h.b16 %v1376
    %v1419 = vpack.c.b16 %v1393, %v1391
    %v1420 = vpack.c.b16 %v1394, %v1392
    %v1421 = vpack.c.b16 %v1397, %v1395
    %v1422 = vpack.c.b16 %v1398, %v1396
    %v1423 = vpack.c.b16 %v1401, %v1399
    %v1424 = vpack.c.b16 %v1402, %v1400
    %v1425 = vpack.c.b16 %v1405, %v1403
    %v1426 = vpack.c.b16 %v1406, %v1404
    %v1427 = vpack.c.b16 %v1409, %v1407
    %v1428 = vpack.c.b16 %v1410, %v1408
    %v1429 = vpack.c.b16 %v1413, %v1411
    %v1430 = vpack.c.b16 %v1414, %v1412
    %v1431 = vpack.c.b16 %v1417, %v1415
    %v1432 = vpack.c.b16 %v1418, %v1416
    %v1441 = vsel %vm720, %v1420, 0
    %v1444 = vsel %vm720, %v1422, 0
    %v1447 = vsel %vm720, %v1424, 0
    %v1450 = vsel %vm720, %v1426, 0
    %v1453 = vsel %vm720, %v1428, 0
    %v1456 = vsel %vm720, %v1430, 0
    %v1459 = vsel %vm720, %v1432, 0
    %1461 = vmatprep.subr.bf16.mxu0 %v529
    %1462 = vmatpush1.bf16.msra.mxu0 %v528
    %1463 = vmatprep.subr.bf16.mxu0 %v537
    %1464 = vmatpush1.bf16.msra.mxu0 %v536
    %1465 = vmatprep.subr.bf16.mxu0 %v545
    %1466 = vmatpush1.bf16.msra.mxu0 %v544
    %1467 = vmatprep.subr.bf16.mxu0 %v553
    %1468 = vmatpush1.bf16.msra.mxu0 %v552
    %1469 = vmatprep.subr.bf16.mxu0 %v561
    %1470 = vmatpush1.bf16.msra.mxu0 %v560
    %1471 = vmatprep.subr.bf16.mxu0 %v569
    %1472 = vmatpush1.bf16.msra.mxu0 %v568
    %1473 = vmatprep.subr.bf16.mxu0 %v577
    %1474 = vmatpush1.bf16.msra.mxu0 %v576
    %1475 = vmatprep.subr.bf16.mxu0 %v585
    %1476 = vmatpush1.bf16.msra.mxu0 %v584
    %1477 = vmatprep.subr.bf16.mxu0 %v593
    %1478 = vmatpush1.bf16.msra.mxu0 %v592
    %1479 = vmatprep.subr.bf16.mxu0 %v601
    %1480 = vmatpush1.bf16.msra.mxu0 %v600
    %1481 = vmatprep.subr.bf16.mxu0 %v609
    %1482 = vmatpush1.bf16.msra.mxu0 %v608
    %1483 = vmatprep.subr.bf16.mxu0 %v617
    %1484 = vmatpush1.bf16.msra.mxu0 %v616
    %1485 = vmatprep.subr.bf16.mxu0 0
    %1486 = vmatpush1.bf16.msra.mxu0 0
    %1487 = vmatprep.subr.bf16.mxu0 0
    %1488 = vmatpush1.bf16.msra.mxu0 0
    %1489 = vmatprep.subr.bf16.mxu0 0
    %1490 = vmatpush1.bf16.msra.mxu0 0
    %1491 = vmatprep.subr.bf16.mxu0 0
    %1492 = vmatpush1.bf16.msra.mxu0 0
    %1493 = vmatprep.mubr.bf16.mxu0 %v1441
    %1494 = vmatmul.mubr.bf16.gmra.mrb[0].mxu0 %v1419
    %v1495 = vpop.f32.mrb[0].mxu0
    %v1496 = vadd.f32 %v140, %v1495
    %v1497 = vpop.f32.mrb[0].mxu0
    %v1498 = vadd.f32 %v144, %v1497
    %v1499 = vpop.f32.mrb[0].mxu0
    %v1500 = vadd.f32 %v140, %v1499
    %v1501 = vpop.f32.mrb[0].mxu0
    %v1502 = vadd.f32 %v144, %v1501
    %1503 = vmatprep.mubr.bf16.mxu0 %v1444
    %1504 = vmatmul.mubr.bf16.gmra.mrb[0].mxu0 %v1421
    %v1505 = vpop.f32.mrb[0].mxu0
    %v1506 = vadd.f32 %v140, %v1505
    %v1507 = vpop.f32.mrb[0].mxu0
    %v1508 = vadd.f32 %v144, %v1507
    %v1509 = vpop.f32.mrb[0].mxu0
    %v1510 = vadd.f32 %v140, %v1509
    %v1511 = vpop.f32.mrb[0].mxu0
    %v1512 = vadd.f32 %v144, %v1511
    %1513 = vmatprep.mubr.bf16.mxu0 %v1447
    %1514 = vmatmul.mubr.bf16.gmra.mrb[0].mxu0 %v1423
    %v1515 = vpop.f32.mrb[0].mxu0
    %v1516 = vadd.f32 %v140, %v1515
    %v1517 = vpop.f32.mrb[0].mxu0
    %v1518 = vadd.f32 %v144, %v1517
    %v1519 = vpop.f32.mrb[0].mxu0
    %v1520 = vadd.f32 %v140, %v1519
    %v1521 = vpop.f32.mrb[0].mxu0
    %v1522 = vadd.f32 %v144, %v1521
    %1523 = vmatprep.mubr.bf16.mxu0 %v1450
    %1524 = vmatmul.mubr.bf16.gmra.mrb[0].mxu0 %v1425
    %v1525 = vpop.f32.mrb[0].mxu0
    %v1526 = vadd.f32 %v140, %v1525
    %v1527 = vpop.f32.mrb[0].mxu0
    %v1528 = vadd.f32 %v144, %v1527
    %v1529 = vpop.f32.mrb[0].mxu0
    %v1530 = vadd.f32 %v140, %v1529
    %v1531 = vpop.f32.mrb[0].mxu0
    %v1532 = vadd.f32 %v144, %v1531
    %1533 = vmatprep.mubr.bf16.mxu0 %v1453
    %1534 = vmatmul.mubr.bf16.gmra.mrb[0].mxu0 %v1427
    %v1535 = vpop.f32.mrb[0].mxu0
    %v1536 = vadd.f32 %v140, %v1535
    %v1537 = vpop.f32.mrb[0].mxu0
    %v1538 = vadd.f32 %v144, %v1537
    %v1539 = vpop.f32.mrb[0].mxu0
    %v1540 = vadd.f32 %v140, %v1539
    %v1541 = vpop.f32.mrb[0].mxu0
    %v1542 = vadd.f32 %v144, %v1541
    %1543 = vmatprep.mubr.bf16.mxu0 %v1456
    %1544 = vmatmul.mubr.bf16.gmra.mrb[0].mxu0 %v1429
    %v1545 = vpop.f32.mrb[0].mxu0
    %v1546 = vadd.f32 %v140, %v1545
    %v1547 = vpop.f32.mrb[0].mxu0
    %v1548 = vadd.f32 %v144, %v1547
    %v1549 = vpop.f32.mrb[0].mxu0
    %v1550 = vadd.f32 %v140, %v1549
    %v1551 = vpop.f32.mrb[0].mxu0
    %v1552 = vadd.f32 %v144, %v1551
    %1553 = vmatprep.mubr.bf16.mxu0 %v1459
    %1554 = vmatmul.mubr.bf16.gmra.mrb[0].mxu0 %v1431
    %v1555 = vpop.f32.mrb[0].mxu0
    %v1556 = vadd.f32 %v140, %v1555
    %v1557 = vpop.f32.mrb[0].mxu0
    %v1558 = vadd.f32 %v144, %v1557
    %v1559 = vpop.f32.mrb[0].mxu0
    %v1560 = vadd.f32 %v140, %v1559
    %v1561 = vpop.f32.mrb[0].mxu0
    %v1562 = vadd.f32 %v144, %v1561
    %1563 = vdwg.mxu0
    %1564 = vmatprep.subr.bf16.mxu0 %v531
    %1565 = vmatpush1.bf16.msra.mxu0 %v530
    %1566 = vmatprep.subr.bf16.mxu0 %v539
    %1567 = vmatpush1.bf16.msra.mxu0 %v538
    %1568 = vmatprep.subr.bf16.mxu0 %v547
    %1569 = vmatpush1.bf16.msra.mxu0 %v546
    %1570 = vmatprep.subr.bf16.mxu0 %v555
    %1571 = vmatpush1.bf16.msra.mxu0 %v554
    %1572 = vmatprep.subr.bf16.mxu0 %v563
    %1573 = vmatpush1.bf16.msra.mxu0 %v562
    %1574 = vmatprep.subr.bf16.mxu0 %v571
    %1575 = vmatpush1.bf16.msra.mxu0 %v570
    %1576 = vmatprep.subr.bf16.mxu0 %v579
    %1577 = vmatpush1.bf16.msra.mxu0 %v578
    %1578 = vmatprep.subr.bf16.mxu0 %v587
    %1579 = vmatpush1.bf16.msra.mxu0 %v586
    %1580 = vmatprep.subr.bf16.mxu0 %v595
    %1581 = vmatpush1.bf16.msra.mxu0 %v594
    %1582 = vmatprep.subr.bf16.mxu0 %v603
    %1583 = vmatpush1.bf16.msra.mxu0 %v602
    %1584 = vmatprep.subr.bf16.mxu0 %v611
    %1585 = vmatpush1.bf16.msra.mxu0 %v610
    %1586 = vmatprep.subr.bf16.mxu0 %v619
    %1587 = vmatpush1.bf16.msra.mxu0 %v618
    %1588 = vmatprep.subr.bf16.mxu0 0
    %1589 = vmatpush1.bf16.msra.mxu0 0
    %1590 = vmatprep.subr.bf16.mxu0 0
    %1591 = vmatpush1.bf16.msra.mxu0 0
    %1592 = vmatprep.subr.bf16.mxu0 0
    %1593 = vmatpush1.bf16.msra.mxu0 0
    %1594 = vmatprep.subr.bf16.mxu0 0
    %1595 = vmatpush1.bf16.msra.mxu0 0
    %1596 = vmatprep.mubr.bf16.mxu0 %v1441
    %1597 = vmatmul.mubr.bf16.gmra.mrb[0].mxu0 %v1419
    %v1598 = vpop.f32.mrb[0].mxu0
    %v1599 = vadd.f32 %v148, %v1598
    %v1600 = vpop.f32.mrb[0].mxu0
    %v1601 = vadd.f32 %v152, %v1600
    %v1602 = vpop.f32.mrb[0].mxu0
    %v1603 = vadd.f32 %v148, %v1602
    %v1604 = vpop.f32.mrb[0].mxu0
    %v1605 = vadd.f32 %v152, %v1604
    %1606 = vmatprep.mubr.bf16.mxu0 %v1444
    %1607 = vmatmul.mubr.bf16.gmra.mrb[0].mxu0 %v1421
    %v1608 = vpop.f32.mrb[0].mxu0
    %v1609 = vadd.f32 %v148, %v1608
    %v1610 = vpop.f32.mrb[0].mxu0
    %v1611 = vadd.f32 %v152, %v1610
    %v1612 = vpop.f32.mrb[0].mxu0
    %v1613 = vadd.f32 %v148, %v1612
    %v1614 = vpop.f32.mrb[0].mxu0
    %v1615 = vadd.f32 %v152, %v1614
    %1616 = vmatprep.mubr.bf16.mxu0 %v1447
    %1617 = vmatmul.mubr.bf16.gmra.mrb[0].mxu0 %v1423
    %v1618 = vpop.f32.mrb[0].mxu0
    %v1619 = vadd.f32 %v148, %v1618
    %v1620 = vpop.f32.mrb[0].mxu0
    %v1621 = vadd.f32 %v152, %v1620
    %v1622 = vpop.f32.mrb[0].mxu0
    %v1623 = vadd.f32 %v148, %v1622
    %v1624 = vpop.f32.mrb[0].mxu0
    %v1625 = vadd.f32 %v152, %v1624
    %1626 = vmatprep.mubr.bf16.mxu0 %v1450
    %1627 = vmatmul.mubr.bf16.gmra.mrb[0].mxu0 %v1425
    %v1628 = vpop.f32.mrb[0].mxu0
    %v1629 = vadd.f32 %v148, %v1628
    %v1630 = vpop.f32.mrb[0].mxu0
    %v1631 = vadd.f32 %v152, %v1630
    %v1632 = vpop.f32.mrb[0].mxu0
    %v1633 = vadd.f32 %v148, %v1632
    %v1634 = vpop.f32.mrb[0].mxu0
    %v1635 = vadd.f32 %v152, %v1634
    %1636 = vmatprep.mubr.bf16.mxu0 %v1453
    %1637 = vmatmul.mubr.bf16.gmra.mrb[0].mxu0 %v1427
    %v1638 = vpop.f32.mrb[0].mxu0
    %v1639 = vadd.f32 %v148, %v1638
    %v1640 = vpop.f32.mrb[0].mxu0
    %v1641 = vadd.f32 %v152, %v1640
    %v1642 = vpop.f32.mrb[0].mxu0
    %v1643 = vadd.f32 %v148, %v1642
    %v1644 = vpop.f32.mrb[0].mxu0
    %v1645 = vadd.f32 %v152, %v1644
    %1646 = vmatprep.mubr.bf16.mxu0 %v1456
    %1647 = vmatmul.mubr.bf16.gmra.mrb[0].mxu0 %v1429
    %v1648 = vpop.f32.mrb[0].mxu0
    %v1649 = vadd.f32 %v148, %v1648
    %v1650 = vpop.f32.mrb[0].mxu0
    %v1651 = vadd.f32 %v152, %v1650
    %v1652 = vpop.f32.mrb[0].mxu0
    %v1653 = vadd.f32 %v148, %v1652
    %v1654 = vpop.f32.mrb[0].mxu0
    %v1655 = vadd.f32 %v152, %v1654
    %1656 = vmatprep.mubr.bf16.mxu0 %v1459
    %1657 = vmatmul.mubr.bf16.gmra.mrb[0].mxu0 %v1431
    %v1658 = vpop.f32.mrb[0].mxu0
    %v1659 = vadd.f32 %v148, %v1658
    %v1660 = vpop.f32.mrb[0].mxu0
    %v1661 = vadd.f32 %v152, %v1660
    %v1662 = vpop.f32.mrb[0].mxu0
    %v1663 = vadd.f32 %v148, %v1662
    %v1664 = vpop.f32.mrb[0].mxu0
    %v1665 = vadd.f32 %v152, %v1664
    %1666 = vdwg.mxu0
    %1667 = vmatprep.subr.bf16.mxu0 %v533
    %1668 = vmatpush1.bf16.msra.mxu0 %v532
    %1669 = vmatprep.subr.bf16.mxu0 %v541
    %1670 = vmatpush1.bf16.msra.mxu0 %v540
    %1671 = vmatprep.subr.bf16.mxu0 %v549
    %1672 = vmatpush1.bf16.msra.mxu0 %v548
    %1673 = vmatprep.subr.bf16.mxu0 %v557
    %1674 = vmatpush1.bf16.msra.mxu0 %v556
    %1675 = vmatprep.subr.bf16.mxu0 %v565
    %1676 = vmatpush1.bf16.msra.mxu0 %v564
    %1677 = vmatprep.subr.bf16.mxu0 %v573
    %1678 = vmatpush1.bf16.msra.mxu0 %v572
    %1679 = vmatprep.subr.bf16.mxu0 %v581
    %1680 = vmatpush1.bf16.msra.mxu0 %v580
    %1681 = vmatprep.subr.bf16.mxu0 %v589
    %1682 = vmatpush1.bf16.msra.mxu0 %v588
    %1683 = vmatprep.subr.bf16.mxu0 %v597
    %1684 = vmatpush1.bf16.msra.mxu0 %v596
    %1685 = vmatprep.subr.bf16.mxu0 %v605
    %1686 = vmatpush1.bf16.msra.mxu0 %v604
    %1687 = vmatprep.subr.bf16.mxu0 %v613
    %1688 = vmatpush1.bf16.msra.mxu0 %v612
    %1689 = vmatprep.subr.bf16.mxu0 %v621
    %1690 = vmatpush1.bf16.msra.mxu0 %v620
    %1691 = vmatprep.subr.bf16.mxu0 0
    %1692 = vmatpush1.bf16.msra.mxu0 0
    %1693 = vmatprep.subr.bf16.mxu0 0
    %1694 = vmatpush1.bf16.msra.mxu0 0
    %1695 = vmatprep.subr.bf16.mxu0 0
    %1696 = vmatpush1.bf16.msra.mxu0 0
    %1697 = vmatprep.subr.bf16.mxu0 0
    %1698 = vmatpush1.bf16.msra.mxu0 0
    %1699 = vmatprep.mubr.bf16.mxu0 %v1441
    %1700 = vmatmul.mubr.bf16.gmra.mrb[0].mxu0 %v1419
    %v1701 = vpop.f32.mrb[0].mxu0
    %v1702 = vadd.f32 %v156, %v1701
    %v1703 = vpop.f32.mrb[0].mxu0
    %v1704 = vadd.f32 %v160, %v1703
    %v1705 = vpop.f32.mrb[0].mxu0
    %v1706 = vadd.f32 %v156, %v1705
    %v1707 = vpop.f32.mrb[0].mxu0
    %v1708 = vadd.f32 %v160, %v1707
    %1709 = vmatprep.mubr.bf16.mxu0 %v1444
    %1710 = vmatmul.mubr.bf16.gmra.mrb[0].mxu0 %v1421
    %v1711 = vpop.f32.mrb[0].mxu0
    %v1712 = vadd.f32 %v156, %v1711
    %v1713 = vpop.f32.mrb[0].mxu0
    %v1714 = vadd.f32 %v160, %v1713
    %v1715 = vpop.f32.mrb[0].mxu0
    %v1716 = vadd.f32 %v156, %v1715
    %v1717 = vpop.f32.mrb[0].mxu0
    %v1718 = vadd.f32 %v160, %v1717
    %1719 = vmatprep.mubr.bf16.mxu0 %v1447
    %1720 = vmatmul.mubr.bf16.gmra.mrb[0].mxu0 %v1423
    %v1721 = vpop.f32.mrb[0].mxu0
    %v1722 = vadd.f32 %v156, %v1721
    %v1723 = vpop.f32.mrb[0].mxu0
    %v1724 = vadd.f32 %v160, %v1723
    %v1725 = vpop.f32.mrb[0].mxu0
    %v1726 = vadd.f32 %v156, %v1725
    %v1727 = vpop.f32.mrb[0].mxu0
    %v1728 = vadd.f32 %v160, %v1727
    %1729 = vmatprep.mubr.bf16.mxu0 %v1450
    %1730 = vmatmul.mubr.bf16.gmra.mrb[0].mxu0 %v1425
    %v1731 = vpop.f32.mrb[0].mxu0
    %v1732 = vadd.f32 %v156, %v1731
    %v1733 = vpop.f32.mrb[0].mxu0
    %v1734 = vadd.f32 %v160, %v1733
    %v1735 = vpop.f32.mrb[0].mxu0
    %v1736 = vadd.f32 %v156, %v1735
    %v1737 = vpop.f32.mrb[0].mxu0
    %v1738 = vadd.f32 %v160, %v1737
    %1739 = vmatprep.mubr.bf16.mxu0 %v1453
    %1740 = vmatmul.mubr.bf16.gmra.mrb[0].mxu0 %v1427
    %v1741 = vpop.f32.mrb[0].mxu0
    %v1742 = vadd.f32 %v156, %v1741
    %v1743 = vpop.f32.mrb[0].mxu0
    %v1744 = vadd.f32 %v160, %v1743
    %v1745 = vpop.f32.mrb[0].mxu0
    %v1746 = vadd.f32 %v156, %v1745
    %v1747 = vpop.f32.mrb[0].mxu0
    %v1748 = vadd.f32 %v160, %v1747
    %1749 = vmatprep.mubr.bf16.mxu0 %v1456
    %1750 = vmatmul.mubr.bf16.gmra.mrb[0].mxu0 %v1429
    %v1751 = vpop.f32.mrb[0].mxu0
    %v1752 = vadd.f32 %v156, %v1751
    %v1753 = vpop.f32.mrb[0].mxu0
    %v1754 = vadd.f32 %v160, %v1753
    %v1755 = vpop.f32.mrb[0].mxu0
    %v1756 = vadd.f32 %v156, %v1755
    %v1757 = vpop.f32.mrb[0].mxu0
    %v1758 = vadd.f32 %v160, %v1757
    %1759 = vmatprep.mubr.bf16.mxu0 %v1459
    %1760 = vmatmul.mubr.bf16.gmra.mrb[0].mxu0 %v1431
    %v1761 = vpop.f32.mrb[0].mxu0
    %v1762 = vadd.f32 %v156, %v1761
    %v1763 = vpop.f32.mrb[0].mxu0
    %v1764 = vadd.f32 %v160, %v1763
    %v1765 = vpop.f32.mrb[0].mxu0
    %v1766 = vadd.f32 %v156, %v1765
    %v1767 = vpop.f32.mrb[0].mxu0
    %v1768 = vadd.f32 %v160, %v1767
    %1769 = vdwg.mxu0
    %1770 = vmatprep.subr.bf16.mxu0 %v535
    %1771 = vmatpush1.bf16.msra.mxu0 %v534
    %1772 = vmatprep.subr.bf16.mxu0 %v543
    %1773 = vmatpush1.bf16.msra.mxu0 %v542
    %1774 = vmatprep.subr.bf16.mxu0 %v551
    %1775 = vmatpush1.bf16.msra.mxu0 %v550
    %1776 = vmatprep.subr.bf16.mxu0 %v559
    %1777 = vmatpush1.bf16.msra.mxu0 %v558
    %1778 = vmatprep.subr.bf16.mxu0 %v567
    %1779 = vmatpush1.bf16.msra.mxu0 %v566
    %1780 = vmatprep.subr.bf16.mxu0 %v575
    %1781 = vmatpush1.bf16.msra.mxu0 %v574
    %1782 = vmatprep.subr.bf16.mxu0 %v583
    %1783 = vmatpush1.bf16.msra.mxu0 %v582
    %1784 = vmatprep.subr.bf16.mxu0 %v591
    %1785 = vmatpush1.bf16.msra.mxu0 %v590
    %1786 = vmatprep.subr.bf16.mxu0 %v599
    %1787 = vmatpush1.bf16.msra.mxu0 %v598
    %1788 = vmatprep.subr.bf16.mxu0 %v607
    %1789 = vmatpush1.bf16.msra.mxu0 %v606
    %1790 = vmatprep.subr.bf16.mxu0 %v615
    %1791 = vmatpush1.bf16.msra.mxu0 %v614
    %1792 = vmatprep.subr.bf16.mxu0 %v623
    %1793 = vmatpush1.bf16.msra.mxu0 %v622
    %1794 = vmatprep.subr.bf16.mxu0 0
    %1795 = vmatpush1.bf16.msra.mxu0 0
    %1796 = vmatprep.subr.bf16.mxu0 0
    %1797 = vmatpush1.bf16.msra.mxu0 0
    %1798 = vmatprep.subr.bf16.mxu0 0
    %1799 = vmatpush1.bf16.msra.mxu0 0
    %1800 = vmatprep.subr.bf16.mxu0 0
    %1801 = vmatpush1.bf16.msra.mxu0 0
    %1802 = vmatprep.mubr.bf16.mxu0 %v1441
    %1803 = vmatmul.mubr.bf16.gmra.mrb[0].mxu0 %v1419
    %v1804 = vpop.f32.mrb[0].mxu0
    %v1805 = vadd.f32 %v164, %v1804
    %v1806 = vpop.f32.mrb[0].mxu0
    %v1807 = vadd.f32 %v168, %v1806
    %v1808 = vpop.f32.mrb[0].mxu0
    %v1809 = vadd.f32 %v164, %v1808
    %v1810 = vpop.f32.mrb[0].mxu0
    %v1811 = vadd.f32 %v168, %v1810
    %1812 = vmatprep.mubr.bf16.mxu0 %v1444
    %1813 = vmatmul.mubr.bf16.gmra.mrb[0].mxu0 %v1421
    %v1814 = vpop.f32.mrb[0].mxu0
    %v1815 = vadd.f32 %v164, %v1814
    %v1816 = vpop.f32.mrb[0].mxu0
    %v1817 = vadd.f32 %v168, %v1816
    %v1818 = vpop.f32.mrb[0].mxu0
    %v1819 = vadd.f32 %v164, %v1818
    %v1820 = vpop.f32.mrb[0].mxu0
    %v1821 = vadd.f32 %v168, %v1820
    %1822 = vmatprep.mubr.bf16.mxu0 %v1447
    %1823 = vmatmul.mubr.bf16.gmra.mrb[0].mxu0 %v1423
    %v1824 = vpop.f32.mrb[0].mxu0
    %v1825 = vadd.f32 %v164, %v1824
    %v1826 = vpop.f32.mrb[0].mxu0
    %v1827 = vadd.f32 %v168, %v1826
    %v1828 = vpop.f32.mrb[0].mxu0
    %v1829 = vadd.f32 %v164, %v1828
    %v1830 = vpop.f32.mrb[0].mxu0
    %v1831 = vadd.f32 %v168, %v1830
    %1832 = vmatprep.mubr.bf16.mxu0 %v1450
    %1833 = vmatmul.mubr.bf16.gmra.mrb[0].mxu0 %v1425
    %v1834 = vpop.f32.mrb[0].mxu0
    %v1835 = vadd.f32 %v164, %v1834
    %v1836 = vpop.f32.mrb[0].mxu0
    %v1837 = vadd.f32 %v168, %v1836
    %v1838 = vpop.f32.mrb[0].mxu0
    %v1839 = vadd.f32 %v164, %v1838
    %v1840 = vpop.f32.mrb[0].mxu0
    %v1841 = vadd.f32 %v168, %v1840
    %1842 = vmatprep.mubr.bf16.mxu0 %v1453
    %1843 = vmatmul.mubr.bf16.gmra.mrb[0].mxu0 %v1427
    %v1844 = vpop.f32.mrb[0].mxu0
    %v1845 = vadd.f32 %v164, %v1844
    %v1846 = vpop.f32.mrb[0].mxu0
    %v1847 = vadd.f32 %v168, %v1846
    %v1848 = vpop.f32.mrb[0].mxu0
    %v1849 = vadd.f32 %v164, %v1848
    %v1850 = vpop.f32.mrb[0].mxu0
    %v1851 = vadd.f32 %v168, %v1850
    %1852 = vmatprep.mubr.bf16.mxu0 %v1456
    %1853 = vmatmul.mubr.bf16.gmra.mrb[0].mxu0 %v1429
    %v1854 = vpop.f32.mrb[0].mxu0
    %v1855 = vadd.f32 %v164, %v1854
    %v1856 = vpop.f32.mrb[0].mxu0
    %v1857 = vadd.f32 %v168, %v1856
    %v1858 = vpop.f32.mrb[0].mxu0
    %v1859 = vadd.f32 %v164, %v1858
    %v1860 = vpop.f32.mrb[0].mxu0
    %v1861 = vadd.f32 %v168, %v1860
    %1862 = vmatprep.mubr.bf16.mxu0 %v1459
    %1863 = vmatmul.mubr.bf16.gmra.mrb[0].mxu0 %v1431
    %v1864 = vpop.f32.mrb[0].mxu0
    %v1865 = vadd.f32 %v164, %v1864
    %v1866 = vpop.f32.mrb[0].mxu0
    %v1867 = vadd.f32 %v168, %v1866
    %v1868 = vpop.f32.mrb[0].mxu0
    %v1869 = vadd.f32 %v164, %v1868
    %v1870 = vpop.f32.mrb[0].mxu0
    %v1871 = vadd.f32 %v168, %v1870
    %1872 = vdwg.mxu0
    %v1873 = vmax.f32 %v1496, 0.0
    %v1874 = vmax.f32 %v1498, 0.0
    %v1875 = vmax.f32 %v1599, 0.0
    %v1876 = vmax.f32 %v1601, 0.0
    %v1877 = vmax.f32 %v1702, 0.0
    %v1878 = vmax.f32 %v1704, 0.0
    %v1879 = vmax.f32 %v1805, 0.0
    %v1880 = vmax.f32 %v1807, 0.0
    %v1881 = vmax.f32 %v1500, 0.0
    %v1882 = vmax.f32 %v1502, 0.0
    %v1883 = vmax.f32 %v1603, 0.0
    %v1884 = vmax.f32 %v1605, 0.0
    %v1885 = vmax.f32 %v1706, 0.0
    %v1886 = vmax.f32 %v1708, 0.0
    %v1887 = vmax.f32 %v1809, 0.0
    %v1888 = vmax.f32 %v1811, 0.0
    %v1889 = vmax.f32 %v1506, 0.0
    %v1890 = vmax.f32 %v1508, 0.0
    %v1891 = vmax.f32 %v1609, 0.0
    %v1892 = vmax.f32 %v1611, 0.0
    %v1893 = vmax.f32 %v1712, 0.0
    %v1894 = vmax.f32 %v1714, 0.0
    %v1895 = vmax.f32 %v1815, 0.0
    %v1896 = vmax.f32 %v1817, 0.0
    %v1897 = vmax.f32 %v1510, 0.0
    %v1898 = vmax.f32 %v1512, 0.0
    %v1899 = vmax.f32 %v1613, 0.0
    %v1900 = vmax.f32 %v1615, 0.0
    %v1901 = vmax.f32 %v1716, 0.0
    %v1902 = vmax.f32 %v1718, 0.0
    %v1903 = vmax.f32 %v1819, 0.0
    %v1904 = vmax.f32 %v1821, 0.0
    %v1905 = vmax.f32 %v1516, 0.0
    %v1906 = vmax.f32 %v1518, 0.0
    %v1907 = vmax.f32 %v1619, 0.0
    %v1908 = vmax.f32 %v1621, 0.0
    %v1909 = vmax.f32 %v1722, 0.0
    %v1910 = vmax.f32 %v1724, 0.0
    %v1911 = vmax.f32 %v1825, 0.0
    %v1912 = vmax.f32 %v1827, 0.0
    %v1913 = vmax.f32 %v1520, 0.0
    %v1914 = vmax.f32 %v1522, 0.0
    %v1915 = vmax.f32 %v1623, 0.0
    %v1916 = vmax.f32 %v1625, 0.0
    %v1917 = vmax.f32 %v1726, 0.0
    %v1918 = vmax.f32 %v1728, 0.0
    %v1919 = vmax.f32 %v1829, 0.0
    %v1920 = vmax.f32 %v1831, 0.0
    %v1921 = vmax.f32 %v1526, 0.0
    %v1922 = vmax.f32 %v1528, 0.0
    %v1923 = vmax.f32 %v1629, 0.0
    %v1924 = vmax.f32 %v1631, 0.0
    %v1925 = vmax.f32 %v1732, 0.0
    %v1926 = vmax.f32 %v1734, 0.0
    %v1927 = vmax.f32 %v1835, 0.0
    %v1928 = vmax.f32 %v1837, 0.0
    %v1929 = vmax.f32 %v1530, 0.0
    %v1930 = vmax.f32 %v1532, 0.0
    %v1931 = vmax.f32 %v1633, 0.0
    %v1932 = vmax.f32 %v1635, 0.0
    %v1933 = vmax.f32 %v1736, 0.0
    %v1934 = vmax.f32 %v1738, 0.0
    %v1935 = vmax.f32 %v1839, 0.0
    %v1936 = vmax.f32 %v1841, 0.0
    %v1937 = vmax.f32 %v1536, 0.0
    %v1938 = vmax.f32 %v1538, 0.0
    %v1939 = vmax.f32 %v1639, 0.0
    %v1940 = vmax.f32 %v1641, 0.0
    %v1941 = vmax.f32 %v1742, 0.0
    %v1942 = vmax.f32 %v1744, 0.0
    %v1943 = vmax.f32 %v1845, 0.0
    %v1944 = vmax.f32 %v1847, 0.0
    %v1945 = vmax.f32 %v1540, 0.0
    %v1946 = vmax.f32 %v1542, 0.0
    %v1947 = vmax.f32 %v1643, 0.0
    %v1948 = vmax.f32 %v1645, 0.0
    %v1949 = vmax.f32 %v1746, 0.0
    %v1950 = vmax.f32 %v1748, 0.0
    %v1951 = vmax.f32 %v1849, 0.0
    %v1952 = vmax.f32 %v1851, 0.0
    %v1953 = vmax.f32 %v1546, 0.0
    %v1954 = vmax.f32 %v1548, 0.0
    %v1955 = vmax.f32 %v1649, 0.0
    %v1956 = vmax.f32 %v1651, 0.0
    %v1957 = vmax.f32 %v1752, 0.0
    %v1958 = vmax.f32 %v1754, 0.0
    %v1959 = vmax.f32 %v1855, 0.0
    %v1960 = vmax.f32 %v1857, 0.0
    %v1961 = vmax.f32 %v1550, 0.0
    %v1962 = vmax.f32 %v1552, 0.0
    %v1963 = vmax.f32 %v1653, 0.0
    %v1964 = vmax.f32 %v1655, 0.0
    %v1965 = vmax.f32 %v1756, 0.0
    %v1966 = vmax.f32 %v1758, 0.0
    %v1967 = vmax.f32 %v1859, 0.0
    %v1968 = vmax.f32 %v1861, 0.0
    %v1969 = vmax.f32 %v1556, 0.0
    %v1970 = vmax.f32 %v1558, 0.0
    %v1971 = vmax.f32 %v1659, 0.0
    %v1972 = vmax.f32 %v1661, 0.0
    %v1973 = vmax.f32 %v1762, 0.0
    %v1974 = vmax.f32 %v1764, 0.0
    %v1975 = vmax.f32 %v1865, 0.0
    %v1976 = vmax.f32 %v1867, 0.0
    %v1977 = vmax.f32 %v1560, 0.0
    %v1978 = vmax.f32 %v1562, 0.0
    %v1979 = vmax.f32 %v1663, 0.0
    %v1980 = vmax.f32 %v1665, 0.0
    %v1981 = vmax.f32 %v1766, 0.0
    %v1982 = vmax.f32 %v1768, 0.0
    %v1983 = vmax.f32 %v1869, 0.0
    %v1984 = vmax.f32 %v1871, 0.0
    %v1985 = vadd.f32 %v1873, %v1889
    %v1986 = vadd.f32 %v1874, %v1890
    %v1987 = vadd.f32 %v1875, %v1891
    %v1988 = vadd.f32 %v1876, %v1892
    %v1989 = vadd.f32 %v1877, %v1893
    %v1990 = vadd.f32 %v1878, %v1894
    %v1991 = vadd.f32 %v1879, %v1895
    %v1992 = vadd.f32 %v1880, %v1896
    %v1993 = vadd.f32 %v1881, %v1897
    %v1994 = vadd.f32 %v1882, %v1898
    %v1995 = vadd.f32 %v1883, %v1899
    %v1996 = vadd.f32 %v1884, %v1900
    %v1997 = vadd.f32 %v1885, %v1901
    %v1998 = vadd.f32 %v1886, %v1902
    %v1999 = vadd.f32 %v1887, %v1903
    %v2000 = vadd.f32 %v1888, %v1904
    %v2001 = vadd.f32 %v1985, %v1905
    %v2002 = vadd.f32 %v1986, %v1906
    %v2003 = vadd.f32 %v1987, %v1907
    %v2004 = vadd.f32 %v1988, %v1908
    %v2005 = vadd.f32 %v1989, %v1909
    %v2006 = vadd.f32 %v1990, %v1910
    %v2007 = vadd.f32 %v1991, %v1911
    %v2008 = vadd.f32 %v1992, %v1912
    %v2009 = vadd.f32 %v1993, %v1913
    %v2010 = vadd.f32 %v1994, %v1914
    %v2011 = vadd.f32 %v1995, %v1915
    %v2012 = vadd.f32 %v1996, %v1916
    %v2013 = vadd.f32 %v1997, %v1917
    %v2014 = vadd.f32 %v1998, %v1918
    %v2015 = vadd.f32 %v1999, %v1919
    %v2016 = vadd.f32 %v2000, %v1920
    %v2017 = vadd.f32 %v2001, %v1921
    %v2018 = vadd.f32 %v2002, %v1922
    %v2019 = vadd.f32 %v2003, %v1923
    %v2020 = vadd.f32 %v2004, %v1924
    %v2021 = vadd.f32 %v2005, %v1925
    %v2022 = vadd.f32 %v2006, %v1926
    %v2023 = vadd.f32 %v2007, %v1927
    %v2024 = vadd.f32 %v2008, %v1928
    %v2025 = vadd.f32 %v2009, %v1929
    %v2026 = vadd.f32 %v2010, %v1930
    %v2027 = vadd.f32 %v2011, %v1931
    %v2028 = vadd.f32 %v2012, %v1932
    %v2029 = vadd.f32 %v2013, %v1933
    %v2030 = vadd.f32 %v2014, %v1934
    %v2031 = vadd.f32 %v2015, %v1935
    %v2032 = vadd.f32 %v2016, %v1936
    %v2033 = vadd.f32 %v2017, %v1937
    %v2034 = vadd.f32 %v2018, %v1938
    %v2035 = vadd.f32 %v2019, %v1939
    %v2036 = vadd.f32 %v2020, %v1940
    %v2037 = vadd.f32 %v2021, %v1941
    %v2038 = vadd.f32 %v2022, %v1942
    %v2039 = vadd.f32 %v2023, %v1943
    %v2040 = vadd.f32 %v2024, %v1944
    %v2041 = vadd.f32 %v2025, %v1945
    %v2042 = vadd.f32 %v2026, %v1946
    %v2043 = vadd.f32 %v2027, %v1947
    %v2044 = vadd.f32 %v2028, %v1948
    %v2045 = vadd.f32 %v2029, %v1949
    %v2046 = vadd.f32 %v2030, %v1950
    %v2047 = vadd.f32 %v2031, %v1951
    %v2048 = vadd.f32 %v2032, %v1952
    %v2049 = vadd.f32 %v2033, %v1953
    %v2050 = vadd.f32 %v2034, %v1954
    %v2051 = vadd.f32 %v2035, %v1955
    %v2052 = vadd.f32 %v2036, %v1956
    %v2053 = vadd.f32 %v2037, %v1957
    %v2054 = vadd.f32 %v2038, %v1958
    %v2055 = vadd.f32 %v2039, %v1959
    %v2056 = vadd.f32 %v2040, %v1960
    %v2057 = vadd.f32 %v2041, %v1961
    %v2058 = vadd.f32 %v2042, %v1962
    %v2059 = vadd.f32 %v2043, %v1963
    %v2060 = vadd.f32 %v2044, %v1964
    %v2061 = vadd.f32 %v2045, %v1965
    %v2062 = vadd.f32 %v2046, %v1966
    %v2063 = vadd.f32 %v2047, %v1967
    %v2064 = vadd.f32 %v2048, %v1968
    %v2065 = vadd.f32 %v2049, %v1969
    %v2066 = vadd.f32 %v2050, %v1970
    %v2067 = vadd.f32 %v2051, %v1971
    %v2068 = vadd.f32 %v2052, %v1972
    %v2069 = vadd.f32 %v2053, %v1973
    %v2070 = vadd.f32 %v2054, %v1974
    %v2071 = vadd.f32 %v2055, %v1975
    %v2072 = vadd.f32 %v2056, %v1976
    %v2073 = vadd.f32 %v2057, %v1977
    %v2074 = vadd.f32 %v2058, %v1978
    %v2075 = vadd.f32 %v2059, %v1979
    %v2076 = vadd.f32 %v2060, %v1980
    %v2077 = vadd.f32 %v2061, %v1981
    %v2078 = vadd.f32 %v2062, %v1982
    %v2079 = vadd.f32 %v2063, %v1983
    %v2080 = vadd.f32 %v2064, %v1984
    %v2081 = vadd.f32 %v1346, %v2065
    %v2082 = vadd.f32 %v1347, %v2066
    %v2083 = vadd.f32 %v1348, %v2067
    %v2084 = vadd.f32 %v1349, %v2068
    %v2085 = vadd.f32 %v1350, %v2069
    %v2086 = vadd.f32 %v1351, %v2070
    %v2087 = vadd.f32 %v1352, %v2071
    %v2088 = vadd.f32 %v1353, %v2072
    %v2089 = vadd.f32 %v1354, %v2073
    %v2090 = vadd.f32 %v1355, %v2074
    %v2091 = vadd.f32 %v1356, %v2075
    %v2092 = vadd.f32 %v1357, %v2076
    %v2093 = vadd.f32 %v1358, %v2077
    %v2094 = vadd.f32 %v1359, %v2078
    %v2095 = vadd.f32 %v1360, %v2079
    %v2096 = vadd.f32 %v1361, %v2080
    %s2097 = scalar_lea.vmem %s0, 224
    %v2098 = vld [vmem:[%s2097] sm:$0xff]
    %v2099 = vld [vmem:[%s2097 + $0x8] sm:$0xff]
    %v2100 = vld [vmem:[%s2097 + $0x10] sm:$0xff]
    %v2101 = vld [vmem:[%s2097 + $0x18] sm:$0xff]
    %v2102 = vld [vmem:[%s2097 + $0x20] sm:$0xff]
    %v2103 = vld [vmem:[%s2097 + $0x28] sm:$0xff]
    %v2104 = vld [vmem:[%s2097 + $0x30] sm:$0xff]
    %v2105 = vld [vmem:[%s2097 + $0x38] sm:$0xff]
    %v2106 = vld [vmem:[%s2097 + $0x40] sm:$0xff]
    %v2107 = vld [vmem:[%s2097 + $0x48] sm:$0xff]
    %v2108 = vld [vmem:[%s2097 + $0x50] sm:$0xff]
    %v2109 = vld [vmem:[%s2097 + $0x58] sm:$0xff]
    %v2110 = vld [vmem:[%s2097 + $0x60] sm:$0xff]
    %v2111 = vld [vmem:[%s2097 + $0x68] sm:$0xff]
    %v2126 = vunpack.c.l.b16 %v2098
    %v2127 = vunpack.c.h.b16 %v2098
    %v2128 = vunpack.c.l.b16 %v2099
    %v2129 = vunpack.c.h.b16 %v2099
    %v2130 = vunpack.c.l.b16 %v2100
    %v2131 = vunpack.c.h.b16 %v2100
    %v2132 = vunpack.c.l.b16 %v2101
    %v2133 = vunpack.c.h.b16 %v2101
    %v2134 = vunpack.c.l.b16 %v2102
    %v2135 = vunpack.c.h.b16 %v2102
    %v2136 = vunpack.c.l.b16 %v2103
    %v2137 = vunpack.c.h.b16 %v2103
    %v2138 = vunpack.c.l.b16 %v2104
    %v2139 = vunpack.c.h.b16 %v2104
    %v2140 = vunpack.c.l.b16 %v2105
    %v2141 = vunpack.c.h.b16 %v2105
    %v2142 = vunpack.c.l.b16 %v2106
    %v2143 = vunpack.c.h.b16 %v2106
    %v2144 = vunpack.c.l.b16 %v2107
    %v2145 = vunpack.c.h.b16 %v2107
    %v2146 = vunpack.c.l.b16 %v2108
    %v2147 = vunpack.c.h.b16 %v2108
    %v2148 = vunpack.c.l.b16 %v2109
    %v2149 = vunpack.c.h.b16 %v2109
    %v2150 = vunpack.c.l.b16 %v2110
    %v2151 = vunpack.c.h.b16 %v2110
    %v2152 = vunpack.c.l.b16 %v2111
    %v2153 = vunpack.c.h.b16 %v2111
    %v2154 = vpack.c.b16 %v2128, %v2126
    %v2155 = vpack.c.b16 %v2129, %v2127
    %v2156 = vpack.c.b16 %v2132, %v2130
    %v2157 = vpack.c.b16 %v2133, %v2131
    %v2158 = vpack.c.b16 %v2136, %v2134
    %v2159 = vpack.c.b16 %v2137, %v2135
    %v2160 = vpack.c.b16 %v2140, %v2138
    %v2161 = vpack.c.b16 %v2141, %v2139
    %v2162 = vpack.c.b16 %v2144, %v2142
    %v2163 = vpack.c.b16 %v2145, %v2143
    %v2164 = vpack.c.b16 %v2148, %v2146
    %v2165 = vpack.c.b16 %v2149, %v2147
    %v2166 = vpack.c.b16 %v2152, %v2150
    %v2167 = vpack.c.b16 %v2153, %v2151
    %v2176 = vsel %vm720, %v2155, 0
    %v2179 = vsel %vm720, %v2157, 0
    %v2182 = vsel %vm720, %v2159, 0
    %v2185 = vsel %vm720, %v2161, 0
    %v2188 = vsel %vm720, %v2163, 0
    %v2191 = vsel %vm720, %v2165, 0
    %v2194 = vsel %vm720, %v2167, 0
    %2196 = vmatprep.subr.bf16.mxu0 %v529
    %2197 = vmatpush1.bf16.msra.mxu0 %v528
    %2198 = vmatprep.subr.bf16.mxu0 %v537
    %2199 = vmatpush1.bf16.msra.mxu0 %v536
    %2200 = vmatprep.subr.bf16.mxu0 %v545
    %2201 = vmatpush1.bf16.msra.mxu0 %v544
    %2202 = vmatprep.subr.bf16.mxu0 %v553
    %2203 = vmatpush1.bf16.msra.mxu0 %v552
    %2204 = vmatprep.subr.bf16.mxu0 %v561
    %2205 = vmatpush1.bf16.msra.mxu0 %v560
    %2206 = vmatprep.subr.bf16.mxu0 %v569
    %2207 = vmatpush1.bf16.msra.mxu0 %v568
    %2208 = vmatprep.subr.bf16.mxu0 %v577
    %2209 = vmatpush1.bf16.msra.mxu0 %v576
    %2210 = vmatprep.subr.bf16.mxu0 %v585
    %2211 = vmatpush1.bf16.msra.mxu0 %v584
    %2212 = vmatprep.subr.bf16.mxu0 %v593
    %2213 = vmatpush1.bf16.msra.mxu0 %v592
    %2214 = vmatprep.subr.bf16.mxu0 %v601
    %2215 = vmatpush1.bf16.msra.mxu0 %v600
    %2216 = vmatprep.subr.bf16.mxu0 %v609
    %2217 = vmatpush1.bf16.msra.mxu0 %v608
    %2218 = vmatprep.subr.bf16.mxu0 %v617
    %2219 = vmatpush1.bf16.msra.mxu0 %v616
    %2220 = vmatprep.subr.bf16.mxu0 0
    %2221 = vmatpush1.bf16.msra.mxu0 0
    %2222 = vmatprep.subr.bf16.mxu0 0
    %2223 = vmatpush1.bf16.msra.mxu0 0
    %2224 = vmatprep.subr.bf16.mxu0 0
    %2225 = vmatpush1.bf16.msra.mxu0 0
    %2226 = vmatprep.subr.bf16.mxu0 0
    %2227 = vmatpush1.bf16.msra.mxu0 0
    %2228 = vmatprep.mubr.bf16.mxu0 %v2176
    %2229 = vmatmul.mubr.bf16.gmra.mrb[0].mxu0 %v2154
    %v2230 = vpop.f32.mrb[0].mxu0
    %v2231 = vadd.f32 %v140, %v2230
    %v2232 = vpop.f32.mrb[0].mxu0
    %v2233 = vadd.f32 %v144, %v2232
    %v2234 = vpop.f32.mrb[0].mxu0
    %v2235 = vadd.f32 %v140, %v2234
    %v2236 = vpop.f32.mrb[0].mxu0
    %v2237 = vadd.f32 %v144, %v2236
    %2238 = vmatprep.mubr.bf16.mxu0 %v2179
    %2239 = vmatmul.mubr.bf16.gmra.mrb[0].mxu0 %v2156
    %v2240 = vpop.f32.mrb[0].mxu0
    %v2241 = vadd.f32 %v140, %v2240
    %v2242 = vpop.f32.mrb[0].mxu0
    %v2243 = vadd.f32 %v144, %v2242
    %v2244 = vpop.f32.mrb[0].mxu0
    %v2245 = vadd.f32 %v140, %v2244
    %v2246 = vpop.f32.mrb[0].mxu0
    %v2247 = vadd.f32 %v144, %v2246
    %2248 = vmatprep.mubr.bf16.mxu0 %v2182
    %2249 = vmatmul.mubr.bf16.gmra.mrb[0].mxu0 %v2158
    %v2250 = vpop.f32.mrb[0].mxu0
    %v2251 = vadd.f32 %v140, %v2250
    %v2252 = vpop.f32.mrb[0].mxu0
    %v2253 = vadd.f32 %v144, %v2252
    %v2254 = vpop.f32.mrb[0].mxu0
    %v2255 = vadd.f32 %v140, %v2254
    %v2256 = vpop.f32.mrb[0].mxu0
    %v2257 = vadd.f32 %v144, %v2256
    %2258 = vmatprep.mubr.bf16.mxu0 %v2185
    %2259 = vmatmul.mubr.bf16.gmra.mrb[0].mxu0 %v2160
    %v2260 = vpop.f32.mrb[0].mxu0
    %v2261 = vadd.f32 %v140, %v2260
    %v2262 = vpop.f32.mrb[0].mxu0
    %v2263 = vadd.f32 %v144, %v2262
    %v2264 = vpop.f32.mrb[0].mxu0
    %v2265 = vadd.f32 %v140, %v2264
    %v2266 = vpop.f32.mrb[0].mxu0
    %v2267 = vadd.f32 %v144, %v2266
    %2268 = vmatprep.mubr.bf16.mxu0 %v2188
    %2269 = vmatmul.mubr.bf16.gmra.mrb[0].mxu0 %v2162
    %v2270 = vpop.f32.mrb[0].mxu0
    %v2271 = vadd.f32 %v140, %v2270
    %v2272 = vpop.f32.mrb[0].mxu0
    %v2273 = vadd.f32 %v144, %v2272
    %v2274 = vpop.f32.mrb[0].mxu0
    %v2275 = vadd.f32 %v140, %v2274
    %v2276 = vpop.f32.mrb[0].mxu0
    %v2277 = vadd.f32 %v144, %v2276
    %2278 = vmatprep.mubr.bf16.mxu0 %v2191
    %2279 = vmatmul.mubr.bf16.gmra.mrb[0].mxu0 %v2164
    %v2280 = vpop.f32.mrb[0].mxu0
    %v2281 = vadd.f32 %v140, %v2280
    %v2282 = vpop.f32.mrb[0].mxu0
    %v2283 = vadd.f32 %v144, %v2282
    %v2284 = vpop.f32.mrb[0].mxu0
    %v2285 = vadd.f32 %v140, %v2284
    %v2286 = vpop.f32.mrb[0].mxu0
    %v2287 = vadd.f32 %v144, %v2286
    %2288 = vmatprep.mubr.bf16.mxu0 %v2194
    %2289 = vmatmul.mubr.bf16.gmra.mrb[0].mxu0 %v2166
    %v2290 = vpop.f32.mrb[0].mxu0
    %v2291 = vadd.f32 %v140, %v2290
    %v2292 = vpop.f32.mrb[0].mxu0
    %v2293 = vadd.f32 %v144, %v2292
    %v2294 = vpop.f32.mrb[0].mxu0
    %v2295 = vadd.f32 %v140, %v2294
    %v2296 = vpop.f32.mrb[0].mxu0
    %v2297 = vadd.f32 %v144, %v2296
    %2298 = vdwg.mxu0
    %2299 = vmatprep.subr.bf16.mxu0 %v531
    %2300 = vmatpush1.bf16.msra.mxu0 %v530
    %2301 = vmatprep.subr.bf16.mxu0 %v539
    %2302 = vmatpush1.bf16.msra.mxu0 %v538
    %2303 = vmatprep.subr.bf16.mxu0 %v547
    %2304 = vmatpush1.bf16.msra.mxu0 %v546
    %2305 = vmatprep.subr.bf16.mxu0 %v555
    %2306 = vmatpush1.bf16.msra.mxu0 %v554
    %2307 = vmatprep.subr.bf16.mxu0 %v563
    %2308 = vmatpush1.bf16.msra.mxu0 %v562
    %2309 = vmatprep.subr.bf16.mxu0 %v571
    %2310 = vmatpush1.bf16.msra.mxu0 %v570
    %2311 = vmatprep.subr.bf16.mxu0 %v579
    %2312 = vmatpush1.bf16.msra.mxu0 %v578
    %2313 = vmatprep.subr.bf16.mxu0 %v587
    %2314 = vmatpush1.bf16.msra.mxu0 %v586
    %2315 = vmatprep.subr.bf16.mxu0 %v595
    %2316 = vmatpush1.bf16.msra.mxu0 %v594
    %2317 = vmatprep.subr.bf16.mxu0 %v603
    %2318 = vmatpush1.bf16.msra.mxu0 %v602
    %2319 = vmatprep.subr.bf16.mxu0 %v611
    %2320 = vmatpush1.bf16.msra.mxu0 %v610
    %2321 = vmatprep.subr.bf16.mxu0 %v619
    %2322 = vmatpush1.bf16.msra.mxu0 %v618
    %2323 = vmatprep.subr.bf16.mxu0 0
    %2324 = vmatpush1.bf16.msra.mxu0 0
    %2325 = vmatprep.subr.bf16.mxu0 0
    %2326 = vmatpush1.bf16.msra.mxu0 0
    %2327 = vmatprep.subr.bf16.mxu0 0
    %2328 = vmatpush1.bf16.msra.mxu0 0
    %2329 = vmatprep.subr.bf16.mxu0 0
    %2330 = vmatpush1.bf16.msra.mxu0 0
    %2331 = vmatprep.mubr.bf16.mxu0 %v2176
    %2332 = vmatmul.mubr.bf16.gmra.mrb[0].mxu0 %v2154
    %v2333 = vpop.f32.mrb[0].mxu0
    %v2334 = vadd.f32 %v148, %v2333
    %v2335 = vpop.f32.mrb[0].mxu0
    %v2336 = vadd.f32 %v152, %v2335
    %v2337 = vpop.f32.mrb[0].mxu0
    %v2338 = vadd.f32 %v148, %v2337
    %v2339 = vpop.f32.mrb[0].mxu0
    %v2340 = vadd.f32 %v152, %v2339
    %2341 = vmatprep.mubr.bf16.mxu0 %v2179
    %2342 = vmatmul.mubr.bf16.gmra.mrb[0].mxu0 %v2156
    %v2343 = vpop.f32.mrb[0].mxu0
    %v2344 = vadd.f32 %v148, %v2343
    %v2345 = vpop.f32.mrb[0].mxu0
    %v2346 = vadd.f32 %v152, %v2345
    %v2347 = vpop.f32.mrb[0].mxu0
    %v2348 = vadd.f32 %v148, %v2347
    %v2349 = vpop.f32.mrb[0].mxu0
    %v2350 = vadd.f32 %v152, %v2349
    %2351 = vmatprep.mubr.bf16.mxu0 %v2182
    %2352 = vmatmul.mubr.bf16.gmra.mrb[0].mxu0 %v2158
    %v2353 = vpop.f32.mrb[0].mxu0
    %v2354 = vadd.f32 %v148, %v2353
    %v2355 = vpop.f32.mrb[0].mxu0
    %v2356 = vadd.f32 %v152, %v2355
    %v2357 = vpop.f32.mrb[0].mxu0
    %v2358 = vadd.f32 %v148, %v2357
    %v2359 = vpop.f32.mrb[0].mxu0
    %v2360 = vadd.f32 %v152, %v2359
    %2361 = vmatprep.mubr.bf16.mxu0 %v2185
    %2362 = vmatmul.mubr.bf16.gmra.mrb[0].mxu0 %v2160
    %v2363 = vpop.f32.mrb[0].mxu0
    %v2364 = vadd.f32 %v148, %v2363
    %v2365 = vpop.f32.mrb[0].mxu0
    %v2366 = vadd.f32 %v152, %v2365
    %v2367 = vpop.f32.mrb[0].mxu0
    %v2368 = vadd.f32 %v148, %v2367
    %v2369 = vpop.f32.mrb[0].mxu0
    %v2370 = vadd.f32 %v152, %v2369
    %2371 = vmatprep.mubr.bf16.mxu0 %v2188
    %2372 = vmatmul.mubr.bf16.gmra.mrb[0].mxu0 %v2162
    %v2373 = vpop.f32.mrb[0].mxu0
    %v2374 = vadd.f32 %v148, %v2373
    %v2375 = vpop.f32.mrb[0].mxu0
    %v2376 = vadd.f32 %v152, %v2375
    %v2377 = vpop.f32.mrb[0].mxu0
    %v2378 = vadd.f32 %v148, %v2377
    %v2379 = vpop.f32.mrb[0].mxu0
    %v2380 = vadd.f32 %v152, %v2379
    %2381 = vmatprep.mubr.bf16.mxu0 %v2191
    %2382 = vmatmul.mubr.bf16.gmra.mrb[0].mxu0 %v2164
    %v2383 = vpop.f32.mrb[0].mxu0
    %v2384 = vadd.f32 %v148, %v2383
    %v2385 = vpop.f32.mrb[0].mxu0
    %v2386 = vadd.f32 %v152, %v2385
    %v2387 = vpop.f32.mrb[0].mxu0
    %v2388 = vadd.f32 %v148, %v2387
    %v2389 = vpop.f32.mrb[0].mxu0
    %v2390 = vadd.f32 %v152, %v2389
    %2391 = vmatprep.mubr.bf16.mxu0 %v2194
    %2392 = vmatmul.mubr.bf16.gmra.mrb[0].mxu0 %v2166
    %v2393 = vpop.f32.mrb[0].mxu0
    %v2394 = vadd.f32 %v148, %v2393
    %v2395 = vpop.f32.mrb[0].mxu0
    %v2396 = vadd.f32 %v152, %v2395
    %v2397 = vpop.f32.mrb[0].mxu0
    %v2398 = vadd.f32 %v148, %v2397
    %v2399 = vpop.f32.mrb[0].mxu0
    %v2400 = vadd.f32 %v152, %v2399
    %2401 = vdwg.mxu0
    %2402 = vmatprep.subr.bf16.mxu0 %v533
    %2403 = vmatpush1.bf16.msra.mxu0 %v532
    %2404 = vmatprep.subr.bf16.mxu0 %v541
    %2405 = vmatpush1.bf16.msra.mxu0 %v540
    %2406 = vmatprep.subr.bf16.mxu0 %v549
    %2407 = vmatpush1.bf16.msra.mxu0 %v548
    %2408 = vmatprep.subr.bf16.mxu0 %v557
    %2409 = vmatpush1.bf16.msra.mxu0 %v556
    %2410 = vmatprep.subr.bf16.mxu0 %v565
    %2411 = vmatpush1.bf16.msra.mxu0 %v564
    %2412 = vmatprep.subr.bf16.mxu0 %v573
    %2413 = vmatpush1.bf16.msra.mxu0 %v572
    %2414 = vmatprep.subr.bf16.mxu0 %v581
    %2415 = vmatpush1.bf16.msra.mxu0 %v580
    %2416 = vmatprep.subr.bf16.mxu0 %v589
    %2417 = vmatpush1.bf16.msra.mxu0 %v588
    %2418 = vmatprep.subr.bf16.mxu0 %v597
    %2419 = vmatpush1.bf16.msra.mxu0 %v596
    %2420 = vmatprep.subr.bf16.mxu0 %v605
    %2421 = vmatpush1.bf16.msra.mxu0 %v604
    %2422 = vmatprep.subr.bf16.mxu0 %v613
    %2423 = vmatpush1.bf16.msra.mxu0 %v612
    %2424 = vmatprep.subr.bf16.mxu0 %v621
    %2425 = vmatpush1.bf16.msra.mxu0 %v620
    %2426 = vmatprep.subr.bf16.mxu0 0
    %2427 = vmatpush1.bf16.msra.mxu0 0
    %2428 = vmatprep.subr.bf16.mxu0 0
    %2429 = vmatpush1.bf16.msra.mxu0 0
    %2430 = vmatprep.subr.bf16.mxu0 0
    %2431 = vmatpush1.bf16.msra.mxu0 0
    %2432 = vmatprep.subr.bf16.mxu0 0
    %2433 = vmatpush1.bf16.msra.mxu0 0
    %2434 = vmatprep.mubr.bf16.mxu0 %v2176
    %2435 = vmatmul.mubr.bf16.gmra.mrb[0].mxu0 %v2154
    %v2436 = vpop.f32.mrb[0].mxu0
    %v2437 = vadd.f32 %v156, %v2436
    %v2438 = vpop.f32.mrb[0].mxu0
    %v2439 = vadd.f32 %v160, %v2438
    %v2440 = vpop.f32.mrb[0].mxu0
    %v2441 = vadd.f32 %v156, %v2440
    %v2442 = vpop.f32.mrb[0].mxu0
    %v2443 = vadd.f32 %v160, %v2442
    %2444 = vmatprep.mubr.bf16.mxu0 %v2179
    %2445 = vmatmul.mubr.bf16.gmra.mrb[0].mxu0 %v2156
    %v2446 = vpop.f32.mrb[0].mxu0
    %v2447 = vadd.f32 %v156, %v2446
    %v2448 = vpop.f32.mrb[0].mxu0
    %v2449 = vadd.f32 %v160, %v2448
    %v2450 = vpop.f32.mrb[0].mxu0
    %v2451 = vadd.f32 %v156, %v2450
    %v2452 = vpop.f32.mrb[0].mxu0
    %v2453 = vadd.f32 %v160, %v2452
    %2454 = vmatprep.mubr.bf16.mxu0 %v2182
    %2455 = vmatmul.mubr.bf16.gmra.mrb[0].mxu0 %v2158
    %v2456 = vpop.f32.mrb[0].mxu0
    %v2457 = vadd.f32 %v156, %v2456
    %v2458 = vpop.f32.mrb[0].mxu0
    %v2459 = vadd.f32 %v160, %v2458
    %v2460 = vpop.f32.mrb[0].mxu0
    %v2461 = vadd.f32 %v156, %v2460
    %v2462 = vpop.f32.mrb[0].mxu0
    %v2463 = vadd.f32 %v160, %v2462
    %2464 = vmatprep.mubr.bf16.mxu0 %v2185
    %2465 = vmatmul.mubr.bf16.gmra.mrb[0].mxu0 %v2160
    %v2466 = vpop.f32.mrb[0].mxu0
    %v2467 = vadd.f32 %v156, %v2466
    %v2468 = vpop.f32.mrb[0].mxu0
    %v2469 = vadd.f32 %v160, %v2468
    %v2470 = vpop.f32.mrb[0].mxu0
    %v2471 = vadd.f32 %v156, %v2470
    %v2472 = vpop.f32.mrb[0].mxu0
    %v2473 = vadd.f32 %v160, %v2472
    %2474 = vmatprep.mubr.bf16.mxu0 %v2188
    %2475 = vmatmul.mubr.bf16.gmra.mrb[0].mxu0 %v2162
    %v2476 = vpop.f32.mrb[0].mxu0
    %v2477 = vadd.f32 %v156, %v2476
    %v2478 = vpop.f32.mrb[0].mxu0
    %v2479 = vadd.f32 %v160, %v2478
    %v2480 = vpop.f32.mrb[0].mxu0
    %v2481 = vadd.f32 %v156, %v2480
    %v2482 = vpop.f32.mrb[0].mxu0
    %v2483 = vadd.f32 %v160, %v2482
    %2484 = vmatprep.mubr.bf16.mxu0 %v2191
    %2485 = vmatmul.mubr.bf16.gmra.mrb[0].mxu0 %v2164
    %v2486 = vpop.f32.mrb[0].mxu0
    %v2487 = vadd.f32 %v156, %v2486
    %v2488 = vpop.f32.mrb[0].mxu0
    %v2489 = vadd.f32 %v160, %v2488
    %v2490 = vpop.f32.mrb[0].mxu0
    %v2491 = vadd.f32 %v156, %v2490
    %v2492 = vpop.f32.mrb[0].mxu0
    %v2493 = vadd.f32 %v160, %v2492
    %2494 = vmatprep.mubr.bf16.mxu0 %v2194
    %2495 = vmatmul.mubr.bf16.gmra.mrb[0].mxu0 %v2166
    %v2496 = vpop.f32.mrb[0].mxu0
    %v2497 = vadd.f32 %v156, %v2496
    %v2498 = vpop.f32.mrb[0].mxu0
    %v2499 = vadd.f32 %v160, %v2498
    %v2500 = vpop.f32.mrb[0].mxu0
    %v2501 = vadd.f32 %v156, %v2500
    %v2502 = vpop.f32.mrb[0].mxu0
    %v2503 = vadd.f32 %v160, %v2502
    %2504 = vdwg.mxu0
    %2505 = vmatprep.subr.bf16.mxu0 %v535
    %2506 = vmatpush1.bf16.msra.mxu0 %v534
    %2507 = vmatprep.subr.bf16.mxu0 %v543
    %2508 = vmatpush1.bf16.msra.mxu0 %v542
    %2509 = vmatprep.subr.bf16.mxu0 %v551
    %2510 = vmatpush1.bf16.msra.mxu0 %v550
    %2511 = vmatprep.subr.bf16.mxu0 %v559
    %2512 = vmatpush1.bf16.msra.mxu0 %v558
    %2513 = vmatprep.subr.bf16.mxu0 %v567
    %2514 = vmatpush1.bf16.msra.mxu0 %v566
    %2515 = vmatprep.subr.bf16.mxu0 %v575
    %2516 = vmatpush1.bf16.msra.mxu0 %v574
    %2517 = vmatprep.subr.bf16.mxu0 %v583
    %2518 = vmatpush1.bf16.msra.mxu0 %v582
    %2519 = vmatprep.subr.bf16.mxu0 %v591
    %2520 = vmatpush1.bf16.msra.mxu0 %v590
    %2521 = vmatprep.subr.bf16.mxu0 %v599
    %2522 = vmatpush1.bf16.msra.mxu0 %v598
    %2523 = vmatprep.subr.bf16.mxu0 %v607
    %2524 = vmatpush1.bf16.msra.mxu0 %v606
    %2525 = vmatprep.subr.bf16.mxu0 %v615
    %2526 = vmatpush1.bf16.msra.mxu0 %v614
    %2527 = vmatprep.subr.bf16.mxu0 %v623
    %2528 = vmatpush1.bf16.msra.mxu0 %v622
    %2529 = vmatprep.subr.bf16.mxu0 0
    %2530 = vmatpush1.bf16.msra.mxu0 0
    %2531 = vmatprep.subr.bf16.mxu0 0
    %2532 = vmatpush1.bf16.msra.mxu0 0
    %2533 = vmatprep.subr.bf16.mxu0 0
    %2534 = vmatpush1.bf16.msra.mxu0 0
    %2535 = vmatprep.subr.bf16.mxu0 0
    %2536 = vmatpush1.bf16.msra.mxu0 0
    %2537 = vmatprep.mubr.bf16.mxu0 %v2176
    %2538 = vmatmul.mubr.bf16.gmra.mrb[0].mxu0 %v2154
    %v2539 = vpop.f32.mrb[0].mxu0
    %v2540 = vadd.f32 %v164, %v2539
    %v2541 = vpop.f32.mrb[0].mxu0
    %v2542 = vadd.f32 %v168, %v2541
    %v2543 = vpop.f32.mrb[0].mxu0
    %v2544 = vadd.f32 %v164, %v2543
    %v2545 = vpop.f32.mrb[0].mxu0
    %v2546 = vadd.f32 %v168, %v2545
    %2547 = vmatprep.mubr.bf16.mxu0 %v2179
    %2548 = vmatmul.mubr.bf16.gmra.mrb[0].mxu0 %v2156
    %v2549 = vpop.f32.mrb[0].mxu0
    %v2550 = vadd.f32 %v164, %v2549
    %v2551 = vpop.f32.mrb[0].mxu0
    %v2552 = vadd.f32 %v168, %v2551
    %v2553 = vpop.f32.mrb[0].mxu0
    %v2554 = vadd.f32 %v164, %v2553
    %v2555 = vpop.f32.mrb[0].mxu0
    %v2556 = vadd.f32 %v168, %v2555
    %2557 = vmatprep.mubr.bf16.mxu0 %v2182
    %2558 = vmatmul.mubr.bf16.gmra.mrb[0].mxu0 %v2158
    %v2559 = vpop.f32.mrb[0].mxu0
    %v2560 = vadd.f32 %v164, %v2559
    %v2561 = vpop.f32.mrb[0].mxu0
    %v2562 = vadd.f32 %v168, %v2561
    %v2563 = vpop.f32.mrb[0].mxu0
    %v2564 = vadd.f32 %v164, %v2563
    %v2565 = vpop.f32.mrb[0].mxu0
    %v2566 = vadd.f32 %v168, %v2565
    %2567 = vmatprep.mubr.bf16.mxu0 %v2185
    %2568 = vmatmul.mubr.bf16.gmra.mrb[0].mxu0 %v2160
    %v2569 = vpop.f32.mrb[0].mxu0
    %v2570 = vadd.f32 %v164, %v2569
    %v2571 = vpop.f32.mrb[0].mxu0
    %v2572 = vadd.f32 %v168, %v2571
    %v2573 = vpop.f32.mrb[0].mxu0
    %v2574 = vadd.f32 %v164, %v2573
    %v2575 = vpop.f32.mrb[0].mxu0
    %v2576 = vadd.f32 %v168, %v2575
    %2577 = vmatprep.mubr.bf16.mxu0 %v2188
    %2578 = vmatmul.mubr.bf16.gmra.mrb[0].mxu0 %v2162
    %v2579 = vpop.f32.mrb[0].mxu0
    %v2580 = vadd.f32 %v164, %v2579
    %v2581 = vpop.f32.mrb[0].mxu0
    %v2582 = vadd.f32 %v168, %v2581
    %v2583 = vpop.f32.mrb[0].mxu0
    %v2584 = vadd.f32 %v164, %v2583
    %v2585 = vpop.f32.mrb[0].mxu0
    %v2586 = vadd.f32 %v168, %v2585
    %2587 = vmatprep.mubr.bf16.mxu0 %v2191
    %2588 = vmatmul.mubr.bf16.gmra.mrb[0].mxu0 %v2164
    %v2589 = vpop.f32.mrb[0].mxu0
    %v2590 = vadd.f32 %v164, %v2589
    %v2591 = vpop.f32.mrb[0].mxu0
    %v2592 = vadd.f32 %v168, %v2591
    %v2593 = vpop.f32.mrb[0].mxu0
    %v2594 = vadd.f32 %v164, %v2593
    %v2595 = vpop.f32.mrb[0].mxu0
    %v2596 = vadd.f32 %v168, %v2595
    %2597 = vmatprep.mubr.bf16.mxu0 %v2194
    %2598 = vmatmul.mubr.bf16.gmra.mrb[0].mxu0 %v2166
    %v2599 = vpop.f32.mrb[0].mxu0
    %v2600 = vadd.f32 %v164, %v2599
    %v2601 = vpop.f32.mrb[0].mxu0
    %v2602 = vadd.f32 %v168, %v2601
    %v2603 = vpop.f32.mrb[0].mxu0
    %v2604 = vadd.f32 %v164, %v2603
    %v2605 = vpop.f32.mrb[0].mxu0
    %v2606 = vadd.f32 %v168, %v2605
    %2607 = vdwg.mxu0
    %v2608 = vmax.f32 %v2231, 0.0
    %v2609 = vmax.f32 %v2233, 0.0
    %v2610 = vmax.f32 %v2334, 0.0
    %v2611 = vmax.f32 %v2336, 0.0
    %v2612 = vmax.f32 %v2437, 0.0
    %v2613 = vmax.f32 %v2439, 0.0
    %v2614 = vmax.f32 %v2540, 0.0
    %v2615 = vmax.f32 %v2542, 0.0
    %v2616 = vmax.f32 %v2235, 0.0
    %v2617 = vmax.f32 %v2237, 0.0
    %v2618 = vmax.f32 %v2338, 0.0
    %v2619 = vmax.f32 %v2340, 0.0
    %v2620 = vmax.f32 %v2441, 0.0
    %v2621 = vmax.f32 %v2443, 0.0
    %v2622 = vmax.f32 %v2544, 0.0
    %v2623 = vmax.f32 %v2546, 0.0
    %v2624 = vmax.f32 %v2241, 0.0
    %v2625 = vmax.f32 %v2243, 0.0
    %v2626 = vmax.f32 %v2344, 0.0
    %v2627 = vmax.f32 %v2346, 0.0
    %v2628 = vmax.f32 %v2447, 0.0
    %v2629 = vmax.f32 %v2449, 0.0
    %v2630 = vmax.f32 %v2550, 0.0
    %v2631 = vmax.f32 %v2552, 0.0
    %v2632 = vmax.f32 %v2245, 0.0
    %v2633 = vmax.f32 %v2247, 0.0
    %v2634 = vmax.f32 %v2348, 0.0
    %v2635 = vmax.f32 %v2350, 0.0
    %v2636 = vmax.f32 %v2451, 0.0
    %v2637 = vmax.f32 %v2453, 0.0
    %v2638 = vmax.f32 %v2554, 0.0
    %v2639 = vmax.f32 %v2556, 0.0
    %v2640 = vmax.f32 %v2251, 0.0
    %v2641 = vmax.f32 %v2253, 0.0
    %v2642 = vmax.f32 %v2354, 0.0
    %v2643 = vmax.f32 %v2356, 0.0
    %v2644 = vmax.f32 %v2457, 0.0
    %v2645 = vmax.f32 %v2459, 0.0
    %v2646 = vmax.f32 %v2560, 0.0
    %v2647 = vmax.f32 %v2562, 0.0
    %v2648 = vmax.f32 %v2255, 0.0
    %v2649 = vmax.f32 %v2257, 0.0
    %v2650 = vmax.f32 %v2358, 0.0
    %v2651 = vmax.f32 %v2360, 0.0
    %v2652 = vmax.f32 %v2461, 0.0
    %v2653 = vmax.f32 %v2463, 0.0
    %v2654 = vmax.f32 %v2564, 0.0
    %v2655 = vmax.f32 %v2566, 0.0
    %v2656 = vmax.f32 %v2261, 0.0
    %v2657 = vmax.f32 %v2263, 0.0
    %v2658 = vmax.f32 %v2364, 0.0
    %v2659 = vmax.f32 %v2366, 0.0
    %v2660 = vmax.f32 %v2467, 0.0
    %v2661 = vmax.f32 %v2469, 0.0
    %v2662 = vmax.f32 %v2570, 0.0
    %v2663 = vmax.f32 %v2572, 0.0
    %v2664 = vmax.f32 %v2265, 0.0
    %v2665 = vmax.f32 %v2267, 0.0
    %v2666 = vmax.f32 %v2368, 0.0
    %v2667 = vmax.f32 %v2370, 0.0
    %v2668 = vmax.f32 %v2471, 0.0
    %v2669 = vmax.f32 %v2473, 0.0
    %v2670 = vmax.f32 %v2574, 0.0
    %v2671 = vmax.f32 %v2576, 0.0
    %v2672 = vmax.f32 %v2271, 0.0
    %v2673 = vmax.f32 %v2273, 0.0
    %v2674 = vmax.f32 %v2374, 0.0
    %v2675 = vmax.f32 %v2376, 0.0
    %v2676 = vmax.f32 %v2477, 0.0
    %v2677 = vmax.f32 %v2479, 0.0
    %v2678 = vmax.f32 %v2580, 0.0
    %v2679 = vmax.f32 %v2582, 0.0
    %v2680 = vmax.f32 %v2275, 0.0
    %v2681 = vmax.f32 %v2277, 0.0
    %v2682 = vmax.f32 %v2378, 0.0
    %v2683 = vmax.f32 %v2380, 0.0
    %v2684 = vmax.f32 %v2481, 0.0
    %v2685 = vmax.f32 %v2483, 0.0
    %v2686 = vmax.f32 %v2584, 0.0
    %v2687 = vmax.f32 %v2586, 0.0
    %v2688 = vmax.f32 %v2281, 0.0
    %v2689 = vmax.f32 %v2283, 0.0
    %v2690 = vmax.f32 %v2384, 0.0
    %v2691 = vmax.f32 %v2386, 0.0
    %v2692 = vmax.f32 %v2487, 0.0
    %v2693 = vmax.f32 %v2489, 0.0
    %v2694 = vmax.f32 %v2590, 0.0
    %v2695 = vmax.f32 %v2592, 0.0
    %v2696 = vmax.f32 %v2285, 0.0
    %v2697 = vmax.f32 %v2287, 0.0
    %v2698 = vmax.f32 %v2388, 0.0
    %v2699 = vmax.f32 %v2390, 0.0
    %v2700 = vmax.f32 %v2491, 0.0
    %v2701 = vmax.f32 %v2493, 0.0
    %v2702 = vmax.f32 %v2594, 0.0
    %v2703 = vmax.f32 %v2596, 0.0
    %v2704 = vmax.f32 %v2291, 0.0
    %v2705 = vmax.f32 %v2293, 0.0
    %v2706 = vmax.f32 %v2394, 0.0
    %v2707 = vmax.f32 %v2396, 0.0
    %v2708 = vmax.f32 %v2497, 0.0
    %v2709 = vmax.f32 %v2499, 0.0
    %v2710 = vmax.f32 %v2600, 0.0
    %v2711 = vmax.f32 %v2602, 0.0
    %v2712 = vmax.f32 %v2295, 0.0
    %v2713 = vmax.f32 %v2297, 0.0
    %v2714 = vmax.f32 %v2398, 0.0
    %v2715 = vmax.f32 %v2400, 0.0
    %v2716 = vmax.f32 %v2501, 0.0
    %v2717 = vmax.f32 %v2503, 0.0
    %v2718 = vmax.f32 %v2604, 0.0
    %v2719 = vmax.f32 %v2606, 0.0
    %v2720 = vadd.f32 %v2608, %v2624
    %v2721 = vadd.f32 %v2609, %v2625
    %v2722 = vadd.f32 %v2610, %v2626
    %v2723 = vadd.f32 %v2611, %v2627
    %v2724 = vadd.f32 %v2612, %v2628
    %v2725 = vadd.f32 %v2613, %v2629
    %v2726 = vadd.f32 %v2614, %v2630
    %v2727 = vadd.f32 %v2615, %v2631
    %v2728 = vadd.f32 %v2616, %v2632
    %v2729 = vadd.f32 %v2617, %v2633
    %v2730 = vadd.f32 %v2618, %v2634
    %v2731 = vadd.f32 %v2619, %v2635
    %v2732 = vadd.f32 %v2620, %v2636
    %v2733 = vadd.f32 %v2621, %v2637
    %v2734 = vadd.f32 %v2622, %v2638
    %v2735 = vadd.f32 %v2623, %v2639
    %v2736 = vadd.f32 %v2720, %v2640
    %v2737 = vadd.f32 %v2721, %v2641
    %v2738 = vadd.f32 %v2722, %v2642
    %v2739 = vadd.f32 %v2723, %v2643
    %v2740 = vadd.f32 %v2724, %v2644
    %v2741 = vadd.f32 %v2725, %v2645
    %v2742 = vadd.f32 %v2726, %v2646
    %v2743 = vadd.f32 %v2727, %v2647
    %v2744 = vadd.f32 %v2728, %v2648
    %v2745 = vadd.f32 %v2729, %v2649
    %v2746 = vadd.f32 %v2730, %v2650
    %v2747 = vadd.f32 %v2731, %v2651
    %v2748 = vadd.f32 %v2732, %v2652
    %v2749 = vadd.f32 %v2733, %v2653
    %v2750 = vadd.f32 %v2734, %v2654
    %v2751 = vadd.f32 %v2735, %v2655
    %v2752 = vadd.f32 %v2736, %v2656
    %v2753 = vadd.f32 %v2737, %v2657
    %v2754 = vadd.f32 %v2738, %v2658
    %v2755 = vadd.f32 %v2739, %v2659
    %v2756 = vadd.f32 %v2740, %v2660
    %v2757 = vadd.f32 %v2741, %v2661
    %v2758 = vadd.f32 %v2742, %v2662
    %v2759 = vadd.f32 %v2743, %v2663
    %v2760 = vadd.f32 %v2744, %v2664
    %v2761 = vadd.f32 %v2745, %v2665
    %v2762 = vadd.f32 %v2746, %v2666
    %v2763 = vadd.f32 %v2747, %v2667
    %v2764 = vadd.f32 %v2748, %v2668
    %v2765 = vadd.f32 %v2749, %v2669
    %v2766 = vadd.f32 %v2750, %v2670
    %v2767 = vadd.f32 %v2751, %v2671
    %v2768 = vadd.f32 %v2752, %v2672
    %v2769 = vadd.f32 %v2753, %v2673
    %v2770 = vadd.f32 %v2754, %v2674
    %v2771 = vadd.f32 %v2755, %v2675
    %v2772 = vadd.f32 %v2756, %v2676
    %v2773 = vadd.f32 %v2757, %v2677
    %v2774 = vadd.f32 %v2758, %v2678
    %v2775 = vadd.f32 %v2759, %v2679
    %v2776 = vadd.f32 %v2760, %v2680
    %v2777 = vadd.f32 %v2761, %v2681
    %v2778 = vadd.f32 %v2762, %v2682
    %v2779 = vadd.f32 %v2763, %v2683
    %v2780 = vadd.f32 %v2764, %v2684
    %v2781 = vadd.f32 %v2765, %v2685
    %v2782 = vadd.f32 %v2766, %v2686
    %v2783 = vadd.f32 %v2767, %v2687
    %v2784 = vadd.f32 %v2768, %v2688
    %v2785 = vadd.f32 %v2769, %v2689
    %v2786 = vadd.f32 %v2770, %v2690
    %v2787 = vadd.f32 %v2771, %v2691
    %v2788 = vadd.f32 %v2772, %v2692
    %v2789 = vadd.f32 %v2773, %v2693
    %v2790 = vadd.f32 %v2774, %v2694
    %v2791 = vadd.f32 %v2775, %v2695
    %v2792 = vadd.f32 %v2776, %v2696
    %v2793 = vadd.f32 %v2777, %v2697
    %v2794 = vadd.f32 %v2778, %v2698
    %v2795 = vadd.f32 %v2779, %v2699
    %v2796 = vadd.f32 %v2780, %v2700
    %v2797 = vadd.f32 %v2781, %v2701
    %v2798 = vadd.f32 %v2782, %v2702
    %v2799 = vadd.f32 %v2783, %v2703
    %v2800 = vadd.f32 %v2784, %v2704
    %v2801 = vadd.f32 %v2785, %v2705
    %v2802 = vadd.f32 %v2786, %v2706
    %v2803 = vadd.f32 %v2787, %v2707
    %v2804 = vadd.f32 %v2788, %v2708
    %v2805 = vadd.f32 %v2789, %v2709
    %v2806 = vadd.f32 %v2790, %v2710
    %v2807 = vadd.f32 %v2791, %v2711
    %v2808 = vadd.f32 %v2792, %v2712
    %v2809 = vadd.f32 %v2793, %v2713
    %v2810 = vadd.f32 %v2794, %v2714
    %v2811 = vadd.f32 %v2795, %v2715
    %v2812 = vadd.f32 %v2796, %v2716
    %v2813 = vadd.f32 %v2797, %v2717
    %v2814 = vadd.f32 %v2798, %v2718
    %v2815 = vadd.f32 %v2799, %v2719
    %v2816 = vadd.f32 %v2081, %v2800
    %v2817 = vadd.f32 %v2082, %v2801
    %v2818 = vadd.f32 %v2083, %v2802
    %v2819 = vadd.f32 %v2084, %v2803
    %v2820 = vadd.f32 %v2085, %v2804
    %v2821 = vadd.f32 %v2086, %v2805
    %v2822 = vadd.f32 %v2087, %v2806
    %v2823 = vadd.f32 %v2088, %v2807
    %v2824 = vadd.f32 %v2089, %v2808
    %v2825 = vadd.f32 %v2090, %v2809
    %v2826 = vadd.f32 %v2091, %v2810
    %v2827 = vadd.f32 %v2092, %v2811
    %v2828 = vadd.f32 %v2093, %v2812
    %v2829 = vadd.f32 %v2094, %v2813
    %v2830 = vadd.f32 %v2095, %v2814
    %v2831 = vadd.f32 %v2096, %v2815
    %s2832 = scalar_lea.vmem %s0, 336
    %v2833 = vld [vmem:[%s2832] sm:$0xff]
    %v2834 = vld [vmem:[%s2832 + $0x8] sm:$0xff]
    %v2835 = vld [vmem:[%s2832 + $0x10] sm:$0xff]
    %v2836 = vld [vmem:[%s2832 + $0x18] sm:$0xff]
    %v2837 = vld [vmem:[%s2832 + $0x20] sm:$0xff]
    %v2838 = vld [vmem:[%s2832 + $0x28] sm:$0xff]
    %v2839 = vld [vmem:[%s2832 + $0x30] sm:$0xff]
    %v2840 = vld [vmem:[%s2832 + $0x38] sm:$0xff]
    %v2841 = vld [vmem:[%s2832 + $0x40] sm:$0xff]
    %v2842 = vld [vmem:[%s2832 + $0x48] sm:$0xff]
    %v2843 = vld [vmem:[%s2832 + $0x50] sm:$0xff]
    %v2844 = vld [vmem:[%s2832 + $0x58] sm:$0xff]
    %v2845 = vld [vmem:[%s2832 + $0x60] sm:$0xff]
    %v2846 = vld [vmem:[%s2832 + $0x68] sm:$0xff]
    %v2861 = vunpack.c.l.b16 %v2833
    %v2862 = vunpack.c.h.b16 %v2833
    %v2863 = vunpack.c.l.b16 %v2834
    %v2864 = vunpack.c.h.b16 %v2834
    %v2865 = vunpack.c.l.b16 %v2835
    %v2866 = vunpack.c.h.b16 %v2835
    %v2867 = vunpack.c.l.b16 %v2836
    %v2868 = vunpack.c.h.b16 %v2836
    %v2869 = vunpack.c.l.b16 %v2837
    %v2870 = vunpack.c.h.b16 %v2837
    %v2871 = vunpack.c.l.b16 %v2838
    %v2872 = vunpack.c.h.b16 %v2838
    %v2873 = vunpack.c.l.b16 %v2839
    %v2874 = vunpack.c.h.b16 %v2839
    %v2875 = vunpack.c.l.b16 %v2840
    %v2876 = vunpack.c.h.b16 %v2840
    %v2877 = vunpack.c.l.b16 %v2841
    %v2878 = vunpack.c.h.b16 %v2841
    %v2879 = vunpack.c.l.b16 %v2842
    %v2880 = vunpack.c.h.b16 %v2842
    %v2881 = vunpack.c.l.b16 %v2843
    %v2882 = vunpack.c.h.b16 %v2843
    %v2883 = vunpack.c.l.b16 %v2844
    %v2884 = vunpack.c.h.b16 %v2844
    %v2885 = vunpack.c.l.b16 %v2845
    %v2886 = vunpack.c.h.b16 %v2845
    %v2887 = vunpack.c.l.b16 %v2846
    %v2888 = vunpack.c.h.b16 %v2846
    %v2889 = vpack.c.b16 %v2863, %v2861
    %v2890 = vpack.c.b16 %v2864, %v2862
    %v2891 = vpack.c.b16 %v2867, %v2865
    %v2892 = vpack.c.b16 %v2868, %v2866
    %v2893 = vpack.c.b16 %v2871, %v2869
    %v2894 = vpack.c.b16 %v2872, %v2870
    %v2895 = vpack.c.b16 %v2875, %v2873
    %v2896 = vpack.c.b16 %v2876, %v2874
    %v2897 = vpack.c.b16 %v2879, %v2877
    %v2898 = vpack.c.b16 %v2880, %v2878
    %v2899 = vpack.c.b16 %v2883, %v2881
    %v2900 = vpack.c.b16 %v2884, %v2882
    %v2901 = vpack.c.b16 %v2887, %v2885
    %v2902 = vpack.c.b16 %v2888, %v2886
    %v2911 = vsel %vm720, %v2890, 0
    %v2914 = vsel %vm720, %v2892, 0
    %v2917 = vsel %vm720, %v2894, 0
    %v2920 = vsel %vm720, %v2896, 0
    %v2923 = vsel %vm720, %v2898, 0
    %v2926 = vsel %vm720, %v2900, 0
    %v2929 = vsel %vm720, %v2902, 0
    %2931 = vmatprep.subr.bf16.mxu0 %v529
    %2932 = vmatpush1.bf16.msra.mxu0 %v528
    %2933 = vmatprep.subr.bf16.mxu0 %v537
    %2934 = vmatpush1.bf16.msra.mxu0 %v536
    %2935 = vmatprep.subr.bf16.mxu0 %v545
    %2936 = vmatpush1.bf16.msra.mxu0 %v544
    %2937 = vmatprep.subr.bf16.mxu0 %v553
    %2938 = vmatpush1.bf16.msra.mxu0 %v552
    %2939 = vmatprep.subr.bf16.mxu0 %v561
    %2940 = vmatpush1.bf16.msra.mxu0 %v560
    %2941 = vmatprep.subr.bf16.mxu0 %v569
    %2942 = vmatpush1.bf16.msra.mxu0 %v568
    %2943 = vmatprep.subr.bf16.mxu0 %v577
    %2944 = vmatpush1.bf16.msra.mxu0 %v576
    %2945 = vmatprep.subr.bf16.mxu0 %v585
    %2946 = vmatpush1.bf16.msra.mxu0 %v584
    %2947 = vmatprep.subr.bf16.mxu0 %v593
    %2948 = vmatpush1.bf16.msra.mxu0 %v592
    %2949 = vmatprep.subr.bf16.mxu0 %v601
    %2950 = vmatpush1.bf16.msra.mxu0 %v600
    %2951 = vmatprep.subr.bf16.mxu0 %v609
    %2952 = vmatpush1.bf16.msra.mxu0 %v608
    %2953 = vmatprep.subr.bf16.mxu0 %v617
    %2954 = vmatpush1.bf16.msra.mxu0 %v616
    %2955 = vmatprep.subr.bf16.mxu0 0
    %2956 = vmatpush1.bf16.msra.mxu0 0
    %2957 = vmatprep.subr.bf16.mxu0 0
    %2958 = vmatpush1.bf16.msra.mxu0 0
    %2959 = vmatprep.subr.bf16.mxu0 0
    %2960 = vmatpush1.bf16.msra.mxu0 0
    %2961 = vmatprep.subr.bf16.mxu0 0
    %2962 = vmatpush1.bf16.msra.mxu0 0
    %2963 = vmatprep.mubr.bf16.mxu0 %v2911
    %2964 = vmatmul.mubr.bf16.gmra.mrb[0].mxu0 %v2889
    %v2965 = vpop.f32.mrb[0].mxu0
    %v2966 = vadd.f32 %v140, %v2965
    %v2967 = vpop.f32.mrb[0].mxu0
    %v2968 = vadd.f32 %v144, %v2967
    %v2969 = vpop.f32.mrb[0].mxu0
    %v2970 = vadd.f32 %v140, %v2969
    %v2971 = vpop.f32.mrb[0].mxu0
    %v2972 = vadd.f32 %v144, %v2971
    %2973 = vmatprep.mubr.bf16.mxu0 %v2914
    %2974 = vmatmul.mubr.bf16.gmra.mrb[0].mxu0 %v2891
    %v2975 = vpop.f32.mrb[0].mxu0
    %v2976 = vadd.f32 %v140, %v2975
    %v2977 = vpop.f32.mrb[0].mxu0
    %v2978 = vadd.f32 %v144, %v2977
    %v2979 = vpop.f32.mrb[0].mxu0
    %v2980 = vadd.f32 %v140, %v2979
    %v2981 = vpop.f32.mrb[0].mxu0
    %v2982 = vadd.f32 %v144, %v2981
    %2983 = vmatprep.mubr.bf16.mxu0 %v2917
    %2984 = vmatmul.mubr.bf16.gmra.mrb[0].mxu0 %v2893
    %v2985 = vpop.f32.mrb[0].mxu0
    %v2986 = vadd.f32 %v140, %v2985
    %v2987 = vpop.f32.mrb[0].mxu0
    %v2988 = vadd.f32 %v144, %v2987
    %v2989 = vpop.f32.mrb[0].mxu0
    %v2990 = vadd.f32 %v140, %v2989
    %v2991 = vpop.f32.mrb[0].mxu0
    %v2992 = vadd.f32 %v144, %v2991
    %2993 = vmatprep.mubr.bf16.mxu0 %v2920
    %2994 = vmatmul.mubr.bf16.gmra.mrb[0].mxu0 %v2895
    %v2995 = vpop.f32.mrb[0].mxu0
    %v2996 = vadd.f32 %v140, %v2995
    %v2997 = vpop.f32.mrb[0].mxu0
    %v2998 = vadd.f32 %v144, %v2997
    %v2999 = vpop.f32.mrb[0].mxu0
    %v3000 = vadd.f32 %v140, %v2999
    %v3001 = vpop.f32.mrb[0].mxu0
    %v3002 = vadd.f32 %v144, %v3001
    %3003 = vmatprep.mubr.bf16.mxu0 %v2923
    %3004 = vmatmul.mubr.bf16.gmra.mrb[0].mxu0 %v2897
    %v3005 = vpop.f32.mrb[0].mxu0
    %v3006 = vadd.f32 %v140, %v3005
    %v3007 = vpop.f32.mrb[0].mxu0
    %v3008 = vadd.f32 %v144, %v3007
    %v3009 = vpop.f32.mrb[0].mxu0
    %v3010 = vadd.f32 %v140, %v3009
    %v3011 = vpop.f32.mrb[0].mxu0
    %v3012 = vadd.f32 %v144, %v3011
    %3013 = vmatprep.mubr.bf16.mxu0 %v2926
    %3014 = vmatmul.mubr.bf16.gmra.mrb[0].mxu0 %v2899
    %v3015 = vpop.f32.mrb[0].mxu0
    %v3016 = vadd.f32 %v140, %v3015
    %v3017 = vpop.f32.mrb[0].mxu0
    %v3018 = vadd.f32 %v144, %v3017
    %v3019 = vpop.f32.mrb[0].mxu0
    %v3020 = vadd.f32 %v140, %v3019
    %v3021 = vpop.f32.mrb[0].mxu0
    %v3022 = vadd.f32 %v144, %v3021
    %3023 = vmatprep.mubr.bf16.mxu0 %v2929
    %3024 = vmatmul.mubr.bf16.gmra.mrb[0].mxu0 %v2901
    %v3025 = vpop.f32.mrb[0].mxu0
    %v3026 = vadd.f32 %v140, %v3025
    %v3027 = vpop.f32.mrb[0].mxu0
    %v3028 = vadd.f32 %v144, %v3027
    %v3029 = vpop.f32.mrb[0].mxu0
    %v3030 = vadd.f32 %v140, %v3029
    %v3031 = vpop.f32.mrb[0].mxu0
    %v3032 = vadd.f32 %v144, %v3031
    %3033 = vdwg.mxu0
    %3034 = vmatprep.subr.bf16.mxu0 %v531
    %3035 = vmatpush1.bf16.msra.mxu0 %v530
    %3036 = vmatprep.subr.bf16.mxu0 %v539
    %3037 = vmatpush1.bf16.msra.mxu0 %v538
    %3038 = vmatprep.subr.bf16.mxu0 %v547
    %3039 = vmatpush1.bf16.msra.mxu0 %v546
    %3040 = vmatprep.subr.bf16.mxu0 %v555
    %3041 = vmatpush1.bf16.msra.mxu0 %v554
    %3042 = vmatprep.subr.bf16.mxu0 %v563
    %3043 = vmatpush1.bf16.msra.mxu0 %v562
    %3044 = vmatprep.subr.bf16.mxu0 %v571
    %3045 = vmatpush1.bf16.msra.mxu0 %v570
    %3046 = vmatprep.subr.bf16.mxu0 %v579
    %3047 = vmatpush1.bf16.msra.mxu0 %v578
    %3048 = vmatprep.subr.bf16.mxu0 %v587
    %3049 = vmatpush1.bf16.msra.mxu0 %v586
    %3050 = vmatprep.subr.bf16.mxu0 %v595
    %3051 = vmatpush1.bf16.msra.mxu0 %v594
    %3052 = vmatprep.subr.bf16.mxu0 %v603
    %3053 = vmatpush1.bf16.msra.mxu0 %v602
    %3054 = vmatprep.subr.bf16.mxu0 %v611
    %3055 = vmatpush1.bf16.msra.mxu0 %v610
    %3056 = vmatprep.subr.bf16.mxu0 %v619
    %3057 = vmatpush1.bf16.msra.mxu0 %v618
    %3058 = vmatprep.subr.bf16.mxu0 0
    %3059 = vmatpush1.bf16.msra.mxu0 0
    %3060 = vmatprep.subr.bf16.mxu0 0
    %3061 = vmatpush1.bf16.msra.mxu0 0
    %3062 = vmatprep.subr.bf16.mxu0 0
    %3063 = vmatpush1.bf16.msra.mxu0 0
    %3064 = vmatprep.subr.bf16.mxu0 0
    %3065 = vmatpush1.bf16.msra.mxu0 0
    %3066 = vmatprep.mubr.bf16.mxu0 %v2911
    %3067 = vmatmul.mubr.bf16.gmra.mrb[0].mxu0 %v2889
    %v3068 = vpop.f32.mrb[0].mxu0
    %v3069 = vadd.f32 %v148, %v3068
    %v3070 = vpop.f32.mrb[0].mxu0
    %v3071 = vadd.f32 %v152, %v3070
    %v3072 = vpop.f32.mrb[0].mxu0
    %v3073 = vadd.f32 %v148, %v3072
    %v3074 = vpop.f32.mrb[0].mxu0
    %v3075 = vadd.f32 %v152, %v3074
    %3076 = vmatprep.mubr.bf16.mxu0 %v2914
    %3077 = vmatmul.mubr.bf16.gmra.mrb[0].mxu0 %v2891
    %v3078 = vpop.f32.mrb[0].mxu0
    %v3079 = vadd.f32 %v148, %v3078
    %v3080 = vpop.f32.mrb[0].mxu0
    %v3081 = vadd.f32 %v152, %v3080
    %v3082 = vpop.f32.mrb[0].mxu0
    %v3083 = vadd.f32 %v148, %v3082
    %v3084 = vpop.f32.mrb[0].mxu0
    %v3085 = vadd.f32 %v152, %v3084
    %3086 = vmatprep.mubr.bf16.mxu0 %v2917
    %3087 = vmatmul.mubr.bf16.gmra.mrb[0].mxu0 %v2893
    %v3088 = vpop.f32.mrb[0].mxu0
    %v3089 = vadd.f32 %v148, %v3088
    %v3090 = vpop.f32.mrb[0].mxu0
    %v3091 = vadd.f32 %v152, %v3090
    %v3092 = vpop.f32.mrb[0].mxu0
    %v3093 = vadd.f32 %v148, %v3092
    %v3094 = vpop.f32.mrb[0].mxu0
    %v3095 = vadd.f32 %v152, %v3094
    %3096 = vmatprep.mubr.bf16.mxu0 %v2920
    %3097 = vmatmul.mubr.bf16.gmra.mrb[0].mxu0 %v2895
    %v3098 = vpop.f32.mrb[0].mxu0
    %v3099 = vadd.f32 %v148, %v3098
    %v3100 = vpop.f32.mrb[0].mxu0
    %v3101 = vadd.f32 %v152, %v3100
    %v3102 = vpop.f32.mrb[0].mxu0
    %v3103 = vadd.f32 %v148, %v3102
    %v3104 = vpop.f32.mrb[0].mxu0
    %v3105 = vadd.f32 %v152, %v3104
    %3106 = vmatprep.mubr.bf16.mxu0 %v2923
    %3107 = vmatmul.mubr.bf16.gmra.mrb[0].mxu0 %v2897
    %v3108 = vpop.f32.mrb[0].mxu0
    %v3109 = vadd.f32 %v148, %v3108
    %v3110 = vpop.f32.mrb[0].mxu0
    %v3111 = vadd.f32 %v152, %v3110
    %v3112 = vpop.f32.mrb[0].mxu0
    %v3113 = vadd.f32 %v148, %v3112
    %v3114 = vpop.f32.mrb[0].mxu0
    %v3115 = vadd.f32 %v152, %v3114
    %3116 = vmatprep.mubr.bf16.mxu0 %v2926
    %3117 = vmatmul.mubr.bf16.gmra.mrb[0].mxu0 %v2899
    %v3118 = vpop.f32.mrb[0].mxu0
    %v3119 = vadd.f32 %v148, %v3118
    %v3120 = vpop.f32.mrb[0].mxu0
    %v3121 = vadd.f32 %v152, %v3120
    %v3122 = vpop.f32.mrb[0].mxu0
    %v3123 = vadd.f32 %v148, %v3122
    %v3124 = vpop.f32.mrb[0].mxu0
    %v3125 = vadd.f32 %v152, %v3124
    %3126 = vmatprep.mubr.bf16.mxu0 %v2929
    %3127 = vmatmul.mubr.bf16.gmra.mrb[0].mxu0 %v2901
    %v3128 = vpop.f32.mrb[0].mxu0
    %v3129 = vadd.f32 %v148, %v3128
    %v3130 = vpop.f32.mrb[0].mxu0
    %v3131 = vadd.f32 %v152, %v3130
    %v3132 = vpop.f32.mrb[0].mxu0
    %v3133 = vadd.f32 %v148, %v3132
    %v3134 = vpop.f32.mrb[0].mxu0
    %v3135 = vadd.f32 %v152, %v3134
    %3136 = vdwg.mxu0
    %3137 = vmatprep.subr.bf16.mxu0 %v533
    %3138 = vmatpush1.bf16.msra.mxu0 %v532
    %3139 = vmatprep.subr.bf16.mxu0 %v541
    %3140 = vmatpush1.bf16.msra.mxu0 %v540
    %3141 = vmatprep.subr.bf16.mxu0 %v549
    %3142 = vmatpush1.bf16.msra.mxu0 %v548
    %3143 = vmatprep.subr.bf16.mxu0 %v557
    %3144 = vmatpush1.bf16.msra.mxu0 %v556
    %3145 = vmatprep.subr.bf16.mxu0 %v565
    %3146 = vmatpush1.bf16.msra.mxu0 %v564
    %3147 = vmatprep.subr.bf16.mxu0 %v573
    %3148 = vmatpush1.bf16.msra.mxu0 %v572
    %3149 = vmatprep.subr.bf16.mxu0 %v581
    %3150 = vmatpush1.bf16.msra.mxu0 %v580
    %3151 = vmatprep.subr.bf16.mxu0 %v589
    %3152 = vmatpush1.bf16.msra.mxu0 %v588
    %3153 = vmatprep.subr.bf16.mxu0 %v597
    %3154 = vmatpush1.bf16.msra.mxu0 %v596
    %3155 = vmatprep.subr.bf16.mxu0 %v605
    %3156 = vmatpush1.bf16.msra.mxu0 %v604
    %3157 = vmatprep.subr.bf16.mxu0 %v613
    %3158 = vmatpush1.bf16.msra.mxu0 %v612
    %3159 = vmatprep.subr.bf16.mxu0 %v621
    %3160 = vmatpush1.bf16.msra.mxu0 %v620
    %3161 = vmatprep.subr.bf16.mxu0 0
    %3162 = vmatpush1.bf16.msra.mxu0 0
    %3163 = vmatprep.subr.bf16.mxu0 0
    %3164 = vmatpush1.bf16.msra.mxu0 0
    %3165 = vmatprep.subr.bf16.mxu0 0
    %3166 = vmatpush1.bf16.msra.mxu0 0
    %3167 = vmatprep.subr.bf16.mxu0 0
    %3168 = vmatpush1.bf16.msra.mxu0 0
    %3169 = vmatprep.mubr.bf16.mxu0 %v2911
    %3170 = vmatmul.mubr.bf16.gmra.mrb[0].mxu0 %v2889
    %v3171 = vpop.f32.mrb[0].mxu0
    %v3172 = vadd.f32 %v156, %v3171
    %v3173 = vpop.f32.mrb[0].mxu0
    %v3174 = vadd.f32 %v160, %v3173
    %v3175 = vpop.f32.mrb[0].mxu0
    %v3176 = vadd.f32 %v156, %v3175
    %v3177 = vpop.f32.mrb[0].mxu0
    %v3178 = vadd.f32 %v160, %v3177
    %3179 = vmatprep.mubr.bf16.mxu0 %v2914
    %3180 = vmatmul.mubr.bf16.gmra.mrb[0].mxu0 %v2891
    %v3181 = vpop.f32.mrb[0].mxu0
    %v3182 = vadd.f32 %v156, %v3181
    %v3183 = vpop.f32.mrb[0].mxu0
    %v3184 = vadd.f32 %v160, %v3183
    %v3185 = vpop.f32.mrb[0].mxu0
    %v3186 = vadd.f32 %v156, %v3185
    %v3187 = vpop.f32.mrb[0].mxu0
    %v3188 = vadd.f32 %v160, %v3187
    %3189 = vmatprep.mubr.bf16.mxu0 %v2917
    %3190 = vmatmul.mubr.bf16.gmra.mrb[0].mxu0 %v2893
    %v3191 = vpop.f32.mrb[0].mxu0
    %v3192 = vadd.f32 %v156, %v3191
    %v3193 = vpop.f32.mrb[0].mxu0
    %v3194 = vadd.f32 %v160, %v3193
    %v3195 = vpop.f32.mrb[0].mxu0
    %v3196 = vadd.f32 %v156, %v3195
    %v3197 = vpop.f32.mrb[0].mxu0
    %v3198 = vadd.f32 %v160, %v3197
    %3199 = vmatprep.mubr.bf16.mxu0 %v2920
    %3200 = vmatmul.mubr.bf16.gmra.mrb[0].mxu0 %v2895
    %v3201 = vpop.f32.mrb[0].mxu0
    %v3202 = vadd.f32 %v156, %v3201
    %v3203 = vpop.f32.mrb[0].mxu0
    %v3204 = vadd.f32 %v160, %v3203
    %v3205 = vpop.f32.mrb[0].mxu0
    %v3206 = vadd.f32 %v156, %v3205
    %v3207 = vpop.f32.mrb[0].mxu0
    %v3208 = vadd.f32 %v160, %v3207
    %3209 = vmatprep.mubr.bf16.mxu0 %v2923
    %3210 = vmatmul.mubr.bf16.gmra.mrb[0].mxu0 %v2897
    %v3211 = vpop.f32.mrb[0].mxu0
    %v3212 = vadd.f32 %v156, %v3211
    %v3213 = vpop.f32.mrb[0].mxu0
    %v3214 = vadd.f32 %v160, %v3213
    %v3215 = vpop.f32.mrb[0].mxu0
    %v3216 = vadd.f32 %v156, %v3215
    %v3217 = vpop.f32.mrb[0].mxu0
    %v3218 = vadd.f32 %v160, %v3217
    %3219 = vmatprep.mubr.bf16.mxu0 %v2926
    %3220 = vmatmul.mubr.bf16.gmra.mrb[0].mxu0 %v2899
    %v3221 = vpop.f32.mrb[0].mxu0
    %v3222 = vadd.f32 %v156, %v3221
    %v3223 = vpop.f32.mrb[0].mxu0
    %v3224 = vadd.f32 %v160, %v3223
    %v3225 = vpop.f32.mrb[0].mxu0
    %v3226 = vadd.f32 %v156, %v3225
    %v3227 = vpop.f32.mrb[0].mxu0
    %v3228 = vadd.f32 %v160, %v3227
    %3229 = vmatprep.mubr.bf16.mxu0 %v2929
    %3230 = vmatmul.mubr.bf16.gmra.mrb[0].mxu0 %v2901
    %v3231 = vpop.f32.mrb[0].mxu0
    %v3232 = vadd.f32 %v156, %v3231
    %v3233 = vpop.f32.mrb[0].mxu0
    %v3234 = vadd.f32 %v160, %v3233
    %v3235 = vpop.f32.mrb[0].mxu0
    %v3236 = vadd.f32 %v156, %v3235
    %v3237 = vpop.f32.mrb[0].mxu0
    %v3238 = vadd.f32 %v160, %v3237
    %3239 = vdwg.mxu0
    %3240 = vmatprep.subr.bf16.mxu0 %v535
    %3241 = vmatpush1.bf16.msra.mxu0 %v534
    %3242 = vmatprep.subr.bf16.mxu0 %v543
    %3243 = vmatpush1.bf16.msra.mxu0 %v542
    %3244 = vmatprep.subr.bf16.mxu0 %v551
    %3245 = vmatpush1.bf16.msra.mxu0 %v550
    %3246 = vmatprep.subr.bf16.mxu0 %v559
    %3247 = vmatpush1.bf16.msra.mxu0 %v558
    %3248 = vmatprep.subr.bf16.mxu0 %v567
    %3249 = vmatpush1.bf16.msra.mxu0 %v566
    %3250 = vmatprep.subr.bf16.mxu0 %v575
    %3251 = vmatpush1.bf16.msra.mxu0 %v574
    %3252 = vmatprep.subr.bf16.mxu0 %v583
    %3253 = vmatpush1.bf16.msra.mxu0 %v582
    %3254 = vmatprep.subr.bf16.mxu0 %v591
    %3255 = vmatpush1.bf16.msra.mxu0 %v590
    %3256 = vmatprep.subr.bf16.mxu0 %v599
    %3257 = vmatpush1.bf16.msra.mxu0 %v598
    %3258 = vmatprep.subr.bf16.mxu0 %v607
    %3259 = vmatpush1.bf16.msra.mxu0 %v606
    %3260 = vmatprep.subr.bf16.mxu0 %v615
    %3261 = vmatpush1.bf16.msra.mxu0 %v614
    %3262 = vmatprep.subr.bf16.mxu0 %v623
    %3263 = vmatpush1.bf16.msra.mxu0 %v622
    %3264 = vmatprep.subr.bf16.mxu0 0
    %3265 = vmatpush1.bf16.msra.mxu0 0
    %3266 = vmatprep.subr.bf16.mxu0 0
    %3267 = vmatpush1.bf16.msra.mxu0 0
    %3268 = vmatprep.subr.bf16.mxu0 0
    %3269 = vmatpush1.bf16.msra.mxu0 0
    %3270 = vmatprep.subr.bf16.mxu0 0
    %3271 = vmatpush1.bf16.msra.mxu0 0
    %3272 = vmatprep.mubr.bf16.mxu0 %v2911
    %3273 = vmatmul.mubr.bf16.gmra.mrb[0].mxu0 %v2889
    %v3274 = vpop.f32.mrb[0].mxu0
    %v3275 = vadd.f32 %v164, %v3274
    %v3276 = vpop.f32.mrb[0].mxu0
    %v3277 = vadd.f32 %v168, %v3276
    %v3278 = vpop.f32.mrb[0].mxu0
    %v3279 = vadd.f32 %v164, %v3278
    %v3280 = vpop.f32.mrb[0].mxu0
    %v3281 = vadd.f32 %v168, %v3280
    %3282 = vmatprep.mubr.bf16.mxu0 %v2914
    %3283 = vmatmul.mubr.bf16.gmra.mrb[0].mxu0 %v2891
    %v3284 = vpop.f32.mrb[0].mxu0
    %v3285 = vadd.f32 %v164, %v3284
    %v3286 = vpop.f32.mrb[0].mxu0
    %v3287 = vadd.f32 %v168, %v3286
    %v3288 = vpop.f32.mrb[0].mxu0
    %v3289 = vadd.f32 %v164, %v3288
    %v3290 = vpop.f32.mrb[0].mxu0
    %v3291 = vadd.f32 %v168, %v3290
    %3292 = vmatprep.mubr.bf16.mxu0 %v2917
    %3293 = vmatmul.mubr.bf16.gmra.mrb[0].mxu0 %v2893
    %v3294 = vpop.f32.mrb[0].mxu0
    %v3295 = vadd.f32 %v164, %v3294
    %v3296 = vpop.f32.mrb[0].mxu0
    %v3297 = vadd.f32 %v168, %v3296
    %v3298 = vpop.f32.mrb[0].mxu0
    %v3299 = vadd.f32 %v164, %v3298
    %v3300 = vpop.f32.mrb[0].mxu0
    %v3301 = vadd.f32 %v168, %v3300
    %3302 = vmatprep.mubr.bf16.mxu0 %v2920
    %3303 = vmatmul.mubr.bf16.gmra.mrb[0].mxu0 %v2895
    %v3304 = vpop.f32.mrb[0].mxu0
    %v3305 = vadd.f32 %v164, %v3304
    %v3306 = vpop.f32.mrb[0].mxu0
    %v3307 = vadd.f32 %v168, %v3306
    %v3308 = vpop.f32.mrb[0].mxu0
    %v3309 = vadd.f32 %v164, %v3308
    %v3310 = vpop.f32.mrb[0].mxu0
    %v3311 = vadd.f32 %v168, %v3310
    %3312 = vmatprep.mubr.bf16.mxu0 %v2923
    %3313 = vmatmul.mubr.bf16.gmra.mrb[0].mxu0 %v2897
    %v3314 = vpop.f32.mrb[0].mxu0
    %v3315 = vadd.f32 %v164, %v3314
    %v3316 = vpop.f32.mrb[0].mxu0
    %v3317 = vadd.f32 %v168, %v3316
    %v3318 = vpop.f32.mrb[0].mxu0
    %v3319 = vadd.f32 %v164, %v3318
    %v3320 = vpop.f32.mrb[0].mxu0
    %v3321 = vadd.f32 %v168, %v3320
    %3322 = vmatprep.mubr.bf16.mxu0 %v2926
    %3323 = vmatmul.mubr.bf16.gmra.mrb[0].mxu0 %v2899
    %v3324 = vpop.f32.mrb[0].mxu0
    %v3325 = vadd.f32 %v164, %v3324
    %v3326 = vpop.f32.mrb[0].mxu0
    %v3327 = vadd.f32 %v168, %v3326
    %v3328 = vpop.f32.mrb[0].mxu0
    %v3329 = vadd.f32 %v164, %v3328
    %v3330 = vpop.f32.mrb[0].mxu0
    %v3331 = vadd.f32 %v168, %v3330
    %3332 = vmatprep.mubr.bf16.mxu0 %v2929
    %3333 = vmatmul.mubr.bf16.gmra.mrb[0].mxu0 %v2901
    %v3334 = vpop.f32.mrb[0].mxu0
    %v3335 = vadd.f32 %v164, %v3334
    %v3336 = vpop.f32.mrb[0].mxu0
    %v3337 = vadd.f32 %v168, %v3336
    %v3338 = vpop.f32.mrb[0].mxu0
    %v3339 = vadd.f32 %v164, %v3338
    %v3340 = vpop.f32.mrb[0].mxu0
    %v3341 = vadd.f32 %v168, %v3340
    %3342 = vdwg.mxu0
    %v3343 = vmax.f32 %v2966, 0.0
    %v3344 = vmax.f32 %v2968, 0.0
    %v3345 = vmax.f32 %v3069, 0.0
    %v3346 = vmax.f32 %v3071, 0.0
    %v3347 = vmax.f32 %v3172, 0.0
    %v3348 = vmax.f32 %v3174, 0.0
    %v3349 = vmax.f32 %v3275, 0.0
    %v3350 = vmax.f32 %v3277, 0.0
    %v3351 = vmax.f32 %v2970, 0.0
    %v3352 = vmax.f32 %v2972, 0.0
    %v3353 = vmax.f32 %v3073, 0.0
    %v3354 = vmax.f32 %v3075, 0.0
    %v3355 = vmax.f32 %v3176, 0.0
    %v3356 = vmax.f32 %v3178, 0.0
    %v3357 = vmax.f32 %v3279, 0.0
    %v3358 = vmax.f32 %v3281, 0.0
    %v3359 = vmax.f32 %v2976, 0.0
    %v3360 = vmax.f32 %v2978, 0.0
    %v3361 = vmax.f32 %v3079, 0.0
    %v3362 = vmax.f32 %v3081, 0.0
    %v3363 = vmax.f32 %v3182, 0.0
    %v3364 = vmax.f32 %v3184, 0.0
    %v3365 = vmax.f32 %v3285, 0.0
    %v3366 = vmax.f32 %v3287, 0.0
    %v3367 = vmax.f32 %v2980, 0.0
    %v3368 = vmax.f32 %v2982, 0.0
    %v3369 = vmax.f32 %v3083, 0.0
    %v3370 = vmax.f32 %v3085, 0.0
    %v3371 = vmax.f32 %v3186, 0.0
    %v3372 = vmax.f32 %v3188, 0.0
    %v3373 = vmax.f32 %v3289, 0.0
    %v3374 = vmax.f32 %v3291, 0.0
    %v3375 = vmax.f32 %v2986, 0.0
    %v3376 = vmax.f32 %v2988, 0.0
    %v3377 = vmax.f32 %v3089, 0.0
    %v3378 = vmax.f32 %v3091, 0.0
    %v3379 = vmax.f32 %v3192, 0.0
    %v3380 = vmax.f32 %v3194, 0.0
    %v3381 = vmax.f32 %v3295, 0.0
    %v3382 = vmax.f32 %v3297, 0.0
    %v3383 = vmax.f32 %v2990, 0.0
    %v3384 = vmax.f32 %v2992, 0.0
    %v3385 = vmax.f32 %v3093, 0.0
    %v3386 = vmax.f32 %v3095, 0.0
    %v3387 = vmax.f32 %v3196, 0.0
    %v3388 = vmax.f32 %v3198, 0.0
    %v3389 = vmax.f32 %v3299, 0.0
    %v3390 = vmax.f32 %v3301, 0.0
    %v3391 = vmax.f32 %v2996, 0.0
    %v3392 = vmax.f32 %v2998, 0.0
    %v3393 = vmax.f32 %v3099, 0.0
    %v3394 = vmax.f32 %v3101, 0.0
    %v3395 = vmax.f32 %v3202, 0.0
    %v3396 = vmax.f32 %v3204, 0.0
    %v3397 = vmax.f32 %v3305, 0.0
    %v3398 = vmax.f32 %v3307, 0.0
    %v3399 = vmax.f32 %v3000, 0.0
    %v3400 = vmax.f32 %v3002, 0.0
    %v3401 = vmax.f32 %v3103, 0.0
    %v3402 = vmax.f32 %v3105, 0.0
    %v3403 = vmax.f32 %v3206, 0.0
    %v3404 = vmax.f32 %v3208, 0.0
    %v3405 = vmax.f32 %v3309, 0.0
    %v3406 = vmax.f32 %v3311, 0.0
    %v3407 = vmax.f32 %v3006, 0.0
    %v3408 = vmax.f32 %v3008, 0.0
    %v3409 = vmax.f32 %v3109, 0.0
    %v3410 = vmax.f32 %v3111, 0.0
    %v3411 = vmax.f32 %v3212, 0.0
    %v3412 = vmax.f32 %v3214, 0.0
    %v3413 = vmax.f32 %v3315, 0.0
    %v3414 = vmax.f32 %v3317, 0.0
    %v3415 = vmax.f32 %v3010, 0.0
    %v3416 = vmax.f32 %v3012, 0.0
    %v3417 = vmax.f32 %v3113, 0.0
    %v3418 = vmax.f32 %v3115, 0.0
    %v3419 = vmax.f32 %v3216, 0.0
    %v3420 = vmax.f32 %v3218, 0.0
    %v3421 = vmax.f32 %v3319, 0.0
    %v3422 = vmax.f32 %v3321, 0.0
    %v3423 = vmax.f32 %v3016, 0.0
    %v3424 = vmax.f32 %v3018, 0.0
    %v3425 = vmax.f32 %v3119, 0.0
    %v3426 = vmax.f32 %v3121, 0.0
    %v3427 = vmax.f32 %v3222, 0.0
    %v3428 = vmax.f32 %v3224, 0.0
    %v3429 = vmax.f32 %v3325, 0.0
    %v3430 = vmax.f32 %v3327, 0.0
    %v3431 = vmax.f32 %v3020, 0.0
    %v3432 = vmax.f32 %v3022, 0.0
    %v3433 = vmax.f32 %v3123, 0.0
    %v3434 = vmax.f32 %v3125, 0.0
    %v3435 = vmax.f32 %v3226, 0.0
    %v3436 = vmax.f32 %v3228, 0.0
    %v3437 = vmax.f32 %v3329, 0.0
    %v3438 = vmax.f32 %v3331, 0.0
    %v3439 = vmax.f32 %v3026, 0.0
    %v3440 = vmax.f32 %v3028, 0.0
    %v3441 = vmax.f32 %v3129, 0.0
    %v3442 = vmax.f32 %v3131, 0.0
    %v3443 = vmax.f32 %v3232, 0.0
    %v3444 = vmax.f32 %v3234, 0.0
    %v3445 = vmax.f32 %v3335, 0.0
    %v3446 = vmax.f32 %v3337, 0.0
    %v3447 = vmax.f32 %v3030, 0.0
    %v3448 = vmax.f32 %v3032, 0.0
    %v3449 = vmax.f32 %v3133, 0.0
    %v3450 = vmax.f32 %v3135, 0.0
    %v3451 = vmax.f32 %v3236, 0.0
    %v3452 = vmax.f32 %v3238, 0.0
    %v3453 = vmax.f32 %v3339, 0.0
    %v3454 = vmax.f32 %v3341, 0.0
    %v3455 = vadd.f32 %v3343, %v3359
    %v3456 = vadd.f32 %v3344, %v3360
    %v3457 = vadd.f32 %v3345, %v3361
    %v3458 = vadd.f32 %v3346, %v3362
    %v3459 = vadd.f32 %v3347, %v3363
    %v3460 = vadd.f32 %v3348, %v3364
    %v3461 = vadd.f32 %v3349, %v3365
    %v3462 = vadd.f32 %v3350, %v3366
    %v3463 = vadd.f32 %v3351, %v3367
    %v3464 = vadd.f32 %v3352, %v3368
    %v3465 = vadd.f32 %v3353, %v3369
    %v3466 = vadd.f32 %v3354, %v3370
    %v3467 = vadd.f32 %v3355, %v3371
    %v3468 = vadd.f32 %v3356, %v3372
    %v3469 = vadd.f32 %v3357, %v3373
    %v3470 = vadd.f32 %v3358, %v3374
    %v3471 = vadd.f32 %v3455, %v3375
    %v3472 = vadd.f32 %v3456, %v3376
    %v3473 = vadd.f32 %v3457, %v3377
    %v3474 = vadd.f32 %v3458, %v3378
    %v3475 = vadd.f32 %v3459, %v3379
    %v3476 = vadd.f32 %v3460, %v3380
    %v3477 = vadd.f32 %v3461, %v3381
    %v3478 = vadd.f32 %v3462, %v3382
    %v3479 = vadd.f32 %v3463, %v3383
    %v3480 = vadd.f32 %v3464, %v3384
    %v3481 = vadd.f32 %v3465, %v3385
    %v3482 = vadd.f32 %v3466, %v3386
    %v3483 = vadd.f32 %v3467, %v3387
    %v3484 = vadd.f32 %v3468, %v3388
    %v3485 = vadd.f32 %v3469, %v3389
    %v3486 = vadd.f32 %v3470, %v3390
    %v3487 = vadd.f32 %v3471, %v3391
    %v3488 = vadd.f32 %v3472, %v3392
    %v3489 = vadd.f32 %v3473, %v3393
    %v3490 = vadd.f32 %v3474, %v3394
    %v3491 = vadd.f32 %v3475, %v3395
    %v3492 = vadd.f32 %v3476, %v3396
    %v3493 = vadd.f32 %v3477, %v3397
    %v3494 = vadd.f32 %v3478, %v3398
    %v3495 = vadd.f32 %v3479, %v3399
    %v3496 = vadd.f32 %v3480, %v3400
    %v3497 = vadd.f32 %v3481, %v3401
    %v3498 = vadd.f32 %v3482, %v3402
    %v3499 = vadd.f32 %v3483, %v3403
    %v3500 = vadd.f32 %v3484, %v3404
    %v3501 = vadd.f32 %v3485, %v3405
    %v3502 = vadd.f32 %v3486, %v3406
    %v3503 = vadd.f32 %v3487, %v3407
    %v3504 = vadd.f32 %v3488, %v3408
    %v3505 = vadd.f32 %v3489, %v3409
    %v3506 = vadd.f32 %v3490, %v3410
    %v3507 = vadd.f32 %v3491, %v3411
    %v3508 = vadd.f32 %v3492, %v3412
    %v3509 = vadd.f32 %v3493, %v3413
    %v3510 = vadd.f32 %v3494, %v3414
    %v3511 = vadd.f32 %v3495, %v3415
    %v3512 = vadd.f32 %v3496, %v3416
    %v3513 = vadd.f32 %v3497, %v3417
    %v3514 = vadd.f32 %v3498, %v3418
    %v3515 = vadd.f32 %v3499, %v3419
    %v3516 = vadd.f32 %v3500, %v3420
    %v3517 = vadd.f32 %v3501, %v3421
    %v3518 = vadd.f32 %v3502, %v3422
    %v3519 = vadd.f32 %v3503, %v3423
    %v3520 = vadd.f32 %v3504, %v3424
    %v3521 = vadd.f32 %v3505, %v3425
    %v3522 = vadd.f32 %v3506, %v3426
    %v3523 = vadd.f32 %v3507, %v3427
    %v3524 = vadd.f32 %v3508, %v3428
    %v3525 = vadd.f32 %v3509, %v3429
    %v3526 = vadd.f32 %v3510, %v3430
    %v3527 = vadd.f32 %v3511, %v3431
    %v3528 = vadd.f32 %v3512, %v3432
    %v3529 = vadd.f32 %v3513, %v3433
    %v3530 = vadd.f32 %v3514, %v3434
    %v3531 = vadd.f32 %v3515, %v3435
    %v3532 = vadd.f32 %v3516, %v3436
    %v3533 = vadd.f32 %v3517, %v3437
    %v3534 = vadd.f32 %v3518, %v3438
    %v3535 = vadd.f32 %v3519, %v3439
    %v3536 = vadd.f32 %v3520, %v3440
    %v3537 = vadd.f32 %v3521, %v3441
    %v3538 = vadd.f32 %v3522, %v3442
    %v3539 = vadd.f32 %v3523, %v3443
    %v3540 = vadd.f32 %v3524, %v3444
    %v3541 = vadd.f32 %v3525, %v3445
    %v3542 = vadd.f32 %v3526, %v3446
    %v3543 = vadd.f32 %v3527, %v3447
    %v3544 = vadd.f32 %v3528, %v3448
    %v3545 = vadd.f32 %v3529, %v3449
    %v3546 = vadd.f32 %v3530, %v3450
    %v3547 = vadd.f32 %v3531, %v3451
    %v3548 = vadd.f32 %v3532, %v3452
    %v3549 = vadd.f32 %v3533, %v3453
    %v3550 = vadd.f32 %v3534, %v3454
    %v3551 = vadd.f32 %v2816, %v3535
    %v3552 = vadd.f32 %v2817, %v3536
    %v3553 = vadd.f32 %v2818, %v3537
    %v3554 = vadd.f32 %v2819, %v3538
    %v3555 = vadd.f32 %v2820, %v3539
    %v3556 = vadd.f32 %v2821, %v3540
    %v3557 = vadd.f32 %v2822, %v3541
    %v3558 = vadd.f32 %v2823, %v3542
    %v3559 = vadd.f32 %v2824, %v3543
    %v3560 = vadd.f32 %v2825, %v3544
    %v3561 = vadd.f32 %v2826, %v3545
    %v3562 = vadd.f32 %v2827, %v3546
    %v3563 = vadd.f32 %v2828, %v3547
    %v3564 = vadd.f32 %v2829, %v3548
    %v3565 = vadd.f32 %v2830, %v3549
    %v3566 = vadd.f32 %v2831, %v3550
    %s3567 = scalar_lea.vmem %s0, 448
    %v3568 = vld [vmem:[%s3567] sm:$0xff]
    %v3569 = vld [vmem:[%s3567 + $0x8] sm:$0xff]
    %v3570 = vld [vmem:[%s3567 + $0x10] sm:$0xff]
    %v3571 = vld [vmem:[%s3567 + $0x18] sm:$0xff]
    %v3572 = vld [vmem:[%s3567 + $0x20] sm:$0xff]
    %v3573 = vld [vmem:[%s3567 + $0x28] sm:$0xff]
    %v3574 = vld [vmem:[%s3567 + $0x30] sm:$0xff]
    %v3575 = vld [vmem:[%s3567 + $0x38] sm:$0xff]
    %v3576 = vld [vmem:[%s3567 + $0x40] sm:$0xff]
    %v3577 = vld [vmem:[%s3567 + $0x48] sm:$0xff]
    %v3578 = vld [vmem:[%s3567 + $0x50] sm:$0xff]
    %v3579 = vld [vmem:[%s3567 + $0x58] sm:$0xff]
    %v3580 = vld [vmem:[%s3567 + $0x60] sm:$0xff]
    %v3581 = vld [vmem:[%s3567 + $0x68] sm:$0xff]
    %v3596 = vunpack.c.l.b16 %v3568
    %v3597 = vunpack.c.h.b16 %v3568
    %v3598 = vunpack.c.l.b16 %v3569
    %v3599 = vunpack.c.h.b16 %v3569
    %v3600 = vunpack.c.l.b16 %v3570
    %v3601 = vunpack.c.h.b16 %v3570
    %v3602 = vunpack.c.l.b16 %v3571
    %v3603 = vunpack.c.h.b16 %v3571
    %v3604 = vunpack.c.l.b16 %v3572
    %v3605 = vunpack.c.h.b16 %v3572
    %v3606 = vunpack.c.l.b16 %v3573
    %v3607 = vunpack.c.h.b16 %v3573
    %v3608 = vunpack.c.l.b16 %v3574
    %v3609 = vunpack.c.h.b16 %v3574
    %v3610 = vunpack.c.l.b16 %v3575
    %v3611 = vunpack.c.h.b16 %v3575
    %v3612 = vunpack.c.l.b16 %v3576
    %v3613 = vunpack.c.h.b16 %v3576
    %v3614 = vunpack.c.l.b16 %v3577
    %v3615 = vunpack.c.h.b16 %v3577
    %v3616 = vunpack.c.l.b16 %v3578
    %v3617 = vunpack.c.h.b16 %v3578
    %v3618 = vunpack.c.l.b16 %v3579
    %v3619 = vunpack.c.h.b16 %v3579
    %v3620 = vunpack.c.l.b16 %v3580
    %v3621 = vunpack.c.h.b16 %v3580
    %v3622 = vunpack.c.l.b16 %v3581
    %v3623 = vunpack.c.h.b16 %v3581
    %v3624 = vpack.c.b16 %v3598, %v3596
    %v3625 = vpack.c.b16 %v3599, %v3597
    %v3626 = vpack.c.b16 %v3602, %v3600
    %v3627 = vpack.c.b16 %v3603, %v3601
    %v3628 = vpack.c.b16 %v3606, %v3604
    %v3629 = vpack.c.b16 %v3607, %v3605
    %v3630 = vpack.c.b16 %v3610, %v3608
    %v3631 = vpack.c.b16 %v3611, %v3609
    %v3632 = vpack.c.b16 %v3614, %v3612
    %v3633 = vpack.c.b16 %v3615, %v3613
    %v3634 = vpack.c.b16 %v3618, %v3616
    %v3635 = vpack.c.b16 %v3619, %v3617
    %v3636 = vpack.c.b16 %v3622, %v3620
    %v3637 = vpack.c.b16 %v3623, %v3621
    %v3646 = vsel %vm720, %v3625, 0
    %v3649 = vsel %vm720, %v3627, 0
    %v3652 = vsel %vm720, %v3629, 0
    %v3655 = vsel %vm720, %v3631, 0
    %v3658 = vsel %vm720, %v3633, 0
    %v3661 = vsel %vm720, %v3635, 0
    %v3664 = vsel %vm720, %v3637, 0
    %3666 = vmatprep.subr.bf16.mxu0 %v529
    %3667 = vmatpush1.bf16.msra.mxu0 %v528
    %3668 = vmatprep.subr.bf16.mxu0 %v537
    %3669 = vmatpush1.bf16.msra.mxu0 %v536
    %3670 = vmatprep.subr.bf16.mxu0 %v545
    %3671 = vmatpush1.bf16.msra.mxu0 %v544
    %3672 = vmatprep.subr.bf16.mxu0 %v553
    %3673 = vmatpush1.bf16.msra.mxu0 %v552
    %3674 = vmatprep.subr.bf16.mxu0 %v561
    %3675 = vmatpush1.bf16.msra.mxu0 %v560
    %3676 = vmatprep.subr.bf16.mxu0 %v569
    %3677 = vmatpush1.bf16.msra.mxu0 %v568
    %3678 = vmatprep.subr.bf16.mxu0 %v577
    %3679 = vmatpush1.bf16.msra.mxu0 %v576
    %3680 = vmatprep.subr.bf16.mxu0 %v585
    %3681 = vmatpush1.bf16.msra.mxu0 %v584
    %3682 = vmatprep.subr.bf16.mxu0 %v593
    %3683 = vmatpush1.bf16.msra.mxu0 %v592
    %3684 = vmatprep.subr.bf16.mxu0 %v601
    %3685 = vmatpush1.bf16.msra.mxu0 %v600
    %3686 = vmatprep.subr.bf16.mxu0 %v609
    %3687 = vmatpush1.bf16.msra.mxu0 %v608
    %3688 = vmatprep.subr.bf16.mxu0 %v617
    %3689 = vmatpush1.bf16.msra.mxu0 %v616
    %3690 = vmatprep.subr.bf16.mxu0 0
    %3691 = vmatpush1.bf16.msra.mxu0 0
    %3692 = vmatprep.subr.bf16.mxu0 0
    %3693 = vmatpush1.bf16.msra.mxu0 0
    %3694 = vmatprep.subr.bf16.mxu0 0
    %3695 = vmatpush1.bf16.msra.mxu0 0
    %3696 = vmatprep.subr.bf16.mxu0 0
    %3697 = vmatpush1.bf16.msra.mxu0 0
    %3698 = vmatprep.mubr.bf16.mxu0 %v3646
    %3699 = vmatmul.mubr.bf16.gmra.mrb[0].mxu0 %v3624
    %v3700 = vpop.f32.mrb[0].mxu0
    %v3701 = vadd.f32 %v140, %v3700
    %v3702 = vpop.f32.mrb[0].mxu0
    %v3703 = vadd.f32 %v144, %v3702
    %v3704 = vpop.f32.mrb[0].mxu0
    %v3705 = vadd.f32 %v140, %v3704
    %v3706 = vpop.f32.mrb[0].mxu0
    %v3707 = vadd.f32 %v144, %v3706
    %3708 = vmatprep.mubr.bf16.mxu0 %v3649
    %3709 = vmatmul.mubr.bf16.gmra.mrb[0].mxu0 %v3626
    %v3710 = vpop.f32.mrb[0].mxu0
    %v3711 = vadd.f32 %v140, %v3710
    %v3712 = vpop.f32.mrb[0].mxu0
    %v3713 = vadd.f32 %v144, %v3712
    %v3714 = vpop.f32.mrb[0].mxu0
    %v3715 = vadd.f32 %v140, %v3714
    %v3716 = vpop.f32.mrb[0].mxu0
    %v3717 = vadd.f32 %v144, %v3716
    %3718 = vmatprep.mubr.bf16.mxu0 %v3652
    %3719 = vmatmul.mubr.bf16.gmra.mrb[0].mxu0 %v3628
    %v3720 = vpop.f32.mrb[0].mxu0
    %v3721 = vadd.f32 %v140, %v3720
    %v3722 = vpop.f32.mrb[0].mxu0
    %v3723 = vadd.f32 %v144, %v3722
    %v3724 = vpop.f32.mrb[0].mxu0
    %v3725 = vadd.f32 %v140, %v3724
    %v3726 = vpop.f32.mrb[0].mxu0
    %v3727 = vadd.f32 %v144, %v3726
    %3728 = vmatprep.mubr.bf16.mxu0 %v3655
    %3729 = vmatmul.mubr.bf16.gmra.mrb[0].mxu0 %v3630
    %v3730 = vpop.f32.mrb[0].mxu0
    %v3731 = vadd.f32 %v140, %v3730
    %v3732 = vpop.f32.mrb[0].mxu0
    %v3733 = vadd.f32 %v144, %v3732
    %v3734 = vpop.f32.mrb[0].mxu0
    %v3735 = vadd.f32 %v140, %v3734
    %v3736 = vpop.f32.mrb[0].mxu0
    %v3737 = vadd.f32 %v144, %v3736
    %3738 = vmatprep.mubr.bf16.mxu0 %v3658
    %3739 = vmatmul.mubr.bf16.gmra.mrb[0].mxu0 %v3632
    %v3740 = vpop.f32.mrb[0].mxu0
    %v3741 = vadd.f32 %v140, %v3740
    %v3742 = vpop.f32.mrb[0].mxu0
    %v3743 = vadd.f32 %v144, %v3742
    %v3744 = vpop.f32.mrb[0].mxu0
    %v3745 = vadd.f32 %v140, %v3744
    %v3746 = vpop.f32.mrb[0].mxu0
    %v3747 = vadd.f32 %v144, %v3746
    %3748 = vmatprep.mubr.bf16.mxu0 %v3661
    %3749 = vmatmul.mubr.bf16.gmra.mrb[0].mxu0 %v3634
    %v3750 = vpop.f32.mrb[0].mxu0
    %v3751 = vadd.f32 %v140, %v3750
    %v3752 = vpop.f32.mrb[0].mxu0
    %v3753 = vadd.f32 %v144, %v3752
    %v3754 = vpop.f32.mrb[0].mxu0
    %v3755 = vadd.f32 %v140, %v3754
    %v3756 = vpop.f32.mrb[0].mxu0
    %v3757 = vadd.f32 %v144, %v3756
    %3758 = vmatprep.mubr.bf16.mxu0 %v3664
    %3759 = vmatmul.mubr.bf16.gmra.mrb[0].mxu0 %v3636
    %v3760 = vpop.f32.mrb[0].mxu0
    %v3761 = vadd.f32 %v140, %v3760
    %v3762 = vpop.f32.mrb[0].mxu0
    %v3763 = vadd.f32 %v144, %v3762
    %v3764 = vpop.f32.mrb[0].mxu0
    %v3765 = vadd.f32 %v140, %v3764
    %v3766 = vpop.f32.mrb[0].mxu0
    %v3767 = vadd.f32 %v144, %v3766
    %3768 = vdwg.mxu0
    %3769 = vmatprep.subr.bf16.mxu0 %v531
    %3770 = vmatpush1.bf16.msra.mxu0 %v530
    %3771 = vmatprep.subr.bf16.mxu0 %v539
    %3772 = vmatpush1.bf16.msra.mxu0 %v538
    %3773 = vmatprep.subr.bf16.mxu0 %v547
    %3774 = vmatpush1.bf16.msra.mxu0 %v546
    %3775 = vmatprep.subr.bf16.mxu0 %v555
    %3776 = vmatpush1.bf16.msra.mxu0 %v554
    %3777 = vmatprep.subr.bf16.mxu0 %v563
    %3778 = vmatpush1.bf16.msra.mxu0 %v562
    %3779 = vmatprep.subr.bf16.mxu0 %v571
    %3780 = vmatpush1.bf16.msra.mxu0 %v570
    %3781 = vmatprep.subr.bf16.mxu0 %v579
    %3782 = vmatpush1.bf16.msra.mxu0 %v578
    %3783 = vmatprep.subr.bf16.mxu0 %v587
    %3784 = vmatpush1.bf16.msra.mxu0 %v586
    %3785 = vmatprep.subr.bf16.mxu0 %v595
    %3786 = vmatpush1.bf16.msra.mxu0 %v594
    %3787 = vmatprep.subr.bf16.mxu0 %v603
    %3788 = vmatpush1.bf16.msra.mxu0 %v602
    %3789 = vmatprep.subr.bf16.mxu0 %v611
    %3790 = vmatpush1.bf16.msra.mxu0 %v610
    %3791 = vmatprep.subr.bf16.mxu0 %v619
    %3792 = vmatpush1.bf16.msra.mxu0 %v618
    %3793 = vmatprep.subr.bf16.mxu0 0
    %3794 = vmatpush1.bf16.msra.mxu0 0
    %3795 = vmatprep.subr.bf16.mxu0 0
    %3796 = vmatpush1.bf16.msra.mxu0 0
    %3797 = vmatprep.subr.bf16.mxu0 0
    %3798 = vmatpush1.bf16.msra.mxu0 0
    %3799 = vmatprep.subr.bf16.mxu0 0
    %3800 = vmatpush1.bf16.msra.mxu0 0
    %3801 = vmatprep.mubr.bf16.mxu0 %v3646
    %3802 = vmatmul.mubr.bf16.gmra.mrb[0].mxu0 %v3624
    %v3803 = vpop.f32.mrb[0].mxu0
    %v3804 = vadd.f32 %v148, %v3803
    %v3805 = vpop.f32.mrb[0].mxu0
    %v3806 = vadd.f32 %v152, %v3805
    %v3807 = vpop.f32.mrb[0].mxu0
    %v3808 = vadd.f32 %v148, %v3807
    %v3809 = vpop.f32.mrb[0].mxu0
    %v3810 = vadd.f32 %v152, %v3809
    %3811 = vmatprep.mubr.bf16.mxu0 %v3649
    %3812 = vmatmul.mubr.bf16.gmra.mrb[0].mxu0 %v3626
    %v3813 = vpop.f32.mrb[0].mxu0
    %v3814 = vadd.f32 %v148, %v3813
    %v3815 = vpop.f32.mrb[0].mxu0
    %v3816 = vadd.f32 %v152, %v3815
    %v3817 = vpop.f32.mrb[0].mxu0
    %v3818 = vadd.f32 %v148, %v3817
    %v3819 = vpop.f32.mrb[0].mxu0
    %v3820 = vadd.f32 %v152, %v3819
    %3821 = vmatprep.mubr.bf16.mxu0 %v3652
    %3822 = vmatmul.mubr.bf16.gmra.mrb[0].mxu0 %v3628
    %v3823 = vpop.f32.mrb[0].mxu0
    %v3824 = vadd.f32 %v148, %v3823
    %v3825 = vpop.f32.mrb[0].mxu0
    %v3826 = vadd.f32 %v152, %v3825
    %v3827 = vpop.f32.mrb[0].mxu0
    %v3828 = vadd.f32 %v148, %v3827
    %v3829 = vpop.f32.mrb[0].mxu0
    %v3830 = vadd.f32 %v152, %v3829
    %3831 = vmatprep.mubr.bf16.mxu0 %v3655
    %3832 = vmatmul.mubr.bf16.gmra.mrb[0].mxu0 %v3630
    %v3833 = vpop.f32.mrb[0].mxu0
    %v3834 = vadd.f32 %v148, %v3833
    %v3835 = vpop.f32.mrb[0].mxu0
    %v3836 = vadd.f32 %v152, %v3835
    %v3837 = vpop.f32.mrb[0].mxu0
    %v3838 = vadd.f32 %v148, %v3837
    %v3839 = vpop.f32.mrb[0].mxu0
    %v3840 = vadd.f32 %v152, %v3839
    %3841 = vmatprep.mubr.bf16.mxu0 %v3658
    %3842 = vmatmul.mubr.bf16.gmra.mrb[0].mxu0 %v3632
    %v3843 = vpop.f32.mrb[0].mxu0
    %v3844 = vadd.f32 %v148, %v3843
    %v3845 = vpop.f32.mrb[0].mxu0
    %v3846 = vadd.f32 %v152, %v3845
    %v3847 = vpop.f32.mrb[0].mxu0
    %v3848 = vadd.f32 %v148, %v3847
    %v3849 = vpop.f32.mrb[0].mxu0
    %v3850 = vadd.f32 %v152, %v3849
    %3851 = vmatprep.mubr.bf16.mxu0 %v3661
    %3852 = vmatmul.mubr.bf16.gmra.mrb[0].mxu0 %v3634
    %v3853 = vpop.f32.mrb[0].mxu0
    %v3854 = vadd.f32 %v148, %v3853
    %v3855 = vpop.f32.mrb[0].mxu0
    %v3856 = vadd.f32 %v152, %v3855
    %v3857 = vpop.f32.mrb[0].mxu0
    %v3858 = vadd.f32 %v148, %v3857
    %v3859 = vpop.f32.mrb[0].mxu0
    %v3860 = vadd.f32 %v152, %v3859
    %3861 = vmatprep.mubr.bf16.mxu0 %v3664
    %3862 = vmatmul.mubr.bf16.gmra.mrb[0].mxu0 %v3636
    %v3863 = vpop.f32.mrb[0].mxu0
    %v3864 = vadd.f32 %v148, %v3863
    %v3865 = vpop.f32.mrb[0].mxu0
    %v3866 = vadd.f32 %v152, %v3865
    %v3867 = vpop.f32.mrb[0].mxu0
    %v3868 = vadd.f32 %v148, %v3867
    %v3869 = vpop.f32.mrb[0].mxu0
    %v3870 = vadd.f32 %v152, %v3869
    %3871 = vdwg.mxu0
    %3872 = vmatprep.subr.bf16.mxu0 %v533
    %3873 = vmatpush1.bf16.msra.mxu0 %v532
    %3874 = vmatprep.subr.bf16.mxu0 %v541
    %3875 = vmatpush1.bf16.msra.mxu0 %v540
    %3876 = vmatprep.subr.bf16.mxu0 %v549
    %3877 = vmatpush1.bf16.msra.mxu0 %v548
    %3878 = vmatprep.subr.bf16.mxu0 %v557
    %3879 = vmatpush1.bf16.msra.mxu0 %v556
    %3880 = vmatprep.subr.bf16.mxu0 %v565
    %3881 = vmatpush1.bf16.msra.mxu0 %v564
    %3882 = vmatprep.subr.bf16.mxu0 %v573
    %3883 = vmatpush1.bf16.msra.mxu0 %v572
    %3884 = vmatprep.subr.bf16.mxu0 %v581
    %3885 = vmatpush1.bf16.msra.mxu0 %v580
    %3886 = vmatprep.subr.bf16.mxu0 %v589
    %3887 = vmatpush1.bf16.msra.mxu0 %v588
    %3888 = vmatprep.subr.bf16.mxu0 %v597
    %3889 = vmatpush1.bf16.msra.mxu0 %v596
    %3890 = vmatprep.subr.bf16.mxu0 %v605
    %3891 = vmatpush1.bf16.msra.mxu0 %v604
    %3892 = vmatprep.subr.bf16.mxu0 %v613
    %3893 = vmatpush1.bf16.msra.mxu0 %v612
    %3894 = vmatprep.subr.bf16.mxu0 %v621
    %3895 = vmatpush1.bf16.msra.mxu0 %v620
    %3896 = vmatprep.subr.bf16.mxu0 0
    %3897 = vmatpush1.bf16.msra.mxu0 0
    %3898 = vmatprep.subr.bf16.mxu0 0
    %3899 = vmatpush1.bf16.msra.mxu0 0
    %3900 = vmatprep.subr.bf16.mxu0 0
    %3901 = vmatpush1.bf16.msra.mxu0 0
    %3902 = vmatprep.subr.bf16.mxu0 0
    %3903 = vmatpush1.bf16.msra.mxu0 0
    %3904 = vmatprep.mubr.bf16.mxu0 %v3646
    %3905 = vmatmul.mubr.bf16.gmra.mrb[0].mxu0 %v3624
    %v3906 = vpop.f32.mrb[0].mxu0
    %v3907 = vadd.f32 %v156, %v3906
    %v3908 = vpop.f32.mrb[0].mxu0
    %v3909 = vadd.f32 %v160, %v3908
    %v3910 = vpop.f32.mrb[0].mxu0
    %v3911 = vadd.f32 %v156, %v3910
    %v3912 = vpop.f32.mrb[0].mxu0
    %v3913 = vadd.f32 %v160, %v3912
    %3914 = vmatprep.mubr.bf16.mxu0 %v3649
    %3915 = vmatmul.mubr.bf16.gmra.mrb[0].mxu0 %v3626
    %v3916 = vpop.f32.mrb[0].mxu0
    %v3917 = vadd.f32 %v156, %v3916
    %v3918 = vpop.f32.mrb[0].mxu0
    %v3919 = vadd.f32 %v160, %v3918
    %v3920 = vpop.f32.mrb[0].mxu0
    %v3921 = vadd.f32 %v156, %v3920
    %v3922 = vpop.f32.mrb[0].mxu0
    %v3923 = vadd.f32 %v160, %v3922
    %3924 = vmatprep.mubr.bf16.mxu0 %v3652
    %3925 = vmatmul.mubr.bf16.gmra.mrb[0].mxu0 %v3628
    %v3926 = vpop.f32.mrb[0].mxu0
    %v3927 = vadd.f32 %v156, %v3926
    %v3928 = vpop.f32.mrb[0].mxu0
    %v3929 = vadd.f32 %v160, %v3928
    %v3930 = vpop.f32.mrb[0].mxu0
    %v3931 = vadd.f32 %v156, %v3930
    %v3932 = vpop.f32.mrb[0].mxu0
    %v3933 = vadd.f32 %v160, %v3932
    %3934 = vmatprep.mubr.bf16.mxu0 %v3655
    %3935 = vmatmul.mubr.bf16.gmra.mrb[0].mxu0 %v3630
    %v3936 = vpop.f32.mrb[0].mxu0
    %v3937 = vadd.f32 %v156, %v3936
    %v3938 = vpop.f32.mrb[0].mxu0
    %v3939 = vadd.f32 %v160, %v3938
    %v3940 = vpop.f32.mrb[0].mxu0
    %v3941 = vadd.f32 %v156, %v3940
    %v3942 = vpop.f32.mrb[0].mxu0
    %v3943 = vadd.f32 %v160, %v3942
    %3944 = vmatprep.mubr.bf16.mxu0 %v3658
    %3945 = vmatmul.mubr.bf16.gmra.mrb[0].mxu0 %v3632
    %v3946 = vpop.f32.mrb[0].mxu0
    %v3947 = vadd.f32 %v156, %v3946
    %v3948 = vpop.f32.mrb[0].mxu0
    %v3949 = vadd.f32 %v160, %v3948
    %v3950 = vpop.f32.mrb[0].mxu0
    %v3951 = vadd.f32 %v156, %v3950
    %v3952 = vpop.f32.mrb[0].mxu0
    %v3953 = vadd.f32 %v160, %v3952
    %3954 = vmatprep.mubr.bf16.mxu0 %v3661
    %3955 = vmatmul.mubr.bf16.gmra.mrb[0].mxu0 %v3634
    %v3956 = vpop.f32.mrb[0].mxu0
    %v3957 = vadd.f32 %v156, %v3956
    %v3958 = vpop.f32.mrb[0].mxu0
    %v3959 = vadd.f32 %v160, %v3958
    %v3960 = vpop.f32.mrb[0].mxu0
    %v3961 = vadd.f32 %v156, %v3960
    %v3962 = vpop.f32.mrb[0].mxu0
    %v3963 = vadd.f32 %v160, %v3962
    %3964 = vmatprep.mubr.bf16.mxu0 %v3664
    %3965 = vmatmul.mubr.bf16.gmra.mrb[0].mxu0 %v3636
    %v3966 = vpop.f32.mrb[0].mxu0
    %v3967 = vadd.f32 %v156, %v3966
    %v3968 = vpop.f32.mrb[0].mxu0
    %v3969 = vadd.f32 %v160, %v3968
    %v3970 = vpop.f32.mrb[0].mxu0
    %v3971 = vadd.f32 %v156, %v3970
    %v3972 = vpop.f32.mrb[0].mxu0
    %v3973 = vadd.f32 %v160, %v3972
    %3974 = vdwg.mxu0
    %3975 = vmatprep.subr.bf16.mxu0 %v535
    %3976 = vmatpush1.bf16.msra.mxu0 %v534
    %3977 = vmatprep.subr.bf16.mxu0 %v543
    %3978 = vmatpush1.bf16.msra.mxu0 %v542
    %3979 = vmatprep.subr.bf16.mxu0 %v551
    %3980 = vmatpush1.bf16.msra.mxu0 %v550
    %3981 = vmatprep.subr.bf16.mxu0 %v559
    %3982 = vmatpush1.bf16.msra.mxu0 %v558
    %3983 = vmatprep.subr.bf16.mxu0 %v567
    %3984 = vmatpush1.bf16.msra.mxu0 %v566
    %3985 = vmatprep.subr.bf16.mxu0 %v575
    %3986 = vmatpush1.bf16.msra.mxu0 %v574
    %3987 = vmatprep.subr.bf16.mxu0 %v583
    %3988 = vmatpush1.bf16.msra.mxu0 %v582
    %3989 = vmatprep.subr.bf16.mxu0 %v591
    %3990 = vmatpush1.bf16.msra.mxu0 %v590
    %3991 = vmatprep.subr.bf16.mxu0 %v599
    %3992 = vmatpush1.bf16.msra.mxu0 %v598
    %3993 = vmatprep.subr.bf16.mxu0 %v607
    %3994 = vmatpush1.bf16.msra.mxu0 %v606
    %3995 = vmatprep.subr.bf16.mxu0 %v615
    %3996 = vmatpush1.bf16.msra.mxu0 %v614
    %3997 = vmatprep.subr.bf16.mxu0 %v623
    %3998 = vmatpush1.bf16.msra.mxu0 %v622
    %3999 = vmatprep.subr.bf16.mxu0 0
    %4000 = vmatpush1.bf16.msra.mxu0 0
    %4001 = vmatprep.subr.bf16.mxu0 0
    %4002 = vmatpush1.bf16.msra.mxu0 0
    %4003 = vmatprep.subr.bf16.mxu0 0
    %4004 = vmatpush1.bf16.msra.mxu0 0
    %4005 = vmatprep.subr.bf16.mxu0 0
    %4006 = vmatpush1.bf16.msra.mxu0 0
    %4007 = vmatprep.mubr.bf16.mxu0 %v3646
    %4008 = vmatmul.mubr.bf16.gmra.mrb[0].mxu0 %v3624
    %v4009 = vpop.f32.mrb[0].mxu0
    %v4010 = vadd.f32 %v164, %v4009
    %v4011 = vpop.f32.mrb[0].mxu0
    %v4012 = vadd.f32 %v168, %v4011
    %v4013 = vpop.f32.mrb[0].mxu0
    %v4014 = vadd.f32 %v164, %v4013
    %v4015 = vpop.f32.mrb[0].mxu0
    %v4016 = vadd.f32 %v168, %v4015
    %4017 = vmatprep.mubr.bf16.mxu0 %v3649
    %4018 = vmatmul.mubr.bf16.gmra.mrb[0].mxu0 %v3626
    %v4019 = vpop.f32.mrb[0].mxu0
    %v4020 = vadd.f32 %v164, %v4019
    %v4021 = vpop.f32.mrb[0].mxu0
    %v4022 = vadd.f32 %v168, %v4021
    %v4023 = vpop.f32.mrb[0].mxu0
    %v4024 = vadd.f32 %v164, %v4023
    %v4025 = vpop.f32.mrb[0].mxu0
    %v4026 = vadd.f32 %v168, %v4025
    %4027 = vmatprep.mubr.bf16.mxu0 %v3652
    %4028 = vmatmul.mubr.bf16.gmra.mrb[0].mxu0 %v3628
    %v4029 = vpop.f32.mrb[0].mxu0
    %v4030 = vadd.f32 %v164, %v4029
    %v4031 = vpop.f32.mrb[0].mxu0
    %v4032 = vadd.f32 %v168, %v4031
    %v4033 = vpop.f32.mrb[0].mxu0
    %v4034 = vadd.f32 %v164, %v4033
    %v4035 = vpop.f32.mrb[0].mxu0
    %v4036 = vadd.f32 %v168, %v4035
    %4037 = vmatprep.mubr.bf16.mxu0 %v3655
    %4038 = vmatmul.mubr.bf16.gmra.mrb[0].mxu0 %v3630
    %v4039 = vpop.f32.mrb[0].mxu0
    %v4040 = vadd.f32 %v164, %v4039
    %v4041 = vpop.f32.mrb[0].mxu0
    %v4042 = vadd.f32 %v168, %v4041
    %v4043 = vpop.f32.mrb[0].mxu0
    %v4044 = vadd.f32 %v164, %v4043
    %v4045 = vpop.f32.mrb[0].mxu0
    %v4046 = vadd.f32 %v168, %v4045
    %4047 = vmatprep.mubr.bf16.mxu0 %v3658
    %4048 = vmatmul.mubr.bf16.gmra.mrb[0].mxu0 %v3632
    %v4049 = vpop.f32.mrb[0].mxu0
    %v4050 = vadd.f32 %v164, %v4049
    %v4051 = vpop.f32.mrb[0].mxu0
    %v4052 = vadd.f32 %v168, %v4051
    %v4053 = vpop.f32.mrb[0].mxu0
    %v4054 = vadd.f32 %v164, %v4053
    %v4055 = vpop.f32.mrb[0].mxu0
    %v4056 = vadd.f32 %v168, %v4055
    %4057 = vmatprep.mubr.bf16.mxu0 %v3661
    %4058 = vmatmul.mubr.bf16.gmra.mrb[0].mxu0 %v3634
    %v4059 = vpop.f32.mrb[0].mxu0
    %v4060 = vadd.f32 %v164, %v4059
    %v4061 = vpop.f32.mrb[0].mxu0
    %v4062 = vadd.f32 %v168, %v4061
    %v4063 = vpop.f32.mrb[0].mxu0
    %v4064 = vadd.f32 %v164, %v4063
    %v4065 = vpop.f32.mrb[0].mxu0
    %v4066 = vadd.f32 %v168, %v4065
    %4067 = vmatprep.mubr.bf16.mxu0 %v3664
    %4068 = vmatmul.mubr.bf16.gmra.mrb[0].mxu0 %v3636
    %v4069 = vpop.f32.mrb[0].mxu0
    %v4070 = vadd.f32 %v164, %v4069
    %v4071 = vpop.f32.mrb[0].mxu0
    %v4072 = vadd.f32 %v168, %v4071
    %v4073 = vpop.f32.mrb[0].mxu0
    %v4074 = vadd.f32 %v164, %v4073
    %v4075 = vpop.f32.mrb[0].mxu0
    %v4076 = vadd.f32 %v168, %v4075
    %4077 = vdwg.mxu0
    %v4078 = vmax.f32 %v3701, 0.0
    %v4079 = vmax.f32 %v3703, 0.0
    %v4080 = vmax.f32 %v3804, 0.0
    %v4081 = vmax.f32 %v3806, 0.0
    %v4082 = vmax.f32 %v3907, 0.0
    %v4083 = vmax.f32 %v3909, 0.0
    %v4084 = vmax.f32 %v4010, 0.0
    %v4085 = vmax.f32 %v4012, 0.0
    %v4086 = vmax.f32 %v3705, 0.0
    %v4087 = vmax.f32 %v3707, 0.0
    %v4088 = vmax.f32 %v3808, 0.0
    %v4089 = vmax.f32 %v3810, 0.0
    %v4090 = vmax.f32 %v3911, 0.0
    %v4091 = vmax.f32 %v3913, 0.0
    %v4092 = vmax.f32 %v4014, 0.0
    %v4093 = vmax.f32 %v4016, 0.0
    %v4094 = vmax.f32 %v3711, 0.0
    %v4095 = vmax.f32 %v3713, 0.0
    %v4096 = vmax.f32 %v3814, 0.0
    %v4097 = vmax.f32 %v3816, 0.0
    %v4098 = vmax.f32 %v3917, 0.0
    %v4099 = vmax.f32 %v3919, 0.0
    %v4100 = vmax.f32 %v4020, 0.0
    %v4101 = vmax.f32 %v4022, 0.0
    %v4102 = vmax.f32 %v3715, 0.0
    %v4103 = vmax.f32 %v3717, 0.0
    %v4104 = vmax.f32 %v3818, 0.0
    %v4105 = vmax.f32 %v3820, 0.0
    %v4106 = vmax.f32 %v3921, 0.0
    %v4107 = vmax.f32 %v3923, 0.0
    %v4108 = vmax.f32 %v4024, 0.0
    %v4109 = vmax.f32 %v4026, 0.0
    %v4110 = vmax.f32 %v3721, 0.0
    %v4111 = vmax.f32 %v3723, 0.0
    %v4112 = vmax.f32 %v3824, 0.0
    %v4113 = vmax.f32 %v3826, 0.0
    %v4114 = vmax.f32 %v3927, 0.0
    %v4115 = vmax.f32 %v3929, 0.0
    %v4116 = vmax.f32 %v4030, 0.0
    %v4117 = vmax.f32 %v4032, 0.0
    %v4118 = vmax.f32 %v3725, 0.0
    %v4119 = vmax.f32 %v3727, 0.0
    %v4120 = vmax.f32 %v3828, 0.0
    %v4121 = vmax.f32 %v3830, 0.0
    %v4122 = vmax.f32 %v3931, 0.0
    %v4123 = vmax.f32 %v3933, 0.0
    %v4124 = vmax.f32 %v4034, 0.0
    %v4125 = vmax.f32 %v4036, 0.0
    %v4126 = vmax.f32 %v3731, 0.0
    %v4127 = vmax.f32 %v3733, 0.0
    %v4128 = vmax.f32 %v3834, 0.0
    %v4129 = vmax.f32 %v3836, 0.0
    %v4130 = vmax.f32 %v3937, 0.0
    %v4131 = vmax.f32 %v3939, 0.0
    %v4132 = vmax.f32 %v4040, 0.0
    %v4133 = vmax.f32 %v4042, 0.0
    %v4134 = vmax.f32 %v3735, 0.0
    %v4135 = vmax.f32 %v3737, 0.0
    %v4136 = vmax.f32 %v3838, 0.0
    %v4137 = vmax.f32 %v3840, 0.0
    %v4138 = vmax.f32 %v3941, 0.0
    %v4139 = vmax.f32 %v3943, 0.0
    %v4140 = vmax.f32 %v4044, 0.0
    %v4141 = vmax.f32 %v4046, 0.0
    %v4142 = vmax.f32 %v3741, 0.0
    %v4143 = vmax.f32 %v3743, 0.0
    %v4144 = vmax.f32 %v3844, 0.0
    %v4145 = vmax.f32 %v3846, 0.0
    %v4146 = vmax.f32 %v3947, 0.0
    %v4147 = vmax.f32 %v3949, 0.0
    %v4148 = vmax.f32 %v4050, 0.0
    %v4149 = vmax.f32 %v4052, 0.0
    %v4150 = vmax.f32 %v3745, 0.0
    %v4151 = vmax.f32 %v3747, 0.0
    %v4152 = vmax.f32 %v3848, 0.0
    %v4153 = vmax.f32 %v3850, 0.0
    %v4154 = vmax.f32 %v3951, 0.0
    %v4155 = vmax.f32 %v3953, 0.0
    %v4156 = vmax.f32 %v4054, 0.0
    %v4157 = vmax.f32 %v4056, 0.0
    %v4158 = vmax.f32 %v3751, 0.0
    %v4159 = vmax.f32 %v3753, 0.0
    %v4160 = vmax.f32 %v3854, 0.0
    %v4161 = vmax.f32 %v3856, 0.0
    %v4162 = vmax.f32 %v3957, 0.0
    %v4163 = vmax.f32 %v3959, 0.0
    %v4164 = vmax.f32 %v4060, 0.0
    %v4165 = vmax.f32 %v4062, 0.0
    %v4166 = vmax.f32 %v3755, 0.0
    %v4167 = vmax.f32 %v3757, 0.0
    %v4168 = vmax.f32 %v3858, 0.0
    %v4169 = vmax.f32 %v3860, 0.0
    %v4170 = vmax.f32 %v3961, 0.0
    %v4171 = vmax.f32 %v3963, 0.0
    %v4172 = vmax.f32 %v4064, 0.0
    %v4173 = vmax.f32 %v4066, 0.0
    %v4174 = vmax.f32 %v3761, 0.0
    %v4175 = vmax.f32 %v3763, 0.0
    %v4176 = vmax.f32 %v3864, 0.0
    %v4177 = vmax.f32 %v3866, 0.0
    %v4178 = vmax.f32 %v3967, 0.0
    %v4179 = vmax.f32 %v3969, 0.0
    %v4180 = vmax.f32 %v4070, 0.0
    %v4181 = vmax.f32 %v4072, 0.0
    %v4182 = vmax.f32 %v3765, 0.0
    %v4183 = vmax.f32 %v3767, 0.0
    %v4184 = vmax.f32 %v3868, 0.0
    %v4185 = vmax.f32 %v3870, 0.0
    %v4186 = vmax.f32 %v3971, 0.0
    %v4187 = vmax.f32 %v3973, 0.0
    %v4188 = vmax.f32 %v4074, 0.0
    %v4189 = vmax.f32 %v4076, 0.0
    %v4190 = vadd.f32 %v4078, %v4094
    %v4191 = vadd.f32 %v4079, %v4095
    %v4192 = vadd.f32 %v4080, %v4096
    %v4193 = vadd.f32 %v4081, %v4097
    %v4194 = vadd.f32 %v4082, %v4098
    %v4195 = vadd.f32 %v4083, %v4099
    %v4196 = vadd.f32 %v4084, %v4100
    %v4197 = vadd.f32 %v4085, %v4101
    %v4198 = vadd.f32 %v4086, %v4102
    %v4199 = vadd.f32 %v4087, %v4103
    %v4200 = vadd.f32 %v4088, %v4104
    %v4201 = vadd.f32 %v4089, %v4105
    %v4202 = vadd.f32 %v4090, %v4106
    %v4203 = vadd.f32 %v4091, %v4107
    %v4204 = vadd.f32 %v4092, %v4108
    %v4205 = vadd.f32 %v4093, %v4109
    %v4206 = vadd.f32 %v4190, %v4110
    %v4207 = vadd.f32 %v4191, %v4111
    %v4208 = vadd.f32 %v4192, %v4112
    %v4209 = vadd.f32 %v4193, %v4113
    %v4210 = vadd.f32 %v4194, %v4114
    %v4211 = vadd.f32 %v4195, %v4115
    %v4212 = vadd.f32 %v4196, %v4116
    %v4213 = vadd.f32 %v4197, %v4117
    %v4214 = vadd.f32 %v4198, %v4118
    %v4215 = vadd.f32 %v4199, %v4119
    %v4216 = vadd.f32 %v4200, %v4120
    %v4217 = vadd.f32 %v4201, %v4121
    %v4218 = vadd.f32 %v4202, %v4122
    %v4219 = vadd.f32 %v4203, %v4123
    %v4220 = vadd.f32 %v4204, %v4124
    %v4221 = vadd.f32 %v4205, %v4125
    %v4222 = vadd.f32 %v4206, %v4126
    %v4223 = vadd.f32 %v4207, %v4127
    %v4224 = vadd.f32 %v4208, %v4128
    %v4225 = vadd.f32 %v4209, %v4129
    %v4226 = vadd.f32 %v4210, %v4130
    %v4227 = vadd.f32 %v4211, %v4131
    %v4228 = vadd.f32 %v4212, %v4132
    %v4229 = vadd.f32 %v4213, %v4133
    %v4230 = vadd.f32 %v4214, %v4134
    %v4231 = vadd.f32 %v4215, %v4135
    %v4232 = vadd.f32 %v4216, %v4136
    %v4233 = vadd.f32 %v4217, %v4137
    %v4234 = vadd.f32 %v4218, %v4138
    %v4235 = vadd.f32 %v4219, %v4139
    %v4236 = vadd.f32 %v4220, %v4140
    %v4237 = vadd.f32 %v4221, %v4141
    %v4238 = vadd.f32 %v4222, %v4142
    %v4239 = vadd.f32 %v4223, %v4143
    %v4240 = vadd.f32 %v4224, %v4144
    %v4241 = vadd.f32 %v4225, %v4145
    %v4242 = vadd.f32 %v4226, %v4146
    %v4243 = vadd.f32 %v4227, %v4147
    %v4244 = vadd.f32 %v4228, %v4148
    %v4245 = vadd.f32 %v4229, %v4149
    %v4246 = vadd.f32 %v4230, %v4150
    %v4247 = vadd.f32 %v4231, %v4151
    %v4248 = vadd.f32 %v4232, %v4152
    %v4249 = vadd.f32 %v4233, %v4153
    %v4250 = vadd.f32 %v4234, %v4154
    %v4251 = vadd.f32 %v4235, %v4155
    %v4252 = vadd.f32 %v4236, %v4156
    %v4253 = vadd.f32 %v4237, %v4157
    %v4254 = vadd.f32 %v4238, %v4158
    %v4255 = vadd.f32 %v4239, %v4159
    %v4256 = vadd.f32 %v4240, %v4160
    %v4257 = vadd.f32 %v4241, %v4161
    %v4258 = vadd.f32 %v4242, %v4162
    %v4259 = vadd.f32 %v4243, %v4163
    %v4260 = vadd.f32 %v4244, %v4164
    %v4261 = vadd.f32 %v4245, %v4165
    %v4262 = vadd.f32 %v4246, %v4166
    %v4263 = vadd.f32 %v4247, %v4167
    %v4264 = vadd.f32 %v4248, %v4168
    %v4265 = vadd.f32 %v4249, %v4169
    %v4266 = vadd.f32 %v4250, %v4170
    %v4267 = vadd.f32 %v4251, %v4171
    %v4268 = vadd.f32 %v4252, %v4172
    %v4269 = vadd.f32 %v4253, %v4173
    %v4270 = vadd.f32 %v4254, %v4174
    %v4271 = vadd.f32 %v4255, %v4175
    %v4272 = vadd.f32 %v4256, %v4176
    %v4273 = vadd.f32 %v4257, %v4177
    %v4274 = vadd.f32 %v4258, %v4178
    %v4275 = vadd.f32 %v4259, %v4179
    %v4276 = vadd.f32 %v4260, %v4180
    %v4277 = vadd.f32 %v4261, %v4181
    %v4278 = vadd.f32 %v4262, %v4182
    %v4279 = vadd.f32 %v4263, %v4183
    %v4280 = vadd.f32 %v4264, %v4184
    %v4281 = vadd.f32 %v4265, %v4185
    %v4282 = vadd.f32 %v4266, %v4186
    %v4283 = vadd.f32 %v4267, %v4187
    %v4284 = vadd.f32 %v4268, %v4188
    %v4285 = vadd.f32 %v4269, %v4189
    %v4286 = vadd.f32 %v3551, %v4270
    %v4287 = vadd.f32 %v3552, %v4271
    %v4288 = vadd.f32 %v3553, %v4272
    %v4289 = vadd.f32 %v3554, %v4273
    %v4290 = vadd.f32 %v3555, %v4274
    %v4291 = vadd.f32 %v3556, %v4275
    %v4292 = vadd.f32 %v3557, %v4276
    %v4293 = vadd.f32 %v3558, %v4277
    %v4294 = vadd.f32 %v3559, %v4278
    %v4295 = vadd.f32 %v3560, %v4279
    %v4296 = vadd.f32 %v3561, %v4280
    %v4297 = vadd.f32 %v3562, %v4281
    %v4298 = vadd.f32 %v3563, %v4282
    %v4299 = vadd.f32 %v3564, %v4283
    %v4300 = vadd.f32 %v3565, %v4284
    %v4301 = vadd.f32 %v3566, %v4285
    %s4302 = scalar_lea.vmem %s0, 560
    %v4303 = vld [vmem:[%s4302] sm:$0xff]
    %v4304 = vld [vmem:[%s4302 + $0x8] sm:$0xff]
    %v4305 = vld [vmem:[%s4302 + $0x10] sm:$0xff]
    %v4306 = vld [vmem:[%s4302 + $0x18] sm:$0xff]
    %v4307 = vld [vmem:[%s4302 + $0x20] sm:$0xff]
    %v4308 = vld [vmem:[%s4302 + $0x28] sm:$0xff]
    %v4309 = vld [vmem:[%s4302 + $0x30] sm:$0xff]
    %v4310 = vld [vmem:[%s4302 + $0x38] sm:$0xff]
    %v4311 = vld [vmem:[%s4302 + $0x40] sm:$0xff]
    %v4312 = vld [vmem:[%s4302 + $0x48] sm:$0xff]
    %v4313 = vld [vmem:[%s4302 + $0x50] sm:$0xff]
    %v4314 = vld [vmem:[%s4302 + $0x58] sm:$0xff]
    %v4315 = vld [vmem:[%s4302 + $0x60] sm:$0xff]
    %v4316 = vld [vmem:[%s4302 + $0x68] sm:$0xff]
    %v4331 = vunpack.c.l.b16 %v4303
    %v4332 = vunpack.c.h.b16 %v4303
    %v4333 = vunpack.c.l.b16 %v4304
    %v4334 = vunpack.c.h.b16 %v4304
    %v4335 = vunpack.c.l.b16 %v4305
    %v4336 = vunpack.c.h.b16 %v4305
    %v4337 = vunpack.c.l.b16 %v4306
    %v4338 = vunpack.c.h.b16 %v4306
    %v4339 = vunpack.c.l.b16 %v4307
    %v4340 = vunpack.c.h.b16 %v4307
    %v4341 = vunpack.c.l.b16 %v4308
    %v4342 = vunpack.c.h.b16 %v4308
    %v4343 = vunpack.c.l.b16 %v4309
    %v4344 = vunpack.c.h.b16 %v4309
    %v4345 = vunpack.c.l.b16 %v4310
    %v4346 = vunpack.c.h.b16 %v4310
    %v4347 = vunpack.c.l.b16 %v4311
    %v4348 = vunpack.c.h.b16 %v4311
    %v4349 = vunpack.c.l.b16 %v4312
    %v4350 = vunpack.c.h.b16 %v4312
    %v4351 = vunpack.c.l.b16 %v4313
    %v4352 = vunpack.c.h.b16 %v4313
    %v4353 = vunpack.c.l.b16 %v4314
    %v4354 = vunpack.c.h.b16 %v4314
    %v4355 = vunpack.c.l.b16 %v4315
    %v4356 = vunpack.c.h.b16 %v4315
    %v4357 = vunpack.c.l.b16 %v4316
    %v4358 = vunpack.c.h.b16 %v4316
    %v4359 = vpack.c.b16 %v4333, %v4331
    %v4360 = vpack.c.b16 %v4334, %v4332
    %v4361 = vpack.c.b16 %v4337, %v4335
    %v4362 = vpack.c.b16 %v4338, %v4336
    %v4363 = vpack.c.b16 %v4341, %v4339
    %v4364 = vpack.c.b16 %v4342, %v4340
    %v4365 = vpack.c.b16 %v4345, %v4343
    %v4366 = vpack.c.b16 %v4346, %v4344
    %v4367 = vpack.c.b16 %v4349, %v4347
    %v4368 = vpack.c.b16 %v4350, %v4348
    %v4369 = vpack.c.b16 %v4353, %v4351
    %v4370 = vpack.c.b16 %v4354, %v4352
    %v4371 = vpack.c.b16 %v4357, %v4355
    %v4372 = vpack.c.b16 %v4358, %v4356
    %v4381 = vsel %vm720, %v4360, 0
    %v4384 = vsel %vm720, %v4362, 0
    %v4387 = vsel %vm720, %v4364, 0
    %v4390 = vsel %vm720, %v4366, 0
    %v4393 = vsel %vm720, %v4368, 0
    %v4396 = vsel %vm720, %v4370, 0
    %v4399 = vsel %vm720, %v4372, 0
    %4401 = vmatprep.subr.bf16.mxu0 %v529
    %4402 = vmatpush1.bf16.msra.mxu0 %v528
    %4403 = vmatprep.subr.bf16.mxu0 %v537
    %4404 = vmatpush1.bf16.msra.mxu0 %v536
    %4405 = vmatprep.subr.bf16.mxu0 %v545
    %4406 = vmatpush1.bf16.msra.mxu0 %v544
    %4407 = vmatprep.subr.bf16.mxu0 %v553
    %4408 = vmatpush1.bf16.msra.mxu0 %v552
    %4409 = vmatprep.subr.bf16.mxu0 %v561
    %4410 = vmatpush1.bf16.msra.mxu0 %v560
    %4411 = vmatprep.subr.bf16.mxu0 %v569
    %4412 = vmatpush1.bf16.msra.mxu0 %v568
    %4413 = vmatprep.subr.bf16.mxu0 %v577
    %4414 = vmatpush1.bf16.msra.mxu0 %v576
    %4415 = vmatprep.subr.bf16.mxu0 %v585
    %4416 = vmatpush1.bf16.msra.mxu0 %v584
    %4417 = vmatprep.subr.bf16.mxu0 %v593
    %4418 = vmatpush1.bf16.msra.mxu0 %v592
    %4419 = vmatprep.subr.bf16.mxu0 %v601
    %4420 = vmatpush1.bf16.msra.mxu0 %v600
    %4421 = vmatprep.subr.bf16.mxu0 %v609
    %4422 = vmatpush1.bf16.msra.mxu0 %v608
    %4423 = vmatprep.subr.bf16.mxu0 %v617
    %4424 = vmatpush1.bf16.msra.mxu0 %v616
    %4425 = vmatprep.subr.bf16.mxu0 0
    %4426 = vmatpush1.bf16.msra.mxu0 0
    %4427 = vmatprep.subr.bf16.mxu0 0
    %4428 = vmatpush1.bf16.msra.mxu0 0
    %4429 = vmatprep.subr.bf16.mxu0 0
    %4430 = vmatpush1.bf16.msra.mxu0 0
    %4431 = vmatprep.subr.bf16.mxu0 0
    %4432 = vmatpush1.bf16.msra.mxu0 0
    %4433 = vmatprep.mubr.bf16.mxu0 %v4381
    %4434 = vmatmul.mubr.bf16.gmra.mrb[0].mxu0 %v4359
    %v4435 = vpop.f32.mrb[0].mxu0
    %v4436 = vadd.f32 %v140, %v4435
    %v4437 = vpop.f32.mrb[0].mxu0
    %v4438 = vadd.f32 %v144, %v4437
    %v4439 = vpop.f32.mrb[0].mxu0
    %v4440 = vadd.f32 %v140, %v4439
    %v4441 = vpop.f32.mrb[0].mxu0
    %v4442 = vadd.f32 %v144, %v4441
    %4443 = vmatprep.mubr.bf16.mxu0 %v4384
    %4444 = vmatmul.mubr.bf16.gmra.mrb[0].mxu0 %v4361
    %v4445 = vpop.f32.mrb[0].mxu0
    %v4446 = vadd.f32 %v140, %v4445
    %v4447 = vpop.f32.mrb[0].mxu0
    %v4448 = vadd.f32 %v144, %v4447
    %v4449 = vpop.f32.mrb[0].mxu0
    %v4450 = vadd.f32 %v140, %v4449
    %v4451 = vpop.f32.mrb[0].mxu0
    %v4452 = vadd.f32 %v144, %v4451
    %4453 = vmatprep.mubr.bf16.mxu0 %v4387
    %4454 = vmatmul.mubr.bf16.gmra.mrb[0].mxu0 %v4363
    %v4455 = vpop.f32.mrb[0].mxu0
    %v4456 = vadd.f32 %v140, %v4455
    %v4457 = vpop.f32.mrb[0].mxu0
    %v4458 = vadd.f32 %v144, %v4457
    %v4459 = vpop.f32.mrb[0].mxu0
    %v4460 = vadd.f32 %v140, %v4459
    %v4461 = vpop.f32.mrb[0].mxu0
    %v4462 = vadd.f32 %v144, %v4461
    %4463 = vmatprep.mubr.bf16.mxu0 %v4390
    %4464 = vmatmul.mubr.bf16.gmra.mrb[0].mxu0 %v4365
    %v4465 = vpop.f32.mrb[0].mxu0
    %v4466 = vadd.f32 %v140, %v4465
    %v4467 = vpop.f32.mrb[0].mxu0
    %v4468 = vadd.f32 %v144, %v4467
    %v4469 = vpop.f32.mrb[0].mxu0
    %v4470 = vadd.f32 %v140, %v4469
    %v4471 = vpop.f32.mrb[0].mxu0
    %v4472 = vadd.f32 %v144, %v4471
    %4473 = vmatprep.mubr.bf16.mxu0 %v4393
    %4474 = vmatmul.mubr.bf16.gmra.mrb[0].mxu0 %v4367
    %v4475 = vpop.f32.mrb[0].mxu0
    %v4476 = vadd.f32 %v140, %v4475
    %v4477 = vpop.f32.mrb[0].mxu0
    %v4478 = vadd.f32 %v144, %v4477
    %v4479 = vpop.f32.mrb[0].mxu0
    %v4480 = vadd.f32 %v140, %v4479
    %v4481 = vpop.f32.mrb[0].mxu0
    %v4482 = vadd.f32 %v144, %v4481
    %4483 = vmatprep.mubr.bf16.mxu0 %v4396
    %4484 = vmatmul.mubr.bf16.gmra.mrb[0].mxu0 %v4369
    %v4485 = vpop.f32.mrb[0].mxu0
    %v4486 = vadd.f32 %v140, %v4485
    %v4487 = vpop.f32.mrb[0].mxu0
    %v4488 = vadd.f32 %v144, %v4487
    %v4489 = vpop.f32.mrb[0].mxu0
    %v4490 = vadd.f32 %v140, %v4489
    %v4491 = vpop.f32.mrb[0].mxu0
    %v4492 = vadd.f32 %v144, %v4491
    %4493 = vmatprep.mubr.bf16.mxu0 %v4399
    %4494 = vmatmul.mubr.bf16.gmra.mrb[0].mxu0 %v4371
    %v4495 = vpop.f32.mrb[0].mxu0
    %v4496 = vadd.f32 %v140, %v4495
    %v4497 = vpop.f32.mrb[0].mxu0
    %v4498 = vadd.f32 %v144, %v4497
    %v4499 = vpop.f32.mrb[0].mxu0
    %v4500 = vadd.f32 %v140, %v4499
    %v4501 = vpop.f32.mrb[0].mxu0
    %v4502 = vadd.f32 %v144, %v4501
    %4503 = vdwg.mxu0
    %4504 = vmatprep.subr.bf16.mxu0 %v531
    %4505 = vmatpush1.bf16.msra.mxu0 %v530
    %4506 = vmatprep.subr.bf16.mxu0 %v539
    %4507 = vmatpush1.bf16.msra.mxu0 %v538
    %4508 = vmatprep.subr.bf16.mxu0 %v547
    %4509 = vmatpush1.bf16.msra.mxu0 %v546
    %4510 = vmatprep.subr.bf16.mxu0 %v555
    %4511 = vmatpush1.bf16.msra.mxu0 %v554
    %4512 = vmatprep.subr.bf16.mxu0 %v563
    %4513 = vmatpush1.bf16.msra.mxu0 %v562
    %4514 = vmatprep.subr.bf16.mxu0 %v571
    %4515 = vmatpush1.bf16.msra.mxu0 %v570
    %4516 = vmatprep.subr.bf16.mxu0 %v579
    %4517 = vmatpush1.bf16.msra.mxu0 %v578
    %4518 = vmatprep.subr.bf16.mxu0 %v587
    %4519 = vmatpush1.bf16.msra.mxu0 %v586
    %4520 = vmatprep.subr.bf16.mxu0 %v595
    %4521 = vmatpush1.bf16.msra.mxu0 %v594
    %4522 = vmatprep.subr.bf16.mxu0 %v603
    %4523 = vmatpush1.bf16.msra.mxu0 %v602
    %4524 = vmatprep.subr.bf16.mxu0 %v611
    %4525 = vmatpush1.bf16.msra.mxu0 %v610
    %4526 = vmatprep.subr.bf16.mxu0 %v619
    %4527 = vmatpush1.bf16.msra.mxu0 %v618
    %4528 = vmatprep.subr.bf16.mxu0 0
    %4529 = vmatpush1.bf16.msra.mxu0 0
    %4530 = vmatprep.subr.bf16.mxu0 0
    %4531 = vmatpush1.bf16.msra.mxu0 0
    %4532 = vmatprep.subr.bf16.mxu0 0
    %4533 = vmatpush1.bf16.msra.mxu0 0
    %4534 = vmatprep.subr.bf16.mxu0 0
    %4535 = vmatpush1.bf16.msra.mxu0 0
    %4536 = vmatprep.mubr.bf16.mxu0 %v4381
    %4537 = vmatmul.mubr.bf16.gmra.mrb[0].mxu0 %v4359
    %v4538 = vpop.f32.mrb[0].mxu0
    %v4539 = vadd.f32 %v148, %v4538
    %v4540 = vpop.f32.mrb[0].mxu0
    %v4541 = vadd.f32 %v152, %v4540
    %v4542 = vpop.f32.mrb[0].mxu0
    %v4543 = vadd.f32 %v148, %v4542
    %v4544 = vpop.f32.mrb[0].mxu0
    %v4545 = vadd.f32 %v152, %v4544
    %4546 = vmatprep.mubr.bf16.mxu0 %v4384
    %4547 = vmatmul.mubr.bf16.gmra.mrb[0].mxu0 %v4361
    %v4548 = vpop.f32.mrb[0].mxu0
    %v4549 = vadd.f32 %v148, %v4548
    %v4550 = vpop.f32.mrb[0].mxu0
    %v4551 = vadd.f32 %v152, %v4550
    %v4552 = vpop.f32.mrb[0].mxu0
    %v4553 = vadd.f32 %v148, %v4552
    %v4554 = vpop.f32.mrb[0].mxu0
    %v4555 = vadd.f32 %v152, %v4554
    %4556 = vmatprep.mubr.bf16.mxu0 %v4387
    %4557 = vmatmul.mubr.bf16.gmra.mrb[0].mxu0 %v4363
    %v4558 = vpop.f32.mrb[0].mxu0
    %v4559 = vadd.f32 %v148, %v4558
    %v4560 = vpop.f32.mrb[0].mxu0
    %v4561 = vadd.f32 %v152, %v4560
    %v4562 = vpop.f32.mrb[0].mxu0
    %v4563 = vadd.f32 %v148, %v4562
    %v4564 = vpop.f32.mrb[0].mxu0
    %v4565 = vadd.f32 %v152, %v4564
    %4566 = vmatprep.mubr.bf16.mxu0 %v4390
    %4567 = vmatmul.mubr.bf16.gmra.mrb[0].mxu0 %v4365
    %v4568 = vpop.f32.mrb[0].mxu0
    %v4569 = vadd.f32 %v148, %v4568
    %v4570 = vpop.f32.mrb[0].mxu0
    %v4571 = vadd.f32 %v152, %v4570
    %v4572 = vpop.f32.mrb[0].mxu0
    %v4573 = vadd.f32 %v148, %v4572
    %v4574 = vpop.f32.mrb[0].mxu0
    %v4575 = vadd.f32 %v152, %v4574
    %4576 = vmatprep.mubr.bf16.mxu0 %v4393
    %4577 = vmatmul.mubr.bf16.gmra.mrb[0].mxu0 %v4367
    %v4578 = vpop.f32.mrb[0].mxu0
    %v4579 = vadd.f32 %v148, %v4578
    %v4580 = vpop.f32.mrb[0].mxu0
    %v4581 = vadd.f32 %v152, %v4580
    %v4582 = vpop.f32.mrb[0].mxu0
    %v4583 = vadd.f32 %v148, %v4582
    %v4584 = vpop.f32.mrb[0].mxu0
    %v4585 = vadd.f32 %v152, %v4584
    %4586 = vmatprep.mubr.bf16.mxu0 %v4396
    %4587 = vmatmul.mubr.bf16.gmra.mrb[0].mxu0 %v4369
    %v4588 = vpop.f32.mrb[0].mxu0
    %v4589 = vadd.f32 %v148, %v4588
    %v4590 = vpop.f32.mrb[0].mxu0
    %v4591 = vadd.f32 %v152, %v4590
    %v4592 = vpop.f32.mrb[0].mxu0
    %v4593 = vadd.f32 %v148, %v4592
    %v4594 = vpop.f32.mrb[0].mxu0
    %v4595 = vadd.f32 %v152, %v4594
    %4596 = vmatprep.mubr.bf16.mxu0 %v4399
    %4597 = vmatmul.mubr.bf16.gmra.mrb[0].mxu0 %v4371
    %v4598 = vpop.f32.mrb[0].mxu0
    %v4599 = vadd.f32 %v148, %v4598
    %v4600 = vpop.f32.mrb[0].mxu0
    %v4601 = vadd.f32 %v152, %v4600
    %v4602 = vpop.f32.mrb[0].mxu0
    %v4603 = vadd.f32 %v148, %v4602
    %v4604 = vpop.f32.mrb[0].mxu0
    %v4605 = vadd.f32 %v152, %v4604
    %4606 = vdwg.mxu0
    %4607 = vmatprep.subr.bf16.mxu0 %v533
    %4608 = vmatpush1.bf16.msra.mxu0 %v532
    %4609 = vmatprep.subr.bf16.mxu0 %v541
    %4610 = vmatpush1.bf16.msra.mxu0 %v540
    %4611 = vmatprep.subr.bf16.mxu0 %v549
    %4612 = vmatpush1.bf16.msra.mxu0 %v548
    %4613 = vmatprep.subr.bf16.mxu0 %v557
    %4614 = vmatpush1.bf16.msra.mxu0 %v556
    %4615 = vmatprep.subr.bf16.mxu0 %v565
    %4616 = vmatpush1.bf16.msra.mxu0 %v564
    %4617 = vmatprep.subr.bf16.mxu0 %v573
    %4618 = vmatpush1.bf16.msra.mxu0 %v572
    %4619 = vmatprep.subr.bf16.mxu0 %v581
    %4620 = vmatpush1.bf16.msra.mxu0 %v580
    %4621 = vmatprep.subr.bf16.mxu0 %v589
    %4622 = vmatpush1.bf16.msra.mxu0 %v588
    %4623 = vmatprep.subr.bf16.mxu0 %v597
    %4624 = vmatpush1.bf16.msra.mxu0 %v596
    %4625 = vmatprep.subr.bf16.mxu0 %v605
    %4626 = vmatpush1.bf16.msra.mxu0 %v604
    %4627 = vmatprep.subr.bf16.mxu0 %v613
    %4628 = vmatpush1.bf16.msra.mxu0 %v612
    %4629 = vmatprep.subr.bf16.mxu0 %v621
    %4630 = vmatpush1.bf16.msra.mxu0 %v620
    %4631 = vmatprep.subr.bf16.mxu0 0
    %4632 = vmatpush1.bf16.msra.mxu0 0
    %4633 = vmatprep.subr.bf16.mxu0 0
    %4634 = vmatpush1.bf16.msra.mxu0 0
    %4635 = vmatprep.subr.bf16.mxu0 0
    %4636 = vmatpush1.bf16.msra.mxu0 0
    %4637 = vmatprep.subr.bf16.mxu0 0
    %4638 = vmatpush1.bf16.msra.mxu0 0
    %4639 = vmatprep.mubr.bf16.mxu0 %v4381
    %4640 = vmatmul.mubr.bf16.gmra.mrb[0].mxu0 %v4359
    %v4641 = vpop.f32.mrb[0].mxu0
    %v4642 = vadd.f32 %v156, %v4641
    %v4643 = vpop.f32.mrb[0].mxu0
    %v4644 = vadd.f32 %v160, %v4643
    %v4645 = vpop.f32.mrb[0].mxu0
    %v4646 = vadd.f32 %v156, %v4645
    %v4647 = vpop.f32.mrb[0].mxu0
    %v4648 = vadd.f32 %v160, %v4647
    %4649 = vmatprep.mubr.bf16.mxu0 %v4384
    %4650 = vmatmul.mubr.bf16.gmra.mrb[0].mxu0 %v4361
    %v4651 = vpop.f32.mrb[0].mxu0
    %v4652 = vadd.f32 %v156, %v4651
    %v4653 = vpop.f32.mrb[0].mxu0
    %v4654 = vadd.f32 %v160, %v4653
    %v4655 = vpop.f32.mrb[0].mxu0
    %v4656 = vadd.f32 %v156, %v4655
    %v4657 = vpop.f32.mrb[0].mxu0
    %v4658 = vadd.f32 %v160, %v4657
    %4659 = vmatprep.mubr.bf16.mxu0 %v4387
    %4660 = vmatmul.mubr.bf16.gmra.mrb[0].mxu0 %v4363
    %v4661 = vpop.f32.mrb[0].mxu0
    %v4662 = vadd.f32 %v156, %v4661
    %v4663 = vpop.f32.mrb[0].mxu0
    %v4664 = vadd.f32 %v160, %v4663
    %v4665 = vpop.f32.mrb[0].mxu0
    %v4666 = vadd.f32 %v156, %v4665
    %v4667 = vpop.f32.mrb[0].mxu0
    %v4668 = vadd.f32 %v160, %v4667
    %4669 = vmatprep.mubr.bf16.mxu0 %v4390
    %4670 = vmatmul.mubr.bf16.gmra.mrb[0].mxu0 %v4365
    %v4671 = vpop.f32.mrb[0].mxu0
    %v4672 = vadd.f32 %v156, %v4671
    %v4673 = vpop.f32.mrb[0].mxu0
    %v4674 = vadd.f32 %v160, %v4673
    %v4675 = vpop.f32.mrb[0].mxu0
    %v4676 = vadd.f32 %v156, %v4675
    %v4677 = vpop.f32.mrb[0].mxu0
    %v4678 = vadd.f32 %v160, %v4677
    %4679 = vmatprep.mubr.bf16.mxu0 %v4393
    %4680 = vmatmul.mubr.bf16.gmra.mrb[0].mxu0 %v4367
    %v4681 = vpop.f32.mrb[0].mxu0
    %v4682 = vadd.f32 %v156, %v4681
    %v4683 = vpop.f32.mrb[0].mxu0
    %v4684 = vadd.f32 %v160, %v4683
    %v4685 = vpop.f32.mrb[0].mxu0
    %v4686 = vadd.f32 %v156, %v4685
    %v4687 = vpop.f32.mrb[0].mxu0
    %v4688 = vadd.f32 %v160, %v4687
    %4689 = vmatprep.mubr.bf16.mxu0 %v4396
    %4690 = vmatmul.mubr.bf16.gmra.mrb[0].mxu0 %v4369
    %v4691 = vpop.f32.mrb[0].mxu0
    %v4692 = vadd.f32 %v156, %v4691
    %v4693 = vpop.f32.mrb[0].mxu0
    %v4694 = vadd.f32 %v160, %v4693
    %v4695 = vpop.f32.mrb[0].mxu0
    %v4696 = vadd.f32 %v156, %v4695
    %v4697 = vpop.f32.mrb[0].mxu0
    %v4698 = vadd.f32 %v160, %v4697
    %4699 = vmatprep.mubr.bf16.mxu0 %v4399
    %4700 = vmatmul.mubr.bf16.gmra.mrb[0].mxu0 %v4371
    %v4701 = vpop.f32.mrb[0].mxu0
    %v4702 = vadd.f32 %v156, %v4701
    %v4703 = vpop.f32.mrb[0].mxu0
    %v4704 = vadd.f32 %v160, %v4703
    %v4705 = vpop.f32.mrb[0].mxu0
    %v4706 = vadd.f32 %v156, %v4705
    %v4707 = vpop.f32.mrb[0].mxu0
    %v4708 = vadd.f32 %v160, %v4707
    %4709 = vdwg.mxu0
    %4710 = vmatprep.subr.bf16.mxu0 %v535
    %4711 = vmatpush1.bf16.msra.mxu0 %v534
    %4712 = vmatprep.subr.bf16.mxu0 %v543
    %4713 = vmatpush1.bf16.msra.mxu0 %v542
    %4714 = vmatprep.subr.bf16.mxu0 %v551
    %4715 = vmatpush1.bf16.msra.mxu0 %v550
    %4716 = vmatprep.subr.bf16.mxu0 %v559
    %4717 = vmatpush1.bf16.msra.mxu0 %v558
    %4718 = vmatprep.subr.bf16.mxu0 %v567
    %4719 = vmatpush1.bf16.msra.mxu0 %v566
    %4720 = vmatprep.subr.bf16.mxu0 %v575
    %4721 = vmatpush1.bf16.msra.mxu0 %v574
    %4722 = vmatprep.subr.bf16.mxu0 %v583
    %4723 = vmatpush1.bf16.msra.mxu0 %v582
    %4724 = vmatprep.subr.bf16.mxu0 %v591
    %4725 = vmatpush1.bf16.msra.mxu0 %v590
    %4726 = vmatprep.subr.bf16.mxu0 %v599
    %4727 = vmatpush1.bf16.msra.mxu0 %v598
    %4728 = vmatprep.subr.bf16.mxu0 %v607
    %4729 = vmatpush1.bf16.msra.mxu0 %v606
    %4730 = vmatprep.subr.bf16.mxu0 %v615
    %4731 = vmatpush1.bf16.msra.mxu0 %v614
    %4732 = vmatprep.subr.bf16.mxu0 %v623
    %4733 = vmatpush1.bf16.msra.mxu0 %v622
    %4734 = vmatprep.subr.bf16.mxu0 0
    %4735 = vmatpush1.bf16.msra.mxu0 0
    %4736 = vmatprep.subr.bf16.mxu0 0
    %4737 = vmatpush1.bf16.msra.mxu0 0
    %4738 = vmatprep.subr.bf16.mxu0 0
    %4739 = vmatpush1.bf16.msra.mxu0 0
    %4740 = vmatprep.subr.bf16.mxu0 0
    %4741 = vmatpush1.bf16.msra.mxu0 0
    %4742 = vmatprep.mubr.bf16.mxu0 %v4381
    %4743 = vmatmul.mubr.bf16.gmra.mrb[0].mxu0 %v4359
    %v4744 = vpop.f32.mrb[0].mxu0
    %v4745 = vadd.f32 %v164, %v4744
    %v4746 = vpop.f32.mrb[0].mxu0
    %v4747 = vadd.f32 %v168, %v4746
    %v4748 = vpop.f32.mrb[0].mxu0
    %v4749 = vadd.f32 %v164, %v4748
    %v4750 = vpop.f32.mrb[0].mxu0
    %v4751 = vadd.f32 %v168, %v4750
    %4752 = vmatprep.mubr.bf16.mxu0 %v4384
    %4753 = vmatmul.mubr.bf16.gmra.mrb[0].mxu0 %v4361
    %v4754 = vpop.f32.mrb[0].mxu0
    %v4755 = vadd.f32 %v164, %v4754
    %v4756 = vpop.f32.mrb[0].mxu0
    %v4757 = vadd.f32 %v168, %v4756
    %v4758 = vpop.f32.mrb[0].mxu0
    %v4759 = vadd.f32 %v164, %v4758
    %v4760 = vpop.f32.mrb[0].mxu0
    %v4761 = vadd.f32 %v168, %v4760
    %4762 = vmatprep.mubr.bf16.mxu0 %v4387
    %4763 = vmatmul.mubr.bf16.gmra.mrb[0].mxu0 %v4363
    %v4764 = vpop.f32.mrb[0].mxu0
    %v4765 = vadd.f32 %v164, %v4764
    %v4766 = vpop.f32.mrb[0].mxu0
    %v4767 = vadd.f32 %v168, %v4766
    %v4768 = vpop.f32.mrb[0].mxu0
    %v4769 = vadd.f32 %v164, %v4768
    %v4770 = vpop.f32.mrb[0].mxu0
    %v4771 = vadd.f32 %v168, %v4770
    %4772 = vmatprep.mubr.bf16.mxu0 %v4390
    %4773 = vmatmul.mubr.bf16.gmra.mrb[0].mxu0 %v4365
    %v4774 = vpop.f32.mrb[0].mxu0
    %v4775 = vadd.f32 %v164, %v4774
    %v4776 = vpop.f32.mrb[0].mxu0
    %v4777 = vadd.f32 %v168, %v4776
    %v4778 = vpop.f32.mrb[0].mxu0
    %v4779 = vadd.f32 %v164, %v4778
    %v4780 = vpop.f32.mrb[0].mxu0
    %v4781 = vadd.f32 %v168, %v4780
    %4782 = vmatprep.mubr.bf16.mxu0 %v4393
    %4783 = vmatmul.mubr.bf16.gmra.mrb[0].mxu0 %v4367
    %v4784 = vpop.f32.mrb[0].mxu0
    %v4785 = vadd.f32 %v164, %v4784
    %v4786 = vpop.f32.mrb[0].mxu0
    %v4787 = vadd.f32 %v168, %v4786
    %v4788 = vpop.f32.mrb[0].mxu0
    %v4789 = vadd.f32 %v164, %v4788
    %v4790 = vpop.f32.mrb[0].mxu0
    %v4791 = vadd.f32 %v168, %v4790
    %4792 = vmatprep.mubr.bf16.mxu0 %v4396
    %4793 = vmatmul.mubr.bf16.gmra.mrb[0].mxu0 %v4369
    %v4794 = vpop.f32.mrb[0].mxu0
    %v4795 = vadd.f32 %v164, %v4794
    %v4796 = vpop.f32.mrb[0].mxu0
    %v4797 = vadd.f32 %v168, %v4796
    %v4798 = vpop.f32.mrb[0].mxu0
    %v4799 = vadd.f32 %v164, %v4798
    %v4800 = vpop.f32.mrb[0].mxu0
    %v4801 = vadd.f32 %v168, %v4800
    %4802 = vmatprep.mubr.bf16.mxu0 %v4399
    %4803 = vmatmul.mubr.bf16.gmra.mrb[0].mxu0 %v4371
    %v4804 = vpop.f32.mrb[0].mxu0
    %v4805 = vadd.f32 %v164, %v4804
    %v4806 = vpop.f32.mrb[0].mxu0
    %v4807 = vadd.f32 %v168, %v4806
    %v4808 = vpop.f32.mrb[0].mxu0
    %v4809 = vadd.f32 %v164, %v4808
    %v4810 = vpop.f32.mrb[0].mxu0
    %v4811 = vadd.f32 %v168, %v4810
    %4812 = vdwg.mxu0
    %v4813 = vmax.f32 %v4436, 0.0
    %v4814 = vmax.f32 %v4438, 0.0
    %v4815 = vmax.f32 %v4539, 0.0
    %v4816 = vmax.f32 %v4541, 0.0
    %v4817 = vmax.f32 %v4642, 0.0
    %v4818 = vmax.f32 %v4644, 0.0
    %v4819 = vmax.f32 %v4745, 0.0
    %v4820 = vmax.f32 %v4747, 0.0
    %v4821 = vmax.f32 %v4440, 0.0
    %v4822 = vmax.f32 %v4442, 0.0
    %v4823 = vmax.f32 %v4543, 0.0
    %v4824 = vmax.f32 %v4545, 0.0
    %v4825 = vmax.f32 %v4646, 0.0
    %v4826 = vmax.f32 %v4648, 0.0
    %v4827 = vmax.f32 %v4749, 0.0
    %v4828 = vmax.f32 %v4751, 0.0
    %v4829 = vmax.f32 %v4446, 0.0
    %v4830 = vmax.f32 %v4448, 0.0
    %v4831 = vmax.f32 %v4549, 0.0
    %v4832 = vmax.f32 %v4551, 0.0
    %v4833 = vmax.f32 %v4652, 0.0
    %v4834 = vmax.f32 %v4654, 0.0
    %v4835 = vmax.f32 %v4755, 0.0
    %v4836 = vmax.f32 %v4757, 0.0
    %v4837 = vmax.f32 %v4450, 0.0
    %v4838 = vmax.f32 %v4452, 0.0
    %v4839 = vmax.f32 %v4553, 0.0
    %v4840 = vmax.f32 %v4555, 0.0
    %v4841 = vmax.f32 %v4656, 0.0
    %v4842 = vmax.f32 %v4658, 0.0
    %v4843 = vmax.f32 %v4759, 0.0
    %v4844 = vmax.f32 %v4761, 0.0
    %v4845 = vmax.f32 %v4456, 0.0
    %v4846 = vmax.f32 %v4458, 0.0
    %v4847 = vmax.f32 %v4559, 0.0
    %v4848 = vmax.f32 %v4561, 0.0
    %v4849 = vmax.f32 %v4662, 0.0
    %v4850 = vmax.f32 %v4664, 0.0
    %v4851 = vmax.f32 %v4765, 0.0
    %v4852 = vmax.f32 %v4767, 0.0
    %v4853 = vmax.f32 %v4460, 0.0
    %v4854 = vmax.f32 %v4462, 0.0
    %v4855 = vmax.f32 %v4563, 0.0
    %v4856 = vmax.f32 %v4565, 0.0
    %v4857 = vmax.f32 %v4666, 0.0
    %v4858 = vmax.f32 %v4668, 0.0
    %v4859 = vmax.f32 %v4769, 0.0
    %v4860 = vmax.f32 %v4771, 0.0
    %v4861 = vmax.f32 %v4466, 0.0
    %v4862 = vmax.f32 %v4468, 0.0
    %v4863 = vmax.f32 %v4569, 0.0
    %v4864 = vmax.f32 %v4571, 0.0
    %v4865 = vmax.f32 %v4672, 0.0
    %v4866 = vmax.f32 %v4674, 0.0
    %v4867 = vmax.f32 %v4775, 0.0
    %v4868 = vmax.f32 %v4777, 0.0
    %v4869 = vmax.f32 %v4470, 0.0
    %v4870 = vmax.f32 %v4472, 0.0
    %v4871 = vmax.f32 %v4573, 0.0
    %v4872 = vmax.f32 %v4575, 0.0
    %v4873 = vmax.f32 %v4676, 0.0
    %v4874 = vmax.f32 %v4678, 0.0
    %v4875 = vmax.f32 %v4779, 0.0
    %v4876 = vmax.f32 %v4781, 0.0
    %v4877 = vmax.f32 %v4476, 0.0
    %v4878 = vmax.f32 %v4478, 0.0
    %v4879 = vmax.f32 %v4579, 0.0
    %v4880 = vmax.f32 %v4581, 0.0
    %v4881 = vmax.f32 %v4682, 0.0
    %v4882 = vmax.f32 %v4684, 0.0
    %v4883 = vmax.f32 %v4785, 0.0
    %v4884 = vmax.f32 %v4787, 0.0
    %v4885 = vmax.f32 %v4480, 0.0
    %v4886 = vmax.f32 %v4482, 0.0
    %v4887 = vmax.f32 %v4583, 0.0
    %v4888 = vmax.f32 %v4585, 0.0
    %v4889 = vmax.f32 %v4686, 0.0
    %v4890 = vmax.f32 %v4688, 0.0
    %v4891 = vmax.f32 %v4789, 0.0
    %v4892 = vmax.f32 %v4791, 0.0
    %v4893 = vmax.f32 %v4486, 0.0
    %v4894 = vmax.f32 %v4488, 0.0
    %v4895 = vmax.f32 %v4589, 0.0
    %v4896 = vmax.f32 %v4591, 0.0
    %v4897 = vmax.f32 %v4692, 0.0
    %v4898 = vmax.f32 %v4694, 0.0
    %v4899 = vmax.f32 %v4795, 0.0
    %v4900 = vmax.f32 %v4797, 0.0
    %v4901 = vmax.f32 %v4490, 0.0
    %v4902 = vmax.f32 %v4492, 0.0
    %v4903 = vmax.f32 %v4593, 0.0
    %v4904 = vmax.f32 %v4595, 0.0
    %v4905 = vmax.f32 %v4696, 0.0
    %v4906 = vmax.f32 %v4698, 0.0
    %v4907 = vmax.f32 %v4799, 0.0
    %v4908 = vmax.f32 %v4801, 0.0
    %v4909 = vmax.f32 %v4496, 0.0
    %v4910 = vmax.f32 %v4498, 0.0
    %v4911 = vmax.f32 %v4599, 0.0
    %v4912 = vmax.f32 %v4601, 0.0
    %v4913 = vmax.f32 %v4702, 0.0
    %v4914 = vmax.f32 %v4704, 0.0
    %v4915 = vmax.f32 %v4805, 0.0
    %v4916 = vmax.f32 %v4807, 0.0
    %v4917 = vmax.f32 %v4500, 0.0
    %v4918 = vmax.f32 %v4502, 0.0
    %v4919 = vmax.f32 %v4603, 0.0
    %v4920 = vmax.f32 %v4605, 0.0
    %v4921 = vmax.f32 %v4706, 0.0
    %v4922 = vmax.f32 %v4708, 0.0
    %v4923 = vmax.f32 %v4809, 0.0
    %v4924 = vmax.f32 %v4811, 0.0
    %v4925 = vadd.f32 %v4813, %v4829
    %v4926 = vadd.f32 %v4814, %v4830
    %v4927 = vadd.f32 %v4815, %v4831
    %v4928 = vadd.f32 %v4816, %v4832
    %v4929 = vadd.f32 %v4817, %v4833
    %v4930 = vadd.f32 %v4818, %v4834
    %v4931 = vadd.f32 %v4819, %v4835
    %v4932 = vadd.f32 %v4820, %v4836
    %v4933 = vadd.f32 %v4821, %v4837
    %v4934 = vadd.f32 %v4822, %v4838
    %v4935 = vadd.f32 %v4823, %v4839
    %v4936 = vadd.f32 %v4824, %v4840
    %v4937 = vadd.f32 %v4825, %v4841
    %v4938 = vadd.f32 %v4826, %v4842
    %v4939 = vadd.f32 %v4827, %v4843
    %v4940 = vadd.f32 %v4828, %v4844
    %v4941 = vadd.f32 %v4925, %v4845
    %v4942 = vadd.f32 %v4926, %v4846
    %v4943 = vadd.f32 %v4927, %v4847
    %v4944 = vadd.f32 %v4928, %v4848
    %v4945 = vadd.f32 %v4929, %v4849
    %v4946 = vadd.f32 %v4930, %v4850
    %v4947 = vadd.f32 %v4931, %v4851
    %v4948 = vadd.f32 %v4932, %v4852
    %v4949 = vadd.f32 %v4933, %v4853
    %v4950 = vadd.f32 %v4934, %v4854
    %v4951 = vadd.f32 %v4935, %v4855
    %v4952 = vadd.f32 %v4936, %v4856
    %v4953 = vadd.f32 %v4937, %v4857
    %v4954 = vadd.f32 %v4938, %v4858
    %v4955 = vadd.f32 %v4939, %v4859
    %v4956 = vadd.f32 %v4940, %v4860
    %v4957 = vadd.f32 %v4941, %v4861
    %v4958 = vadd.f32 %v4942, %v4862
    %v4959 = vadd.f32 %v4943, %v4863
    %v4960 = vadd.f32 %v4944, %v4864
    %v4961 = vadd.f32 %v4945, %v4865
    %v4962 = vadd.f32 %v4946, %v4866
    %v4963 = vadd.f32 %v4947, %v4867
    %v4964 = vadd.f32 %v4948, %v4868
    %v4965 = vadd.f32 %v4949, %v4869
    %v4966 = vadd.f32 %v4950, %v4870
    %v4967 = vadd.f32 %v4951, %v4871
    %v4968 = vadd.f32 %v4952, %v4872
    %v4969 = vadd.f32 %v4953, %v4873
    %v4970 = vadd.f32 %v4954, %v4874
    %v4971 = vadd.f32 %v4955, %v4875
    %v4972 = vadd.f32 %v4956, %v4876
    %v4973 = vadd.f32 %v4957, %v4877
    %v4974 = vadd.f32 %v4958, %v4878
    %v4975 = vadd.f32 %v4959, %v4879
    %v4976 = vadd.f32 %v4960, %v4880
    %v4977 = vadd.f32 %v4961, %v4881
    %v4978 = vadd.f32 %v4962, %v4882
    %v4979 = vadd.f32 %v4963, %v4883
    %v4980 = vadd.f32 %v4964, %v4884
    %v4981 = vadd.f32 %v4965, %v4885
    %v4982 = vadd.f32 %v4966, %v4886
    %v4983 = vadd.f32 %v4967, %v4887
    %v4984 = vadd.f32 %v4968, %v4888
    %v4985 = vadd.f32 %v4969, %v4889
    %v4986 = vadd.f32 %v4970, %v4890
    %v4987 = vadd.f32 %v4971, %v4891
    %v4988 = vadd.f32 %v4972, %v4892
    %v4989 = vadd.f32 %v4973, %v4893
    %v4990 = vadd.f32 %v4974, %v4894
    %v4991 = vadd.f32 %v4975, %v4895
    %v4992 = vadd.f32 %v4976, %v4896
    %v4993 = vadd.f32 %v4977, %v4897
    %v4994 = vadd.f32 %v4978, %v4898
    %v4995 = vadd.f32 %v4979, %v4899
    %v4996 = vadd.f32 %v4980, %v4900
    %v4997 = vadd.f32 %v4981, %v4901
    %v4998 = vadd.f32 %v4982, %v4902
    %v4999 = vadd.f32 %v4983, %v4903
    %v5000 = vadd.f32 %v4984, %v4904
    %v5001 = vadd.f32 %v4985, %v4905
    %v5002 = vadd.f32 %v4986, %v4906
    %v5003 = vadd.f32 %v4987, %v4907
    %v5004 = vadd.f32 %v4988, %v4908
    %v5005 = vadd.f32 %v4989, %v4909
    %v5006 = vadd.f32 %v4990, %v4910
    %v5007 = vadd.f32 %v4991, %v4911
    %v5008 = vadd.f32 %v4992, %v4912
    %v5009 = vadd.f32 %v4993, %v4913
    %v5010 = vadd.f32 %v4994, %v4914
    %v5011 = vadd.f32 %v4995, %v4915
    %v5012 = vadd.f32 %v4996, %v4916
    %v5013 = vadd.f32 %v4997, %v4917
    %v5014 = vadd.f32 %v4998, %v4918
    %v5015 = vadd.f32 %v4999, %v4919
    %v5016 = vadd.f32 %v5000, %v4920
    %v5017 = vadd.f32 %v5001, %v4921
    %v5018 = vadd.f32 %v5002, %v4922
    %v5019 = vadd.f32 %v5003, %v4923
    %v5020 = vadd.f32 %v5004, %v4924
    %v5021 = vadd.f32 %v4286, %v5005
    %v5022 = vadd.f32 %v4287, %v5006
    %v5023 = vadd.f32 %v4288, %v5007
    %v5024 = vadd.f32 %v4289, %v5008
    %v5025 = vadd.f32 %v4290, %v5009
    %v5026 = vadd.f32 %v4291, %v5010
    %v5027 = vadd.f32 %v4292, %v5011
    %v5028 = vadd.f32 %v4293, %v5012
    %v5029 = vadd.f32 %v4294, %v5013
    %v5030 = vadd.f32 %v4295, %v5014
    %v5031 = vadd.f32 %v4296, %v5015
    %v5032 = vadd.f32 %v4297, %v5016
    %v5033 = vadd.f32 %v4298, %v5017
    %v5034 = vadd.f32 %v4299, %v5018
    %v5035 = vadd.f32 %v4300, %v5019
    %v5036 = vadd.f32 %v4301, %v5020
    %s5037 = scalar_lea.vmem %s0, 672
    %v5038 = vld [vmem:[%s5037] sm:$0xff]
    %v5039 = vld [vmem:[%s5037 + $0x8] sm:$0xff]
    %v5040 = vld [vmem:[%s5037 + $0x10] sm:$0xff]
    %v5041 = vld [vmem:[%s5037 + $0x18] sm:$0xff]
    %v5042 = vld [vmem:[%s5037 + $0x20] sm:$0xff]
    %v5043 = vld [vmem:[%s5037 + $0x28] sm:$0xff]
    %v5044 = vld [vmem:[%s5037 + $0x30] sm:$0xff]
    %v5045 = vld [vmem:[%s5037 + $0x38] sm:$0xff]
    %v5046 = vld [vmem:[%s5037 + $0x40] sm:$0xff]
    %v5047 = vld [vmem:[%s5037 + $0x48] sm:$0xff]
    %v5048 = vld [vmem:[%s5037 + $0x50] sm:$0xff]
    %v5049 = vld [vmem:[%s5037 + $0x58] sm:$0xff]
    %v5050 = vld [vmem:[%s5037 + $0x60] sm:$0xff]
    %v5051 = vld [vmem:[%s5037 + $0x68] sm:$0xff]
    %v5066 = vunpack.c.l.b16 %v5038
    %v5067 = vunpack.c.h.b16 %v5038
    %v5068 = vunpack.c.l.b16 %v5039
    %v5069 = vunpack.c.h.b16 %v5039
    %v5070 = vunpack.c.l.b16 %v5040
    %v5071 = vunpack.c.h.b16 %v5040
    %v5072 = vunpack.c.l.b16 %v5041
    %v5073 = vunpack.c.h.b16 %v5041
    %v5074 = vunpack.c.l.b16 %v5042
    %v5075 = vunpack.c.h.b16 %v5042
    %v5076 = vunpack.c.l.b16 %v5043
    %v5077 = vunpack.c.h.b16 %v5043
    %v5078 = vunpack.c.l.b16 %v5044
    %v5079 = vunpack.c.h.b16 %v5044
    %v5080 = vunpack.c.l.b16 %v5045
    %v5081 = vunpack.c.h.b16 %v5045
    %v5082 = vunpack.c.l.b16 %v5046
    %v5083 = vunpack.c.h.b16 %v5046
    %v5084 = vunpack.c.l.b16 %v5047
    %v5085 = vunpack.c.h.b16 %v5047
    %v5086 = vunpack.c.l.b16 %v5048
    %v5087 = vunpack.c.h.b16 %v5048
    %v5088 = vunpack.c.l.b16 %v5049
    %v5089 = vunpack.c.h.b16 %v5049
    %v5090 = vunpack.c.l.b16 %v5050
    %v5091 = vunpack.c.h.b16 %v5050
    %v5092 = vunpack.c.l.b16 %v5051
    %v5093 = vunpack.c.h.b16 %v5051
    %v5094 = vpack.c.b16 %v5068, %v5066
    %v5095 = vpack.c.b16 %v5069, %v5067
    %v5096 = vpack.c.b16 %v5072, %v5070
    %v5097 = vpack.c.b16 %v5073, %v5071
    %v5098 = vpack.c.b16 %v5076, %v5074
    %v5099 = vpack.c.b16 %v5077, %v5075
    %v5100 = vpack.c.b16 %v5080, %v5078
    %v5101 = vpack.c.b16 %v5081, %v5079
    %v5102 = vpack.c.b16 %v5084, %v5082
    %v5103 = vpack.c.b16 %v5085, %v5083
    %v5104 = vpack.c.b16 %v5088, %v5086
    %v5105 = vpack.c.b16 %v5089, %v5087
    %v5106 = vpack.c.b16 %v5092, %v5090
    %v5107 = vpack.c.b16 %v5093, %v5091
    %v5116 = vsel %vm720, %v5095, 0
    %v5119 = vsel %vm720, %v5097, 0
    %v5122 = vsel %vm720, %v5099, 0
    %v5125 = vsel %vm720, %v5101, 0
    %v5128 = vsel %vm720, %v5103, 0
    %v5131 = vsel %vm720, %v5105, 0
    %v5134 = vsel %vm720, %v5107, 0
    %5136 = vmatprep.subr.bf16.mxu0 %v529
    %5137 = vmatpush1.bf16.msra.mxu0 %v528
    %5138 = vmatprep.subr.bf16.mxu0 %v537
    %5139 = vmatpush1.bf16.msra.mxu0 %v536
    %5140 = vmatprep.subr.bf16.mxu0 %v545
    %5141 = vmatpush1.bf16.msra.mxu0 %v544
    %5142 = vmatprep.subr.bf16.mxu0 %v553
    %5143 = vmatpush1.bf16.msra.mxu0 %v552
    %5144 = vmatprep.subr.bf16.mxu0 %v561
    %5145 = vmatpush1.bf16.msra.mxu0 %v560
    %5146 = vmatprep.subr.bf16.mxu0 %v569
    %5147 = vmatpush1.bf16.msra.mxu0 %v568
    %5148 = vmatprep.subr.bf16.mxu0 %v577
    %5149 = vmatpush1.bf16.msra.mxu0 %v576
    %5150 = vmatprep.subr.bf16.mxu0 %v585
    %5151 = vmatpush1.bf16.msra.mxu0 %v584
    %5152 = vmatprep.subr.bf16.mxu0 %v593
    %5153 = vmatpush1.bf16.msra.mxu0 %v592
    %5154 = vmatprep.subr.bf16.mxu0 %v601
    %5155 = vmatpush1.bf16.msra.mxu0 %v600
    %5156 = vmatprep.subr.bf16.mxu0 %v609
    %5157 = vmatpush1.bf16.msra.mxu0 %v608
    %5158 = vmatprep.subr.bf16.mxu0 %v617
    %5159 = vmatpush1.bf16.msra.mxu0 %v616
    %5160 = vmatprep.subr.bf16.mxu0 0
    %5161 = vmatpush1.bf16.msra.mxu0 0
    %5162 = vmatprep.subr.bf16.mxu0 0
    %5163 = vmatpush1.bf16.msra.mxu0 0
    %5164 = vmatprep.subr.bf16.mxu0 0
    %5165 = vmatpush1.bf16.msra.mxu0 0
    %5166 = vmatprep.subr.bf16.mxu0 0
    %5167 = vmatpush1.bf16.msra.mxu0 0
    %5168 = vmatprep.mubr.bf16.mxu0 %v5116
    %5169 = vmatmul.mubr.bf16.gmra.mrb[0].mxu0 %v5094
    %v5170 = vpop.f32.mrb[0].mxu0
    %v5171 = vadd.f32 %v140, %v5170
    %v5172 = vpop.f32.mrb[0].mxu0
    %v5173 = vadd.f32 %v144, %v5172
    %v5174 = vpop.f32.mrb[0].mxu0
    %v5175 = vadd.f32 %v140, %v5174
    %v5176 = vpop.f32.mrb[0].mxu0
    %v5177 = vadd.f32 %v144, %v5176
    %5178 = vmatprep.mubr.bf16.mxu0 %v5119
    %5179 = vmatmul.mubr.bf16.gmra.mrb[0].mxu0 %v5096
    %v5180 = vpop.f32.mrb[0].mxu0
    %v5181 = vadd.f32 %v140, %v5180
    %v5182 = vpop.f32.mrb[0].mxu0
    %v5183 = vadd.f32 %v144, %v5182
    %v5184 = vpop.f32.mrb[0].mxu0
    %v5185 = vadd.f32 %v140, %v5184
    %v5186 = vpop.f32.mrb[0].mxu0
    %v5187 = vadd.f32 %v144, %v5186
    %5188 = vmatprep.mubr.bf16.mxu0 %v5122
    %5189 = vmatmul.mubr.bf16.gmra.mrb[0].mxu0 %v5098
    %v5190 = vpop.f32.mrb[0].mxu0
    %v5191 = vadd.f32 %v140, %v5190
    %v5192 = vpop.f32.mrb[0].mxu0
    %v5193 = vadd.f32 %v144, %v5192
    %v5194 = vpop.f32.mrb[0].mxu0
    %v5195 = vadd.f32 %v140, %v5194
    %v5196 = vpop.f32.mrb[0].mxu0
    %v5197 = vadd.f32 %v144, %v5196
    %5198 = vmatprep.mubr.bf16.mxu0 %v5125
    %5199 = vmatmul.mubr.bf16.gmra.mrb[0].mxu0 %v5100
    %v5200 = vpop.f32.mrb[0].mxu0
    %v5201 = vadd.f32 %v140, %v5200
    %v5202 = vpop.f32.mrb[0].mxu0
    %v5203 = vadd.f32 %v144, %v5202
    %v5204 = vpop.f32.mrb[0].mxu0
    %v5205 = vadd.f32 %v140, %v5204
    %v5206 = vpop.f32.mrb[0].mxu0
    %v5207 = vadd.f32 %v144, %v5206
    %5208 = vmatprep.mubr.bf16.mxu0 %v5128
    %5209 = vmatmul.mubr.bf16.gmra.mrb[0].mxu0 %v5102
    %v5210 = vpop.f32.mrb[0].mxu0
    %v5211 = vadd.f32 %v140, %v5210
    %v5212 = vpop.f32.mrb[0].mxu0
    %v5213 = vadd.f32 %v144, %v5212
    %v5214 = vpop.f32.mrb[0].mxu0
    %v5215 = vadd.f32 %v140, %v5214
    %v5216 = vpop.f32.mrb[0].mxu0
    %v5217 = vadd.f32 %v144, %v5216
    %5218 = vmatprep.mubr.bf16.mxu0 %v5131
    %5219 = vmatmul.mubr.bf16.gmra.mrb[0].mxu0 %v5104
    %v5220 = vpop.f32.mrb[0].mxu0
    %v5221 = vadd.f32 %v140, %v5220
    %v5222 = vpop.f32.mrb[0].mxu0
    %v5223 = vadd.f32 %v144, %v5222
    %v5224 = vpop.f32.mrb[0].mxu0
    %v5225 = vadd.f32 %v140, %v5224
    %v5226 = vpop.f32.mrb[0].mxu0
    %v5227 = vadd.f32 %v144, %v5226
    %5228 = vmatprep.mubr.bf16.mxu0 %v5134
    %5229 = vmatmul.mubr.bf16.gmra.mrb[0].mxu0 %v5106
    %v5230 = vpop.f32.mrb[0].mxu0
    %v5231 = vadd.f32 %v140, %v5230
    %v5232 = vpop.f32.mrb[0].mxu0
    %v5233 = vadd.f32 %v144, %v5232
    %v5234 = vpop.f32.mrb[0].mxu0
    %v5235 = vadd.f32 %v140, %v5234
    %v5236 = vpop.f32.mrb[0].mxu0
    %v5237 = vadd.f32 %v144, %v5236
    %5238 = vdwg.mxu0
    %5239 = vmatprep.subr.bf16.mxu0 %v531
    %5240 = vmatpush1.bf16.msra.mxu0 %v530
    %5241 = vmatprep.subr.bf16.mxu0 %v539
    %5242 = vmatpush1.bf16.msra.mxu0 %v538
    %5243 = vmatprep.subr.bf16.mxu0 %v547
    %5244 = vmatpush1.bf16.msra.mxu0 %v546
    %5245 = vmatprep.subr.bf16.mxu0 %v555
    %5246 = vmatpush1.bf16.msra.mxu0 %v554
    %5247 = vmatprep.subr.bf16.mxu0 %v563
    %5248 = vmatpush1.bf16.msra.mxu0 %v562
    %5249 = vmatprep.subr.bf16.mxu0 %v571
    %5250 = vmatpush1.bf16.msra.mxu0 %v570
    %5251 = vmatprep.subr.bf16.mxu0 %v579
    %5252 = vmatpush1.bf16.msra.mxu0 %v578
    %5253 = vmatprep.subr.bf16.mxu0 %v587
    %5254 = vmatpush1.bf16.msra.mxu0 %v586
    %5255 = vmatprep.subr.bf16.mxu0 %v595
    %5256 = vmatpush1.bf16.msra.mxu0 %v594
    %5257 = vmatprep.subr.bf16.mxu0 %v603
    %5258 = vmatpush1.bf16.msra.mxu0 %v602
    %5259 = vmatprep.subr.bf16.mxu0 %v611
    %5260 = vmatpush1.bf16.msra.mxu0 %v610
    %5261 = vmatprep.subr.bf16.mxu0 %v619
    %5262 = vmatpush1.bf16.msra.mxu0 %v618
    %5263 = vmatprep.subr.bf16.mxu0 0
    %5264 = vmatpush1.bf16.msra.mxu0 0
    %5265 = vmatprep.subr.bf16.mxu0 0
    %5266 = vmatpush1.bf16.msra.mxu0 0
    %5267 = vmatprep.subr.bf16.mxu0 0
    %5268 = vmatpush1.bf16.msra.mxu0 0
    %5269 = vmatprep.subr.bf16.mxu0 0
    %5270 = vmatpush1.bf16.msra.mxu0 0
    %5271 = vmatprep.mubr.bf16.mxu0 %v5116
    %5272 = vmatmul.mubr.bf16.gmra.mrb[0].mxu0 %v5094
    %v5273 = vpop.f32.mrb[0].mxu0
    %v5274 = vadd.f32 %v148, %v5273
    %v5275 = vpop.f32.mrb[0].mxu0
    %v5276 = vadd.f32 %v152, %v5275
    %v5277 = vpop.f32.mrb[0].mxu0
    %v5278 = vadd.f32 %v148, %v5277
    %v5279 = vpop.f32.mrb[0].mxu0
    %v5280 = vadd.f32 %v152, %v5279
    %5281 = vmatprep.mubr.bf16.mxu0 %v5119
    %5282 = vmatmul.mubr.bf16.gmra.mrb[0].mxu0 %v5096
    %v5283 = vpop.f32.mrb[0].mxu0
    %v5284 = vadd.f32 %v148, %v5283
    %v5285 = vpop.f32.mrb[0].mxu0
    %v5286 = vadd.f32 %v152, %v5285
    %v5287 = vpop.f32.mrb[0].mxu0
    %v5288 = vadd.f32 %v148, %v5287
    %v5289 = vpop.f32.mrb[0].mxu0
    %v5290 = vadd.f32 %v152, %v5289
    %5291 = vmatprep.mubr.bf16.mxu0 %v5122
    %5292 = vmatmul.mubr.bf16.gmra.mrb[0].mxu0 %v5098
    %v5293 = vpop.f32.mrb[0].mxu0
    %v5294 = vadd.f32 %v148, %v5293
    %v5295 = vpop.f32.mrb[0].mxu0
    %v5296 = vadd.f32 %v152, %v5295
    %v5297 = vpop.f32.mrb[0].mxu0
    %v5298 = vadd.f32 %v148, %v5297
    %v5299 = vpop.f32.mrb[0].mxu0
    %v5300 = vadd.f32 %v152, %v5299
    %5301 = vmatprep.mubr.bf16.mxu0 %v5125
    %5302 = vmatmul.mubr.bf16.gmra.mrb[0].mxu0 %v5100
    %v5303 = vpop.f32.mrb[0].mxu0
    %v5304 = vadd.f32 %v148, %v5303
    %v5305 = vpop.f32.mrb[0].mxu0
    %v5306 = vadd.f32 %v152, %v5305
    %v5307 = vpop.f32.mrb[0].mxu0
    %v5308 = vadd.f32 %v148, %v5307
    %v5309 = vpop.f32.mrb[0].mxu0
    %v5310 = vadd.f32 %v152, %v5309
    %5311 = vmatprep.mubr.bf16.mxu0 %v5128
    %5312 = vmatmul.mubr.bf16.gmra.mrb[0].mxu0 %v5102
    %v5313 = vpop.f32.mrb[0].mxu0
    %v5314 = vadd.f32 %v148, %v5313
    %v5315 = vpop.f32.mrb[0].mxu0
    %v5316 = vadd.f32 %v152, %v5315
    %v5317 = vpop.f32.mrb[0].mxu0
    %v5318 = vadd.f32 %v148, %v5317
    %v5319 = vpop.f32.mrb[0].mxu0
    %v5320 = vadd.f32 %v152, %v5319
    %5321 = vmatprep.mubr.bf16.mxu0 %v5131
    %5322 = vmatmul.mubr.bf16.gmra.mrb[0].mxu0 %v5104
    %v5323 = vpop.f32.mrb[0].mxu0
    %v5324 = vadd.f32 %v148, %v5323
    %v5325 = vpop.f32.mrb[0].mxu0
    %v5326 = vadd.f32 %v152, %v5325
    %v5327 = vpop.f32.mrb[0].mxu0
    %v5328 = vadd.f32 %v148, %v5327
    %v5329 = vpop.f32.mrb[0].mxu0
    %v5330 = vadd.f32 %v152, %v5329
    %5331 = vmatprep.mubr.bf16.mxu0 %v5134
    %5332 = vmatmul.mubr.bf16.gmra.mrb[0].mxu0 %v5106
    %v5333 = vpop.f32.mrb[0].mxu0
    %v5334 = vadd.f32 %v148, %v5333
    %v5335 = vpop.f32.mrb[0].mxu0
    %v5336 = vadd.f32 %v152, %v5335
    %v5337 = vpop.f32.mrb[0].mxu0
    %v5338 = vadd.f32 %v148, %v5337
    %v5339 = vpop.f32.mrb[0].mxu0
    %v5340 = vadd.f32 %v152, %v5339
    %5341 = vdwg.mxu0
    %5342 = vmatprep.subr.bf16.mxu0 %v533
    %5343 = vmatpush1.bf16.msra.mxu0 %v532
    %5344 = vmatprep.subr.bf16.mxu0 %v541
    %5345 = vmatpush1.bf16.msra.mxu0 %v540
    %5346 = vmatprep.subr.bf16.mxu0 %v549
    %5347 = vmatpush1.bf16.msra.mxu0 %v548
    %5348 = vmatprep.subr.bf16.mxu0 %v557
    %5349 = vmatpush1.bf16.msra.mxu0 %v556
    %5350 = vmatprep.subr.bf16.mxu0 %v565
    %5351 = vmatpush1.bf16.msra.mxu0 %v564
    %5352 = vmatprep.subr.bf16.mxu0 %v573
    %5353 = vmatpush1.bf16.msra.mxu0 %v572
    %5354 = vmatprep.subr.bf16.mxu0 %v581
    %5355 = vmatpush1.bf16.msra.mxu0 %v580
    %5356 = vmatprep.subr.bf16.mxu0 %v589
    %5357 = vmatpush1.bf16.msra.mxu0 %v588
    %5358 = vmatprep.subr.bf16.mxu0 %v597
    %5359 = vmatpush1.bf16.msra.mxu0 %v596
    %5360 = vmatprep.subr.bf16.mxu0 %v605
    %5361 = vmatpush1.bf16.msra.mxu0 %v604
    %5362 = vmatprep.subr.bf16.mxu0 %v613
    %5363 = vmatpush1.bf16.msra.mxu0 %v612
    %5364 = vmatprep.subr.bf16.mxu0 %v621
    %5365 = vmatpush1.bf16.msra.mxu0 %v620
    %5366 = vmatprep.subr.bf16.mxu0 0
    %5367 = vmatpush1.bf16.msra.mxu0 0
    %5368 = vmatprep.subr.bf16.mxu0 0
    %5369 = vmatpush1.bf16.msra.mxu0 0
    %5370 = vmatprep.subr.bf16.mxu0 0
    %5371 = vmatpush1.bf16.msra.mxu0 0
    %5372 = vmatprep.subr.bf16.mxu0 0
    %5373 = vmatpush1.bf16.msra.mxu0 0
    %5374 = vmatprep.mubr.bf16.mxu0 %v5116
    %5375 = vmatmul.mubr.bf16.gmra.mrb[0].mxu0 %v5094
    %v5376 = vpop.f32.mrb[0].mxu0
    %v5377 = vadd.f32 %v156, %v5376
    %v5378 = vpop.f32.mrb[0].mxu0
    %v5379 = vadd.f32 %v160, %v5378
    %v5380 = vpop.f32.mrb[0].mxu0
    %v5381 = vadd.f32 %v156, %v5380
    %v5382 = vpop.f32.mrb[0].mxu0
    %v5383 = vadd.f32 %v160, %v5382
    %5384 = vmatprep.mubr.bf16.mxu0 %v5119
    %5385 = vmatmul.mubr.bf16.gmra.mrb[0].mxu0 %v5096
    %v5386 = vpop.f32.mrb[0].mxu0
    %v5387 = vadd.f32 %v156, %v5386
    %v5388 = vpop.f32.mrb[0].mxu0
    %v5389 = vadd.f32 %v160, %v5388
    %v5390 = vpop.f32.mrb[0].mxu0
    %v5391 = vadd.f32 %v156, %v5390
    %v5392 = vpop.f32.mrb[0].mxu0
    %v5393 = vadd.f32 %v160, %v5392
    %5394 = vmatprep.mubr.bf16.mxu0 %v5122
    %5395 = vmatmul.mubr.bf16.gmra.mrb[0].mxu0 %v5098
    %v5396 = vpop.f32.mrb[0].mxu0
    %v5397 = vadd.f32 %v156, %v5396
    %v5398 = vpop.f32.mrb[0].mxu0
    %v5399 = vadd.f32 %v160, %v5398
    %v5400 = vpop.f32.mrb[0].mxu0
    %v5401 = vadd.f32 %v156, %v5400
    %v5402 = vpop.f32.mrb[0].mxu0
    %v5403 = vadd.f32 %v160, %v5402
    %5404 = vmatprep.mubr.bf16.mxu0 %v5125
    %5405 = vmatmul.mubr.bf16.gmra.mrb[0].mxu0 %v5100
    %v5406 = vpop.f32.mrb[0].mxu0
    %v5407 = vadd.f32 %v156, %v5406
    %v5408 = vpop.f32.mrb[0].mxu0
    %v5409 = vadd.f32 %v160, %v5408
    %v5410 = vpop.f32.mrb[0].mxu0
    %v5411 = vadd.f32 %v156, %v5410
    %v5412 = vpop.f32.mrb[0].mxu0
    %v5413 = vadd.f32 %v160, %v5412
    %5414 = vmatprep.mubr.bf16.mxu0 %v5128
    %5415 = vmatmul.mubr.bf16.gmra.mrb[0].mxu0 %v5102
    %v5416 = vpop.f32.mrb[0].mxu0
    %v5417 = vadd.f32 %v156, %v5416
    %v5418 = vpop.f32.mrb[0].mxu0
    %v5419 = vadd.f32 %v160, %v5418
    %v5420 = vpop.f32.mrb[0].mxu0
    %v5421 = vadd.f32 %v156, %v5420
    %v5422 = vpop.f32.mrb[0].mxu0
    %v5423 = vadd.f32 %v160, %v5422
    %5424 = vmatprep.mubr.bf16.mxu0 %v5131
    %5425 = vmatmul.mubr.bf16.gmra.mrb[0].mxu0 %v5104
    %v5426 = vpop.f32.mrb[0].mxu0
    %v5427 = vadd.f32 %v156, %v5426
    %v5428 = vpop.f32.mrb[0].mxu0
    %v5429 = vadd.f32 %v160, %v5428
    %v5430 = vpop.f32.mrb[0].mxu0
    %v5431 = vadd.f32 %v156, %v5430
    %v5432 = vpop.f32.mrb[0].mxu0
    %v5433 = vadd.f32 %v160, %v5432
    %5434 = vmatprep.mubr.bf16.mxu0 %v5134
    %5435 = vmatmul.mubr.bf16.gmra.mrb[0].mxu0 %v5106
    %v5436 = vpop.f32.mrb[0].mxu0
    %v5437 = vadd.f32 %v156, %v5436
    %v5438 = vpop.f32.mrb[0].mxu0
    %v5439 = vadd.f32 %v160, %v5438
    %v5440 = vpop.f32.mrb[0].mxu0
    %v5441 = vadd.f32 %v156, %v5440
    %v5442 = vpop.f32.mrb[0].mxu0
    %v5443 = vadd.f32 %v160, %v5442
    %5444 = vdwg.mxu0
    %5445 = vmatprep.subr.bf16.mxu0 %v535
    %5446 = vmatpush1.bf16.msra.mxu0 %v534
    %5447 = vmatprep.subr.bf16.mxu0 %v543
    %5448 = vmatpush1.bf16.msra.mxu0 %v542
    %5449 = vmatprep.subr.bf16.mxu0 %v551
    %5450 = vmatpush1.bf16.msra.mxu0 %v550
    %5451 = vmatprep.subr.bf16.mxu0 %v559
    %5452 = vmatpush1.bf16.msra.mxu0 %v558
    %5453 = vmatprep.subr.bf16.mxu0 %v567
    %5454 = vmatpush1.bf16.msra.mxu0 %v566
    %5455 = vmatprep.subr.bf16.mxu0 %v575
    %5456 = vmatpush1.bf16.msra.mxu0 %v574
    %5457 = vmatprep.subr.bf16.mxu0 %v583
    %5458 = vmatpush1.bf16.msra.mxu0 %v582
    %5459 = vmatprep.subr.bf16.mxu0 %v591
    %5460 = vmatpush1.bf16.msra.mxu0 %v590
    %5461 = vmatprep.subr.bf16.mxu0 %v599
    %5462 = vmatpush1.bf16.msra.mxu0 %v598
    %5463 = vmatprep.subr.bf16.mxu0 %v607
    %5464 = vmatpush1.bf16.msra.mxu0 %v606
    %5465 = vmatprep.subr.bf16.mxu0 %v615
    %5466 = vmatpush1.bf16.msra.mxu0 %v614
    %5467 = vmatprep.subr.bf16.mxu0 %v623
    %5468 = vmatpush1.bf16.msra.mxu0 %v622
    %5469 = vmatprep.subr.bf16.mxu0 0
    %5470 = vmatpush1.bf16.msra.mxu0 0
    %5471 = vmatprep.subr.bf16.mxu0 0
    %5472 = vmatpush1.bf16.msra.mxu0 0
    %5473 = vmatprep.subr.bf16.mxu0 0
    %5474 = vmatpush1.bf16.msra.mxu0 0
    %5475 = vmatprep.subr.bf16.mxu0 0
    %5476 = vmatpush1.bf16.msra.mxu0 0
    %5477 = vmatprep.mubr.bf16.mxu0 %v5116
    %5478 = vmatmul.mubr.bf16.gmra.mrb[0].mxu0 %v5094
    %v5479 = vpop.f32.mrb[0].mxu0
    %v5480 = vadd.f32 %v164, %v5479
    %v5481 = vpop.f32.mrb[0].mxu0
    %v5482 = vadd.f32 %v168, %v5481
    %v5483 = vpop.f32.mrb[0].mxu0
    %v5484 = vadd.f32 %v164, %v5483
    %v5485 = vpop.f32.mrb[0].mxu0
    %v5486 = vadd.f32 %v168, %v5485
    %5487 = vmatprep.mubr.bf16.mxu0 %v5119
    %5488 = vmatmul.mubr.bf16.gmra.mrb[0].mxu0 %v5096
    %v5489 = vpop.f32.mrb[0].mxu0
    %v5490 = vadd.f32 %v164, %v5489
    %v5491 = vpop.f32.mrb[0].mxu0
    %v5492 = vadd.f32 %v168, %v5491
    %v5493 = vpop.f32.mrb[0].mxu0
    %v5494 = vadd.f32 %v164, %v5493
    %v5495 = vpop.f32.mrb[0].mxu0
    %v5496 = vadd.f32 %v168, %v5495
    %5497 = vmatprep.mubr.bf16.mxu0 %v5122
    %5498 = vmatmul.mubr.bf16.gmra.mrb[0].mxu0 %v5098
    %v5499 = vpop.f32.mrb[0].mxu0
    %v5500 = vadd.f32 %v164, %v5499
    %v5501 = vpop.f32.mrb[0].mxu0
    %v5502 = vadd.f32 %v168, %v5501
    %v5503 = vpop.f32.mrb[0].mxu0
    %v5504 = vadd.f32 %v164, %v5503
    %v5505 = vpop.f32.mrb[0].mxu0
    %v5506 = vadd.f32 %v168, %v5505
    %5507 = vmatprep.mubr.bf16.mxu0 %v5125
    %5508 = vmatmul.mubr.bf16.gmra.mrb[0].mxu0 %v5100
    %v5509 = vpop.f32.mrb[0].mxu0
    %v5510 = vadd.f32 %v164, %v5509
    %v5511 = vpop.f32.mrb[0].mxu0
    %v5512 = vadd.f32 %v168, %v5511
    %v5513 = vpop.f32.mrb[0].mxu0
    %v5514 = vadd.f32 %v164, %v5513
    %v5515 = vpop.f32.mrb[0].mxu0
    %v5516 = vadd.f32 %v168, %v5515
    %5517 = vmatprep.mubr.bf16.mxu0 %v5128
    %5518 = vmatmul.mubr.bf16.gmra.mrb[0].mxu0 %v5102
    %v5519 = vpop.f32.mrb[0].mxu0
    %v5520 = vadd.f32 %v164, %v5519
    %v5521 = vpop.f32.mrb[0].mxu0
    %v5522 = vadd.f32 %v168, %v5521
    %v5523 = vpop.f32.mrb[0].mxu0
    %v5524 = vadd.f32 %v164, %v5523
    %v5525 = vpop.f32.mrb[0].mxu0
    %v5526 = vadd.f32 %v168, %v5525
    %5527 = vmatprep.mubr.bf16.mxu0 %v5131
    %5528 = vmatmul.mubr.bf16.gmra.mrb[0].mxu0 %v5104
    %v5529 = vpop.f32.mrb[0].mxu0
    %v5530 = vadd.f32 %v164, %v5529
    %v5531 = vpop.f32.mrb[0].mxu0
    %v5532 = vadd.f32 %v168, %v5531
    %v5533 = vpop.f32.mrb[0].mxu0
    %v5534 = vadd.f32 %v164, %v5533
    %v5535 = vpop.f32.mrb[0].mxu0
    %v5536 = vadd.f32 %v168, %v5535
    %5537 = vmatprep.mubr.bf16.mxu0 %v5134
    %5538 = vmatmul.mubr.bf16.gmra.mrb[0].mxu0 %v5106
    %v5539 = vpop.f32.mrb[0].mxu0
    %v5540 = vadd.f32 %v164, %v5539
    %v5541 = vpop.f32.mrb[0].mxu0
    %v5542 = vadd.f32 %v168, %v5541
    %v5543 = vpop.f32.mrb[0].mxu0
    %v5544 = vadd.f32 %v164, %v5543
    %v5545 = vpop.f32.mrb[0].mxu0
    %v5546 = vadd.f32 %v168, %v5545
    %5547 = vdwg.mxu0
    %v5548 = vmax.f32 %v5171, 0.0
    %v5549 = vmax.f32 %v5173, 0.0
    %v5550 = vmax.f32 %v5274, 0.0
    %v5551 = vmax.f32 %v5276, 0.0
    %v5552 = vmax.f32 %v5377, 0.0
    %v5553 = vmax.f32 %v5379, 0.0
    %v5554 = vmax.f32 %v5480, 0.0
    %v5555 = vmax.f32 %v5482, 0.0
    %v5556 = vmax.f32 %v5175, 0.0
    %v5557 = vmax.f32 %v5177, 0.0
    %v5558 = vmax.f32 %v5278, 0.0
    %v5559 = vmax.f32 %v5280, 0.0
    %v5560 = vmax.f32 %v5381, 0.0
    %v5561 = vmax.f32 %v5383, 0.0
    %v5562 = vmax.f32 %v5484, 0.0
    %v5563 = vmax.f32 %v5486, 0.0
    %v5564 = vmax.f32 %v5181, 0.0
    %v5565 = vmax.f32 %v5183, 0.0
    %v5566 = vmax.f32 %v5284, 0.0
    %v5567 = vmax.f32 %v5286, 0.0
    %v5568 = vmax.f32 %v5387, 0.0
    %v5569 = vmax.f32 %v5389, 0.0
    %v5570 = vmax.f32 %v5490, 0.0
    %v5571 = vmax.f32 %v5492, 0.0
    %v5572 = vmax.f32 %v5185, 0.0
    %v5573 = vmax.f32 %v5187, 0.0
    %v5574 = vmax.f32 %v5288, 0.0
    %v5575 = vmax.f32 %v5290, 0.0
    %v5576 = vmax.f32 %v5391, 0.0
    %v5577 = vmax.f32 %v5393, 0.0
    %v5578 = vmax.f32 %v5494, 0.0
    %v5579 = vmax.f32 %v5496, 0.0
    %v5580 = vmax.f32 %v5191, 0.0
    %v5581 = vmax.f32 %v5193, 0.0
    %v5582 = vmax.f32 %v5294, 0.0
    %v5583 = vmax.f32 %v5296, 0.0
    %v5584 = vmax.f32 %v5397, 0.0
    %v5585 = vmax.f32 %v5399, 0.0
    %v5586 = vmax.f32 %v5500, 0.0
    %v5587 = vmax.f32 %v5502, 0.0
    %v5588 = vmax.f32 %v5195, 0.0
    %v5589 = vmax.f32 %v5197, 0.0
    %v5590 = vmax.f32 %v5298, 0.0
    %v5591 = vmax.f32 %v5300, 0.0
    %v5592 = vmax.f32 %v5401, 0.0
    %v5593 = vmax.f32 %v5403, 0.0
    %v5594 = vmax.f32 %v5504, 0.0
    %v5595 = vmax.f32 %v5506, 0.0
    %v5596 = vmax.f32 %v5201, 0.0
    %v5597 = vmax.f32 %v5203, 0.0
    %v5598 = vmax.f32 %v5304, 0.0
    %v5599 = vmax.f32 %v5306, 0.0
    %v5600 = vmax.f32 %v5407, 0.0
    %v5601 = vmax.f32 %v5409, 0.0
    %v5602 = vmax.f32 %v5510, 0.0
    %v5603 = vmax.f32 %v5512, 0.0
    %v5604 = vmax.f32 %v5205, 0.0
    %v5605 = vmax.f32 %v5207, 0.0
    %v5606 = vmax.f32 %v5308, 0.0
    %v5607 = vmax.f32 %v5310, 0.0
    %v5608 = vmax.f32 %v5411, 0.0
    %v5609 = vmax.f32 %v5413, 0.0
    %v5610 = vmax.f32 %v5514, 0.0
    %v5611 = vmax.f32 %v5516, 0.0
    %v5612 = vmax.f32 %v5211, 0.0
    %v5613 = vmax.f32 %v5213, 0.0
    %v5614 = vmax.f32 %v5314, 0.0
    %v5615 = vmax.f32 %v5316, 0.0
    %v5616 = vmax.f32 %v5417, 0.0
    %v5617 = vmax.f32 %v5419, 0.0
    %v5618 = vmax.f32 %v5520, 0.0
    %v5619 = vmax.f32 %v5522, 0.0
    %v5620 = vmax.f32 %v5215, 0.0
    %v5621 = vmax.f32 %v5217, 0.0
    %v5622 = vmax.f32 %v5318, 0.0
    %v5623 = vmax.f32 %v5320, 0.0
    %v5624 = vmax.f32 %v5421, 0.0
    %v5625 = vmax.f32 %v5423, 0.0
    %v5626 = vmax.f32 %v5524, 0.0
    %v5627 = vmax.f32 %v5526, 0.0
    %v5628 = vmax.f32 %v5221, 0.0
    %v5629 = vmax.f32 %v5223, 0.0
    %v5630 = vmax.f32 %v5324, 0.0
    %v5631 = vmax.f32 %v5326, 0.0
    %v5632 = vmax.f32 %v5427, 0.0
    %v5633 = vmax.f32 %v5429, 0.0
    %v5634 = vmax.f32 %v5530, 0.0
    %v5635 = vmax.f32 %v5532, 0.0
    %v5636 = vmax.f32 %v5225, 0.0
    %v5637 = vmax.f32 %v5227, 0.0
    %v5638 = vmax.f32 %v5328, 0.0
    %v5639 = vmax.f32 %v5330, 0.0
    %v5640 = vmax.f32 %v5431, 0.0
    %v5641 = vmax.f32 %v5433, 0.0
    %v5642 = vmax.f32 %v5534, 0.0
    %v5643 = vmax.f32 %v5536, 0.0
    %v5644 = vmax.f32 %v5231, 0.0
    %v5645 = vmax.f32 %v5233, 0.0
    %v5646 = vmax.f32 %v5334, 0.0
    %v5647 = vmax.f32 %v5336, 0.0
    %v5648 = vmax.f32 %v5437, 0.0
    %v5649 = vmax.f32 %v5439, 0.0
    %v5650 = vmax.f32 %v5540, 0.0
    %v5651 = vmax.f32 %v5542, 0.0
    %v5652 = vmax.f32 %v5235, 0.0
    %v5653 = vmax.f32 %v5237, 0.0
    %v5654 = vmax.f32 %v5338, 0.0
    %v5655 = vmax.f32 %v5340, 0.0
    %v5656 = vmax.f32 %v5441, 0.0
    %v5657 = vmax.f32 %v5443, 0.0
    %v5658 = vmax.f32 %v5544, 0.0
    %v5659 = vmax.f32 %v5546, 0.0
    %v5660 = vadd.f32 %v5548, %v5564
    %v5661 = vadd.f32 %v5549, %v5565
    %v5662 = vadd.f32 %v5550, %v5566
    %v5663 = vadd.f32 %v5551, %v5567
    %v5664 = vadd.f32 %v5552, %v5568
    %v5665 = vadd.f32 %v5553, %v5569
    %v5666 = vadd.f32 %v5554, %v5570
    %v5667 = vadd.f32 %v5555, %v5571
    %v5668 = vadd.f32 %v5556, %v5572
    %v5669 = vadd.f32 %v5557, %v5573
    %v5670 = vadd.f32 %v5558, %v5574
    %v5671 = vadd.f32 %v5559, %v5575
    %v5672 = vadd.f32 %v5560, %v5576
    %v5673 = vadd.f32 %v5561, %v5577
    %v5674 = vadd.f32 %v5562, %v5578
    %v5675 = vadd.f32 %v5563, %v5579
    %v5676 = vadd.f32 %v5660, %v5580
    %v5677 = vadd.f32 %v5661, %v5581
    %v5678 = vadd.f32 %v5662, %v5582
    %v5679 = vadd.f32 %v5663, %v5583
    %v5680 = vadd.f32 %v5664, %v5584
    %v5681 = vadd.f32 %v5665, %v5585
    %v5682 = vadd.f32 %v5666, %v5586
    %v5683 = vadd.f32 %v5667, %v5587
    %v5684 = vadd.f32 %v5668, %v5588
    %v5685 = vadd.f32 %v5669, %v5589
    %v5686 = vadd.f32 %v5670, %v5590
    %v5687 = vadd.f32 %v5671, %v5591
    %v5688 = vadd.f32 %v5672, %v5592
    %v5689 = vadd.f32 %v5673, %v5593
    %v5690 = vadd.f32 %v5674, %v5594
    %v5691 = vadd.f32 %v5675, %v5595
    %v5692 = vadd.f32 %v5676, %v5596
    %v5693 = vadd.f32 %v5677, %v5597
    %v5694 = vadd.f32 %v5678, %v5598
    %v5695 = vadd.f32 %v5679, %v5599
    %v5696 = vadd.f32 %v5680, %v5600
    %v5697 = vadd.f32 %v5681, %v5601
    %v5698 = vadd.f32 %v5682, %v5602
    %v5699 = vadd.f32 %v5683, %v5603
    %v5700 = vadd.f32 %v5684, %v5604
    %v5701 = vadd.f32 %v5685, %v5605
    %v5702 = vadd.f32 %v5686, %v5606
    %v5703 = vadd.f32 %v5687, %v5607
    %v5704 = vadd.f32 %v5688, %v5608
    %v5705 = vadd.f32 %v5689, %v5609
    %v5706 = vadd.f32 %v5690, %v5610
    %v5707 = vadd.f32 %v5691, %v5611
    %v5708 = vadd.f32 %v5692, %v5612
    %v5709 = vadd.f32 %v5693, %v5613
    %v5710 = vadd.f32 %v5694, %v5614
    %v5711 = vadd.f32 %v5695, %v5615
    %v5712 = vadd.f32 %v5696, %v5616
    %v5713 = vadd.f32 %v5697, %v5617
    %v5714 = vadd.f32 %v5698, %v5618
    %v5715 = vadd.f32 %v5699, %v5619
    %v5716 = vadd.f32 %v5700, %v5620
    %v5717 = vadd.f32 %v5701, %v5621
    %v5718 = vadd.f32 %v5702, %v5622
    %v5719 = vadd.f32 %v5703, %v5623
    %v5720 = vadd.f32 %v5704, %v5624
    %v5721 = vadd.f32 %v5705, %v5625
    %v5722 = vadd.f32 %v5706, %v5626
    %v5723 = vadd.f32 %v5707, %v5627
    %v5724 = vadd.f32 %v5708, %v5628
    %v5725 = vadd.f32 %v5709, %v5629
    %v5726 = vadd.f32 %v5710, %v5630
    %v5727 = vadd.f32 %v5711, %v5631
    %v5728 = vadd.f32 %v5712, %v5632
    %v5729 = vadd.f32 %v5713, %v5633
    %v5730 = vadd.f32 %v5714, %v5634
    %v5731 = vadd.f32 %v5715, %v5635
    %v5732 = vadd.f32 %v5716, %v5636
    %v5733 = vadd.f32 %v5717, %v5637
    %v5734 = vadd.f32 %v5718, %v5638
    %v5735 = vadd.f32 %v5719, %v5639
    %v5736 = vadd.f32 %v5720, %v5640
    %v5737 = vadd.f32 %v5721, %v5641
    %v5738 = vadd.f32 %v5722, %v5642
    %v5739 = vadd.f32 %v5723, %v5643
    %v5740 = vadd.f32 %v5724, %v5644
    %v5741 = vadd.f32 %v5725, %v5645
    %v5742 = vadd.f32 %v5726, %v5646
    %v5743 = vadd.f32 %v5727, %v5647
    %v5744 = vadd.f32 %v5728, %v5648
    %v5745 = vadd.f32 %v5729, %v5649
    %v5746 = vadd.f32 %v5730, %v5650
    %v5747 = vadd.f32 %v5731, %v5651
    %v5748 = vadd.f32 %v5732, %v5652
    %v5749 = vadd.f32 %v5733, %v5653
    %v5750 = vadd.f32 %v5734, %v5654
    %v5751 = vadd.f32 %v5735, %v5655
    %v5752 = vadd.f32 %v5736, %v5656
    %v5753 = vadd.f32 %v5737, %v5657
    %v5754 = vadd.f32 %v5738, %v5658
    %v5755 = vadd.f32 %v5739, %v5659
    %v5756 = vadd.f32 %v5021, %v5740
    %v5757 = vadd.f32 %v5022, %v5741
    %v5758 = vadd.f32 %v5023, %v5742
    %v5759 = vadd.f32 %v5024, %v5743
    %v5760 = vadd.f32 %v5025, %v5744
    %v5761 = vadd.f32 %v5026, %v5745
    %v5762 = vadd.f32 %v5027, %v5746
    %v5763 = vadd.f32 %v5028, %v5747
    %v5764 = vadd.f32 %v5029, %v5748
    %v5765 = vadd.f32 %v5030, %v5749
    %v5766 = vadd.f32 %v5031, %v5750
    %v5767 = vadd.f32 %v5032, %v5751
    %v5768 = vadd.f32 %v5033, %v5752
    %v5769 = vadd.f32 %v5034, %v5753
    %v5770 = vadd.f32 %v5035, %v5754
    %v5771 = vadd.f32 %v5036, %v5755
    %s5772 = scalar_lea.vmem %s0, 784
    %v5773 = vld [vmem:[%s5772] sm:$0xff]
    %v5774 = vld [vmem:[%s5772 + $0x8] sm:$0xff]
    %v5775 = vld [vmem:[%s5772 + $0x10] sm:$0xff]
    %v5776 = vld [vmem:[%s5772 + $0x18] sm:$0xff]
    %v5777 = vld [vmem:[%s5772 + $0x20] sm:$0xff]
    %v5778 = vld [vmem:[%s5772 + $0x28] sm:$0xff]
    %v5779 = vld [vmem:[%s5772 + $0x30] sm:$0xff]
    %v5780 = vld [vmem:[%s5772 + $0x38] sm:$0xff]
    %v5781 = vld [vmem:[%s5772 + $0x40] sm:$0xff]
    %v5782 = vld [vmem:[%s5772 + $0x48] sm:$0xff]
    %v5783 = vld [vmem:[%s5772 + $0x50] sm:$0xff]
    %v5784 = vld [vmem:[%s5772 + $0x58] sm:$0xff]
    %v5785 = vld [vmem:[%s5772 + $0x60] sm:$0xff]
    %v5786 = vld [vmem:[%s5772 + $0x68] sm:$0xff]
    %v5801 = vunpack.c.l.b16 %v5773
    %v5802 = vunpack.c.h.b16 %v5773
    %v5803 = vunpack.c.l.b16 %v5774
    %v5804 = vunpack.c.h.b16 %v5774
    %v5805 = vunpack.c.l.b16 %v5775
    %v5806 = vunpack.c.h.b16 %v5775
    %v5807 = vunpack.c.l.b16 %v5776
    %v5808 = vunpack.c.h.b16 %v5776
    %v5809 = vunpack.c.l.b16 %v5777
    %v5810 = vunpack.c.h.b16 %v5777
    %v5811 = vunpack.c.l.b16 %v5778
    %v5812 = vunpack.c.h.b16 %v5778
    %v5813 = vunpack.c.l.b16 %v5779
    %v5814 = vunpack.c.h.b16 %v5779
    %v5815 = vunpack.c.l.b16 %v5780
    %v5816 = vunpack.c.h.b16 %v5780
    %v5817 = vunpack.c.l.b16 %v5781
    %v5818 = vunpack.c.h.b16 %v5781
    %v5819 = vunpack.c.l.b16 %v5782
    %v5820 = vunpack.c.h.b16 %v5782
    %v5821 = vunpack.c.l.b16 %v5783
    %v5822 = vunpack.c.h.b16 %v5783
    %v5823 = vunpack.c.l.b16 %v5784
    %v5824 = vunpack.c.h.b16 %v5784
    %v5825 = vunpack.c.l.b16 %v5785
    %v5826 = vunpack.c.h.b16 %v5785
    %v5827 = vunpack.c.l.b16 %v5786
    %v5828 = vunpack.c.h.b16 %v5786
    %v5829 = vpack.c.b16 %v5803, %v5801
    %v5830 = vpack.c.b16 %v5804, %v5802
    %v5831 = vpack.c.b16 %v5807, %v5805
    %v5832 = vpack.c.b16 %v5808, %v5806
    %v5833 = vpack.c.b16 %v5811, %v5809
    %v5834 = vpack.c.b16 %v5812, %v5810
    %v5835 = vpack.c.b16 %v5815, %v5813
    %v5836 = vpack.c.b16 %v5816, %v5814
    %v5837 = vpack.c.b16 %v5819, %v5817
    %v5838 = vpack.c.b16 %v5820, %v5818
    %v5839 = vpack.c.b16 %v5823, %v5821
    %v5840 = vpack.c.b16 %v5824, %v5822
    %v5841 = vpack.c.b16 %v5827, %v5825
    %v5842 = vpack.c.b16 %v5828, %v5826
    %v5851 = vsel %vm720, %v5830, 0
    %v5854 = vsel %vm720, %v5832, 0
    %v5857 = vsel %vm720, %v5834, 0
    %v5860 = vsel %vm720, %v5836, 0
    %v5863 = vsel %vm720, %v5838, 0
    %v5866 = vsel %vm720, %v5840, 0
    %v5869 = vsel %vm720, %v5842, 0
    %5871 = vmatprep.subr.bf16.mxu0 %v529
    %5872 = vmatpush1.bf16.msra.mxu0 %v528
    %5873 = vmatprep.subr.bf16.mxu0 %v537
    %5874 = vmatpush1.bf16.msra.mxu0 %v536
    %5875 = vmatprep.subr.bf16.mxu0 %v545
    %5876 = vmatpush1.bf16.msra.mxu0 %v544
    %5877 = vmatprep.subr.bf16.mxu0 %v553
    %5878 = vmatpush1.bf16.msra.mxu0 %v552
    %5879 = vmatprep.subr.bf16.mxu0 %v561
    %5880 = vmatpush1.bf16.msra.mxu0 %v560
    %5881 = vmatprep.subr.bf16.mxu0 %v569
    %5882 = vmatpush1.bf16.msra.mxu0 %v568
    %5883 = vmatprep.subr.bf16.mxu0 %v577
    %5884 = vmatpush1.bf16.msra.mxu0 %v576
    %5885 = vmatprep.subr.bf16.mxu0 %v585
    %5886 = vmatpush1.bf16.msra.mxu0 %v584
    %5887 = vmatprep.subr.bf16.mxu0 %v593
    %5888 = vmatpush1.bf16.msra.mxu0 %v592
    %5889 = vmatprep.subr.bf16.mxu0 %v601
    %5890 = vmatpush1.bf16.msra.mxu0 %v600
    %5891 = vmatprep.subr.bf16.mxu0 %v609
    %5892 = vmatpush1.bf16.msra.mxu0 %v608
    %5893 = vmatprep.subr.bf16.mxu0 %v617
    %5894 = vmatpush1.bf16.msra.mxu0 %v616
    %5895 = vmatprep.subr.bf16.mxu0 0
    %5896 = vmatpush1.bf16.msra.mxu0 0
    %5897 = vmatprep.subr.bf16.mxu0 0
    %5898 = vmatpush1.bf16.msra.mxu0 0
    %5899 = vmatprep.subr.bf16.mxu0 0
    %5900 = vmatpush1.bf16.msra.mxu0 0
    %5901 = vmatprep.subr.bf16.mxu0 0
    %5902 = vmatpush1.bf16.msra.mxu0 0
    %5903 = vmatprep.mubr.bf16.mxu0 %v5851
    %5904 = vmatmul.mubr.bf16.gmra.mrb[0].mxu0 %v5829
    %v5905 = vpop.f32.mrb[0].mxu0
    %v5906 = vadd.f32 %v140, %v5905
    %v5907 = vpop.f32.mrb[0].mxu0
    %v5908 = vadd.f32 %v144, %v5907
    %v5909 = vpop.f32.mrb[0].mxu0
    %v5910 = vadd.f32 %v140, %v5909
    %v5911 = vpop.f32.mrb[0].mxu0
    %v5912 = vadd.f32 %v144, %v5911
    %5913 = vmatprep.mubr.bf16.mxu0 %v5854
    %5914 = vmatmul.mubr.bf16.gmra.mrb[0].mxu0 %v5831
    %v5915 = vpop.f32.mrb[0].mxu0
    %v5916 = vadd.f32 %v140, %v5915
    %v5917 = vpop.f32.mrb[0].mxu0
    %v5918 = vadd.f32 %v144, %v5917
    %v5919 = vpop.f32.mrb[0].mxu0
    %v5920 = vadd.f32 %v140, %v5919
    %v5921 = vpop.f32.mrb[0].mxu0
    %v5922 = vadd.f32 %v144, %v5921
    %5923 = vmatprep.mubr.bf16.mxu0 %v5857
    %5924 = vmatmul.mubr.bf16.gmra.mrb[0].mxu0 %v5833
    %v5925 = vpop.f32.mrb[0].mxu0
    %v5926 = vadd.f32 %v140, %v5925
    %v5927 = vpop.f32.mrb[0].mxu0
    %v5928 = vadd.f32 %v144, %v5927
    %v5929 = vpop.f32.mrb[0].mxu0
    %v5930 = vadd.f32 %v140, %v5929
    %v5931 = vpop.f32.mrb[0].mxu0
    %v5932 = vadd.f32 %v144, %v5931
    %5933 = vmatprep.mubr.bf16.mxu0 %v5860
    %5934 = vmatmul.mubr.bf16.gmra.mrb[0].mxu0 %v5835
    %v5935 = vpop.f32.mrb[0].mxu0
    %v5936 = vadd.f32 %v140, %v5935
    %v5937 = vpop.f32.mrb[0].mxu0
    %v5938 = vadd.f32 %v144, %v5937
    %v5939 = vpop.f32.mrb[0].mxu0
    %v5940 = vadd.f32 %v140, %v5939
    %v5941 = vpop.f32.mrb[0].mxu0
    %v5942 = vadd.f32 %v144, %v5941
    %5943 = vmatprep.mubr.bf16.mxu0 %v5863
    %5944 = vmatmul.mubr.bf16.gmra.mrb[0].mxu0 %v5837
    %v5945 = vpop.f32.mrb[0].mxu0
    %v5946 = vadd.f32 %v140, %v5945
    %v5947 = vpop.f32.mrb[0].mxu0
    %v5948 = vadd.f32 %v144, %v5947
    %v5949 = vpop.f32.mrb[0].mxu0
    %v5950 = vadd.f32 %v140, %v5949
    %v5951 = vpop.f32.mrb[0].mxu0
    %v5952 = vadd.f32 %v144, %v5951
    %5953 = vmatprep.mubr.bf16.mxu0 %v5866
    %5954 = vmatmul.mubr.bf16.gmra.mrb[0].mxu0 %v5839
    %v5955 = vpop.f32.mrb[0].mxu0
    %v5956 = vadd.f32 %v140, %v5955
    %v5957 = vpop.f32.mrb[0].mxu0
    %v5958 = vadd.f32 %v144, %v5957
    %v5959 = vpop.f32.mrb[0].mxu0
    %v5960 = vadd.f32 %v140, %v5959
    %v5961 = vpop.f32.mrb[0].mxu0
    %v5962 = vadd.f32 %v144, %v5961
    %5963 = vmatprep.mubr.bf16.mxu0 %v5869
    %5964 = vmatmul.mubr.bf16.gmra.mrb[0].mxu0 %v5841
    %v5965 = vpop.f32.mrb[0].mxu0
    %v5966 = vadd.f32 %v140, %v5965
    %v5967 = vpop.f32.mrb[0].mxu0
    %v5968 = vadd.f32 %v144, %v5967
    %v5969 = vpop.f32.mrb[0].mxu0
    %v5970 = vadd.f32 %v140, %v5969
    %v5971 = vpop.f32.mrb[0].mxu0
    %v5972 = vadd.f32 %v144, %v5971
    %5973 = vdwg.mxu0
    %5974 = vmatprep.subr.bf16.mxu0 %v531
    %5975 = vmatpush1.bf16.msra.mxu0 %v530
    %5976 = vmatprep.subr.bf16.mxu0 %v539
    %5977 = vmatpush1.bf16.msra.mxu0 %v538
    %5978 = vmatprep.subr.bf16.mxu0 %v547
    %5979 = vmatpush1.bf16.msra.mxu0 %v546
    %5980 = vmatprep.subr.bf16.mxu0 %v555
    %5981 = vmatpush1.bf16.msra.mxu0 %v554
    %5982 = vmatprep.subr.bf16.mxu0 %v563
    %5983 = vmatpush1.bf16.msra.mxu0 %v562
    %5984 = vmatprep.subr.bf16.mxu0 %v571
    %5985 = vmatpush1.bf16.msra.mxu0 %v570
    %5986 = vmatprep.subr.bf16.mxu0 %v579
    %5987 = vmatpush1.bf16.msra.mxu0 %v578
    %5988 = vmatprep.subr.bf16.mxu0 %v587
    %5989 = vmatpush1.bf16.msra.mxu0 %v586
    %5990 = vmatprep.subr.bf16.mxu0 %v595
    %5991 = vmatpush1.bf16.msra.mxu0 %v594
    %5992 = vmatprep.subr.bf16.mxu0 %v603
    %5993 = vmatpush1.bf16.msra.mxu0 %v602
    %5994 = vmatprep.subr.bf16.mxu0 %v611
    %5995 = vmatpush1.bf16.msra.mxu0 %v610
    %5996 = vmatprep.subr.bf16.mxu0 %v619
    %5997 = vmatpush1.bf16.msra.mxu0 %v618
    %5998 = vmatprep.subr.bf16.mxu0 0
    %5999 = vmatpush1.bf16.msra.mxu0 0
    %6000 = vmatprep.subr.bf16.mxu0 0
    %6001 = vmatpush1.bf16.msra.mxu0 0
    %6002 = vmatprep.subr.bf16.mxu0 0
    %6003 = vmatpush1.bf16.msra.mxu0 0
    %6004 = vmatprep.subr.bf16.mxu0 0
    %6005 = vmatpush1.bf16.msra.mxu0 0
    %6006 = vmatprep.mubr.bf16.mxu0 %v5851
    %6007 = vmatmul.mubr.bf16.gmra.mrb[0].mxu0 %v5829
    %v6008 = vpop.f32.mrb[0].mxu0
    %v6009 = vadd.f32 %v148, %v6008
    %v6010 = vpop.f32.mrb[0].mxu0
    %v6011 = vadd.f32 %v152, %v6010
    %v6012 = vpop.f32.mrb[0].mxu0
    %v6013 = vadd.f32 %v148, %v6012
    %v6014 = vpop.f32.mrb[0].mxu0
    %v6015 = vadd.f32 %v152, %v6014
    %6016 = vmatprep.mubr.bf16.mxu0 %v5854
    %6017 = vmatmul.mubr.bf16.gmra.mrb[0].mxu0 %v5831
    %v6018 = vpop.f32.mrb[0].mxu0
    %v6019 = vadd.f32 %v148, %v6018
    %v6020 = vpop.f32.mrb[0].mxu0
    %v6021 = vadd.f32 %v152, %v6020
    %v6022 = vpop.f32.mrb[0].mxu0
    %v6023 = vadd.f32 %v148, %v6022
    %v6024 = vpop.f32.mrb[0].mxu0
    %v6025 = vadd.f32 %v152, %v6024
    %6026 = vmatprep.mubr.bf16.mxu0 %v5857
    %6027 = vmatmul.mubr.bf16.gmra.mrb[0].mxu0 %v5833
    %v6028 = vpop.f32.mrb[0].mxu0
    %v6029 = vadd.f32 %v148, %v6028
    %v6030 = vpop.f32.mrb[0].mxu0
    %v6031 = vadd.f32 %v152, %v6030
    %v6032 = vpop.f32.mrb[0].mxu0
    %v6033 = vadd.f32 %v148, %v6032
    %v6034 = vpop.f32.mrb[0].mxu0
    %v6035 = vadd.f32 %v152, %v6034
    %6036 = vmatprep.mubr.bf16.mxu0 %v5860
    %6037 = vmatmul.mubr.bf16.gmra.mrb[0].mxu0 %v5835
    %v6038 = vpop.f32.mrb[0].mxu0
    %v6039 = vadd.f32 %v148, %v6038
    %v6040 = vpop.f32.mrb[0].mxu0
    %v6041 = vadd.f32 %v152, %v6040
    %v6042 = vpop.f32.mrb[0].mxu0
    %v6043 = vadd.f32 %v148, %v6042
    %v6044 = vpop.f32.mrb[0].mxu0
    %v6045 = vadd.f32 %v152, %v6044
    %6046 = vmatprep.mubr.bf16.mxu0 %v5863
    %6047 = vmatmul.mubr.bf16.gmra.mrb[0].mxu0 %v5837
    %v6048 = vpop.f32.mrb[0].mxu0
    %v6049 = vadd.f32 %v148, %v6048
    %v6050 = vpop.f32.mrb[0].mxu0
    %v6051 = vadd.f32 %v152, %v6050
    %v6052 = vpop.f32.mrb[0].mxu0
    %v6053 = vadd.f32 %v148, %v6052
    %v6054 = vpop.f32.mrb[0].mxu0
    %v6055 = vadd.f32 %v152, %v6054
    %6056 = vmatprep.mubr.bf16.mxu0 %v5866
    %6057 = vmatmul.mubr.bf16.gmra.mrb[0].mxu0 %v5839
    %v6058 = vpop.f32.mrb[0].mxu0
    %v6059 = vadd.f32 %v148, %v6058
    %v6060 = vpop.f32.mrb[0].mxu0
    %v6061 = vadd.f32 %v152, %v6060
    %v6062 = vpop.f32.mrb[0].mxu0
    %v6063 = vadd.f32 %v148, %v6062
    %v6064 = vpop.f32.mrb[0].mxu0
    %v6065 = vadd.f32 %v152, %v6064
    %6066 = vmatprep.mubr.bf16.mxu0 %v5869
    %6067 = vmatmul.mubr.bf16.gmra.mrb[0].mxu0 %v5841
    %v6068 = vpop.f32.mrb[0].mxu0
    %v6069 = vadd.f32 %v148, %v6068
    %v6070 = vpop.f32.mrb[0].mxu0
    %v6071 = vadd.f32 %v152, %v6070
    %v6072 = vpop.f32.mrb[0].mxu0
    %v6073 = vadd.f32 %v148, %v6072
    %v6074 = vpop.f32.mrb[0].mxu0
    %v6075 = vadd.f32 %v152, %v6074
    %6076 = vdwg.mxu0
    %6077 = vmatprep.subr.bf16.mxu0 %v533
    %6078 = vmatpush1.bf16.msra.mxu0 %v532
    %6079 = vmatprep.subr.bf16.mxu0 %v541
    %6080 = vmatpush1.bf16.msra.mxu0 %v540
    %6081 = vmatprep.subr.bf16.mxu0 %v549
    %6082 = vmatpush1.bf16.msra.mxu0 %v548
    %6083 = vmatprep.subr.bf16.mxu0 %v557
    %6084 = vmatpush1.bf16.msra.mxu0 %v556
    %6085 = vmatprep.subr.bf16.mxu0 %v565
    %6086 = vmatpush1.bf16.msra.mxu0 %v564
    %6087 = vmatprep.subr.bf16.mxu0 %v573
    %6088 = vmatpush1.bf16.msra.mxu0 %v572
    %6089 = vmatprep.subr.bf16.mxu0 %v581
    %6090 = vmatpush1.bf16.msra.mxu0 %v580
    %6091 = vmatprep.subr.bf16.mxu0 %v589
    %6092 = vmatpush1.bf16.msra.mxu0 %v588
    %6093 = vmatprep.subr.bf16.mxu0 %v597
    %6094 = vmatpush1.bf16.msra.mxu0 %v596
    %6095 = vmatprep.subr.bf16.mxu0 %v605
    %6096 = vmatpush1.bf16.msra.mxu0 %v604
    %6097 = vmatprep.subr.bf16.mxu0 %v613
    %6098 = vmatpush1.bf16.msra.mxu0 %v612
    %6099 = vmatprep.subr.bf16.mxu0 %v621
    %6100 = vmatpush1.bf16.msra.mxu0 %v620
    %6101 = vmatprep.subr.bf16.mxu0 0
    %6102 = vmatpush1.bf16.msra.mxu0 0
    %6103 = vmatprep.subr.bf16.mxu0 0
    %6104 = vmatpush1.bf16.msra.mxu0 0
    %6105 = vmatprep.subr.bf16.mxu0 0
    %6106 = vmatpush1.bf16.msra.mxu0 0
    %6107 = vmatprep.subr.bf16.mxu0 0
    %6108 = vmatpush1.bf16.msra.mxu0 0
    %6109 = vmatprep.mubr.bf16.mxu0 %v5851
    %6110 = vmatmul.mubr.bf16.gmra.mrb[0].mxu0 %v5829
    %v6111 = vpop.f32.mrb[0].mxu0
    %v6112 = vadd.f32 %v156, %v6111
    %v6113 = vpop.f32.mrb[0].mxu0
    %v6114 = vadd.f32 %v160, %v6113
    %v6115 = vpop.f32.mrb[0].mxu0
    %v6116 = vadd.f32 %v156, %v6115
    %v6117 = vpop.f32.mrb[0].mxu0
    %v6118 = vadd.f32 %v160, %v6117
    %6119 = vmatprep.mubr.bf16.mxu0 %v5854
    %6120 = vmatmul.mubr.bf16.gmra.mrb[0].mxu0 %v5831
    %v6121 = vpop.f32.mrb[0].mxu0
    %v6122 = vadd.f32 %v156, %v6121
    %v6123 = vpop.f32.mrb[0].mxu0
    %v6124 = vadd.f32 %v160, %v6123
    %v6125 = vpop.f32.mrb[0].mxu0
    %v6126 = vadd.f32 %v156, %v6125
    %v6127 = vpop.f32.mrb[0].mxu0
    %v6128 = vadd.f32 %v160, %v6127
    %6129 = vmatprep.mubr.bf16.mxu0 %v5857
    %6130 = vmatmul.mubr.bf16.gmra.mrb[0].mxu0 %v5833
    %v6131 = vpop.f32.mrb[0].mxu0
    %v6132 = vadd.f32 %v156, %v6131
    %v6133 = vpop.f32.mrb[0].mxu0
    %v6134 = vadd.f32 %v160, %v6133
    %v6135 = vpop.f32.mrb[0].mxu0
    %v6136 = vadd.f32 %v156, %v6135
    %v6137 = vpop.f32.mrb[0].mxu0
    %v6138 = vadd.f32 %v160, %v6137
    %6139 = vmatprep.mubr.bf16.mxu0 %v5860
    %6140 = vmatmul.mubr.bf16.gmra.mrb[0].mxu0 %v5835
    %v6141 = vpop.f32.mrb[0].mxu0
    %v6142 = vadd.f32 %v156, %v6141
    %v6143 = vpop.f32.mrb[0].mxu0
    %v6144 = vadd.f32 %v160, %v6143
    %v6145 = vpop.f32.mrb[0].mxu0
    %v6146 = vadd.f32 %v156, %v6145
    %v6147 = vpop.f32.mrb[0].mxu0
    %v6148 = vadd.f32 %v160, %v6147
    %6149 = vmatprep.mubr.bf16.mxu0 %v5863
    %6150 = vmatmul.mubr.bf16.gmra.mrb[0].mxu0 %v5837
    %v6151 = vpop.f32.mrb[0].mxu0
    %v6152 = vadd.f32 %v156, %v6151
    %v6153 = vpop.f32.mrb[0].mxu0
    %v6154 = vadd.f32 %v160, %v6153
    %v6155 = vpop.f32.mrb[0].mxu0
    %v6156 = vadd.f32 %v156, %v6155
    %v6157 = vpop.f32.mrb[0].mxu0
    %v6158 = vadd.f32 %v160, %v6157
    %6159 = vmatprep.mubr.bf16.mxu0 %v5866
    %6160 = vmatmul.mubr.bf16.gmra.mrb[0].mxu0 %v5839
    %v6161 = vpop.f32.mrb[0].mxu0
    %v6162 = vadd.f32 %v156, %v6161
    %v6163 = vpop.f32.mrb[0].mxu0
    %v6164 = vadd.f32 %v160, %v6163
    %v6165 = vpop.f32.mrb[0].mxu0
    %v6166 = vadd.f32 %v156, %v6165
    %v6167 = vpop.f32.mrb[0].mxu0
    %v6168 = vadd.f32 %v160, %v6167
    %6169 = vmatprep.mubr.bf16.mxu0 %v5869
    %6170 = vmatmul.mubr.bf16.gmra.mrb[0].mxu0 %v5841
    %v6171 = vpop.f32.mrb[0].mxu0
    %v6172 = vadd.f32 %v156, %v6171
    %v6173 = vpop.f32.mrb[0].mxu0
    %v6174 = vadd.f32 %v160, %v6173
    %v6175 = vpop.f32.mrb[0].mxu0
    %v6176 = vadd.f32 %v156, %v6175
    %v6177 = vpop.f32.mrb[0].mxu0
    %v6178 = vadd.f32 %v160, %v6177
    %6179 = vdwg.mxu0
    %6180 = vmatprep.subr.bf16.mxu0 %v535
    %6181 = vmatpush1.bf16.msra.mxu0 %v534
    %6182 = vmatprep.subr.bf16.mxu0 %v543
    %6183 = vmatpush1.bf16.msra.mxu0 %v542
    %6184 = vmatprep.subr.bf16.mxu0 %v551
    %6185 = vmatpush1.bf16.msra.mxu0 %v550
    %6186 = vmatprep.subr.bf16.mxu0 %v559
    %6187 = vmatpush1.bf16.msra.mxu0 %v558
    %6188 = vmatprep.subr.bf16.mxu0 %v567
    %6189 = vmatpush1.bf16.msra.mxu0 %v566
    %6190 = vmatprep.subr.bf16.mxu0 %v575
    %6191 = vmatpush1.bf16.msra.mxu0 %v574
    %6192 = vmatprep.subr.bf16.mxu0 %v583
    %6193 = vmatpush1.bf16.msra.mxu0 %v582
    %6194 = vmatprep.subr.bf16.mxu0 %v591
    %6195 = vmatpush1.bf16.msra.mxu0 %v590
    %6196 = vmatprep.subr.bf16.mxu0 %v599
    %6197 = vmatpush1.bf16.msra.mxu0 %v598
    %6198 = vmatprep.subr.bf16.mxu0 %v607
    %6199 = vmatpush1.bf16.msra.mxu0 %v606
    %6200 = vmatprep.subr.bf16.mxu0 %v615
    %6201 = vmatpush1.bf16.msra.mxu0 %v614
    %6202 = vmatprep.subr.bf16.mxu0 %v623
    %6203 = vmatpush1.bf16.msra.mxu0 %v622
    %6204 = vmatprep.subr.bf16.mxu0 0
    %6205 = vmatpush1.bf16.msra.mxu0 0
    %6206 = vmatprep.subr.bf16.mxu0 0
    %6207 = vmatpush1.bf16.msra.mxu0 0
    %6208 = vmatprep.subr.bf16.mxu0 0
    %6209 = vmatpush1.bf16.msra.mxu0 0
    %6210 = vmatprep.subr.bf16.mxu0 0
    %6211 = vmatpush1.bf16.msra.mxu0 0
    %6212 = vmatprep.mubr.bf16.mxu0 %v5851
    %6213 = vmatmul.mubr.bf16.gmra.mrb[0].mxu0 %v5829
    %v6214 = vpop.f32.mrb[0].mxu0
    %v6215 = vadd.f32 %v164, %v6214
    %v6216 = vpop.f32.mrb[0].mxu0
    %v6217 = vadd.f32 %v168, %v6216
    %v6218 = vpop.f32.mrb[0].mxu0
    %v6219 = vadd.f32 %v164, %v6218
    %v6220 = vpop.f32.mrb[0].mxu0
    %v6221 = vadd.f32 %v168, %v6220
    %6222 = vmatprep.mubr.bf16.mxu0 %v5854
    %6223 = vmatmul.mubr.bf16.gmra.mrb[0].mxu0 %v5831
    %v6224 = vpop.f32.mrb[0].mxu0
    %v6225 = vadd.f32 %v164, %v6224
    %v6226 = vpop.f32.mrb[0].mxu0
    %v6227 = vadd.f32 %v168, %v6226
    %v6228 = vpop.f32.mrb[0].mxu0
    %v6229 = vadd.f32 %v164, %v6228
    %v6230 = vpop.f32.mrb[0].mxu0
    %v6231 = vadd.f32 %v168, %v6230
    %6232 = vmatprep.mubr.bf16.mxu0 %v5857
    %6233 = vmatmul.mubr.bf16.gmra.mrb[0].mxu0 %v5833
    %v6234 = vpop.f32.mrb[0].mxu0
    %v6235 = vadd.f32 %v164, %v6234
    %v6236 = vpop.f32.mrb[0].mxu0
    %v6237 = vadd.f32 %v168, %v6236
    %v6238 = vpop.f32.mrb[0].mxu0
    %v6239 = vadd.f32 %v164, %v6238
    %v6240 = vpop.f32.mrb[0].mxu0
    %v6241 = vadd.f32 %v168, %v6240
    %6242 = vmatprep.mubr.bf16.mxu0 %v5860
    %6243 = vmatmul.mubr.bf16.gmra.mrb[0].mxu0 %v5835
    %v6244 = vpop.f32.mrb[0].mxu0
    %v6245 = vadd.f32 %v164, %v6244
    %v6246 = vpop.f32.mrb[0].mxu0
    %v6247 = vadd.f32 %v168, %v6246
    %v6248 = vpop.f32.mrb[0].mxu0
    %v6249 = vadd.f32 %v164, %v6248
    %v6250 = vpop.f32.mrb[0].mxu0
    %v6251 = vadd.f32 %v168, %v6250
    %6252 = vmatprep.mubr.bf16.mxu0 %v5863
    %6253 = vmatmul.mubr.bf16.gmra.mrb[0].mxu0 %v5837
    %v6254 = vpop.f32.mrb[0].mxu0
    %v6255 = vadd.f32 %v164, %v6254
    %v6256 = vpop.f32.mrb[0].mxu0
    %v6257 = vadd.f32 %v168, %v6256
    %v6258 = vpop.f32.mrb[0].mxu0
    %v6259 = vadd.f32 %v164, %v6258
    %v6260 = vpop.f32.mrb[0].mxu0
    %v6261 = vadd.f32 %v168, %v6260
    %6262 = vmatprep.mubr.bf16.mxu0 %v5866
    %6263 = vmatmul.mubr.bf16.gmra.mrb[0].mxu0 %v5839
    %v6264 = vpop.f32.mrb[0].mxu0
    %v6265 = vadd.f32 %v164, %v6264
    %v6266 = vpop.f32.mrb[0].mxu0
    %v6267 = vadd.f32 %v168, %v6266
    %v6268 = vpop.f32.mrb[0].mxu0
    %v6269 = vadd.f32 %v164, %v6268
    %v6270 = vpop.f32.mrb[0].mxu0
    %v6271 = vadd.f32 %v168, %v6270
    %6272 = vmatprep.mubr.bf16.mxu0 %v5869
    %6273 = vmatmul.mubr.bf16.gmra.mrb[0].mxu0 %v5841
    %v6274 = vpop.f32.mrb[0].mxu0
    %v6275 = vadd.f32 %v164, %v6274
    %v6276 = vpop.f32.mrb[0].mxu0
    %v6277 = vadd.f32 %v168, %v6276
    %v6278 = vpop.f32.mrb[0].mxu0
    %v6279 = vadd.f32 %v164, %v6278
    %v6280 = vpop.f32.mrb[0].mxu0
    %v6281 = vadd.f32 %v168, %v6280
    %6282 = vdwg.mxu0
    %v6283 = vmax.f32 %v5906, 0.0
    %v6284 = vmax.f32 %v5908, 0.0
    %v6285 = vmax.f32 %v6009, 0.0
    %v6286 = vmax.f32 %v6011, 0.0
    %v6287 = vmax.f32 %v6112, 0.0
    %v6288 = vmax.f32 %v6114, 0.0
    %v6289 = vmax.f32 %v6215, 0.0
    %v6290 = vmax.f32 %v6217, 0.0
    %v6291 = vmax.f32 %v5910, 0.0
    %v6292 = vmax.f32 %v5912, 0.0
    %v6293 = vmax.f32 %v6013, 0.0
    %v6294 = vmax.f32 %v6015, 0.0
    %v6295 = vmax.f32 %v6116, 0.0
    %v6296 = vmax.f32 %v6118, 0.0
    %v6297 = vmax.f32 %v6219, 0.0
    %v6298 = vmax.f32 %v6221, 0.0
    %v6299 = vmax.f32 %v5916, 0.0
    %v6300 = vmax.f32 %v5918, 0.0
    %v6301 = vmax.f32 %v6019, 0.0
    %v6302 = vmax.f32 %v6021, 0.0
    %v6303 = vmax.f32 %v6122, 0.0
    %v6304 = vmax.f32 %v6124, 0.0
    %v6305 = vmax.f32 %v6225, 0.0
    %v6306 = vmax.f32 %v6227, 0.0
    %v6307 = vmax.f32 %v5920, 0.0
    %v6308 = vmax.f32 %v5922, 0.0
    %v6309 = vmax.f32 %v6023, 0.0
    %v6310 = vmax.f32 %v6025, 0.0
    %v6311 = vmax.f32 %v6126, 0.0
    %v6312 = vmax.f32 %v6128, 0.0
    %v6313 = vmax.f32 %v6229, 0.0
    %v6314 = vmax.f32 %v6231, 0.0
    %v6315 = vmax.f32 %v5926, 0.0
    %v6316 = vmax.f32 %v5928, 0.0
    %v6317 = vmax.f32 %v6029, 0.0
    %v6318 = vmax.f32 %v6031, 0.0
    %v6319 = vmax.f32 %v6132, 0.0
    %v6320 = vmax.f32 %v6134, 0.0
    %v6321 = vmax.f32 %v6235, 0.0
    %v6322 = vmax.f32 %v6237, 0.0
    %v6323 = vmax.f32 %v5930, 0.0
    %v6324 = vmax.f32 %v5932, 0.0
    %v6325 = vmax.f32 %v6033, 0.0
    %v6326 = vmax.f32 %v6035, 0.0
    %v6327 = vmax.f32 %v6136, 0.0
    %v6328 = vmax.f32 %v6138, 0.0
    %v6329 = vmax.f32 %v6239, 0.0
    %v6330 = vmax.f32 %v6241, 0.0
    %v6331 = vmax.f32 %v5936, 0.0
    %v6332 = vmax.f32 %v5938, 0.0
    %v6333 = vmax.f32 %v6039, 0.0
    %v6334 = vmax.f32 %v6041, 0.0
    %v6335 = vmax.f32 %v6142, 0.0
    %v6336 = vmax.f32 %v6144, 0.0
    %v6337 = vmax.f32 %v6245, 0.0
    %v6338 = vmax.f32 %v6247, 0.0
    %v6339 = vmax.f32 %v5940, 0.0
    %v6340 = vmax.f32 %v5942, 0.0
    %v6341 = vmax.f32 %v6043, 0.0
    %v6342 = vmax.f32 %v6045, 0.0
    %v6343 = vmax.f32 %v6146, 0.0
    %v6344 = vmax.f32 %v6148, 0.0
    %v6345 = vmax.f32 %v6249, 0.0
    %v6346 = vmax.f32 %v6251, 0.0
    %v6347 = vmax.f32 %v5946, 0.0
    %v6348 = vmax.f32 %v5948, 0.0
    %v6349 = vmax.f32 %v6049, 0.0
    %v6350 = vmax.f32 %v6051, 0.0
    %v6351 = vmax.f32 %v6152, 0.0
    %v6352 = vmax.f32 %v6154, 0.0
    %v6353 = vmax.f32 %v6255, 0.0
    %v6354 = vmax.f32 %v6257, 0.0
    %v6355 = vmax.f32 %v5950, 0.0
    %v6356 = vmax.f32 %v5952, 0.0
    %v6357 = vmax.f32 %v6053, 0.0
    %v6358 = vmax.f32 %v6055, 0.0
    %v6359 = vmax.f32 %v6156, 0.0
    %v6360 = vmax.f32 %v6158, 0.0
    %v6361 = vmax.f32 %v6259, 0.0
    %v6362 = vmax.f32 %v6261, 0.0
    %v6363 = vmax.f32 %v5956, 0.0
    %v6364 = vmax.f32 %v5958, 0.0
    %v6365 = vmax.f32 %v6059, 0.0
    %v6366 = vmax.f32 %v6061, 0.0
    %v6367 = vmax.f32 %v6162, 0.0
    %v6368 = vmax.f32 %v6164, 0.0
    %v6369 = vmax.f32 %v6265, 0.0
    %v6370 = vmax.f32 %v6267, 0.0
    %v6371 = vmax.f32 %v5960, 0.0
    %v6372 = vmax.f32 %v5962, 0.0
    %v6373 = vmax.f32 %v6063, 0.0
    %v6374 = vmax.f32 %v6065, 0.0
    %v6375 = vmax.f32 %v6166, 0.0
    %v6376 = vmax.f32 %v6168, 0.0
    %v6377 = vmax.f32 %v6269, 0.0
    %v6378 = vmax.f32 %v6271, 0.0
    %v6379 = vmax.f32 %v5966, 0.0
    %v6380 = vmax.f32 %v5968, 0.0
    %v6381 = vmax.f32 %v6069, 0.0
    %v6382 = vmax.f32 %v6071, 0.0
    %v6383 = vmax.f32 %v6172, 0.0
    %v6384 = vmax.f32 %v6174, 0.0
    %v6385 = vmax.f32 %v6275, 0.0
    %v6386 = vmax.f32 %v6277, 0.0
    %v6387 = vmax.f32 %v5970, 0.0
    %v6388 = vmax.f32 %v5972, 0.0
    %v6389 = vmax.f32 %v6073, 0.0
    %v6390 = vmax.f32 %v6075, 0.0
    %v6391 = vmax.f32 %v6176, 0.0
    %v6392 = vmax.f32 %v6178, 0.0
    %v6393 = vmax.f32 %v6279, 0.0
    %v6394 = vmax.f32 %v6281, 0.0
    %v6395 = vadd.f32 %v6283, %v6299
    %v6396 = vadd.f32 %v6284, %v6300
    %v6397 = vadd.f32 %v6285, %v6301
    %v6398 = vadd.f32 %v6286, %v6302
    %v6399 = vadd.f32 %v6287, %v6303
    %v6400 = vadd.f32 %v6288, %v6304
    %v6401 = vadd.f32 %v6289, %v6305
    %v6402 = vadd.f32 %v6290, %v6306
    %v6403 = vadd.f32 %v6291, %v6307
    %v6404 = vadd.f32 %v6292, %v6308
    %v6405 = vadd.f32 %v6293, %v6309
    %v6406 = vadd.f32 %v6294, %v6310
    %v6407 = vadd.f32 %v6295, %v6311
    %v6408 = vadd.f32 %v6296, %v6312
    %v6409 = vadd.f32 %v6297, %v6313
    %v6410 = vadd.f32 %v6298, %v6314
    %v6411 = vadd.f32 %v6395, %v6315
    %v6412 = vadd.f32 %v6396, %v6316
    %v6413 = vadd.f32 %v6397, %v6317
    %v6414 = vadd.f32 %v6398, %v6318
    %v6415 = vadd.f32 %v6399, %v6319
    %v6416 = vadd.f32 %v6400, %v6320
    %v6417 = vadd.f32 %v6401, %v6321
    %v6418 = vadd.f32 %v6402, %v6322
    %v6419 = vadd.f32 %v6403, %v6323
    %v6420 = vadd.f32 %v6404, %v6324
    %v6421 = vadd.f32 %v6405, %v6325
    %v6422 = vadd.f32 %v6406, %v6326
    %v6423 = vadd.f32 %v6407, %v6327
    %v6424 = vadd.f32 %v6408, %v6328
    %v6425 = vadd.f32 %v6409, %v6329
    %v6426 = vadd.f32 %v6410, %v6330
    %v6427 = vadd.f32 %v6411, %v6331
    %v6428 = vadd.f32 %v6412, %v6332
    %v6429 = vadd.f32 %v6413, %v6333
    %v6430 = vadd.f32 %v6414, %v6334
    %v6431 = vadd.f32 %v6415, %v6335
    %v6432 = vadd.f32 %v6416, %v6336
    %v6433 = vadd.f32 %v6417, %v6337
    %v6434 = vadd.f32 %v6418, %v6338
    %v6435 = vadd.f32 %v6419, %v6339
    %v6436 = vadd.f32 %v6420, %v6340
    %v6437 = vadd.f32 %v6421, %v6341
    %v6438 = vadd.f32 %v6422, %v6342
    %v6439 = vadd.f32 %v6423, %v6343
    %v6440 = vadd.f32 %v6424, %v6344
    %v6441 = vadd.f32 %v6425, %v6345
    %v6442 = vadd.f32 %v6426, %v6346
    %v6443 = vadd.f32 %v6427, %v6347
    %v6444 = vadd.f32 %v6428, %v6348
    %v6445 = vadd.f32 %v6429, %v6349
    %v6446 = vadd.f32 %v6430, %v6350
    %v6447 = vadd.f32 %v6431, %v6351
    %v6448 = vadd.f32 %v6432, %v6352
    %v6449 = vadd.f32 %v6433, %v6353
    %v6450 = vadd.f32 %v6434, %v6354
    %v6451 = vadd.f32 %v6435, %v6355
    %v6452 = vadd.f32 %v6436, %v6356
    %v6453 = vadd.f32 %v6437, %v6357
    %v6454 = vadd.f32 %v6438, %v6358
    %v6455 = vadd.f32 %v6439, %v6359
    %v6456 = vadd.f32 %v6440, %v6360
    %v6457 = vadd.f32 %v6441, %v6361
    %v6458 = vadd.f32 %v6442, %v6362
    %v6459 = vadd.f32 %v6443, %v6363
    %v6460 = vadd.f32 %v6444, %v6364
    %v6461 = vadd.f32 %v6445, %v6365
    %v6462 = vadd.f32 %v6446, %v6366
    %v6463 = vadd.f32 %v6447, %v6367
    %v6464 = vadd.f32 %v6448, %v6368
    %v6465 = vadd.f32 %v6449, %v6369
    %v6466 = vadd.f32 %v6450, %v6370
    %v6467 = vadd.f32 %v6451, %v6371
    %v6468 = vadd.f32 %v6452, %v6372
    %v6469 = vadd.f32 %v6453, %v6373
    %v6470 = vadd.f32 %v6454, %v6374
    %v6471 = vadd.f32 %v6455, %v6375
    %v6472 = vadd.f32 %v6456, %v6376
    %v6473 = vadd.f32 %v6457, %v6377
    %v6474 = vadd.f32 %v6458, %v6378
    %v6475 = vadd.f32 %v6459, %v6379
    %v6476 = vadd.f32 %v6460, %v6380
    %v6477 = vadd.f32 %v6461, %v6381
    %v6478 = vadd.f32 %v6462, %v6382
    %v6479 = vadd.f32 %v6463, %v6383
    %v6480 = vadd.f32 %v6464, %v6384
    %v6481 = vadd.f32 %v6465, %v6385
    %v6482 = vadd.f32 %v6466, %v6386
    %v6483 = vadd.f32 %v6467, %v6387
    %v6484 = vadd.f32 %v6468, %v6388
    %v6485 = vadd.f32 %v6469, %v6389
    %v6486 = vadd.f32 %v6470, %v6390
    %v6487 = vadd.f32 %v6471, %v6391
    %v6488 = vadd.f32 %v6472, %v6392
    %v6489 = vadd.f32 %v6473, %v6393
    %v6490 = vadd.f32 %v6474, %v6394
    %s6491 = scalar_lea.vmem %s0, 896
    %v6492 = vld [vmem:[%s6491] sm:$0xff]
    %v6493 = vld [vmem:[%s6491 + $0x8] sm:$0xff]
    %v6494 = vld [vmem:[%s6491 + $0x10] sm:$0xff]
    %v6495 = vld [vmem:[%s6491 + $0x18] sm:$0xff]
    %v6496 = vld [vmem:[%s6491 + $0x20] sm:$0xff]
    %v6497 = vld [vmem:[%s6491 + $0x28] sm:$0xff]
    %v6498 = vld [vmem:[%s6491 + $0x30] sm:$0xff]
    %v6499 = vld [vmem:[%s6491 + $0x38] sm:$0xff]
    %v6500 = vld [vmem:[%s6491 + $0x40] sm:$0xff]
    %v6501 = vld [vmem:[%s6491 + $0x48] sm:$0xff]
    %v6502 = vld [vmem:[%s6491 + $0x50] sm:$0xff]
    %v6503 = vld [vmem:[%s6491 + $0x58] sm:$0xff]
    %v6504 = vld [vmem:[%s6491 + $0x60] sm:$0xff]
    %v6505 = vld [vmem:[%s6491 + $0x68] sm:$0xff]
    %v6520 = vunpack.c.l.b16 %v6492
    %v6521 = vunpack.c.h.b16 %v6492
    %v6522 = vunpack.c.l.b16 %v6493
    %v6523 = vunpack.c.h.b16 %v6493
    %v6524 = vunpack.c.l.b16 %v6494
    %v6525 = vunpack.c.h.b16 %v6494
    %v6526 = vunpack.c.l.b16 %v6495
    %v6527 = vunpack.c.h.b16 %v6495
    %v6528 = vunpack.c.l.b16 %v6496
    %v6529 = vunpack.c.h.b16 %v6496
    %v6530 = vunpack.c.l.b16 %v6497
    %v6531 = vunpack.c.h.b16 %v6497
    %v6532 = vunpack.c.l.b16 %v6498
    %v6533 = vunpack.c.h.b16 %v6498
    %v6534 = vunpack.c.l.b16 %v6499
    %v6535 = vunpack.c.h.b16 %v6499
    %v6536 = vunpack.c.l.b16 %v6500
    %v6537 = vunpack.c.h.b16 %v6500
    %v6538 = vunpack.c.l.b16 %v6501
    %v6539 = vunpack.c.h.b16 %v6501
    %v6540 = vunpack.c.l.b16 %v6502
    %v6541 = vunpack.c.h.b16 %v6502
    %v6542 = vunpack.c.l.b16 %v6503
    %v6543 = vunpack.c.h.b16 %v6503
    %v6544 = vunpack.c.l.b16 %v6504
    %v6545 = vunpack.c.h.b16 %v6504
    %v6546 = vunpack.c.l.b16 %v6505
    %v6547 = vunpack.c.h.b16 %v6505
    %v6548 = vpack.c.b16 %v6522, %v6520
    %v6549 = vpack.c.b16 %v6523, %v6521
    %v6550 = vpack.c.b16 %v6526, %v6524
    %v6551 = vpack.c.b16 %v6527, %v6525
    %v6552 = vpack.c.b16 %v6530, %v6528
    %v6553 = vpack.c.b16 %v6531, %v6529
    %v6554 = vpack.c.b16 %v6534, %v6532
    %v6555 = vpack.c.b16 %v6535, %v6533
    %v6556 = vpack.c.b16 %v6538, %v6536
    %v6557 = vpack.c.b16 %v6539, %v6537
    %v6558 = vpack.c.b16 %v6542, %v6540
    %v6559 = vpack.c.b16 %v6543, %v6541
    %v6560 = vpack.c.b16 %v6546, %v6544
    %v6561 = vpack.c.b16 %v6547, %v6545
    %v6570 = vsel %vm720, %v6549, 0
    %v6573 = vsel %vm720, %v6551, 0
    %v6576 = vsel %vm720, %v6553, 0
    %v6579 = vsel %vm720, %v6555, 0
    %v6582 = vsel %vm720, %v6557, 0
    %v6585 = vsel %vm720, %v6559, 0
    %v6588 = vsel %vm720, %v6561, 0
    %6590 = vmatprep.subr.bf16.mxu0 %v529
    %6591 = vmatpush1.bf16.msra.mxu0 %v528
    %6592 = vmatprep.subr.bf16.mxu0 %v537
    %6593 = vmatpush1.bf16.msra.mxu0 %v536
    %6594 = vmatprep.subr.bf16.mxu0 %v545
    %6595 = vmatpush1.bf16.msra.mxu0 %v544
    %6596 = vmatprep.subr.bf16.mxu0 %v553
    %6597 = vmatpush1.bf16.msra.mxu0 %v552
    %6598 = vmatprep.subr.bf16.mxu0 %v561
    %6599 = vmatpush1.bf16.msra.mxu0 %v560
    %6600 = vmatprep.subr.bf16.mxu0 %v569
    %6601 = vmatpush1.bf16.msra.mxu0 %v568
    %6602 = vmatprep.subr.bf16.mxu0 %v577
    %6603 = vmatpush1.bf16.msra.mxu0 %v576
    %6604 = vmatprep.subr.bf16.mxu0 %v585
    %6605 = vmatpush1.bf16.msra.mxu0 %v584
    %6606 = vmatprep.subr.bf16.mxu0 %v593
    %6607 = vmatpush1.bf16.msra.mxu0 %v592
    %6608 = vmatprep.subr.bf16.mxu0 %v601
    %6609 = vmatpush1.bf16.msra.mxu0 %v600
    %6610 = vmatprep.subr.bf16.mxu0 %v609
    %6611 = vmatpush1.bf16.msra.mxu0 %v608
    %6612 = vmatprep.subr.bf16.mxu0 %v617
    %6613 = vmatpush1.bf16.msra.mxu0 %v616
    %6614 = vmatprep.subr.bf16.mxu0 0
    %6615 = vmatpush1.bf16.msra.mxu0 0
    %6616 = vmatprep.subr.bf16.mxu0 0
    %6617 = vmatpush1.bf16.msra.mxu0 0
    %6618 = vmatprep.subr.bf16.mxu0 0
    %6619 = vmatpush1.bf16.msra.mxu0 0
    %6620 = vmatprep.subr.bf16.mxu0 0
    %6621 = vmatpush1.bf16.msra.mxu0 0
    %6622 = vmatprep.mubr.bf16.mxu0 %v6570
    %6623 = vmatmul.mubr.bf16.gmra.mrb[0].mxu0 %v6548
    %v6624 = vpop.f32.mrb[0].mxu0
    %v6625 = vadd.f32 %v140, %v6624
    %v6626 = vpop.f32.mrb[0].mxu0
    %v6627 = vadd.f32 %v144, %v6626
    %v6628 = vpop.f32.mrb[0].mxu0
    %v6629 = vadd.f32 %v140, %v6628
    %v6630 = vpop.f32.mrb[0].mxu0
    %v6631 = vadd.f32 %v144, %v6630
    %6632 = vmatprep.mubr.bf16.mxu0 %v6573
    %6633 = vmatmul.mubr.bf16.gmra.mrb[0].mxu0 %v6550
    %v6634 = vpop.f32.mrb[0].mxu0
    %v6635 = vadd.f32 %v140, %v6634
    %v6636 = vpop.f32.mrb[0].mxu0
    %v6637 = vadd.f32 %v144, %v6636
    %v6638 = vpop.f32.mrb[0].mxu0
    %v6639 = vadd.f32 %v140, %v6638
    %v6640 = vpop.f32.mrb[0].mxu0
    %v6641 = vadd.f32 %v144, %v6640
    %6642 = vmatprep.mubr.bf16.mxu0 %v6576
    %6643 = vmatmul.mubr.bf16.gmra.mrb[0].mxu0 %v6552
    %v6644 = vpop.f32.mrb[0].mxu0
    %v6645 = vadd.f32 %v140, %v6644
    %v6646 = vpop.f32.mrb[0].mxu0
    %v6647 = vadd.f32 %v144, %v6646
    %v6648 = vpop.f32.mrb[0].mxu0
    %v6649 = vadd.f32 %v140, %v6648
    %v6650 = vpop.f32.mrb[0].mxu0
    %v6651 = vadd.f32 %v144, %v6650
    %6652 = vmatprep.mubr.bf16.mxu0 %v6579
    %6653 = vmatmul.mubr.bf16.gmra.mrb[0].mxu0 %v6554
    %v6654 = vpop.f32.mrb[0].mxu0
    %v6655 = vadd.f32 %v140, %v6654
    %v6656 = vpop.f32.mrb[0].mxu0
    %v6657 = vadd.f32 %v144, %v6656
    %v6658 = vpop.f32.mrb[0].mxu0
    %v6659 = vadd.f32 %v140, %v6658
    %v6660 = vpop.f32.mrb[0].mxu0
    %v6661 = vadd.f32 %v144, %v6660
    %6662 = vmatprep.mubr.bf16.mxu0 %v6582
    %6663 = vmatmul.mubr.bf16.gmra.mrb[0].mxu0 %v6556
    %v6664 = vpop.f32.mrb[0].mxu0
    %v6665 = vadd.f32 %v140, %v6664
    %v6666 = vpop.f32.mrb[0].mxu0
    %v6667 = vadd.f32 %v144, %v6666
    %v6668 = vpop.f32.mrb[0].mxu0
    %v6669 = vadd.f32 %v140, %v6668
    %v6670 = vpop.f32.mrb[0].mxu0
    %v6671 = vadd.f32 %v144, %v6670
    %6672 = vmatprep.mubr.bf16.mxu0 %v6585
    %6673 = vmatmul.mubr.bf16.gmra.mrb[0].mxu0 %v6558
    %v6674 = vpop.f32.mrb[0].mxu0
    %v6675 = vadd.f32 %v140, %v6674
    %v6676 = vpop.f32.mrb[0].mxu0
    %v6677 = vadd.f32 %v144, %v6676
    %v6678 = vpop.f32.mrb[0].mxu0
    %v6679 = vadd.f32 %v140, %v6678
    %v6680 = vpop.f32.mrb[0].mxu0
    %v6681 = vadd.f32 %v144, %v6680
    %6682 = vmatprep.mubr.bf16.mxu0 %v6588
    %6683 = vmatmul.mubr.bf16.gmra.mrb[0].mxu0 %v6560
    %v6684 = vpop.f32.mrb[0].mxu0
    %v6685 = vadd.f32 %v140, %v6684
    %v6686 = vpop.f32.mrb[0].mxu0
    %v6687 = vadd.f32 %v144, %v6686
    %v6688 = vpop.f32.mrb[0].mxu0
    %v6689 = vadd.f32 %v140, %v6688
    %v6690 = vpop.f32.mrb[0].mxu0
    %v6691 = vadd.f32 %v144, %v6690
    %6692 = vdwg.mxu0
    %6693 = vmatprep.subr.bf16.mxu0 %v531
    %6694 = vmatpush1.bf16.msra.mxu0 %v530
    %6695 = vmatprep.subr.bf16.mxu0 %v539
    %6696 = vmatpush1.bf16.msra.mxu0 %v538
    %6697 = vmatprep.subr.bf16.mxu0 %v547
    %6698 = vmatpush1.bf16.msra.mxu0 %v546
    %6699 = vmatprep.subr.bf16.mxu0 %v555
    %6700 = vmatpush1.bf16.msra.mxu0 %v554
    %6701 = vmatprep.subr.bf16.mxu0 %v563
    %6702 = vmatpush1.bf16.msra.mxu0 %v562
    %6703 = vmatprep.subr.bf16.mxu0 %v571
    %6704 = vmatpush1.bf16.msra.mxu0 %v570
    %6705 = vmatprep.subr.bf16.mxu0 %v579
    %6706 = vmatpush1.bf16.msra.mxu0 %v578
    %6707 = vmatprep.subr.bf16.mxu0 %v587
    %6708 = vmatpush1.bf16.msra.mxu0 %v586
    %6709 = vmatprep.subr.bf16.mxu0 %v595
    %6710 = vmatpush1.bf16.msra.mxu0 %v594
    %6711 = vmatprep.subr.bf16.mxu0 %v603
    %6712 = vmatpush1.bf16.msra.mxu0 %v602
    %6713 = vmatprep.subr.bf16.mxu0 %v611
    %6714 = vmatpush1.bf16.msra.mxu0 %v610
    %6715 = vmatprep.subr.bf16.mxu0 %v619
    %6716 = vmatpush1.bf16.msra.mxu0 %v618
    %6717 = vmatprep.subr.bf16.mxu0 0
    %6718 = vmatpush1.bf16.msra.mxu0 0
    %6719 = vmatprep.subr.bf16.mxu0 0
    %6720 = vmatpush1.bf16.msra.mxu0 0
    %6721 = vmatprep.subr.bf16.mxu0 0
    %6722 = vmatpush1.bf16.msra.mxu0 0
    %6723 = vmatprep.subr.bf16.mxu0 0
    %6724 = vmatpush1.bf16.msra.mxu0 0
    %6725 = vmatprep.mubr.bf16.mxu0 %v6570
    %6726 = vmatmul.mubr.bf16.gmra.mrb[0].mxu0 %v6548
    %v6727 = vpop.f32.mrb[0].mxu0
    %v6728 = vadd.f32 %v148, %v6727
    %v6729 = vpop.f32.mrb[0].mxu0
    %v6730 = vadd.f32 %v152, %v6729
    %v6731 = vpop.f32.mrb[0].mxu0
    %v6732 = vadd.f32 %v148, %v6731
    %v6733 = vpop.f32.mrb[0].mxu0
    %v6734 = vadd.f32 %v152, %v6733
    %6735 = vmatprep.mubr.bf16.mxu0 %v6573
    %6736 = vmatmul.mubr.bf16.gmra.mrb[0].mxu0 %v6550
    %v6737 = vpop.f32.mrb[0].mxu0
    %v6738 = vadd.f32 %v148, %v6737
    %v6739 = vpop.f32.mrb[0].mxu0
    %v6740 = vadd.f32 %v152, %v6739
    %v6741 = vpop.f32.mrb[0].mxu0
    %v6742 = vadd.f32 %v148, %v6741
    %v6743 = vpop.f32.mrb[0].mxu0
    %v6744 = vadd.f32 %v152, %v6743
    %6745 = vmatprep.mubr.bf16.mxu0 %v6576
    %6746 = vmatmul.mubr.bf16.gmra.mrb[0].mxu0 %v6552
    %v6747 = vpop.f32.mrb[0].mxu0
    %v6748 = vadd.f32 %v148, %v6747
    %v6749 = vpop.f32.mrb[0].mxu0
    %v6750 = vadd.f32 %v152, %v6749
    %v6751 = vpop.f32.mrb[0].mxu0
    %v6752 = vadd.f32 %v148, %v6751
    %v6753 = vpop.f32.mrb[0].mxu0
    %v6754 = vadd.f32 %v152, %v6753
    %6755 = vmatprep.mubr.bf16.mxu0 %v6579
    %6756 = vmatmul.mubr.bf16.gmra.mrb[0].mxu0 %v6554
    %v6757 = vpop.f32.mrb[0].mxu0
    %v6758 = vadd.f32 %v148, %v6757
    %v6759 = vpop.f32.mrb[0].mxu0
    %v6760 = vadd.f32 %v152, %v6759
    %v6761 = vpop.f32.mrb[0].mxu0
    %v6762 = vadd.f32 %v148, %v6761
    %v6763 = vpop.f32.mrb[0].mxu0
    %v6764 = vadd.f32 %v152, %v6763
    %6765 = vmatprep.mubr.bf16.mxu0 %v6582
    %6766 = vmatmul.mubr.bf16.gmra.mrb[0].mxu0 %v6556
    %v6767 = vpop.f32.mrb[0].mxu0
    %v6768 = vadd.f32 %v148, %v6767
    %v6769 = vpop.f32.mrb[0].mxu0
    %v6770 = vadd.f32 %v152, %v6769
    %v6771 = vpop.f32.mrb[0].mxu0
    %v6772 = vadd.f32 %v148, %v6771
    %v6773 = vpop.f32.mrb[0].mxu0
    %v6774 = vadd.f32 %v152, %v6773
    %6775 = vmatprep.mubr.bf16.mxu0 %v6585
    %6776 = vmatmul.mubr.bf16.gmra.mrb[0].mxu0 %v6558
    %v6777 = vpop.f32.mrb[0].mxu0
    %v6778 = vadd.f32 %v148, %v6777
    %v6779 = vpop.f32.mrb[0].mxu0
    %v6780 = vadd.f32 %v152, %v6779
    %v6781 = vpop.f32.mrb[0].mxu0
    %v6782 = vadd.f32 %v148, %v6781
    %v6783 = vpop.f32.mrb[0].mxu0
    %v6784 = vadd.f32 %v152, %v6783
    %6785 = vmatprep.mubr.bf16.mxu0 %v6588
    %6786 = vmatmul.mubr.bf16.gmra.mrb[0].mxu0 %v6560
    %v6787 = vpop.f32.mrb[0].mxu0
    %v6788 = vadd.f32 %v148, %v6787
    %v6789 = vpop.f32.mrb[0].mxu0
    %v6790 = vadd.f32 %v152, %v6789
    %v6791 = vpop.f32.mrb[0].mxu0
    %v6792 = vadd.f32 %v148, %v6791
    %v6793 = vpop.f32.mrb[0].mxu0
    %v6794 = vadd.f32 %v152, %v6793
    %6795 = vdwg.mxu0
    %6796 = vmatprep.subr.bf16.mxu0 %v533
    %6797 = vmatpush1.bf16.msra.mxu0 %v532
    %6798 = vmatprep.subr.bf16.mxu0 %v541
    %6799 = vmatpush1.bf16.msra.mxu0 %v540
    %6800 = vmatprep.subr.bf16.mxu0 %v549
    %6801 = vmatpush1.bf16.msra.mxu0 %v548
    %6802 = vmatprep.subr.bf16.mxu0 %v557
    %6803 = vmatpush1.bf16.msra.mxu0 %v556
    %6804 = vmatprep.subr.bf16.mxu0 %v565
    %6805 = vmatpush1.bf16.msra.mxu0 %v564
    %6806 = vmatprep.subr.bf16.mxu0 %v573
    %6807 = vmatpush1.bf16.msra.mxu0 %v572
    %6808 = vmatprep.subr.bf16.mxu0 %v581
    %6809 = vmatpush1.bf16.msra.mxu0 %v580
    %6810 = vmatprep.subr.bf16.mxu0 %v589
    %6811 = vmatpush1.bf16.msra.mxu0 %v588
    %6812 = vmatprep.subr.bf16.mxu0 %v597
    %6813 = vmatpush1.bf16.msra.mxu0 %v596
    %6814 = vmatprep.subr.bf16.mxu0 %v605
    %6815 = vmatpush1.bf16.msra.mxu0 %v604
    %6816 = vmatprep.subr.bf16.mxu0 %v613
    %6817 = vmatpush1.bf16.msra.mxu0 %v612
    %6818 = vmatprep.subr.bf16.mxu0 %v621
    %6819 = vmatpush1.bf16.msra.mxu0 %v620
    %6820 = vmatprep.subr.bf16.mxu0 0
    %6821 = vmatpush1.bf16.msra.mxu0 0
    %6822 = vmatprep.subr.bf16.mxu0 0
    %6823 = vmatpush1.bf16.msra.mxu0 0
    %6824 = vmatprep.subr.bf16.mxu0 0
    %6825 = vmatpush1.bf16.msra.mxu0 0
    %6826 = vmatprep.subr.bf16.mxu0 0
    %6827 = vmatpush1.bf16.msra.mxu0 0
    %6828 = vmatprep.mubr.bf16.mxu0 %v6570
    %6829 = vmatmul.mubr.bf16.gmra.mrb[0].mxu0 %v6548
    %v6830 = vpop.f32.mrb[0].mxu0
    %v6831 = vadd.f32 %v156, %v6830
    %v6832 = vpop.f32.mrb[0].mxu0
    %v6833 = vadd.f32 %v160, %v6832
    %v6834 = vpop.f32.mrb[0].mxu0
    %v6835 = vadd.f32 %v156, %v6834
    %v6836 = vpop.f32.mrb[0].mxu0
    %v6837 = vadd.f32 %v160, %v6836
    %6838 = vmatprep.mubr.bf16.mxu0 %v6573
    %6839 = vmatmul.mubr.bf16.gmra.mrb[0].mxu0 %v6550
    %v6840 = vpop.f32.mrb[0].mxu0
    %v6841 = vadd.f32 %v156, %v6840
    %v6842 = vpop.f32.mrb[0].mxu0
    %v6843 = vadd.f32 %v160, %v6842
    %v6844 = vpop.f32.mrb[0].mxu0
    %v6845 = vadd.f32 %v156, %v6844
    %v6846 = vpop.f32.mrb[0].mxu0
    %v6847 = vadd.f32 %v160, %v6846
    %6848 = vmatprep.mubr.bf16.mxu0 %v6576
    %6849 = vmatmul.mubr.bf16.gmra.mrb[0].mxu0 %v6552
    %v6850 = vpop.f32.mrb[0].mxu0
    %v6851 = vadd.f32 %v156, %v6850
    %v6852 = vpop.f32.mrb[0].mxu0
    %v6853 = vadd.f32 %v160, %v6852
    %v6854 = vpop.f32.mrb[0].mxu0
    %v6855 = vadd.f32 %v156, %v6854
    %v6856 = vpop.f32.mrb[0].mxu0
    %v6857 = vadd.f32 %v160, %v6856
    %6858 = vmatprep.mubr.bf16.mxu0 %v6579
    %6859 = vmatmul.mubr.bf16.gmra.mrb[0].mxu0 %v6554
    %v6860 = vpop.f32.mrb[0].mxu0
    %v6861 = vadd.f32 %v156, %v6860
    %v6862 = vpop.f32.mrb[0].mxu0
    %v6863 = vadd.f32 %v160, %v6862
    %v6864 = vpop.f32.mrb[0].mxu0
    %v6865 = vadd.f32 %v156, %v6864
    %v6866 = vpop.f32.mrb[0].mxu0
    %v6867 = vadd.f32 %v160, %v6866
    %6868 = vmatprep.mubr.bf16.mxu0 %v6582
    %6869 = vmatmul.mubr.bf16.gmra.mrb[0].mxu0 %v6556
    %v6870 = vpop.f32.mrb[0].mxu0
    %v6871 = vadd.f32 %v156, %v6870
    %v6872 = vpop.f32.mrb[0].mxu0
    %v6873 = vadd.f32 %v160, %v6872
    %v6874 = vpop.f32.mrb[0].mxu0
    %v6875 = vadd.f32 %v156, %v6874
    %v6876 = vpop.f32.mrb[0].mxu0
    %v6877 = vadd.f32 %v160, %v6876
    %6878 = vmatprep.mubr.bf16.mxu0 %v6585
    %6879 = vmatmul.mubr.bf16.gmra.mrb[0].mxu0 %v6558
    %v6880 = vpop.f32.mrb[0].mxu0
    %v6881 = vadd.f32 %v156, %v6880
    %v6882 = vpop.f32.mrb[0].mxu0
    %v6883 = vadd.f32 %v160, %v6882
    %v6884 = vpop.f32.mrb[0].mxu0
    %v6885 = vadd.f32 %v156, %v6884
    %v6886 = vpop.f32.mrb[0].mxu0
    %v6887 = vadd.f32 %v160, %v6886
    %6888 = vmatprep.mubr.bf16.mxu0 %v6588
    %6889 = vmatmul.mubr.bf16.gmra.mrb[0].mxu0 %v6560
    %v6890 = vpop.f32.mrb[0].mxu0
    %v6891 = vadd.f32 %v156, %v6890
    %v6892 = vpop.f32.mrb[0].mxu0
    %v6893 = vadd.f32 %v160, %v6892
    %v6894 = vpop.f32.mrb[0].mxu0
    %v6895 = vadd.f32 %v156, %v6894
    %v6896 = vpop.f32.mrb[0].mxu0
    %v6897 = vadd.f32 %v160, %v6896
    %6898 = vdwg.mxu0
    %6899 = vmatprep.subr.bf16.mxu0 %v535
    %6900 = vmatpush1.bf16.msra.mxu0 %v534
    %6901 = vmatprep.subr.bf16.mxu0 %v543
    %6902 = vmatpush1.bf16.msra.mxu0 %v542
    %6903 = vmatprep.subr.bf16.mxu0 %v551
    %6904 = vmatpush1.bf16.msra.mxu0 %v550
    %6905 = vmatprep.subr.bf16.mxu0 %v559
    %6906 = vmatpush1.bf16.msra.mxu0 %v558
    %6907 = vmatprep.subr.bf16.mxu0 %v567
    %6908 = vmatpush1.bf16.msra.mxu0 %v566
    %6909 = vmatprep.subr.bf16.mxu0 %v575
    %6910 = vmatpush1.bf16.msra.mxu0 %v574
    %6911 = vmatprep.subr.bf16.mxu0 %v583
    %6912 = vmatpush1.bf16.msra.mxu0 %v582
    %6913 = vmatprep.subr.bf16.mxu0 %v591
    %6914 = vmatpush1.bf16.msra.mxu0 %v590
    %6915 = vmatprep.subr.bf16.mxu0 %v599
    %6916 = vmatpush1.bf16.msra.mxu0 %v598
    %6917 = vmatprep.subr.bf16.mxu0 %v607
    %6918 = vmatpush1.bf16.msra.mxu0 %v606
    %6919 = vmatprep.subr.bf16.mxu0 %v615
    %6920 = vmatpush1.bf16.msra.mxu0 %v614
    %6921 = vmatprep.subr.bf16.mxu0 %v623
    %6922 = vmatpush1.bf16.msra.mxu0 %v622
    %6923 = vmatprep.subr.bf16.mxu0 0
    %6924 = vmatpush1.bf16.msra.mxu0 0
    %6925 = vmatprep.subr.bf16.mxu0 0
    %6926 = vmatpush1.bf16.msra.mxu0 0
    %6927 = vmatprep.subr.bf16.mxu0 0
    %6928 = vmatpush1.bf16.msra.mxu0 0
    %6929 = vmatprep.subr.bf16.mxu0 0
    %6930 = vmatpush1.bf16.msra.mxu0 0
    %6931 = vmatprep.mubr.bf16.mxu0 %v6570
    %6932 = vmatmul.mubr.bf16.gmra.mrb[0].mxu0 %v6548
    %v6933 = vpop.f32.mrb[0].mxu0
    %v6934 = vadd.f32 %v164, %v6933
    %v6935 = vpop.f32.mrb[0].mxu0
    %v6936 = vadd.f32 %v168, %v6935
    %v6937 = vpop.f32.mrb[0].mxu0
    %v6938 = vadd.f32 %v164, %v6937
    %v6939 = vpop.f32.mrb[0].mxu0
    %v6940 = vadd.f32 %v168, %v6939
    %6941 = vmatprep.mubr.bf16.mxu0 %v6573
    %6942 = vmatmul.mubr.bf16.gmra.mrb[0].mxu0 %v6550
    %v6943 = vpop.f32.mrb[0].mxu0
    %v6944 = vadd.f32 %v164, %v6943
    %v6945 = vpop.f32.mrb[0].mxu0
    %v6946 = vadd.f32 %v168, %v6945
    %v6947 = vpop.f32.mrb[0].mxu0
    %v6948 = vadd.f32 %v164, %v6947
    %v6949 = vpop.f32.mrb[0].mxu0
    %v6950 = vadd.f32 %v168, %v6949
    %6951 = vmatprep.mubr.bf16.mxu0 %v6576
    %6952 = vmatmul.mubr.bf16.gmra.mrb[0].mxu0 %v6552
    %v6953 = vpop.f32.mrb[0].mxu0
    %v6954 = vadd.f32 %v164, %v6953
    %v6955 = vpop.f32.mrb[0].mxu0
    %v6956 = vadd.f32 %v168, %v6955
    %v6957 = vpop.f32.mrb[0].mxu0
    %v6958 = vadd.f32 %v164, %v6957
    %v6959 = vpop.f32.mrb[0].mxu0
    %v6960 = vadd.f32 %v168, %v6959
    %6961 = vmatprep.mubr.bf16.mxu0 %v6579
    %6962 = vmatmul.mubr.bf16.gmra.mrb[0].mxu0 %v6554
    %v6963 = vpop.f32.mrb[0].mxu0
    %v6964 = vadd.f32 %v164, %v6963
    %v6965 = vpop.f32.mrb[0].mxu0
    %v6966 = vadd.f32 %v168, %v6965
    %v6967 = vpop.f32.mrb[0].mxu0
    %v6968 = vadd.f32 %v164, %v6967
    %v6969 = vpop.f32.mrb[0].mxu0
    %v6970 = vadd.f32 %v168, %v6969
    %6971 = vmatprep.mubr.bf16.mxu0 %v6582
    %6972 = vmatmul.mubr.bf16.gmra.mrb[0].mxu0 %v6556
    %v6973 = vpop.f32.mrb[0].mxu0
    %v6974 = vadd.f32 %v164, %v6973
    %v6975 = vpop.f32.mrb[0].mxu0
    %v6976 = vadd.f32 %v168, %v6975
    %v6977 = vpop.f32.mrb[0].mxu0
    %v6978 = vadd.f32 %v164, %v6977
    %v6979 = vpop.f32.mrb[0].mxu0
    %v6980 = vadd.f32 %v168, %v6979
    %6981 = vmatprep.mubr.bf16.mxu0 %v6585
    %6982 = vmatmul.mubr.bf16.gmra.mrb[0].mxu0 %v6558
    %v6983 = vpop.f32.mrb[0].mxu0
    %v6984 = vadd.f32 %v164, %v6983
    %v6985 = vpop.f32.mrb[0].mxu0
    %v6986 = vadd.f32 %v168, %v6985
    %v6987 = vpop.f32.mrb[0].mxu0
    %v6988 = vadd.f32 %v164, %v6987
    %v6989 = vpop.f32.mrb[0].mxu0
    %v6990 = vadd.f32 %v168, %v6989
    %6991 = vmatprep.mubr.bf16.mxu0 %v6588
    %6992 = vmatmul.mubr.bf16.gmra.mrb[0].mxu0 %v6560
    %v6993 = vpop.f32.mrb[0].mxu0
    %v6994 = vadd.f32 %v164, %v6993
    %v6995 = vpop.f32.mrb[0].mxu0
    %v6996 = vadd.f32 %v168, %v6995
    %v6997 = vpop.f32.mrb[0].mxu0
    %v6998 = vadd.f32 %v164, %v6997
    %v6999 = vpop.f32.mrb[0].mxu0
    %v7000 = vadd.f32 %v168, %v6999
    %7001 = vdwg.mxu0
    %v7002 = vmax.f32 %v6625, 0.0
    %v7003 = vmax.f32 %v6627, 0.0
    %v7004 = vmax.f32 %v6728, 0.0
    %v7005 = vmax.f32 %v6730, 0.0
    %v7006 = vmax.f32 %v6831, 0.0
    %v7007 = vmax.f32 %v6833, 0.0
    %v7008 = vmax.f32 %v6934, 0.0
    %v7009 = vmax.f32 %v6936, 0.0
    %v7010 = vmax.f32 %v6629, 0.0
    %v7011 = vmax.f32 %v6631, 0.0
    %v7012 = vmax.f32 %v6732, 0.0
    %v7013 = vmax.f32 %v6734, 0.0
    %v7014 = vmax.f32 %v6835, 0.0
    %v7015 = vmax.f32 %v6837, 0.0
    %v7016 = vmax.f32 %v6938, 0.0
    %v7017 = vmax.f32 %v6940, 0.0
    %v7018 = vmax.f32 %v6635, 0.0
    %v7019 = vmax.f32 %v6637, 0.0
    %v7020 = vmax.f32 %v6738, 0.0
    %v7021 = vmax.f32 %v6740, 0.0
    %v7022 = vmax.f32 %v6841, 0.0
    %v7023 = vmax.f32 %v6843, 0.0
    %v7024 = vmax.f32 %v6944, 0.0
    %v7025 = vmax.f32 %v6946, 0.0
    %v7026 = vmax.f32 %v6639, 0.0
    %v7027 = vmax.f32 %v6641, 0.0
    %v7028 = vmax.f32 %v6742, 0.0
    %v7029 = vmax.f32 %v6744, 0.0
    %v7030 = vmax.f32 %v6845, 0.0
    %v7031 = vmax.f32 %v6847, 0.0
    %v7032 = vmax.f32 %v6948, 0.0
    %v7033 = vmax.f32 %v6950, 0.0
    %v7034 = vmax.f32 %v6645, 0.0
    %v7035 = vmax.f32 %v6647, 0.0
    %v7036 = vmax.f32 %v6748, 0.0
    %v7037 = vmax.f32 %v6750, 0.0
    %v7038 = vmax.f32 %v6851, 0.0
    %v7039 = vmax.f32 %v6853, 0.0
    %v7040 = vmax.f32 %v6954, 0.0
    %v7041 = vmax.f32 %v6956, 0.0
    %v7042 = vmax.f32 %v6649, 0.0
    %v7043 = vmax.f32 %v6651, 0.0
    %v7044 = vmax.f32 %v6752, 0.0
    %v7045 = vmax.f32 %v6754, 0.0
    %v7046 = vmax.f32 %v6855, 0.0
    %v7047 = vmax.f32 %v6857, 0.0
    %v7048 = vmax.f32 %v6958, 0.0
    %v7049 = vmax.f32 %v6960, 0.0
    %v7050 = vmax.f32 %v6655, 0.0
    %v7051 = vmax.f32 %v6657, 0.0
    %v7052 = vmax.f32 %v6758, 0.0
    %v7053 = vmax.f32 %v6760, 0.0
    %v7054 = vmax.f32 %v6861, 0.0
    %v7055 = vmax.f32 %v6863, 0.0
    %v7056 = vmax.f32 %v6964, 0.0
    %v7057 = vmax.f32 %v6966, 0.0
    %v7058 = vmax.f32 %v6659, 0.0
    %v7059 = vmax.f32 %v6661, 0.0
    %v7060 = vmax.f32 %v6762, 0.0
    %v7061 = vmax.f32 %v6764, 0.0
    %v7062 = vmax.f32 %v6865, 0.0
    %v7063 = vmax.f32 %v6867, 0.0
    %v7064 = vmax.f32 %v6968, 0.0
    %v7065 = vmax.f32 %v6970, 0.0
    %v7066 = vmax.f32 %v6665, 0.0
    %v7067 = vmax.f32 %v6667, 0.0
    %v7068 = vmax.f32 %v6768, 0.0
    %v7069 = vmax.f32 %v6770, 0.0
    %v7070 = vmax.f32 %v6871, 0.0
    %v7071 = vmax.f32 %v6873, 0.0
    %v7072 = vmax.f32 %v6974, 0.0
    %v7073 = vmax.f32 %v6976, 0.0
    %v7074 = vmax.f32 %v6669, 0.0
    %v7075 = vmax.f32 %v6671, 0.0
    %v7076 = vmax.f32 %v6772, 0.0
    %v7077 = vmax.f32 %v6774, 0.0
    %v7078 = vmax.f32 %v6875, 0.0
    %v7079 = vmax.f32 %v6877, 0.0
    %v7080 = vmax.f32 %v6978, 0.0
    %v7081 = vmax.f32 %v6980, 0.0
    %v7082 = vmax.f32 %v6675, 0.0
    %v7083 = vmax.f32 %v6677, 0.0
    %v7084 = vmax.f32 %v6778, 0.0
    %v7085 = vmax.f32 %v6780, 0.0
    %v7086 = vmax.f32 %v6881, 0.0
    %v7087 = vmax.f32 %v6883, 0.0
    %v7088 = vmax.f32 %v6984, 0.0
    %v7089 = vmax.f32 %v6986, 0.0
    %v7090 = vmax.f32 %v6679, 0.0
    %v7091 = vmax.f32 %v6681, 0.0
    %v7092 = vmax.f32 %v6782, 0.0
    %v7093 = vmax.f32 %v6784, 0.0
    %v7094 = vmax.f32 %v6885, 0.0
    %v7095 = vmax.f32 %v6887, 0.0
    %v7096 = vmax.f32 %v6988, 0.0
    %v7097 = vmax.f32 %v6990, 0.0
    %v7098 = vmax.f32 %v6685, 0.0
    %v7099 = vmax.f32 %v6687, 0.0
    %v7100 = vmax.f32 %v6788, 0.0
    %v7101 = vmax.f32 %v6790, 0.0
    %v7102 = vmax.f32 %v6891, 0.0
    %v7103 = vmax.f32 %v6893, 0.0
    %v7104 = vmax.f32 %v6994, 0.0
    %v7105 = vmax.f32 %v6996, 0.0
    %v7106 = vmax.f32 %v6689, 0.0
    %v7107 = vmax.f32 %v6691, 0.0
    %v7108 = vmax.f32 %v6792, 0.0
    %v7109 = vmax.f32 %v6794, 0.0
    %v7110 = vmax.f32 %v6895, 0.0
    %v7111 = vmax.f32 %v6897, 0.0
    %v7112 = vmax.f32 %v6998, 0.0
    %v7113 = vmax.f32 %v7000, 0.0
    %v7114 = vadd.f32 %v7002, %v7018
    %v7115 = vadd.f32 %v7003, %v7019
    %v7116 = vadd.f32 %v7004, %v7020
    %v7117 = vadd.f32 %v7005, %v7021
    %v7118 = vadd.f32 %v7006, %v7022
    %v7119 = vadd.f32 %v7007, %v7023
    %v7120 = vadd.f32 %v7008, %v7024
    %v7121 = vadd.f32 %v7009, %v7025
    %v7122 = vadd.f32 %v7010, %v7026
    %v7123 = vadd.f32 %v7011, %v7027
    %v7124 = vadd.f32 %v7012, %v7028
    %v7125 = vadd.f32 %v7013, %v7029
    %v7126 = vadd.f32 %v7014, %v7030
    %v7127 = vadd.f32 %v7015, %v7031
    %v7128 = vadd.f32 %v7016, %v7032
    %v7129 = vadd.f32 %v7017, %v7033
    %v7130 = vadd.f32 %v7114, %v7034
    %v7131 = vadd.f32 %v7115, %v7035
    %v7132 = vadd.f32 %v7116, %v7036
    %v7133 = vadd.f32 %v7117, %v7037
    %v7134 = vadd.f32 %v7118, %v7038
    %v7135 = vadd.f32 %v7119, %v7039
    %v7136 = vadd.f32 %v7120, %v7040
    %v7137 = vadd.f32 %v7121, %v7041
    %v7138 = vadd.f32 %v7122, %v7042
    %v7139 = vadd.f32 %v7123, %v7043
    %v7140 = vadd.f32 %v7124, %v7044
    %v7141 = vadd.f32 %v7125, %v7045
    %v7142 = vadd.f32 %v7126, %v7046
    %v7143 = vadd.f32 %v7127, %v7047
    %v7144 = vadd.f32 %v7128, %v7048
    %v7145 = vadd.f32 %v7129, %v7049
    %v7146 = vadd.f32 %v7130, %v7050
    %v7147 = vadd.f32 %v7131, %v7051
    %v7148 = vadd.f32 %v7132, %v7052
    %v7149 = vadd.f32 %v7133, %v7053
    %v7150 = vadd.f32 %v7134, %v7054
    %v7151 = vadd.f32 %v7135, %v7055
    %v7152 = vadd.f32 %v7136, %v7056
    %v7153 = vadd.f32 %v7137, %v7057
    %v7154 = vadd.f32 %v7138, %v7058
    %v7155 = vadd.f32 %v7139, %v7059
    %v7156 = vadd.f32 %v7140, %v7060
    %v7157 = vadd.f32 %v7141, %v7061
    %v7158 = vadd.f32 %v7142, %v7062
    %v7159 = vadd.f32 %v7143, %v7063
    %v7160 = vadd.f32 %v7144, %v7064
    %v7161 = vadd.f32 %v7145, %v7065
    %v7162 = vadd.f32 %v7146, %v7066
    %v7163 = vadd.f32 %v7147, %v7067
    %v7164 = vadd.f32 %v7148, %v7068
    %v7165 = vadd.f32 %v7149, %v7069
    %v7166 = vadd.f32 %v7150, %v7070
    %v7167 = vadd.f32 %v7151, %v7071
    %v7168 = vadd.f32 %v7152, %v7072
    %v7169 = vadd.f32 %v7153, %v7073
    %v7170 = vadd.f32 %v7154, %v7074
    %v7171 = vadd.f32 %v7155, %v7075
    %v7172 = vadd.f32 %v7156, %v7076
    %v7173 = vadd.f32 %v7157, %v7077
    %v7174 = vadd.f32 %v7158, %v7078
    %v7175 = vadd.f32 %v7159, %v7079
    %v7176 = vadd.f32 %v7160, %v7080
    %v7177 = vadd.f32 %v7161, %v7081
    %v7178 = vadd.f32 %v7162, %v7082
    %v7179 = vadd.f32 %v7163, %v7083
    %v7180 = vadd.f32 %v7164, %v7084
    %v7181 = vadd.f32 %v7165, %v7085
    %v7182 = vadd.f32 %v7166, %v7086
    %v7183 = vadd.f32 %v7167, %v7087
    %v7184 = vadd.f32 %v7168, %v7088
    %v7185 = vadd.f32 %v7169, %v7089
    %v7186 = vadd.f32 %v7170, %v7090
    %v7187 = vadd.f32 %v7171, %v7091
    %v7188 = vadd.f32 %v7172, %v7092
    %v7189 = vadd.f32 %v7173, %v7093
    %v7190 = vadd.f32 %v7174, %v7094
    %v7191 = vadd.f32 %v7175, %v7095
    %v7192 = vadd.f32 %v7176, %v7096
    %v7193 = vadd.f32 %v7177, %v7097
    %v7194 = vadd.f32 %v7178, %v7098
    %v7195 = vadd.f32 %v7179, %v7099
    %v7196 = vadd.f32 %v7180, %v7100
    %v7197 = vadd.f32 %v7181, %v7101
    %v7198 = vadd.f32 %v7182, %v7102
    %v7199 = vadd.f32 %v7183, %v7103
    %v7200 = vadd.f32 %v7184, %v7104
    %v7201 = vadd.f32 %v7185, %v7105
    %v7202 = vadd.f32 %v7186, %v7106
    %v7203 = vadd.f32 %v7187, %v7107
    %v7204 = vadd.f32 %v7188, %v7108
    %v7205 = vadd.f32 %v7189, %v7109
    %v7206 = vadd.f32 %v7190, %v7110
    %v7207 = vadd.f32 %v7191, %v7111
    %v7208 = vadd.f32 %v7192, %v7112
    %v7209 = vadd.f32 %v7193, %v7113
    %v7210 = vadd.f32 %v6475, %v7194
    %v7211 = vadd.f32 %v6476, %v7195
    %v7212 = vadd.f32 %v6477, %v7196
    %v7213 = vadd.f32 %v6478, %v7197
    %v7214 = vadd.f32 %v6479, %v7198
    %v7215 = vadd.f32 %v6480, %v7199
    %v7216 = vadd.f32 %v6481, %v7200
    %v7217 = vadd.f32 %v6482, %v7201
    %v7218 = vadd.f32 %v6483, %v7202
    %v7219 = vadd.f32 %v6484, %v7203
    %v7220 = vadd.f32 %v6485, %v7204
    %v7221 = vadd.f32 %v6486, %v7205
    %v7222 = vadd.f32 %v6487, %v7206
    %v7223 = vadd.f32 %v6488, %v7207
    %v7224 = vadd.f32 %v6489, %v7208
    %v7225 = vadd.f32 %v6490, %v7209
    %s7226 = scalar_lea.vmem %s0, 1008
    %v7227 = vld [vmem:[%s7226] sm:$0xff]
    %v7228 = vld [vmem:[%s7226 + $0x8] sm:$0xff]
    %v7229 = vld [vmem:[%s7226 + $0x10] sm:$0xff]
    %v7230 = vld [vmem:[%s7226 + $0x18] sm:$0xff]
    %v7231 = vld [vmem:[%s7226 + $0x20] sm:$0xff]
    %v7232 = vld [vmem:[%s7226 + $0x28] sm:$0xff]
    %v7233 = vld [vmem:[%s7226 + $0x30] sm:$0xff]
    %v7234 = vld [vmem:[%s7226 + $0x38] sm:$0xff]
    %v7235 = vld [vmem:[%s7226 + $0x40] sm:$0xff]
    %v7236 = vld [vmem:[%s7226 + $0x48] sm:$0xff]
    %v7237 = vld [vmem:[%s7226 + $0x50] sm:$0xff]
    %v7238 = vld [vmem:[%s7226 + $0x58] sm:$0xff]
    %v7239 = vld [vmem:[%s7226 + $0x60] sm:$0xff]
    %v7240 = vld [vmem:[%s7226 + $0x68] sm:$0xff]
    %v7255 = vunpack.c.l.b16 %v7227
    %v7256 = vunpack.c.h.b16 %v7227
    %v7257 = vunpack.c.l.b16 %v7228
    %v7258 = vunpack.c.h.b16 %v7228
    %v7259 = vunpack.c.l.b16 %v7229
    %v7260 = vunpack.c.h.b16 %v7229
    %v7261 = vunpack.c.l.b16 %v7230
    %v7262 = vunpack.c.h.b16 %v7230
    %v7263 = vunpack.c.l.b16 %v7231
    %v7264 = vunpack.c.h.b16 %v7231
    %v7265 = vunpack.c.l.b16 %v7232
    %v7266 = vunpack.c.h.b16 %v7232
    %v7267 = vunpack.c.l.b16 %v7233
    %v7268 = vunpack.c.h.b16 %v7233
    %v7269 = vunpack.c.l.b16 %v7234
    %v7270 = vunpack.c.h.b16 %v7234
    %v7271 = vunpack.c.l.b16 %v7235
    %v7272 = vunpack.c.h.b16 %v7235
    %v7273 = vunpack.c.l.b16 %v7236
    %v7274 = vunpack.c.h.b16 %v7236
    %v7275 = vunpack.c.l.b16 %v7237
    %v7276 = vunpack.c.h.b16 %v7237
    %v7277 = vunpack.c.l.b16 %v7238
    %v7278 = vunpack.c.h.b16 %v7238
    %v7279 = vunpack.c.l.b16 %v7239
    %v7280 = vunpack.c.h.b16 %v7239
    %v7281 = vunpack.c.l.b16 %v7240
    %v7282 = vunpack.c.h.b16 %v7240
    %v7283 = vpack.c.b16 %v7257, %v7255
    %v7284 = vpack.c.b16 %v7258, %v7256
    %v7285 = vpack.c.b16 %v7261, %v7259
    %v7286 = vpack.c.b16 %v7262, %v7260
    %v7287 = vpack.c.b16 %v7265, %v7263
    %v7288 = vpack.c.b16 %v7266, %v7264
    %v7289 = vpack.c.b16 %v7269, %v7267
    %v7290 = vpack.c.b16 %v7270, %v7268
    %v7291 = vpack.c.b16 %v7273, %v7271
    %v7292 = vpack.c.b16 %v7274, %v7272
    %v7293 = vpack.c.b16 %v7277, %v7275
    %v7294 = vpack.c.b16 %v7278, %v7276
    %v7295 = vpack.c.b16 %v7281, %v7279
    %v7296 = vpack.c.b16 %v7282, %v7280
    %v7305 = vsel %vm720, %v7284, 0
    %v7308 = vsel %vm720, %v7286, 0
    %v7311 = vsel %vm720, %v7288, 0
    %v7314 = vsel %vm720, %v7290, 0
    %v7317 = vsel %vm720, %v7292, 0
    %v7320 = vsel %vm720, %v7294, 0
    %v7323 = vsel %vm720, %v7296, 0
    %7325 = vmatprep.subr.bf16.mxu0 %v529
    %7326 = vmatpush1.bf16.msra.mxu0 %v528
    %7327 = vmatprep.subr.bf16.mxu0 %v537
    %7328 = vmatpush1.bf16.msra.mxu0 %v536
    %7329 = vmatprep.subr.bf16.mxu0 %v545
    %7330 = vmatpush1.bf16.msra.mxu0 %v544
    %7331 = vmatprep.subr.bf16.mxu0 %v553
    %7332 = vmatpush1.bf16.msra.mxu0 %v552
    %7333 = vmatprep.subr.bf16.mxu0 %v561
    %7334 = vmatpush1.bf16.msra.mxu0 %v560
    %7335 = vmatprep.subr.bf16.mxu0 %v569
    %7336 = vmatpush1.bf16.msra.mxu0 %v568
    %7337 = vmatprep.subr.bf16.mxu0 %v577
    %7338 = vmatpush1.bf16.msra.mxu0 %v576
    %7339 = vmatprep.subr.bf16.mxu0 %v585
    %7340 = vmatpush1.bf16.msra.mxu0 %v584
    %7341 = vmatprep.subr.bf16.mxu0 %v593
    %7342 = vmatpush1.bf16.msra.mxu0 %v592
    %7343 = vmatprep.subr.bf16.mxu0 %v601
    %7344 = vmatpush1.bf16.msra.mxu0 %v600
    %7345 = vmatprep.subr.bf16.mxu0 %v609
    %7346 = vmatpush1.bf16.msra.mxu0 %v608
    %7347 = vmatprep.subr.bf16.mxu0 %v617
    %7348 = vmatpush1.bf16.msra.mxu0 %v616
    %7349 = vmatprep.subr.bf16.mxu0 0
    %7350 = vmatpush1.bf16.msra.mxu0 0
    %7351 = vmatprep.subr.bf16.mxu0 0
    %7352 = vmatpush1.bf16.msra.mxu0 0
    %7353 = vmatprep.subr.bf16.mxu0 0
    %7354 = vmatpush1.bf16.msra.mxu0 0
    %7355 = vmatprep.subr.bf16.mxu0 0
    %7356 = vmatpush1.bf16.msra.mxu0 0
    %7357 = vmatprep.mubr.bf16.mxu0 %v7305
    %7358 = vmatmul.mubr.bf16.gmra.mrb[0].mxu0 %v7283
    %v7359 = vpop.f32.mrb[0].mxu0
    %v7360 = vadd.f32 %v140, %v7359
    %v7361 = vpop.f32.mrb[0].mxu0
    %v7362 = vadd.f32 %v144, %v7361
    %v7363 = vpop.f32.mrb[0].mxu0
    %v7364 = vadd.f32 %v140, %v7363
    %v7365 = vpop.f32.mrb[0].mxu0
    %v7366 = vadd.f32 %v144, %v7365
    %7367 = vmatprep.mubr.bf16.mxu0 %v7308
    %7368 = vmatmul.mubr.bf16.gmra.mrb[0].mxu0 %v7285
    %v7369 = vpop.f32.mrb[0].mxu0
    %v7370 = vadd.f32 %v140, %v7369
    %v7371 = vpop.f32.mrb[0].mxu0
    %v7372 = vadd.f32 %v144, %v7371
    %v7373 = vpop.f32.mrb[0].mxu0
    %v7374 = vadd.f32 %v140, %v7373
    %v7375 = vpop.f32.mrb[0].mxu0
    %v7376 = vadd.f32 %v144, %v7375
    %7377 = vmatprep.mubr.bf16.mxu0 %v7311
    %7378 = vmatmul.mubr.bf16.gmra.mrb[0].mxu0 %v7287
    %v7379 = vpop.f32.mrb[0].mxu0
    %v7380 = vadd.f32 %v140, %v7379
    %v7381 = vpop.f32.mrb[0].mxu0
    %v7382 = vadd.f32 %v144, %v7381
    %v7383 = vpop.f32.mrb[0].mxu0
    %v7384 = vadd.f32 %v140, %v7383
    %v7385 = vpop.f32.mrb[0].mxu0
    %v7386 = vadd.f32 %v144, %v7385
    %7387 = vmatprep.mubr.bf16.mxu0 %v7314
    %7388 = vmatmul.mubr.bf16.gmra.mrb[0].mxu0 %v7289
    %v7389 = vpop.f32.mrb[0].mxu0
    %v7390 = vadd.f32 %v140, %v7389
    %v7391 = vpop.f32.mrb[0].mxu0
    %v7392 = vadd.f32 %v144, %v7391
    %v7393 = vpop.f32.mrb[0].mxu0
    %v7394 = vadd.f32 %v140, %v7393
    %v7395 = vpop.f32.mrb[0].mxu0
    %v7396 = vadd.f32 %v144, %v7395
    %7397 = vmatprep.mubr.bf16.mxu0 %v7317
    %7398 = vmatmul.mubr.bf16.gmra.mrb[0].mxu0 %v7291
    %v7399 = vpop.f32.mrb[0].mxu0
    %v7400 = vadd.f32 %v140, %v7399
    %v7401 = vpop.f32.mrb[0].mxu0
    %v7402 = vadd.f32 %v144, %v7401
    %v7403 = vpop.f32.mrb[0].mxu0
    %v7404 = vadd.f32 %v140, %v7403
    %v7405 = vpop.f32.mrb[0].mxu0
    %v7406 = vadd.f32 %v144, %v7405
    %7407 = vmatprep.mubr.bf16.mxu0 %v7320
    %7408 = vmatmul.mubr.bf16.gmra.mrb[0].mxu0 %v7293
    %v7409 = vpop.f32.mrb[0].mxu0
    %v7410 = vadd.f32 %v140, %v7409
    %v7411 = vpop.f32.mrb[0].mxu0
    %v7412 = vadd.f32 %v144, %v7411
    %v7413 = vpop.f32.mrb[0].mxu0
    %v7414 = vadd.f32 %v140, %v7413
    %v7415 = vpop.f32.mrb[0].mxu0
    %v7416 = vadd.f32 %v144, %v7415
    %7417 = vmatprep.mubr.bf16.mxu0 %v7323
    %7418 = vmatmul.mubr.bf16.gmra.mrb[0].mxu0 %v7295
    %v7419 = vpop.f32.mrb[0].mxu0
    %v7420 = vadd.f32 %v140, %v7419
    %v7421 = vpop.f32.mrb[0].mxu0
    %v7422 = vadd.f32 %v144, %v7421
    %v7423 = vpop.f32.mrb[0].mxu0
    %v7424 = vadd.f32 %v140, %v7423
    %v7425 = vpop.f32.mrb[0].mxu0
    %v7426 = vadd.f32 %v144, %v7425
    %7427 = vdwg.mxu0
    %7428 = vmatprep.subr.bf16.mxu0 %v531
    %7429 = vmatpush1.bf16.msra.mxu0 %v530
    %7430 = vmatprep.subr.bf16.mxu0 %v539
    %7431 = vmatpush1.bf16.msra.mxu0 %v538
    %7432 = vmatprep.subr.bf16.mxu0 %v547
    %7433 = vmatpush1.bf16.msra.mxu0 %v546
    %7434 = vmatprep.subr.bf16.mxu0 %v555
    %7435 = vmatpush1.bf16.msra.mxu0 %v554
    %7436 = vmatprep.subr.bf16.mxu0 %v563
    %7437 = vmatpush1.bf16.msra.mxu0 %v562
    %7438 = vmatprep.subr.bf16.mxu0 %v571
    %7439 = vmatpush1.bf16.msra.mxu0 %v570
    %7440 = vmatprep.subr.bf16.mxu0 %v579
    %7441 = vmatpush1.bf16.msra.mxu0 %v578
    %7442 = vmatprep.subr.bf16.mxu0 %v587
    %7443 = vmatpush1.bf16.msra.mxu0 %v586
    %7444 = vmatprep.subr.bf16.mxu0 %v595
    %7445 = vmatpush1.bf16.msra.mxu0 %v594
    %7446 = vmatprep.subr.bf16.mxu0 %v603
    %7447 = vmatpush1.bf16.msra.mxu0 %v602
    %7448 = vmatprep.subr.bf16.mxu0 %v611
    %7449 = vmatpush1.bf16.msra.mxu0 %v610
    %7450 = vmatprep.subr.bf16.mxu0 %v619
    %7451 = vmatpush1.bf16.msra.mxu0 %v618
    %7452 = vmatprep.subr.bf16.mxu0 0
    %7453 = vmatpush1.bf16.msra.mxu0 0
    %7454 = vmatprep.subr.bf16.mxu0 0
    %7455 = vmatpush1.bf16.msra.mxu0 0
    %7456 = vmatprep.subr.bf16.mxu0 0
    %7457 = vmatpush1.bf16.msra.mxu0 0
    %7458 = vmatprep.subr.bf16.mxu0 0
    %7459 = vmatpush1.bf16.msra.mxu0 0
    %7460 = vmatprep.mubr.bf16.mxu0 %v7305
    %7461 = vmatmul.mubr.bf16.gmra.mrb[0].mxu0 %v7283
    %v7462 = vpop.f32.mrb[0].mxu0
    %v7463 = vadd.f32 %v148, %v7462
    %v7464 = vpop.f32.mrb[0].mxu0
    %v7465 = vadd.f32 %v152, %v7464
    %v7466 = vpop.f32.mrb[0].mxu0
    %v7467 = vadd.f32 %v148, %v7466
    %v7468 = vpop.f32.mrb[0].mxu0
    %v7469 = vadd.f32 %v152, %v7468
    %7470 = vmatprep.mubr.bf16.mxu0 %v7308
    %7471 = vmatmul.mubr.bf16.gmra.mrb[0].mxu0 %v7285
    %v7472 = vpop.f32.mrb[0].mxu0
    %v7473 = vadd.f32 %v148, %v7472
    %v7474 = vpop.f32.mrb[0].mxu0
    %v7475 = vadd.f32 %v152, %v7474
    %v7476 = vpop.f32.mrb[0].mxu0
    %v7477 = vadd.f32 %v148, %v7476
    %v7478 = vpop.f32.mrb[0].mxu0
    %v7479 = vadd.f32 %v152, %v7478
    %7480 = vmatprep.mubr.bf16.mxu0 %v7311
    %7481 = vmatmul.mubr.bf16.gmra.mrb[0].mxu0 %v7287
    %v7482 = vpop.f32.mrb[0].mxu0
    %v7483 = vadd.f32 %v148, %v7482
    %v7484 = vpop.f32.mrb[0].mxu0
    %v7485 = vadd.f32 %v152, %v7484
    %v7486 = vpop.f32.mrb[0].mxu0
    %v7487 = vadd.f32 %v148, %v7486
    %v7488 = vpop.f32.mrb[0].mxu0
    %v7489 = vadd.f32 %v152, %v7488
    %7490 = vmatprep.mubr.bf16.mxu0 %v7314
    %7491 = vmatmul.mubr.bf16.gmra.mrb[0].mxu0 %v7289
    %v7492 = vpop.f32.mrb[0].mxu0
    %v7493 = vadd.f32 %v148, %v7492
    %v7494 = vpop.f32.mrb[0].mxu0
    %v7495 = vadd.f32 %v152, %v7494
    %v7496 = vpop.f32.mrb[0].mxu0
    %v7497 = vadd.f32 %v148, %v7496
    %v7498 = vpop.f32.mrb[0].mxu0
    %v7499 = vadd.f32 %v152, %v7498
    %7500 = vmatprep.mubr.bf16.mxu0 %v7317
    %7501 = vmatmul.mubr.bf16.gmra.mrb[0].mxu0 %v7291
    %v7502 = vpop.f32.mrb[0].mxu0
    %v7503 = vadd.f32 %v148, %v7502
    %v7504 = vpop.f32.mrb[0].mxu0
    %v7505 = vadd.f32 %v152, %v7504
    %v7506 = vpop.f32.mrb[0].mxu0
    %v7507 = vadd.f32 %v148, %v7506
    %v7508 = vpop.f32.mrb[0].mxu0
    %v7509 = vadd.f32 %v152, %v7508
    %7510 = vmatprep.mubr.bf16.mxu0 %v7320
    %7511 = vmatmul.mubr.bf16.gmra.mrb[0].mxu0 %v7293
    %v7512 = vpop.f32.mrb[0].mxu0
    %v7513 = vadd.f32 %v148, %v7512
    %v7514 = vpop.f32.mrb[0].mxu0
    %v7515 = vadd.f32 %v152, %v7514
    %v7516 = vpop.f32.mrb[0].mxu0
    %v7517 = vadd.f32 %v148, %v7516
    %v7518 = vpop.f32.mrb[0].mxu0
    %v7519 = vadd.f32 %v152, %v7518
    %7520 = vmatprep.mubr.bf16.mxu0 %v7323
    %7521 = vmatmul.mubr.bf16.gmra.mrb[0].mxu0 %v7295
    %v7522 = vpop.f32.mrb[0].mxu0
    %v7523 = vadd.f32 %v148, %v7522
    %v7524 = vpop.f32.mrb[0].mxu0
    %v7525 = vadd.f32 %v152, %v7524
    %v7526 = vpop.f32.mrb[0].mxu0
    %v7527 = vadd.f32 %v148, %v7526
    %v7528 = vpop.f32.mrb[0].mxu0
    %v7529 = vadd.f32 %v152, %v7528
    %7530 = vdwg.mxu0
    %7531 = vmatprep.subr.bf16.mxu0 %v533
    %7532 = vmatpush1.bf16.msra.mxu0 %v532
    %7533 = vmatprep.subr.bf16.mxu0 %v541
    %7534 = vmatpush1.bf16.msra.mxu0 %v540
    %7535 = vmatprep.subr.bf16.mxu0 %v549
    %7536 = vmatpush1.bf16.msra.mxu0 %v548
    %7537 = vmatprep.subr.bf16.mxu0 %v557
    %7538 = vmatpush1.bf16.msra.mxu0 %v556
    %7539 = vmatprep.subr.bf16.mxu0 %v565
    %7540 = vmatpush1.bf16.msra.mxu0 %v564
    %7541 = vmatprep.subr.bf16.mxu0 %v573
    %7542 = vmatpush1.bf16.msra.mxu0 %v572
    %7543 = vmatprep.subr.bf16.mxu0 %v581
    %7544 = vmatpush1.bf16.msra.mxu0 %v580
    %7545 = vmatprep.subr.bf16.mxu0 %v589
    %7546 = vmatpush1.bf16.msra.mxu0 %v588
    %7547 = vmatprep.subr.bf16.mxu0 %v597
    %7548 = vmatpush1.bf16.msra.mxu0 %v596
    %7549 = vmatprep.subr.bf16.mxu0 %v605
    %7550 = vmatpush1.bf16.msra.mxu0 %v604
    %7551 = vmatprep.subr.bf16.mxu0 %v613
    %7552 = vmatpush1.bf16.msra.mxu0 %v612
    %7553 = vmatprep.subr.bf16.mxu0 %v621
    %7554 = vmatpush1.bf16.msra.mxu0 %v620
    %7555 = vmatprep.subr.bf16.mxu0 0
    %7556 = vmatpush1.bf16.msra.mxu0 0
    %7557 = vmatprep.subr.bf16.mxu0 0
    %7558 = vmatpush1.bf16.msra.mxu0 0
    %7559 = vmatprep.subr.bf16.mxu0 0
    %7560 = vmatpush1.bf16.msra.mxu0 0
    %7561 = vmatprep.subr.bf16.mxu0 0
    %7562 = vmatpush1.bf16.msra.mxu0 0
    %7563 = vmatprep.mubr.bf16.mxu0 %v7305
    %7564 = vmatmul.mubr.bf16.gmra.mrb[0].mxu0 %v7283
    %v7565 = vpop.f32.mrb[0].mxu0
    %v7566 = vadd.f32 %v156, %v7565
    %v7567 = vpop.f32.mrb[0].mxu0
    %v7568 = vadd.f32 %v160, %v7567
    %v7569 = vpop.f32.mrb[0].mxu0
    %v7570 = vadd.f32 %v156, %v7569
    %v7571 = vpop.f32.mrb[0].mxu0
    %v7572 = vadd.f32 %v160, %v7571
    %7573 = vmatprep.mubr.bf16.mxu0 %v7308
    %7574 = vmatmul.mubr.bf16.gmra.mrb[0].mxu0 %v7285
    %v7575 = vpop.f32.mrb[0].mxu0
    %v7576 = vadd.f32 %v156, %v7575
    %v7577 = vpop.f32.mrb[0].mxu0
    %v7578 = vadd.f32 %v160, %v7577
    %v7579 = vpop.f32.mrb[0].mxu0
    %v7580 = vadd.f32 %v156, %v7579
    %v7581 = vpop.f32.mrb[0].mxu0
    %v7582 = vadd.f32 %v160, %v7581
    %7583 = vmatprep.mubr.bf16.mxu0 %v7311
    %7584 = vmatmul.mubr.bf16.gmra.mrb[0].mxu0 %v7287
    %v7585 = vpop.f32.mrb[0].mxu0
    %v7586 = vadd.f32 %v156, %v7585
    %v7587 = vpop.f32.mrb[0].mxu0
    %v7588 = vadd.f32 %v160, %v7587
    %v7589 = vpop.f32.mrb[0].mxu0
    %v7590 = vadd.f32 %v156, %v7589
    %v7591 = vpop.f32.mrb[0].mxu0
    %v7592 = vadd.f32 %v160, %v7591
    %7593 = vmatprep.mubr.bf16.mxu0 %v7314
    %7594 = vmatmul.mubr.bf16.gmra.mrb[0].mxu0 %v7289
    %v7595 = vpop.f32.mrb[0].mxu0
    %v7596 = vadd.f32 %v156, %v7595
    %v7597 = vpop.f32.mrb[0].mxu0
    %v7598 = vadd.f32 %v160, %v7597
    %v7599 = vpop.f32.mrb[0].mxu0
    %v7600 = vadd.f32 %v156, %v7599
    %v7601 = vpop.f32.mrb[0].mxu0
    %v7602 = vadd.f32 %v160, %v7601
    %7603 = vmatprep.mubr.bf16.mxu0 %v7317
    %7604 = vmatmul.mubr.bf16.gmra.mrb[0].mxu0 %v7291
    %v7605 = vpop.f32.mrb[0].mxu0
    %v7606 = vadd.f32 %v156, %v7605
    %v7607 = vpop.f32.mrb[0].mxu0
    %v7608 = vadd.f32 %v160, %v7607
    %v7609 = vpop.f32.mrb[0].mxu0
    %v7610 = vadd.f32 %v156, %v7609
    %v7611 = vpop.f32.mrb[0].mxu0
    %v7612 = vadd.f32 %v160, %v7611
    %7613 = vmatprep.mubr.bf16.mxu0 %v7320
    %7614 = vmatmul.mubr.bf16.gmra.mrb[0].mxu0 %v7293
    %v7615 = vpop.f32.mrb[0].mxu0
    %v7616 = vadd.f32 %v156, %v7615
    %v7617 = vpop.f32.mrb[0].mxu0
    %v7618 = vadd.f32 %v160, %v7617
    %v7619 = vpop.f32.mrb[0].mxu0
    %v7620 = vadd.f32 %v156, %v7619
    %v7621 = vpop.f32.mrb[0].mxu0
    %v7622 = vadd.f32 %v160, %v7621
    %7623 = vmatprep.mubr.bf16.mxu0 %v7323
    %7624 = vmatmul.mubr.bf16.gmra.mrb[0].mxu0 %v7295
    %v7625 = vpop.f32.mrb[0].mxu0
    %v7626 = vadd.f32 %v156, %v7625
    %v7627 = vpop.f32.mrb[0].mxu0
    %v7628 = vadd.f32 %v160, %v7627
    %v7629 = vpop.f32.mrb[0].mxu0
    %v7630 = vadd.f32 %v156, %v7629
    %v7631 = vpop.f32.mrb[0].mxu0
    %v7632 = vadd.f32 %v160, %v7631
    %7633 = vdwg.mxu0
    %7634 = vmatprep.subr.bf16.mxu0 %v535
    %7635 = vmatpush1.bf16.msra.mxu0 %v534
    %7636 = vmatprep.subr.bf16.mxu0 %v543
    %7637 = vmatpush1.bf16.msra.mxu0 %v542
    %7638 = vmatprep.subr.bf16.mxu0 %v551
    %7639 = vmatpush1.bf16.msra.mxu0 %v550
    %7640 = vmatprep.subr.bf16.mxu0 %v559
    %7641 = vmatpush1.bf16.msra.mxu0 %v558
    %7642 = vmatprep.subr.bf16.mxu0 %v567
    %7643 = vmatpush1.bf16.msra.mxu0 %v566
    %7644 = vmatprep.subr.bf16.mxu0 %v575
    %7645 = vmatpush1.bf16.msra.mxu0 %v574
    %7646 = vmatprep.subr.bf16.mxu0 %v583
    %7647 = vmatpush1.bf16.msra.mxu0 %v582
    %7648 = vmatprep.subr.bf16.mxu0 %v591
    %7649 = vmatpush1.bf16.msra.mxu0 %v590
    %7650 = vmatprep.subr.bf16.mxu0 %v599
    %7651 = vmatpush1.bf16.msra.mxu0 %v598
    %7652 = vmatprep.subr.bf16.mxu0 %v607
    %7653 = vmatpush1.bf16.msra.mxu0 %v606
    %7654 = vmatprep.subr.bf16.mxu0 %v615
    %7655 = vmatpush1.bf16.msra.mxu0 %v614
    %7656 = vmatprep.subr.bf16.mxu0 %v623
    %7657 = vmatpush1.bf16.msra.mxu0 %v622
    %7658 = vmatprep.subr.bf16.mxu0 0
    %7659 = vmatpush1.bf16.msra.mxu0 0
    %7660 = vmatprep.subr.bf16.mxu0 0
    %7661 = vmatpush1.bf16.msra.mxu0 0
    %7662 = vmatprep.subr.bf16.mxu0 0
    %7663 = vmatpush1.bf16.msra.mxu0 0
    %7664 = vmatprep.subr.bf16.mxu0 0
    %7665 = vmatpush1.bf16.msra.mxu0 0
    %7666 = vmatprep.mubr.bf16.mxu0 %v7305
    %7667 = vmatmul.mubr.bf16.gmra.mrb[0].mxu0 %v7283
    %v7668 = vpop.f32.mrb[0].mxu0
    %v7669 = vadd.f32 %v164, %v7668
    %v7670 = vpop.f32.mrb[0].mxu0
    %v7671 = vadd.f32 %v168, %v7670
    %v7672 = vpop.f32.mrb[0].mxu0
    %v7673 = vadd.f32 %v164, %v7672
    %v7674 = vpop.f32.mrb[0].mxu0
    %v7675 = vadd.f32 %v168, %v7674
    %7676 = vmatprep.mubr.bf16.mxu0 %v7308
    %7677 = vmatmul.mubr.bf16.gmra.mrb[0].mxu0 %v7285
    %v7678 = vpop.f32.mrb[0].mxu0
    %v7679 = vadd.f32 %v164, %v7678
    %v7680 = vpop.f32.mrb[0].mxu0
    %v7681 = vadd.f32 %v168, %v7680
    %v7682 = vpop.f32.mrb[0].mxu0
    %v7683 = vadd.f32 %v164, %v7682
    %v7684 = vpop.f32.mrb[0].mxu0
    %v7685 = vadd.f32 %v168, %v7684
    %7686 = vmatprep.mubr.bf16.mxu0 %v7311
    %7687 = vmatmul.mubr.bf16.gmra.mrb[0].mxu0 %v7287
    %v7688 = vpop.f32.mrb[0].mxu0
    %v7689 = vadd.f32 %v164, %v7688
    %v7690 = vpop.f32.mrb[0].mxu0
    %v7691 = vadd.f32 %v168, %v7690
    %v7692 = vpop.f32.mrb[0].mxu0
    %v7693 = vadd.f32 %v164, %v7692
    %v7694 = vpop.f32.mrb[0].mxu0
    %v7695 = vadd.f32 %v168, %v7694
    %7696 = vmatprep.mubr.bf16.mxu0 %v7314
    %7697 = vmatmul.mubr.bf16.gmra.mrb[0].mxu0 %v7289
    %v7698 = vpop.f32.mrb[0].mxu0
    %v7699 = vadd.f32 %v164, %v7698
    %v7700 = vpop.f32.mrb[0].mxu0
    %v7701 = vadd.f32 %v168, %v7700
    %v7702 = vpop.f32.mrb[0].mxu0
    %v7703 = vadd.f32 %v164, %v7702
    %v7704 = vpop.f32.mrb[0].mxu0
    %v7705 = vadd.f32 %v168, %v7704
    %7706 = vmatprep.mubr.bf16.mxu0 %v7317
    %7707 = vmatmul.mubr.bf16.gmra.mrb[0].mxu0 %v7291
    %v7708 = vpop.f32.mrb[0].mxu0
    %v7709 = vadd.f32 %v164, %v7708
    %v7710 = vpop.f32.mrb[0].mxu0
    %v7711 = vadd.f32 %v168, %v7710
    %v7712 = vpop.f32.mrb[0].mxu0
    %v7713 = vadd.f32 %v164, %v7712
    %v7714 = vpop.f32.mrb[0].mxu0
    %v7715 = vadd.f32 %v168, %v7714
    %7716 = vmatprep.mubr.bf16.mxu0 %v7320
    %7717 = vmatmul.mubr.bf16.gmra.mrb[0].mxu0 %v7293
    %v7718 = vpop.f32.mrb[0].mxu0
    %v7719 = vadd.f32 %v164, %v7718
    %v7720 = vpop.f32.mrb[0].mxu0
    %v7721 = vadd.f32 %v168, %v7720
    %v7722 = vpop.f32.mrb[0].mxu0
    %v7723 = vadd.f32 %v164, %v7722
    %v7724 = vpop.f32.mrb[0].mxu0
    %v7725 = vadd.f32 %v168, %v7724
    %7726 = vmatprep.mubr.bf16.mxu0 %v7323
    %7727 = vmatmul.mubr.bf16.gmra.mrb[0].mxu0 %v7295
    %v7728 = vpop.f32.mrb[0].mxu0
    %v7729 = vadd.f32 %v164, %v7728
    %v7730 = vpop.f32.mrb[0].mxu0
    %v7731 = vadd.f32 %v168, %v7730
    %v7732 = vpop.f32.mrb[0].mxu0
    %v7733 = vadd.f32 %v164, %v7732
    %v7734 = vpop.f32.mrb[0].mxu0
    %v7735 = vadd.f32 %v168, %v7734
    %7736 = vdwg.mxu0
    %v7737 = vmax.f32 %v7360, 0.0
    %v7738 = vmax.f32 %v7362, 0.0
    %v7739 = vmax.f32 %v7463, 0.0
    %v7740 = vmax.f32 %v7465, 0.0
    %v7741 = vmax.f32 %v7566, 0.0
    %v7742 = vmax.f32 %v7568, 0.0
    %v7743 = vmax.f32 %v7669, 0.0
    %v7744 = vmax.f32 %v7671, 0.0
    %v7745 = vmax.f32 %v7364, 0.0
    %v7746 = vmax.f32 %v7366, 0.0
    %v7747 = vmax.f32 %v7467, 0.0
    %v7748 = vmax.f32 %v7469, 0.0
    %v7749 = vmax.f32 %v7570, 0.0
    %v7750 = vmax.f32 %v7572, 0.0
    %v7751 = vmax.f32 %v7673, 0.0
    %v7752 = vmax.f32 %v7675, 0.0
    %v7753 = vmax.f32 %v7370, 0.0
    %v7754 = vmax.f32 %v7372, 0.0
    %v7755 = vmax.f32 %v7473, 0.0
    %v7756 = vmax.f32 %v7475, 0.0
    %v7757 = vmax.f32 %v7576, 0.0
    %v7758 = vmax.f32 %v7578, 0.0
    %v7759 = vmax.f32 %v7679, 0.0
    %v7760 = vmax.f32 %v7681, 0.0
    %v7761 = vmax.f32 %v7374, 0.0
    %v7762 = vmax.f32 %v7376, 0.0
    %v7763 = vmax.f32 %v7477, 0.0
    %v7764 = vmax.f32 %v7479, 0.0
    %v7765 = vmax.f32 %v7580, 0.0
    %v7766 = vmax.f32 %v7582, 0.0
    %v7767 = vmax.f32 %v7683, 0.0
    %v7768 = vmax.f32 %v7685, 0.0
    %v7769 = vmax.f32 %v7380, 0.0
    %v7770 = vmax.f32 %v7382, 0.0
    %v7771 = vmax.f32 %v7483, 0.0
    %v7772 = vmax.f32 %v7485, 0.0
    %v7773 = vmax.f32 %v7586, 0.0
    %v7774 = vmax.f32 %v7588, 0.0
    %v7775 = vmax.f32 %v7689, 0.0
    %v7776 = vmax.f32 %v7691, 0.0
    %v7777 = vmax.f32 %v7384, 0.0
    %v7778 = vmax.f32 %v7386, 0.0
    %v7779 = vmax.f32 %v7487, 0.0
    %v7780 = vmax.f32 %v7489, 0.0
    %v7781 = vmax.f32 %v7590, 0.0
    %v7782 = vmax.f32 %v7592, 0.0
    %v7783 = vmax.f32 %v7693, 0.0
    %v7784 = vmax.f32 %v7695, 0.0
    %v7785 = vmax.f32 %v7390, 0.0
    %v7786 = vmax.f32 %v7392, 0.0
    %v7787 = vmax.f32 %v7493, 0.0
    %v7788 = vmax.f32 %v7495, 0.0
    %v7789 = vmax.f32 %v7596, 0.0
    %v7790 = vmax.f32 %v7598, 0.0
    %v7791 = vmax.f32 %v7699, 0.0
    %v7792 = vmax.f32 %v7701, 0.0
    %v7793 = vmax.f32 %v7394, 0.0
    %v7794 = vmax.f32 %v7396, 0.0
    %v7795 = vmax.f32 %v7497, 0.0
    %v7796 = vmax.f32 %v7499, 0.0
    %v7797 = vmax.f32 %v7600, 0.0
    %v7798 = vmax.f32 %v7602, 0.0
    %v7799 = vmax.f32 %v7703, 0.0
    %v7800 = vmax.f32 %v7705, 0.0
    %v7801 = vmax.f32 %v7400, 0.0
    %v7802 = vmax.f32 %v7402, 0.0
    %v7803 = vmax.f32 %v7503, 0.0
    %v7804 = vmax.f32 %v7505, 0.0
    %v7805 = vmax.f32 %v7606, 0.0
    %v7806 = vmax.f32 %v7608, 0.0
    %v7807 = vmax.f32 %v7709, 0.0
    %v7808 = vmax.f32 %v7711, 0.0
    %v7809 = vmax.f32 %v7404, 0.0
    %v7810 = vmax.f32 %v7406, 0.0
    %v7811 = vmax.f32 %v7507, 0.0
    %v7812 = vmax.f32 %v7509, 0.0
    %v7813 = vmax.f32 %v7610, 0.0
    %v7814 = vmax.f32 %v7612, 0.0
    %v7815 = vmax.f32 %v7713, 0.0
    %v7816 = vmax.f32 %v7715, 0.0
    %v7817 = vmax.f32 %v7410, 0.0
    %v7818 = vmax.f32 %v7412, 0.0
    %v7819 = vmax.f32 %v7513, 0.0
    %v7820 = vmax.f32 %v7515, 0.0
    %v7821 = vmax.f32 %v7616, 0.0
    %v7822 = vmax.f32 %v7618, 0.0
    %v7823 = vmax.f32 %v7719, 0.0
    %v7824 = vmax.f32 %v7721, 0.0
    %v7825 = vmax.f32 %v7414, 0.0
    %v7826 = vmax.f32 %v7416, 0.0
    %v7827 = vmax.f32 %v7517, 0.0
    %v7828 = vmax.f32 %v7519, 0.0
    %v7829 = vmax.f32 %v7620, 0.0
    %v7830 = vmax.f32 %v7622, 0.0
    %v7831 = vmax.f32 %v7723, 0.0
    %v7832 = vmax.f32 %v7725, 0.0
    %v7833 = vmax.f32 %v7420, 0.0
    %v7834 = vmax.f32 %v7422, 0.0
    %v7835 = vmax.f32 %v7523, 0.0
    %v7836 = vmax.f32 %v7525, 0.0
    %v7837 = vmax.f32 %v7626, 0.0
    %v7838 = vmax.f32 %v7628, 0.0
    %v7839 = vmax.f32 %v7729, 0.0
    %v7840 = vmax.f32 %v7731, 0.0
    %v7841 = vmax.f32 %v7424, 0.0
    %v7842 = vmax.f32 %v7426, 0.0
    %v7843 = vmax.f32 %v7527, 0.0
    %v7844 = vmax.f32 %v7529, 0.0
    %v7845 = vmax.f32 %v7630, 0.0
    %v7846 = vmax.f32 %v7632, 0.0
    %v7847 = vmax.f32 %v7733, 0.0
    %v7848 = vmax.f32 %v7735, 0.0
    %v7849 = vadd.f32 %v7737, %v7753
    %v7850 = vadd.f32 %v7738, %v7754
    %v7851 = vadd.f32 %v7739, %v7755
    %v7852 = vadd.f32 %v7740, %v7756
    %v7853 = vadd.f32 %v7741, %v7757
    %v7854 = vadd.f32 %v7742, %v7758
    %v7855 = vadd.f32 %v7743, %v7759
    %v7856 = vadd.f32 %v7744, %v7760
    %v7857 = vadd.f32 %v7745, %v7761
    %v7858 = vadd.f32 %v7746, %v7762
    %v7859 = vadd.f32 %v7747, %v7763
    %v7860 = vadd.f32 %v7748, %v7764
    %v7861 = vadd.f32 %v7749, %v7765
    %v7862 = vadd.f32 %v7750, %v7766
    %v7863 = vadd.f32 %v7751, %v7767
    %v7864 = vadd.f32 %v7752, %v7768
    %v7865 = vadd.f32 %v7849, %v7769
    %v7866 = vadd.f32 %v7850, %v7770
    %v7867 = vadd.f32 %v7851, %v7771
    %v7868 = vadd.f32 %v7852, %v7772
    %v7869 = vadd.f32 %v7853, %v7773
    %v7870 = vadd.f32 %v7854, %v7774
    %v7871 = vadd.f32 %v7855, %v7775
    %v7872 = vadd.f32 %v7856, %v7776
    %v7873 = vadd.f32 %v7857, %v7777
    %v7874 = vadd.f32 %v7858, %v7778
    %v7875 = vadd.f32 %v7859, %v7779
    %v7876 = vadd.f32 %v7860, %v7780
    %v7877 = vadd.f32 %v7861, %v7781
    %v7878 = vadd.f32 %v7862, %v7782
    %v7879 = vadd.f32 %v7863, %v7783
    %v7880 = vadd.f32 %v7864, %v7784
    %v7881 = vadd.f32 %v7865, %v7785
    %v7882 = vadd.f32 %v7866, %v7786
    %v7883 = vadd.f32 %v7867, %v7787
    %v7884 = vadd.f32 %v7868, %v7788
    %v7885 = vadd.f32 %v7869, %v7789
    %v7886 = vadd.f32 %v7870, %v7790
    %v7887 = vadd.f32 %v7871, %v7791
    %v7888 = vadd.f32 %v7872, %v7792
    %v7889 = vadd.f32 %v7873, %v7793
    %v7890 = vadd.f32 %v7874, %v7794
    %v7891 = vadd.f32 %v7875, %v7795
    %v7892 = vadd.f32 %v7876, %v7796
    %v7893 = vadd.f32 %v7877, %v7797
    %v7894 = vadd.f32 %v7878, %v7798
    %v7895 = vadd.f32 %v7879, %v7799
    %v7896 = vadd.f32 %v7880, %v7800
    %v7897 = vadd.f32 %v7881, %v7801
    %v7898 = vadd.f32 %v7882, %v7802
    %v7899 = vadd.f32 %v7883, %v7803
    %v7900 = vadd.f32 %v7884, %v7804
    %v7901 = vadd.f32 %v7885, %v7805
    %v7902 = vadd.f32 %v7886, %v7806
    %v7903 = vadd.f32 %v7887, %v7807
    %v7904 = vadd.f32 %v7888, %v7808
    %v7905 = vadd.f32 %v7889, %v7809
    %v7906 = vadd.f32 %v7890, %v7810
    %v7907 = vadd.f32 %v7891, %v7811
    %v7908 = vadd.f32 %v7892, %v7812
    %v7909 = vadd.f32 %v7893, %v7813
    %v7910 = vadd.f32 %v7894, %v7814
    %v7911 = vadd.f32 %v7895, %v7815
    %v7912 = vadd.f32 %v7896, %v7816
    %v7913 = vadd.f32 %v7897, %v7817
    %v7914 = vadd.f32 %v7898, %v7818
    %v7915 = vadd.f32 %v7899, %v7819
    %v7916 = vadd.f32 %v7900, %v7820
    %v7917 = vadd.f32 %v7901, %v7821
    %v7918 = vadd.f32 %v7902, %v7822
    %v7919 = vadd.f32 %v7903, %v7823
    %v7920 = vadd.f32 %v7904, %v7824
    %v7921 = vadd.f32 %v7905, %v7825
    %v7922 = vadd.f32 %v7906, %v7826
    %v7923 = vadd.f32 %v7907, %v7827
    %v7924 = vadd.f32 %v7908, %v7828
    %v7925 = vadd.f32 %v7909, %v7829
    %v7926 = vadd.f32 %v7910, %v7830
    %v7927 = vadd.f32 %v7911, %v7831
    %v7928 = vadd.f32 %v7912, %v7832
    %v7929 = vadd.f32 %v7913, %v7833
    %v7930 = vadd.f32 %v7914, %v7834
    %v7931 = vadd.f32 %v7915, %v7835
    %v7932 = vadd.f32 %v7916, %v7836
    %v7933 = vadd.f32 %v7917, %v7837
    %v7934 = vadd.f32 %v7918, %v7838
    %v7935 = vadd.f32 %v7919, %v7839
    %v7936 = vadd.f32 %v7920, %v7840
    %v7937 = vadd.f32 %v7921, %v7841
    %v7938 = vadd.f32 %v7922, %v7842
    %v7939 = vadd.f32 %v7923, %v7843
    %v7940 = vadd.f32 %v7924, %v7844
    %v7941 = vadd.f32 %v7925, %v7845
    %v7942 = vadd.f32 %v7926, %v7846
    %v7943 = vadd.f32 %v7927, %v7847
    %v7944 = vadd.f32 %v7928, %v7848
    %v7945 = vadd.f32 %v7210, %v7929
    %v7946 = vadd.f32 %v7211, %v7930
    %v7947 = vadd.f32 %v7212, %v7931
    %v7948 = vadd.f32 %v7213, %v7932
    %v7949 = vadd.f32 %v7214, %v7933
    %v7950 = vadd.f32 %v7215, %v7934
    %v7951 = vadd.f32 %v7216, %v7935
    %v7952 = vadd.f32 %v7217, %v7936
    %v7953 = vadd.f32 %v7218, %v7937
    %v7954 = vadd.f32 %v7219, %v7938
    %v7955 = vadd.f32 %v7220, %v7939
    %v7956 = vadd.f32 %v7221, %v7940
    %v7957 = vadd.f32 %v7222, %v7941
    %v7958 = vadd.f32 %v7223, %v7942
    %v7959 = vadd.f32 %v7224, %v7943
    %v7960 = vadd.f32 %v7225, %v7944
    %s7961 = scalar_lea.vmem %s0, 1120
    %v7962 = vld [vmem:[%s7961] sm:$0xff]
    %v7963 = vld [vmem:[%s7961 + $0x8] sm:$0xff]
    %v7964 = vld [vmem:[%s7961 + $0x10] sm:$0xff]
    %v7965 = vld [vmem:[%s7961 + $0x18] sm:$0xff]
    %v7966 = vld [vmem:[%s7961 + $0x20] sm:$0xff]
    %v7967 = vld [vmem:[%s7961 + $0x28] sm:$0xff]
    %v7968 = vld [vmem:[%s7961 + $0x30] sm:$0xff]
    %v7969 = vld [vmem:[%s7961 + $0x38] sm:$0xff]
    %v7970 = vld [vmem:[%s7961 + $0x40] sm:$0xff]
    %v7971 = vld [vmem:[%s7961 + $0x48] sm:$0xff]
    %v7972 = vld [vmem:[%s7961 + $0x50] sm:$0xff]
    %v7973 = vld [vmem:[%s7961 + $0x58] sm:$0xff]
    %v7974 = vld [vmem:[%s7961 + $0x60] sm:$0xff]
    %v7975 = vld [vmem:[%s7961 + $0x68] sm:$0xff]
    %v7990 = vunpack.c.l.b16 %v7962
    %v7991 = vunpack.c.h.b16 %v7962
    %v7992 = vunpack.c.l.b16 %v7963
    %v7993 = vunpack.c.h.b16 %v7963
    %v7994 = vunpack.c.l.b16 %v7964
    %v7995 = vunpack.c.h.b16 %v7964
    %v7996 = vunpack.c.l.b16 %v7965
    %v7997 = vunpack.c.h.b16 %v7965
    %v7998 = vunpack.c.l.b16 %v7966
    %v7999 = vunpack.c.h.b16 %v7966
    %v8000 = vunpack.c.l.b16 %v7967
    %v8001 = vunpack.c.h.b16 %v7967
    %v8002 = vunpack.c.l.b16 %v7968
    %v8003 = vunpack.c.h.b16 %v7968
    %v8004 = vunpack.c.l.b16 %v7969
    %v8005 = vunpack.c.h.b16 %v7969
    %v8006 = vunpack.c.l.b16 %v7970
    %v8007 = vunpack.c.h.b16 %v7970
    %v8008 = vunpack.c.l.b16 %v7971
    %v8009 = vunpack.c.h.b16 %v7971
    %v8010 = vunpack.c.l.b16 %v7972
    %v8011 = vunpack.c.h.b16 %v7972
    %v8012 = vunpack.c.l.b16 %v7973
    %v8013 = vunpack.c.h.b16 %v7973
    %v8014 = vunpack.c.l.b16 %v7974
    %v8015 = vunpack.c.h.b16 %v7974
    %v8016 = vunpack.c.l.b16 %v7975
    %v8017 = vunpack.c.h.b16 %v7975
    %v8018 = vpack.c.b16 %v7992, %v7990
    %v8019 = vpack.c.b16 %v7993, %v7991
    %v8020 = vpack.c.b16 %v7996, %v7994
    %v8021 = vpack.c.b16 %v7997, %v7995
    %v8022 = vpack.c.b16 %v8000, %v7998
    %v8023 = vpack.c.b16 %v8001, %v7999
    %v8024 = vpack.c.b16 %v8004, %v8002
    %v8025 = vpack.c.b16 %v8005, %v8003
    %v8026 = vpack.c.b16 %v8008, %v8006
    %v8027 = vpack.c.b16 %v8009, %v8007
    %v8028 = vpack.c.b16 %v8012, %v8010
    %v8029 = vpack.c.b16 %v8013, %v8011
    %v8030 = vpack.c.b16 %v8016, %v8014
    %v8031 = vpack.c.b16 %v8017, %v8015
    %v8040 = vsel %vm720, %v8019, 0
    %v8043 = vsel %vm720, %v8021, 0
    %v8046 = vsel %vm720, %v8023, 0
    %v8049 = vsel %vm720, %v8025, 0
    %v8052 = vsel %vm720, %v8027, 0
    %v8055 = vsel %vm720, %v8029, 0
    %v8058 = vsel %vm720, %v8031, 0
    %8060 = vmatprep.subr.bf16.mxu0 %v529
    %8061 = vmatpush1.bf16.msra.mxu0 %v528
    %8062 = vmatprep.subr.bf16.mxu0 %v537
    %8063 = vmatpush1.bf16.msra.mxu0 %v536
    %8064 = vmatprep.subr.bf16.mxu0 %v545
    %8065 = vmatpush1.bf16.msra.mxu0 %v544
    %8066 = vmatprep.subr.bf16.mxu0 %v553
    %8067 = vmatpush1.bf16.msra.mxu0 %v552
    %8068 = vmatprep.subr.bf16.mxu0 %v561
    %8069 = vmatpush1.bf16.msra.mxu0 %v560
    %8070 = vmatprep.subr.bf16.mxu0 %v569
    %8071 = vmatpush1.bf16.msra.mxu0 %v568
    %8072 = vmatprep.subr.bf16.mxu0 %v577
    %8073 = vmatpush1.bf16.msra.mxu0 %v576
    %8074 = vmatprep.subr.bf16.mxu0 %v585
    %8075 = vmatpush1.bf16.msra.mxu0 %v584
    %8076 = vmatprep.subr.bf16.mxu0 %v593
    %8077 = vmatpush1.bf16.msra.mxu0 %v592
    %8078 = vmatprep.subr.bf16.mxu0 %v601
    %8079 = vmatpush1.bf16.msra.mxu0 %v600
    %8080 = vmatprep.subr.bf16.mxu0 %v609
    %8081 = vmatpush1.bf16.msra.mxu0 %v608
    %8082 = vmatprep.subr.bf16.mxu0 %v617
    %8083 = vmatpush1.bf16.msra.mxu0 %v616
    %8084 = vmatprep.subr.bf16.mxu0 0
    %8085 = vmatpush1.bf16.msra.mxu0 0
    %8086 = vmatprep.subr.bf16.mxu0 0
    %8087 = vmatpush1.bf16.msra.mxu0 0
    %8088 = vmatprep.subr.bf16.mxu0 0
    %8089 = vmatpush1.bf16.msra.mxu0 0
    %8090 = vmatprep.subr.bf16.mxu0 0
    %8091 = vmatpush1.bf16.msra.mxu0 0
    %8092 = vmatprep.mubr.bf16.mxu0 %v8040
    %8093 = vmatmul.mubr.bf16.gmra.mrb[0].mxu0 %v8018
    %v8094 = vpop.f32.mrb[0].mxu0
    %v8095 = vadd.f32 %v140, %v8094
    %v8096 = vpop.f32.mrb[0].mxu0
    %v8097 = vadd.f32 %v144, %v8096
    %v8098 = vpop.f32.mrb[0].mxu0
    %v8099 = vadd.f32 %v140, %v8098
    %v8100 = vpop.f32.mrb[0].mxu0
    %v8101 = vadd.f32 %v144, %v8100
    %8102 = vmatprep.mubr.bf16.mxu0 %v8043
    %8103 = vmatmul.mubr.bf16.gmra.mrb[0].mxu0 %v8020
    %v8104 = vpop.f32.mrb[0].mxu0
    %v8105 = vadd.f32 %v140, %v8104
    %v8106 = vpop.f32.mrb[0].mxu0
    %v8107 = vadd.f32 %v144, %v8106
    %v8108 = vpop.f32.mrb[0].mxu0
    %v8109 = vadd.f32 %v140, %v8108
    %v8110 = vpop.f32.mrb[0].mxu0
    %v8111 = vadd.f32 %v144, %v8110
    %8112 = vmatprep.mubr.bf16.mxu0 %v8046
    %8113 = vmatmul.mubr.bf16.gmra.mrb[0].mxu0 %v8022
    %v8114 = vpop.f32.mrb[0].mxu0
    %v8115 = vadd.f32 %v140, %v8114
    %v8116 = vpop.f32.mrb[0].mxu0
    %v8117 = vadd.f32 %v144, %v8116
    %v8118 = vpop.f32.mrb[0].mxu0
    %v8119 = vadd.f32 %v140, %v8118
    %v8120 = vpop.f32.mrb[0].mxu0
    %v8121 = vadd.f32 %v144, %v8120
    %8122 = vmatprep.mubr.bf16.mxu0 %v8049
    %8123 = vmatmul.mubr.bf16.gmra.mrb[0].mxu0 %v8024
    %v8124 = vpop.f32.mrb[0].mxu0
    %v8125 = vadd.f32 %v140, %v8124
    %v8126 = vpop.f32.mrb[0].mxu0
    %v8127 = vadd.f32 %v144, %v8126
    %v8128 = vpop.f32.mrb[0].mxu0
    %v8129 = vadd.f32 %v140, %v8128
    %v8130 = vpop.f32.mrb[0].mxu0
    %v8131 = vadd.f32 %v144, %v8130
    %8132 = vmatprep.mubr.bf16.mxu0 %v8052
    %8133 = vmatmul.mubr.bf16.gmra.mrb[0].mxu0 %v8026
    %v8134 = vpop.f32.mrb[0].mxu0
    %v8135 = vadd.f32 %v140, %v8134
    %v8136 = vpop.f32.mrb[0].mxu0
    %v8137 = vadd.f32 %v144, %v8136
    %v8138 = vpop.f32.mrb[0].mxu0
    %v8139 = vadd.f32 %v140, %v8138
    %v8140 = vpop.f32.mrb[0].mxu0
    %v8141 = vadd.f32 %v144, %v8140
    %8142 = vmatprep.mubr.bf16.mxu0 %v8055
    %8143 = vmatmul.mubr.bf16.gmra.mrb[0].mxu0 %v8028
    %v8144 = vpop.f32.mrb[0].mxu0
    %v8145 = vadd.f32 %v140, %v8144
    %v8146 = vpop.f32.mrb[0].mxu0
    %v8147 = vadd.f32 %v144, %v8146
    %v8148 = vpop.f32.mrb[0].mxu0
    %v8149 = vadd.f32 %v140, %v8148
    %v8150 = vpop.f32.mrb[0].mxu0
    %v8151 = vadd.f32 %v144, %v8150
    %8152 = vmatprep.mubr.bf16.mxu0 %v8058
    %8153 = vmatmul.mubr.bf16.gmra.mrb[0].mxu0 %v8030
    %v8154 = vpop.f32.mrb[0].mxu0
    %v8155 = vadd.f32 %v140, %v8154
    %v8156 = vpop.f32.mrb[0].mxu0
    %v8157 = vadd.f32 %v144, %v8156
    %v8158 = vpop.f32.mrb[0].mxu0
    %v8159 = vadd.f32 %v140, %v8158
    %v8160 = vpop.f32.mrb[0].mxu0
    %v8161 = vadd.f32 %v144, %v8160
    %8162 = vdwg.mxu0
    %8163 = vmatprep.subr.bf16.mxu0 %v531
    %8164 = vmatpush1.bf16.msra.mxu0 %v530
    %8165 = vmatprep.subr.bf16.mxu0 %v539
    %8166 = vmatpush1.bf16.msra.mxu0 %v538
    %8167 = vmatprep.subr.bf16.mxu0 %v547
    %8168 = vmatpush1.bf16.msra.mxu0 %v546
    %8169 = vmatprep.subr.bf16.mxu0 %v555
    %8170 = vmatpush1.bf16.msra.mxu0 %v554
    %8171 = vmatprep.subr.bf16.mxu0 %v563
    %8172 = vmatpush1.bf16.msra.mxu0 %v562
    %8173 = vmatprep.subr.bf16.mxu0 %v571
    %8174 = vmatpush1.bf16.msra.mxu0 %v570
    %8175 = vmatprep.subr.bf16.mxu0 %v579
    %8176 = vmatpush1.bf16.msra.mxu0 %v578
    %8177 = vmatprep.subr.bf16.mxu0 %v587
    %8178 = vmatpush1.bf16.msra.mxu0 %v586
    %8179 = vmatprep.subr.bf16.mxu0 %v595
    %8180 = vmatpush1.bf16.msra.mxu0 %v594
    %8181 = vmatprep.subr.bf16.mxu0 %v603
    %8182 = vmatpush1.bf16.msra.mxu0 %v602
    %8183 = vmatprep.subr.bf16.mxu0 %v611
    %8184 = vmatpush1.bf16.msra.mxu0 %v610
    %8185 = vmatprep.subr.bf16.mxu0 %v619
    %8186 = vmatpush1.bf16.msra.mxu0 %v618
    %8187 = vmatprep.subr.bf16.mxu0 0
    %8188 = vmatpush1.bf16.msra.mxu0 0
    %8189 = vmatprep.subr.bf16.mxu0 0
    %8190 = vmatpush1.bf16.msra.mxu0 0
    %8191 = vmatprep.subr.bf16.mxu0 0
    %8192 = vmatpush1.bf16.msra.mxu0 0
    %8193 = vmatprep.subr.bf16.mxu0 0
    %8194 = vmatpush1.bf16.msra.mxu0 0
    %8195 = vmatprep.mubr.bf16.mxu0 %v8040
    %8196 = vmatmul.mubr.bf16.gmra.mrb[0].mxu0 %v8018
    %v8197 = vpop.f32.mrb[0].mxu0
    %v8198 = vadd.f32 %v148, %v8197
    %v8199 = vpop.f32.mrb[0].mxu0
    %v8200 = vadd.f32 %v152, %v8199
    %v8201 = vpop.f32.mrb[0].mxu0
    %v8202 = vadd.f32 %v148, %v8201
    %v8203 = vpop.f32.mrb[0].mxu0
    %v8204 = vadd.f32 %v152, %v8203
    %8205 = vmatprep.mubr.bf16.mxu0 %v8043
    %8206 = vmatmul.mubr.bf16.gmra.mrb[0].mxu0 %v8020
    %v8207 = vpop.f32.mrb[0].mxu0
    %v8208 = vadd.f32 %v148, %v8207
    %v8209 = vpop.f32.mrb[0].mxu0
    %v8210 = vadd.f32 %v152, %v8209
    %v8211 = vpop.f32.mrb[0].mxu0
    %v8212 = vadd.f32 %v148, %v8211
    %v8213 = vpop.f32.mrb[0].mxu0
    %v8214 = vadd.f32 %v152, %v8213
    %8215 = vmatprep.mubr.bf16.mxu0 %v8046
    %8216 = vmatmul.mubr.bf16.gmra.mrb[0].mxu0 %v8022
    %v8217 = vpop.f32.mrb[0].mxu0
    %v8218 = vadd.f32 %v148, %v8217
    %v8219 = vpop.f32.mrb[0].mxu0
    %v8220 = vadd.f32 %v152, %v8219
    %v8221 = vpop.f32.mrb[0].mxu0
    %v8222 = vadd.f32 %v148, %v8221
    %v8223 = vpop.f32.mrb[0].mxu0
    %v8224 = vadd.f32 %v152, %v8223
    %8225 = vmatprep.mubr.bf16.mxu0 %v8049
    %8226 = vmatmul.mubr.bf16.gmra.mrb[0].mxu0 %v8024
    %v8227 = vpop.f32.mrb[0].mxu0
    %v8228 = vadd.f32 %v148, %v8227
    %v8229 = vpop.f32.mrb[0].mxu0
    %v8230 = vadd.f32 %v152, %v8229
    %v8231 = vpop.f32.mrb[0].mxu0
    %v8232 = vadd.f32 %v148, %v8231
    %v8233 = vpop.f32.mrb[0].mxu0
    %v8234 = vadd.f32 %v152, %v8233
    %8235 = vmatprep.mubr.bf16.mxu0 %v8052
    %8236 = vmatmul.mubr.bf16.gmra.mrb[0].mxu0 %v8026
    %v8237 = vpop.f32.mrb[0].mxu0
    %v8238 = vadd.f32 %v148, %v8237
    %v8239 = vpop.f32.mrb[0].mxu0
    %v8240 = vadd.f32 %v152, %v8239
    %v8241 = vpop.f32.mrb[0].mxu0
    %v8242 = vadd.f32 %v148, %v8241
    %v8243 = vpop.f32.mrb[0].mxu0
    %v8244 = vadd.f32 %v152, %v8243
    %8245 = vmatprep.mubr.bf16.mxu0 %v8055
    %8246 = vmatmul.mubr.bf16.gmra.mrb[0].mxu0 %v8028
    %v8247 = vpop.f32.mrb[0].mxu0
    %v8248 = vadd.f32 %v148, %v8247
    %v8249 = vpop.f32.mrb[0].mxu0
    %v8250 = vadd.f32 %v152, %v8249
    %v8251 = vpop.f32.mrb[0].mxu0
    %v8252 = vadd.f32 %v148, %v8251
    %v8253 = vpop.f32.mrb[0].mxu0
    %v8254 = vadd.f32 %v152, %v8253
    %8255 = vmatprep.mubr.bf16.mxu0 %v8058
    %8256 = vmatmul.mubr.bf16.gmra.mrb[0].mxu0 %v8030
    %v8257 = vpop.f32.mrb[0].mxu0
    %v8258 = vadd.f32 %v148, %v8257
    %v8259 = vpop.f32.mrb[0].mxu0
    %v8260 = vadd.f32 %v152, %v8259
    %v8261 = vpop.f32.mrb[0].mxu0
    %v8262 = vadd.f32 %v148, %v8261
    %v8263 = vpop.f32.mrb[0].mxu0
    %v8264 = vadd.f32 %v152, %v8263
    %8265 = vdwg.mxu0
    %8266 = vmatprep.subr.bf16.mxu0 %v533
    %8267 = vmatpush1.bf16.msra.mxu0 %v532
    %8268 = vmatprep.subr.bf16.mxu0 %v541
    %8269 = vmatpush1.bf16.msra.mxu0 %v540
    %8270 = vmatprep.subr.bf16.mxu0 %v549
    %8271 = vmatpush1.bf16.msra.mxu0 %v548
    %8272 = vmatprep.subr.bf16.mxu0 %v557
    %8273 = vmatpush1.bf16.msra.mxu0 %v556
    %8274 = vmatprep.subr.bf16.mxu0 %v565
    %8275 = vmatpush1.bf16.msra.mxu0 %v564
    %8276 = vmatprep.subr.bf16.mxu0 %v573
    %8277 = vmatpush1.bf16.msra.mxu0 %v572
    %8278 = vmatprep.subr.bf16.mxu0 %v581
    %8279 = vmatpush1.bf16.msra.mxu0 %v580
    %8280 = vmatprep.subr.bf16.mxu0 %v589
    %8281 = vmatpush1.bf16.msra.mxu0 %v588
    %8282 = vmatprep.subr.bf16.mxu0 %v597
    %8283 = vmatpush1.bf16.msra.mxu0 %v596
    %8284 = vmatprep.subr.bf16.mxu0 %v605
    %8285 = vmatpush1.bf16.msra.mxu0 %v604
    %8286 = vmatprep.subr.bf16.mxu0 %v613
    %8287 = vmatpush1.bf16.msra.mxu0 %v612
    %8288 = vmatprep.subr.bf16.mxu0 %v621
    %8289 = vmatpush1.bf16.msra.mxu0 %v620
    %8290 = vmatprep.subr.bf16.mxu0 0
    %8291 = vmatpush1.bf16.msra.mxu0 0
    %8292 = vmatprep.subr.bf16.mxu0 0
    %8293 = vmatpush1.bf16.msra.mxu0 0
    %8294 = vmatprep.subr.bf16.mxu0 0
    %8295 = vmatpush1.bf16.msra.mxu0 0
    %8296 = vmatprep.subr.bf16.mxu0 0
    %8297 = vmatpush1.bf16.msra.mxu0 0
    %8298 = vmatprep.mubr.bf16.mxu0 %v8040
    %8299 = vmatmul.mubr.bf16.gmra.mrb[0].mxu0 %v8018
    %v8300 = vpop.f32.mrb[0].mxu0
    %v8301 = vadd.f32 %v156, %v8300
    %v8302 = vpop.f32.mrb[0].mxu0
    %v8303 = vadd.f32 %v160, %v8302
    %v8304 = vpop.f32.mrb[0].mxu0
    %v8305 = vadd.f32 %v156, %v8304
    %v8306 = vpop.f32.mrb[0].mxu0
    %v8307 = vadd.f32 %v160, %v8306
    %8308 = vmatprep.mubr.bf16.mxu0 %v8043
    %8309 = vmatmul.mubr.bf16.gmra.mrb[0].mxu0 %v8020
    %v8310 = vpop.f32.mrb[0].mxu0
    %v8311 = vadd.f32 %v156, %v8310
    %v8312 = vpop.f32.mrb[0].mxu0
    %v8313 = vadd.f32 %v160, %v8312
    %v8314 = vpop.f32.mrb[0].mxu0
    %v8315 = vadd.f32 %v156, %v8314
    %v8316 = vpop.f32.mrb[0].mxu0
    %v8317 = vadd.f32 %v160, %v8316
    %8318 = vmatprep.mubr.bf16.mxu0 %v8046
    %8319 = vmatmul.mubr.bf16.gmra.mrb[0].mxu0 %v8022
    %v8320 = vpop.f32.mrb[0].mxu0
    %v8321 = vadd.f32 %v156, %v8320
    %v8322 = vpop.f32.mrb[0].mxu0
    %v8323 = vadd.f32 %v160, %v8322
    %v8324 = vpop.f32.mrb[0].mxu0
    %v8325 = vadd.f32 %v156, %v8324
    %v8326 = vpop.f32.mrb[0].mxu0
    %v8327 = vadd.f32 %v160, %v8326
    %8328 = vmatprep.mubr.bf16.mxu0 %v8049
    %8329 = vmatmul.mubr.bf16.gmra.mrb[0].mxu0 %v8024
    %v8330 = vpop.f32.mrb[0].mxu0
    %v8331 = vadd.f32 %v156, %v8330
    %v8332 = vpop.f32.mrb[0].mxu0
    %v8333 = vadd.f32 %v160, %v8332
    %v8334 = vpop.f32.mrb[0].mxu0
    %v8335 = vadd.f32 %v156, %v8334
    %v8336 = vpop.f32.mrb[0].mxu0
    %v8337 = vadd.f32 %v160, %v8336
    %8338 = vmatprep.mubr.bf16.mxu0 %v8052
    %8339 = vmatmul.mubr.bf16.gmra.mrb[0].mxu0 %v8026
    %v8340 = vpop.f32.mrb[0].mxu0
    %v8341 = vadd.f32 %v156, %v8340
    %v8342 = vpop.f32.mrb[0].mxu0
    %v8343 = vadd.f32 %v160, %v8342
    %v8344 = vpop.f32.mrb[0].mxu0
    %v8345 = vadd.f32 %v156, %v8344
    %v8346 = vpop.f32.mrb[0].mxu0
    %v8347 = vadd.f32 %v160, %v8346
    %8348 = vmatprep.mubr.bf16.mxu0 %v8055
    %8349 = vmatmul.mubr.bf16.gmra.mrb[0].mxu0 %v8028
    %v8350 = vpop.f32.mrb[0].mxu0
    %v8351 = vadd.f32 %v156, %v8350
    %v8352 = vpop.f32.mrb[0].mxu0
    %v8353 = vadd.f32 %v160, %v8352
    %v8354 = vpop.f32.mrb[0].mxu0
    %v8355 = vadd.f32 %v156, %v8354
    %v8356 = vpop.f32.mrb[0].mxu0
    %v8357 = vadd.f32 %v160, %v8356
    %8358 = vmatprep.mubr.bf16.mxu0 %v8058
    %8359 = vmatmul.mubr.bf16.gmra.mrb[0].mxu0 %v8030
    %v8360 = vpop.f32.mrb[0].mxu0
    %v8361 = vadd.f32 %v156, %v8360
    %v8362 = vpop.f32.mrb[0].mxu0
    %v8363 = vadd.f32 %v160, %v8362
    %v8364 = vpop.f32.mrb[0].mxu0
    %v8365 = vadd.f32 %v156, %v8364
    %v8366 = vpop.f32.mrb[0].mxu0
    %v8367 = vadd.f32 %v160, %v8366
    %8368 = vdwg.mxu0
    %8369 = vmatprep.subr.bf16.mxu0 %v535
    %8370 = vmatpush1.bf16.msra.mxu0 %v534
    %8371 = vmatprep.subr.bf16.mxu0 %v543
    %8372 = vmatpush1.bf16.msra.mxu0 %v542
    %8373 = vmatprep.subr.bf16.mxu0 %v551
    %8374 = vmatpush1.bf16.msra.mxu0 %v550
    %8375 = vmatprep.subr.bf16.mxu0 %v559
    %8376 = vmatpush1.bf16.msra.mxu0 %v558
    %8377 = vmatprep.subr.bf16.mxu0 %v567
    %8378 = vmatpush1.bf16.msra.mxu0 %v566
    %8379 = vmatprep.subr.bf16.mxu0 %v575
    %8380 = vmatpush1.bf16.msra.mxu0 %v574
    %8381 = vmatprep.subr.bf16.mxu0 %v583
    %8382 = vmatpush1.bf16.msra.mxu0 %v582
    %8383 = vmatprep.subr.bf16.mxu0 %v591
    %8384 = vmatpush1.bf16.msra.mxu0 %v590
    %8385 = vmatprep.subr.bf16.mxu0 %v599
    %8386 = vmatpush1.bf16.msra.mxu0 %v598
    %8387 = vmatprep.subr.bf16.mxu0 %v607
    %8388 = vmatpush1.bf16.msra.mxu0 %v606
    %8389 = vmatprep.subr.bf16.mxu0 %v615
    %8390 = vmatpush1.bf16.msra.mxu0 %v614
    %8391 = vmatprep.subr.bf16.mxu0 %v623
    %8392 = vmatpush1.bf16.msra.mxu0 %v622
    %8393 = vmatprep.subr.bf16.mxu0 0
    %8394 = vmatpush1.bf16.msra.mxu0 0
    %8395 = vmatprep.subr.bf16.mxu0 0
    %8396 = vmatpush1.bf16.msra.mxu0 0
    %8397 = vmatprep.subr.bf16.mxu0 0
    %8398 = vmatpush1.bf16.msra.mxu0 0
    %8399 = vmatprep.subr.bf16.mxu0 0
    %8400 = vmatpush1.bf16.msra.mxu0 0
    %8401 = vmatprep.mubr.bf16.mxu0 %v8040
    %8402 = vmatmul.mubr.bf16.gmra.mrb[0].mxu0 %v8018
    %v8403 = vpop.f32.mrb[0].mxu0
    %v8404 = vadd.f32 %v164, %v8403
    %v8405 = vpop.f32.mrb[0].mxu0
    %v8406 = vadd.f32 %v168, %v8405
    %v8407 = vpop.f32.mrb[0].mxu0
    %v8408 = vadd.f32 %v164, %v8407
    %v8409 = vpop.f32.mrb[0].mxu0
    %v8410 = vadd.f32 %v168, %v8409
    %8411 = vmatprep.mubr.bf16.mxu0 %v8043
    %8412 = vmatmul.mubr.bf16.gmra.mrb[0].mxu0 %v8020
    %v8413 = vpop.f32.mrb[0].mxu0
    %v8414 = vadd.f32 %v164, %v8413
    %v8415 = vpop.f32.mrb[0].mxu0
    %v8416 = vadd.f32 %v168, %v8415
    %v8417 = vpop.f32.mrb[0].mxu0
    %v8418 = vadd.f32 %v164, %v8417
    %v8419 = vpop.f32.mrb[0].mxu0
    %v8420 = vadd.f32 %v168, %v8419
    %8421 = vmatprep.mubr.bf16.mxu0 %v8046
    %8422 = vmatmul.mubr.bf16.gmra.mrb[0].mxu0 %v8022
    %v8423 = vpop.f32.mrb[0].mxu0
    %v8424 = vadd.f32 %v164, %v8423
    %v8425 = vpop.f32.mrb[0].mxu0
    %v8426 = vadd.f32 %v168, %v8425
    %v8427 = vpop.f32.mrb[0].mxu0
    %v8428 = vadd.f32 %v164, %v8427
    %v8429 = vpop.f32.mrb[0].mxu0
    %v8430 = vadd.f32 %v168, %v8429
    %8431 = vmatprep.mubr.bf16.mxu0 %v8049
    %8432 = vmatmul.mubr.bf16.gmra.mrb[0].mxu0 %v8024
    %v8433 = vpop.f32.mrb[0].mxu0
    %v8434 = vadd.f32 %v164, %v8433
    %v8435 = vpop.f32.mrb[0].mxu0
    %v8436 = vadd.f32 %v168, %v8435
    %v8437 = vpop.f32.mrb[0].mxu0
    %v8438 = vadd.f32 %v164, %v8437
    %v8439 = vpop.f32.mrb[0].mxu0
    %v8440 = vadd.f32 %v168, %v8439
    %8441 = vmatprep.mubr.bf16.mxu0 %v8052
    %8442 = vmatmul.mubr.bf16.gmra.mrb[0].mxu0 %v8026
    %v8443 = vpop.f32.mrb[0].mxu0
    %v8444 = vadd.f32 %v164, %v8443
    %v8445 = vpop.f32.mrb[0].mxu0
    %v8446 = vadd.f32 %v168, %v8445
    %v8447 = vpop.f32.mrb[0].mxu0
    %v8448 = vadd.f32 %v164, %v8447
    %v8449 = vpop.f32.mrb[0].mxu0
    %v8450 = vadd.f32 %v168, %v8449
    %8451 = vmatprep.mubr.bf16.mxu0 %v8055
    %8452 = vmatmul.mubr.bf16.gmra.mrb[0].mxu0 %v8028
    %v8453 = vpop.f32.mrb[0].mxu0
    %v8454 = vadd.f32 %v164, %v8453
    %v8455 = vpop.f32.mrb[0].mxu0
    %v8456 = vadd.f32 %v168, %v8455
    %v8457 = vpop.f32.mrb[0].mxu0
    %v8458 = vadd.f32 %v164, %v8457
    %v8459 = vpop.f32.mrb[0].mxu0
    %v8460 = vadd.f32 %v168, %v8459
    %8461 = vmatprep.mubr.bf16.mxu0 %v8058
    %8462 = vmatmul.mubr.bf16.gmra.mrb[0].mxu0 %v8030
    %v8463 = vpop.f32.mrb[0].mxu0
    %v8464 = vadd.f32 %v164, %v8463
    %v8465 = vpop.f32.mrb[0].mxu0
    %v8466 = vadd.f32 %v168, %v8465
    %v8467 = vpop.f32.mrb[0].mxu0
    %v8468 = vadd.f32 %v164, %v8467
    %v8469 = vpop.f32.mrb[0].mxu0
    %v8470 = vadd.f32 %v168, %v8469
    %8471 = vdwg.mxu0
    %v8472 = vmax.f32 %v8095, 0.0
    %v8473 = vmax.f32 %v8097, 0.0
    %v8474 = vmax.f32 %v8198, 0.0
    %v8475 = vmax.f32 %v8200, 0.0
    %v8476 = vmax.f32 %v8301, 0.0
    %v8477 = vmax.f32 %v8303, 0.0
    %v8478 = vmax.f32 %v8404, 0.0
    %v8479 = vmax.f32 %v8406, 0.0
    %v8480 = vmax.f32 %v8099, 0.0
    %v8481 = vmax.f32 %v8101, 0.0
    %v8482 = vmax.f32 %v8202, 0.0
    %v8483 = vmax.f32 %v8204, 0.0
    %v8484 = vmax.f32 %v8305, 0.0
    %v8485 = vmax.f32 %v8307, 0.0
    %v8486 = vmax.f32 %v8408, 0.0
    %v8487 = vmax.f32 %v8410, 0.0
    %v8488 = vmax.f32 %v8105, 0.0
    %v8489 = vmax.f32 %v8107, 0.0
    %v8490 = vmax.f32 %v8208, 0.0
    %v8491 = vmax.f32 %v8210, 0.0
    %v8492 = vmax.f32 %v8311, 0.0
    %v8493 = vmax.f32 %v8313, 0.0
    %v8494 = vmax.f32 %v8414, 0.0
    %v8495 = vmax.f32 %v8416, 0.0
    %v8496 = vmax.f32 %v8109, 0.0
    %v8497 = vmax.f32 %v8111, 0.0
    %v8498 = vmax.f32 %v8212, 0.0
    %v8499 = vmax.f32 %v8214, 0.0
    %v8500 = vmax.f32 %v8315, 0.0
    %v8501 = vmax.f32 %v8317, 0.0
    %v8502 = vmax.f32 %v8418, 0.0
    %v8503 = vmax.f32 %v8420, 0.0
    %v8504 = vmax.f32 %v8115, 0.0
    %v8505 = vmax.f32 %v8117, 0.0
    %v8506 = vmax.f32 %v8218, 0.0
    %v8507 = vmax.f32 %v8220, 0.0
    %v8508 = vmax.f32 %v8321, 0.0
    %v8509 = vmax.f32 %v8323, 0.0
    %v8510 = vmax.f32 %v8424, 0.0
    %v8511 = vmax.f32 %v8426, 0.0
    %v8512 = vmax.f32 %v8119, 0.0
    %v8513 = vmax.f32 %v8121, 0.0
    %v8514 = vmax.f32 %v8222, 0.0
    %v8515 = vmax.f32 %v8224, 0.0
    %v8516 = vmax.f32 %v8325, 0.0
    %v8517 = vmax.f32 %v8327, 0.0
    %v8518 = vmax.f32 %v8428, 0.0
    %v8519 = vmax.f32 %v8430, 0.0
    %v8520 = vmax.f32 %v8125, 0.0
    %v8521 = vmax.f32 %v8127, 0.0
    %v8522 = vmax.f32 %v8228, 0.0
    %v8523 = vmax.f32 %v8230, 0.0
    %v8524 = vmax.f32 %v8331, 0.0
    %v8525 = vmax.f32 %v8333, 0.0
    %v8526 = vmax.f32 %v8434, 0.0
    %v8527 = vmax.f32 %v8436, 0.0
    %v8528 = vmax.f32 %v8129, 0.0
    %v8529 = vmax.f32 %v8131, 0.0
    %v8530 = vmax.f32 %v8232, 0.0
    %v8531 = vmax.f32 %v8234, 0.0
    %v8532 = vmax.f32 %v8335, 0.0
    %v8533 = vmax.f32 %v8337, 0.0
    %v8534 = vmax.f32 %v8438, 0.0
    %v8535 = vmax.f32 %v8440, 0.0
    %v8536 = vmax.f32 %v8135, 0.0
    %v8537 = vmax.f32 %v8137, 0.0
    %v8538 = vmax.f32 %v8238, 0.0
    %v8539 = vmax.f32 %v8240, 0.0
    %v8540 = vmax.f32 %v8341, 0.0
    %v8541 = vmax.f32 %v8343, 0.0
    %v8542 = vmax.f32 %v8444, 0.0
    %v8543 = vmax.f32 %v8446, 0.0
    %v8544 = vmax.f32 %v8139, 0.0
    %v8545 = vmax.f32 %v8141, 0.0
    %v8546 = vmax.f32 %v8242, 0.0
    %v8547 = vmax.f32 %v8244, 0.0
    %v8548 = vmax.f32 %v8345, 0.0
    %v8549 = vmax.f32 %v8347, 0.0
    %v8550 = vmax.f32 %v8448, 0.0
    %v8551 = vmax.f32 %v8450, 0.0
    %v8552 = vmax.f32 %v8145, 0.0
    %v8553 = vmax.f32 %v8147, 0.0
    %v8554 = vmax.f32 %v8248, 0.0
    %v8555 = vmax.f32 %v8250, 0.0
    %v8556 = vmax.f32 %v8351, 0.0
    %v8557 = vmax.f32 %v8353, 0.0
    %v8558 = vmax.f32 %v8454, 0.0
    %v8559 = vmax.f32 %v8456, 0.0
    %v8560 = vmax.f32 %v8149, 0.0
    %v8561 = vmax.f32 %v8151, 0.0
    %v8562 = vmax.f32 %v8252, 0.0
    %v8563 = vmax.f32 %v8254, 0.0
    %v8564 = vmax.f32 %v8355, 0.0
    %v8565 = vmax.f32 %v8357, 0.0
    %v8566 = vmax.f32 %v8458, 0.0
    %v8567 = vmax.f32 %v8460, 0.0
    %v8568 = vmax.f32 %v8155, 0.0
    %v8569 = vmax.f32 %v8157, 0.0
    %v8570 = vmax.f32 %v8258, 0.0
    %v8571 = vmax.f32 %v8260, 0.0
    %v8572 = vmax.f32 %v8361, 0.0
    %v8573 = vmax.f32 %v8363, 0.0
    %v8574 = vmax.f32 %v8464, 0.0
    %v8575 = vmax.f32 %v8466, 0.0
    %v8576 = vmax.f32 %v8159, 0.0
    %v8577 = vmax.f32 %v8161, 0.0
    %v8578 = vmax.f32 %v8262, 0.0
    %v8579 = vmax.f32 %v8264, 0.0
    %v8580 = vmax.f32 %v8365, 0.0
    %v8581 = vmax.f32 %v8367, 0.0
    %v8582 = vmax.f32 %v8468, 0.0
    %v8583 = vmax.f32 %v8470, 0.0
    %v8584 = vadd.f32 %v8472, %v8488
    %v8585 = vadd.f32 %v8473, %v8489
    %v8586 = vadd.f32 %v8474, %v8490
    %v8587 = vadd.f32 %v8475, %v8491
    %v8588 = vadd.f32 %v8476, %v8492
    %v8589 = vadd.f32 %v8477, %v8493
    %v8590 = vadd.f32 %v8478, %v8494
    %v8591 = vadd.f32 %v8479, %v8495
    %v8592 = vadd.f32 %v8480, %v8496
    %v8593 = vadd.f32 %v8481, %v8497
    %v8594 = vadd.f32 %v8482, %v8498
    %v8595 = vadd.f32 %v8483, %v8499
    %v8596 = vadd.f32 %v8484, %v8500
    %v8597 = vadd.f32 %v8485, %v8501
    %v8598 = vadd.f32 %v8486, %v8502
    %v8599 = vadd.f32 %v8487, %v8503
    %v8600 = vadd.f32 %v8584, %v8504
    %v8601 = vadd.f32 %v8585, %v8505
    %v8602 = vadd.f32 %v8586, %v8506
    %v8603 = vadd.f32 %v8587, %v8507
    %v8604 = vadd.f32 %v8588, %v8508
    %v8605 = vadd.f32 %v8589, %v8509
    %v8606 = vadd.f32 %v8590, %v8510
    %v8607 = vadd.f32 %v8591, %v8511
    %v8608 = vadd.f32 %v8592, %v8512
    %v8609 = vadd.f32 %v8593, %v8513
    %v8610 = vadd.f32 %v8594, %v8514
    %v8611 = vadd.f32 %v8595, %v8515
    %v8612 = vadd.f32 %v8596, %v8516
    %v8613 = vadd.f32 %v8597, %v8517
    %v8614 = vadd.f32 %v8598, %v8518
    %v8615 = vadd.f32 %v8599, %v8519
    %v8616 = vadd.f32 %v8600, %v8520
    %v8617 = vadd.f32 %v8601, %v8521
    %v8618 = vadd.f32 %v8602, %v8522
    %v8619 = vadd.f32 %v8603, %v8523
    %v8620 = vadd.f32 %v8604, %v8524
    %v8621 = vadd.f32 %v8605, %v8525
    %v8622 = vadd.f32 %v8606, %v8526
    %v8623 = vadd.f32 %v8607, %v8527
    %v8624 = vadd.f32 %v8608, %v8528
    %v8625 = vadd.f32 %v8609, %v8529
    %v8626 = vadd.f32 %v8610, %v8530
    %v8627 = vadd.f32 %v8611, %v8531
    %v8628 = vadd.f32 %v8612, %v8532
    %v8629 = vadd.f32 %v8613, %v8533
    %v8630 = vadd.f32 %v8614, %v8534
    %v8631 = vadd.f32 %v8615, %v8535
    %v8632 = vadd.f32 %v8616, %v8536
    %v8633 = vadd.f32 %v8617, %v8537
    %v8634 = vadd.f32 %v8618, %v8538
    %v8635 = vadd.f32 %v8619, %v8539
    %v8636 = vadd.f32 %v8620, %v8540
    %v8637 = vadd.f32 %v8621, %v8541
    %v8638 = vadd.f32 %v8622, %v8542
    %v8639 = vadd.f32 %v8623, %v8543
    %v8640 = vadd.f32 %v8624, %v8544
    %v8641 = vadd.f32 %v8625, %v8545
    %v8642 = vadd.f32 %v8626, %v8546
    %v8643 = vadd.f32 %v8627, %v8547
    %v8644 = vadd.f32 %v8628, %v8548
    %v8645 = vadd.f32 %v8629, %v8549
    %v8646 = vadd.f32 %v8630, %v8550
    %v8647 = vadd.f32 %v8631, %v8551
    %v8648 = vadd.f32 %v8632, %v8552
    %v8649 = vadd.f32 %v8633, %v8553
    %v8650 = vadd.f32 %v8634, %v8554
    %v8651 = vadd.f32 %v8635, %v8555
    %v8652 = vadd.f32 %v8636, %v8556
    %v8653 = vadd.f32 %v8637, %v8557
    %v8654 = vadd.f32 %v8638, %v8558
    %v8655 = vadd.f32 %v8639, %v8559
    %v8656 = vadd.f32 %v8640, %v8560
    %v8657 = vadd.f32 %v8641, %v8561
    %v8658 = vadd.f32 %v8642, %v8562
    %v8659 = vadd.f32 %v8643, %v8563
    %v8660 = vadd.f32 %v8644, %v8564
    %v8661 = vadd.f32 %v8645, %v8565
    %v8662 = vadd.f32 %v8646, %v8566
    %v8663 = vadd.f32 %v8647, %v8567
    %v8664 = vadd.f32 %v8648, %v8568
    %v8665 = vadd.f32 %v8649, %v8569
    %v8666 = vadd.f32 %v8650, %v8570
    %v8667 = vadd.f32 %v8651, %v8571
    %v8668 = vadd.f32 %v8652, %v8572
    %v8669 = vadd.f32 %v8653, %v8573
    %v8670 = vadd.f32 %v8654, %v8574
    %v8671 = vadd.f32 %v8655, %v8575
    %v8672 = vadd.f32 %v8656, %v8576
    %v8673 = vadd.f32 %v8657, %v8577
    %v8674 = vadd.f32 %v8658, %v8578
    %v8675 = vadd.f32 %v8659, %v8579
    %v8676 = vadd.f32 %v8660, %v8580
    %v8677 = vadd.f32 %v8661, %v8581
    %v8678 = vadd.f32 %v8662, %v8582
    %v8679 = vadd.f32 %v8663, %v8583
    %v8680 = vadd.f32 %v7945, %v8664
    %v8681 = vadd.f32 %v7946, %v8665
    %v8682 = vadd.f32 %v7947, %v8666
    %v8683 = vadd.f32 %v7948, %v8667
    %v8684 = vadd.f32 %v7949, %v8668
    %v8685 = vadd.f32 %v7950, %v8669
    %v8686 = vadd.f32 %v7951, %v8670
    %v8687 = vadd.f32 %v7952, %v8671
    %v8688 = vadd.f32 %v7953, %v8672
    %v8689 = vadd.f32 %v7954, %v8673
    %v8690 = vadd.f32 %v7955, %v8674
    %v8691 = vadd.f32 %v7956, %v8675
    %v8692 = vadd.f32 %v7957, %v8676
    %v8693 = vadd.f32 %v7958, %v8677
    %v8694 = vadd.f32 %v7959, %v8678
    %v8695 = vadd.f32 %v7960, %v8679
    %s8696 = scalar_lea.vmem %s0, 1232
    %v8697 = vld [vmem:[%s8696] sm:$0xff]
    %v8698 = vld [vmem:[%s8696 + $0x8] sm:$0xff]
    %v8699 = vld [vmem:[%s8696 + $0x10] sm:$0xff]
    %v8700 = vld [vmem:[%s8696 + $0x18] sm:$0xff]
    %v8701 = vld [vmem:[%s8696 + $0x20] sm:$0xff]
    %v8702 = vld [vmem:[%s8696 + $0x28] sm:$0xff]
    %v8703 = vld [vmem:[%s8696 + $0x30] sm:$0xff]
    %v8704 = vld [vmem:[%s8696 + $0x38] sm:$0xff]
    %v8705 = vld [vmem:[%s8696 + $0x40] sm:$0xff]
    %v8706 = vld [vmem:[%s8696 + $0x48] sm:$0xff]
    %v8707 = vld [vmem:[%s8696 + $0x50] sm:$0xff]
    %v8708 = vld [vmem:[%s8696 + $0x58] sm:$0xff]
    %v8709 = vld [vmem:[%s8696 + $0x60] sm:$0xff]
    %v8710 = vld [vmem:[%s8696 + $0x68] sm:$0xff]
    %v8725 = vunpack.c.l.b16 %v8697
    %v8726 = vunpack.c.h.b16 %v8697
    %v8727 = vunpack.c.l.b16 %v8698
    %v8728 = vunpack.c.h.b16 %v8698
    %v8729 = vunpack.c.l.b16 %v8699
    %v8730 = vunpack.c.h.b16 %v8699
    %v8731 = vunpack.c.l.b16 %v8700
    %v8732 = vunpack.c.h.b16 %v8700
    %v8733 = vunpack.c.l.b16 %v8701
    %v8734 = vunpack.c.h.b16 %v8701
    %v8735 = vunpack.c.l.b16 %v8702
    %v8736 = vunpack.c.h.b16 %v8702
    %v8737 = vunpack.c.l.b16 %v8703
    %v8738 = vunpack.c.h.b16 %v8703
    %v8739 = vunpack.c.l.b16 %v8704
    %v8740 = vunpack.c.h.b16 %v8704
    %v8741 = vunpack.c.l.b16 %v8705
    %v8742 = vunpack.c.h.b16 %v8705
    %v8743 = vunpack.c.l.b16 %v8706
    %v8744 = vunpack.c.h.b16 %v8706
    %v8745 = vunpack.c.l.b16 %v8707
    %v8746 = vunpack.c.h.b16 %v8707
    %v8747 = vunpack.c.l.b16 %v8708
    %v8748 = vunpack.c.h.b16 %v8708
    %v8749 = vunpack.c.l.b16 %v8709
    %v8750 = vunpack.c.h.b16 %v8709
    %v8751 = vunpack.c.l.b16 %v8710
    %v8752 = vunpack.c.h.b16 %v8710
    %v8753 = vpack.c.b16 %v8727, %v8725
    %v8754 = vpack.c.b16 %v8728, %v8726
    %v8755 = vpack.c.b16 %v8731, %v8729
    %v8756 = vpack.c.b16 %v8732, %v8730
    %v8757 = vpack.c.b16 %v8735, %v8733
    %v8758 = vpack.c.b16 %v8736, %v8734
    %v8759 = vpack.c.b16 %v8739, %v8737
    %v8760 = vpack.c.b16 %v8740, %v8738
    %v8761 = vpack.c.b16 %v8743, %v8741
    %v8762 = vpack.c.b16 %v8744, %v8742
    %v8763 = vpack.c.b16 %v8747, %v8745
    %v8764 = vpack.c.b16 %v8748, %v8746
    %v8765 = vpack.c.b16 %v8751, %v8749
    %v8766 = vpack.c.b16 %v8752, %v8750
    %v8775 = vsel %vm720, %v8754, 0
    %v8778 = vsel %vm720, %v8756, 0
    %v8781 = vsel %vm720, %v8758, 0
    %v8784 = vsel %vm720, %v8760, 0
    %v8787 = vsel %vm720, %v8762, 0
    %v8790 = vsel %vm720, %v8764, 0
    %v8793 = vsel %vm720, %v8766, 0
    %8795 = vmatprep.subr.bf16.mxu0 %v529
    %8796 = vmatpush1.bf16.msra.mxu0 %v528
    %8797 = vmatprep.subr.bf16.mxu0 %v537
    %8798 = vmatpush1.bf16.msra.mxu0 %v536
    %8799 = vmatprep.subr.bf16.mxu0 %v545
    %8800 = vmatpush1.bf16.msra.mxu0 %v544
    %8801 = vmatprep.subr.bf16.mxu0 %v553
    %8802 = vmatpush1.bf16.msra.mxu0 %v552
    %8803 = vmatprep.subr.bf16.mxu0 %v561
    %8804 = vmatpush1.bf16.msra.mxu0 %v560
    %8805 = vmatprep.subr.bf16.mxu0 %v569
    %8806 = vmatpush1.bf16.msra.mxu0 %v568
    %8807 = vmatprep.subr.bf16.mxu0 %v577
    %8808 = vmatpush1.bf16.msra.mxu0 %v576
    %8809 = vmatprep.subr.bf16.mxu0 %v585
    %8810 = vmatpush1.bf16.msra.mxu0 %v584
    %8811 = vmatprep.subr.bf16.mxu0 %v593
    %8812 = vmatpush1.bf16.msra.mxu0 %v592
    %8813 = vmatprep.subr.bf16.mxu0 %v601
    %8814 = vmatpush1.bf16.msra.mxu0 %v600
    %8815 = vmatprep.subr.bf16.mxu0 %v609
    %8816 = vmatpush1.bf16.msra.mxu0 %v608
    %8817 = vmatprep.subr.bf16.mxu0 %v617
    %8818 = vmatpush1.bf16.msra.mxu0 %v616
    %8819 = vmatprep.subr.bf16.mxu0 0
    %8820 = vmatpush1.bf16.msra.mxu0 0
    %8821 = vmatprep.subr.bf16.mxu0 0
    %8822 = vmatpush1.bf16.msra.mxu0 0
    %8823 = vmatprep.subr.bf16.mxu0 0
    %8824 = vmatpush1.bf16.msra.mxu0 0
    %8825 = vmatprep.subr.bf16.mxu0 0
    %8826 = vmatpush1.bf16.msra.mxu0 0
    %8827 = vmatprep.mubr.bf16.mxu0 %v8775
    %8828 = vmatmul.mubr.bf16.gmra.mrb[0].mxu0 %v8753
    %v8829 = vpop.f32.mrb[0].mxu0
    %v8830 = vadd.f32 %v140, %v8829
    %v8831 = vpop.f32.mrb[0].mxu0
    %v8832 = vadd.f32 %v144, %v8831
    %v8833 = vpop.f32.mrb[0].mxu0
    %v8834 = vadd.f32 %v140, %v8833
    %v8835 = vpop.f32.mrb[0].mxu0
    %v8836 = vadd.f32 %v144, %v8835
    %8837 = vmatprep.mubr.bf16.mxu0 %v8778
    %8838 = vmatmul.mubr.bf16.gmra.mrb[0].mxu0 %v8755
    %v8839 = vpop.f32.mrb[0].mxu0
    %v8840 = vadd.f32 %v140, %v8839
    %v8841 = vpop.f32.mrb[0].mxu0
    %v8842 = vadd.f32 %v144, %v8841
    %v8843 = vpop.f32.mrb[0].mxu0
    %v8844 = vadd.f32 %v140, %v8843
    %v8845 = vpop.f32.mrb[0].mxu0
    %v8846 = vadd.f32 %v144, %v8845
    %8847 = vmatprep.mubr.bf16.mxu0 %v8781
    %8848 = vmatmul.mubr.bf16.gmra.mrb[0].mxu0 %v8757
    %v8849 = vpop.f32.mrb[0].mxu0
    %v8850 = vadd.f32 %v140, %v8849
    %v8851 = vpop.f32.mrb[0].mxu0
    %v8852 = vadd.f32 %v144, %v8851
    %v8853 = vpop.f32.mrb[0].mxu0
    %v8854 = vadd.f32 %v140, %v8853
    %v8855 = vpop.f32.mrb[0].mxu0
    %v8856 = vadd.f32 %v144, %v8855
    %8857 = vmatprep.mubr.bf16.mxu0 %v8784
    %8858 = vmatmul.mubr.bf16.gmra.mrb[0].mxu0 %v8759
    %v8859 = vpop.f32.mrb[0].mxu0
    %v8860 = vadd.f32 %v140, %v8859
    %v8861 = vpop.f32.mrb[0].mxu0
    %v8862 = vadd.f32 %v144, %v8861
    %v8863 = vpop.f32.mrb[0].mxu0
    %v8864 = vadd.f32 %v140, %v8863
    %v8865 = vpop.f32.mrb[0].mxu0
    %v8866 = vadd.f32 %v144, %v8865
    %8867 = vmatprep.mubr.bf16.mxu0 %v8787
    %8868 = vmatmul.mubr.bf16.gmra.mrb[0].mxu0 %v8761
    %v8869 = vpop.f32.mrb[0].mxu0
    %v8870 = vadd.f32 %v140, %v8869
    %v8871 = vpop.f32.mrb[0].mxu0
    %v8872 = vadd.f32 %v144, %v8871
    %v8873 = vpop.f32.mrb[0].mxu0
    %v8874 = vadd.f32 %v140, %v8873
    %v8875 = vpop.f32.mrb[0].mxu0
    %v8876 = vadd.f32 %v144, %v8875
    %8877 = vmatprep.mubr.bf16.mxu0 %v8790
    %8878 = vmatmul.mubr.bf16.gmra.mrb[0].mxu0 %v8763
    %v8879 = vpop.f32.mrb[0].mxu0
    %v8880 = vadd.f32 %v140, %v8879
    %v8881 = vpop.f32.mrb[0].mxu0
    %v8882 = vadd.f32 %v144, %v8881
    %v8883 = vpop.f32.mrb[0].mxu0
    %v8884 = vadd.f32 %v140, %v8883
    %v8885 = vpop.f32.mrb[0].mxu0
    %v8886 = vadd.f32 %v144, %v8885
    %8887 = vmatprep.mubr.bf16.mxu0 %v8793
    %8888 = vmatmul.mubr.bf16.gmra.mrb[0].mxu0 %v8765
    %v8889 = vpop.f32.mrb[0].mxu0
    %v8890 = vadd.f32 %v140, %v8889
    %v8891 = vpop.f32.mrb[0].mxu0
    %v8892 = vadd.f32 %v144, %v8891
    %v8893 = vpop.f32.mrb[0].mxu0
    %v8894 = vadd.f32 %v140, %v8893
    %v8895 = vpop.f32.mrb[0].mxu0
    %v8896 = vadd.f32 %v144, %v8895
    %8897 = vdwg.mxu0
    %8898 = vmatprep.subr.bf16.mxu0 %v531
    %8899 = vmatpush1.bf16.msra.mxu0 %v530
    %8900 = vmatprep.subr.bf16.mxu0 %v539
    %8901 = vmatpush1.bf16.msra.mxu0 %v538
    %8902 = vmatprep.subr.bf16.mxu0 %v547
    %8903 = vmatpush1.bf16.msra.mxu0 %v546
    %8904 = vmatprep.subr.bf16.mxu0 %v555
    %8905 = vmatpush1.bf16.msra.mxu0 %v554
    %8906 = vmatprep.subr.bf16.mxu0 %v563
    %8907 = vmatpush1.bf16.msra.mxu0 %v562
    %8908 = vmatprep.subr.bf16.mxu0 %v571
    %8909 = vmatpush1.bf16.msra.mxu0 %v570
    %8910 = vmatprep.subr.bf16.mxu0 %v579
    %8911 = vmatpush1.bf16.msra.mxu0 %v578
    %8912 = vmatprep.subr.bf16.mxu0 %v587
    %8913 = vmatpush1.bf16.msra.mxu0 %v586
    %8914 = vmatprep.subr.bf16.mxu0 %v595
    %8915 = vmatpush1.bf16.msra.mxu0 %v594
    %8916 = vmatprep.subr.bf16.mxu0 %v603
    %8917 = vmatpush1.bf16.msra.mxu0 %v602
    %8918 = vmatprep.subr.bf16.mxu0 %v611
    %8919 = vmatpush1.bf16.msra.mxu0 %v610
    %8920 = vmatprep.subr.bf16.mxu0 %v619
    %8921 = vmatpush1.bf16.msra.mxu0 %v618
    %8922 = vmatprep.subr.bf16.mxu0 0
    %8923 = vmatpush1.bf16.msra.mxu0 0
    %8924 = vmatprep.subr.bf16.mxu0 0
    %8925 = vmatpush1.bf16.msra.mxu0 0
    %8926 = vmatprep.subr.bf16.mxu0 0
    %8927 = vmatpush1.bf16.msra.mxu0 0
    %8928 = vmatprep.subr.bf16.mxu0 0
    %8929 = vmatpush1.bf16.msra.mxu0 0
    %8930 = vmatprep.mubr.bf16.mxu0 %v8775
    %8931 = vmatmul.mubr.bf16.gmra.mrb[0].mxu0 %v8753
    %v8932 = vpop.f32.mrb[0].mxu0
    %v8933 = vadd.f32 %v148, %v8932
    %v8934 = vpop.f32.mrb[0].mxu0
    %v8935 = vadd.f32 %v152, %v8934
    %v8936 = vpop.f32.mrb[0].mxu0
    %v8937 = vadd.f32 %v148, %v8936
    %v8938 = vpop.f32.mrb[0].mxu0
    %v8939 = vadd.f32 %v152, %v8938
    %8940 = vmatprep.mubr.bf16.mxu0 %v8778
    %8941 = vmatmul.mubr.bf16.gmra.mrb[0].mxu0 %v8755
    %v8942 = vpop.f32.mrb[0].mxu0
    %v8943 = vadd.f32 %v148, %v8942
    %v8944 = vpop.f32.mrb[0].mxu0
    %v8945 = vadd.f32 %v152, %v8944
    %v8946 = vpop.f32.mrb[0].mxu0
    %v8947 = vadd.f32 %v148, %v8946
    %v8948 = vpop.f32.mrb[0].mxu0
    %v8949 = vadd.f32 %v152, %v8948
    %8950 = vmatprep.mubr.bf16.mxu0 %v8781
    %8951 = vmatmul.mubr.bf16.gmra.mrb[0].mxu0 %v8757
    %v8952 = vpop.f32.mrb[0].mxu0
    %v8953 = vadd.f32 %v148, %v8952
    %v8954 = vpop.f32.mrb[0].mxu0
    %v8955 = vadd.f32 %v152, %v8954
    %v8956 = vpop.f32.mrb[0].mxu0
    %v8957 = vadd.f32 %v148, %v8956
    %v8958 = vpop.f32.mrb[0].mxu0
    %v8959 = vadd.f32 %v152, %v8958
    %8960 = vmatprep.mubr.bf16.mxu0 %v8784
    %8961 = vmatmul.mubr.bf16.gmra.mrb[0].mxu0 %v8759
    %v8962 = vpop.f32.mrb[0].mxu0
    %v8963 = vadd.f32 %v148, %v8962
    %v8964 = vpop.f32.mrb[0].mxu0
    %v8965 = vadd.f32 %v152, %v8964
    %v8966 = vpop.f32.mrb[0].mxu0
    %v8967 = vadd.f32 %v148, %v8966
    %v8968 = vpop.f32.mrb[0].mxu0
    %v8969 = vadd.f32 %v152, %v8968
    %8970 = vmatprep.mubr.bf16.mxu0 %v8787
    %8971 = vmatmul.mubr.bf16.gmra.mrb[0].mxu0 %v8761
    %v8972 = vpop.f32.mrb[0].mxu0
    %v8973 = vadd.f32 %v148, %v8972
    %v8974 = vpop.f32.mrb[0].mxu0
    %v8975 = vadd.f32 %v152, %v8974
    %v8976 = vpop.f32.mrb[0].mxu0
    %v8977 = vadd.f32 %v148, %v8976
    %v8978 = vpop.f32.mrb[0].mxu0
    %v8979 = vadd.f32 %v152, %v8978
    %8980 = vmatprep.mubr.bf16.mxu0 %v8790
    %8981 = vmatmul.mubr.bf16.gmra.mrb[0].mxu0 %v8763
    %v8982 = vpop.f32.mrb[0].mxu0
    %v8983 = vadd.f32 %v148, %v8982
    %v8984 = vpop.f32.mrb[0].mxu0
    %v8985 = vadd.f32 %v152, %v8984
    %v8986 = vpop.f32.mrb[0].mxu0
    %v8987 = vadd.f32 %v148, %v8986
    %v8988 = vpop.f32.mrb[0].mxu0
    %v8989 = vadd.f32 %v152, %v8988
    %8990 = vmatprep.mubr.bf16.mxu0 %v8793
    %8991 = vmatmul.mubr.bf16.gmra.mrb[0].mxu0 %v8765
    %v8992 = vpop.f32.mrb[0].mxu0
    %v8993 = vadd.f32 %v148, %v8992
    %v8994 = vpop.f32.mrb[0].mxu0
    %v8995 = vadd.f32 %v152, %v8994
    %v8996 = vpop.f32.mrb[0].mxu0
    %v8997 = vadd.f32 %v148, %v8996
    %v8998 = vpop.f32.mrb[0].mxu0
    %v8999 = vadd.f32 %v152, %v8998
    %9000 = vdwg.mxu0
    %9001 = vmatprep.subr.bf16.mxu0 %v533
    %9002 = vmatpush1.bf16.msra.mxu0 %v532
    %9003 = vmatprep.subr.bf16.mxu0 %v541
    %9004 = vmatpush1.bf16.msra.mxu0 %v540
    %9005 = vmatprep.subr.bf16.mxu0 %v549
    %9006 = vmatpush1.bf16.msra.mxu0 %v548
    %9007 = vmatprep.subr.bf16.mxu0 %v557
    %9008 = vmatpush1.bf16.msra.mxu0 %v556
    %9009 = vmatprep.subr.bf16.mxu0 %v565
    %9010 = vmatpush1.bf16.msra.mxu0 %v564
    %9011 = vmatprep.subr.bf16.mxu0 %v573
    %9012 = vmatpush1.bf16.msra.mxu0 %v572
    %9013 = vmatprep.subr.bf16.mxu0 %v581
    %9014 = vmatpush1.bf16.msra.mxu0 %v580
    %9015 = vmatprep.subr.bf16.mxu0 %v589
    %9016 = vmatpush1.bf16.msra.mxu0 %v588
    %9017 = vmatprep.subr.bf16.mxu0 %v597
    %9018 = vmatpush1.bf16.msra.mxu0 %v596
    %9019 = vmatprep.subr.bf16.mxu0 %v605
    %9020 = vmatpush1.bf16.msra.mxu0 %v604
    %9021 = vmatprep.subr.bf16.mxu0 %v613
    %9022 = vmatpush1.bf16.msra.mxu0 %v612
    %9023 = vmatprep.subr.bf16.mxu0 %v621
    %9024 = vmatpush1.bf16.msra.mxu0 %v620
    %9025 = vmatprep.subr.bf16.mxu0 0
    %9026 = vmatpush1.bf16.msra.mxu0 0
    %9027 = vmatprep.subr.bf16.mxu0 0
    %9028 = vmatpush1.bf16.msra.mxu0 0
    %9029 = vmatprep.subr.bf16.mxu0 0
    %9030 = vmatpush1.bf16.msra.mxu0 0
    %9031 = vmatprep.subr.bf16.mxu0 0
    %9032 = vmatpush1.bf16.msra.mxu0 0
    %9033 = vmatprep.mubr.bf16.mxu0 %v8775
    %9034 = vmatmul.mubr.bf16.gmra.mrb[0].mxu0 %v8753
    %v9035 = vpop.f32.mrb[0].mxu0
    %v9036 = vadd.f32 %v156, %v9035
    %v9037 = vpop.f32.mrb[0].mxu0
    %v9038 = vadd.f32 %v160, %v9037
    %v9039 = vpop.f32.mrb[0].mxu0
    %v9040 = vadd.f32 %v156, %v9039
    %v9041 = vpop.f32.mrb[0].mxu0
    %v9042 = vadd.f32 %v160, %v9041
    %9043 = vmatprep.mubr.bf16.mxu0 %v8778
    %9044 = vmatmul.mubr.bf16.gmra.mrb[0].mxu0 %v8755
    %v9045 = vpop.f32.mrb[0].mxu0
    %v9046 = vadd.f32 %v156, %v9045
    %v9047 = vpop.f32.mrb[0].mxu0
    %v9048 = vadd.f32 %v160, %v9047
    %v9049 = vpop.f32.mrb[0].mxu0
    %v9050 = vadd.f32 %v156, %v9049
    %v9051 = vpop.f32.mrb[0].mxu0
    %v9052 = vadd.f32 %v160, %v9051
    %9053 = vmatprep.mubr.bf16.mxu0 %v8781
    %9054 = vmatmul.mubr.bf16.gmra.mrb[0].mxu0 %v8757
    %v9055 = vpop.f32.mrb[0].mxu0
    %v9056 = vadd.f32 %v156, %v9055
    %v9057 = vpop.f32.mrb[0].mxu0
    %v9058 = vadd.f32 %v160, %v9057
    %v9059 = vpop.f32.mrb[0].mxu0
    %v9060 = vadd.f32 %v156, %v9059
    %v9061 = vpop.f32.mrb[0].mxu0
    %v9062 = vadd.f32 %v160, %v9061
    %9063 = vmatprep.mubr.bf16.mxu0 %v8784
    %9064 = vmatmul.mubr.bf16.gmra.mrb[0].mxu0 %v8759
    %v9065 = vpop.f32.mrb[0].mxu0
    %v9066 = vadd.f32 %v156, %v9065
    %v9067 = vpop.f32.mrb[0].mxu0
    %v9068 = vadd.f32 %v160, %v9067
    %v9069 = vpop.f32.mrb[0].mxu0
    %v9070 = vadd.f32 %v156, %v9069
    %v9071 = vpop.f32.mrb[0].mxu0
    %v9072 = vadd.f32 %v160, %v9071
    %9073 = vmatprep.mubr.bf16.mxu0 %v8787
    %9074 = vmatmul.mubr.bf16.gmra.mrb[0].mxu0 %v8761
    %v9075 = vpop.f32.mrb[0].mxu0
    %v9076 = vadd.f32 %v156, %v9075
    %v9077 = vpop.f32.mrb[0].mxu0
    %v9078 = vadd.f32 %v160, %v9077
    %v9079 = vpop.f32.mrb[0].mxu0
    %v9080 = vadd.f32 %v156, %v9079
    %v9081 = vpop.f32.mrb[0].mxu0
    %v9082 = vadd.f32 %v160, %v9081
    %9083 = vmatprep.mubr.bf16.mxu0 %v8790
    %9084 = vmatmul.mubr.bf16.gmra.mrb[0].mxu0 %v8763
    %v9085 = vpop.f32.mrb[0].mxu0
    %v9086 = vadd.f32 %v156, %v9085
    %v9087 = vpop.f32.mrb[0].mxu0
    %v9088 = vadd.f32 %v160, %v9087
    %v9089 = vpop.f32.mrb[0].mxu0
    %v9090 = vadd.f32 %v156, %v9089
    %v9091 = vpop.f32.mrb[0].mxu0
    %v9092 = vadd.f32 %v160, %v9091
    %9093 = vmatprep.mubr.bf16.mxu0 %v8793
    %9094 = vmatmul.mubr.bf16.gmra.mrb[0].mxu0 %v8765
    %v9095 = vpop.f32.mrb[0].mxu0
    %v9096 = vadd.f32 %v156, %v9095
    %v9097 = vpop.f32.mrb[0].mxu0
    %v9098 = vadd.f32 %v160, %v9097
    %v9099 = vpop.f32.mrb[0].mxu0
    %v9100 = vadd.f32 %v156, %v9099
    %v9101 = vpop.f32.mrb[0].mxu0
    %v9102 = vadd.f32 %v160, %v9101
    %9103 = vdwg.mxu0
    %9104 = vmatprep.subr.bf16.mxu0 %v535
    %9105 = vmatpush1.bf16.msra.mxu0 %v534
    %9106 = vmatprep.subr.bf16.mxu0 %v543
    %9107 = vmatpush1.bf16.msra.mxu0 %v542
    %9108 = vmatprep.subr.bf16.mxu0 %v551
    %9109 = vmatpush1.bf16.msra.mxu0 %v550
    %9110 = vmatprep.subr.bf16.mxu0 %v559
    %9111 = vmatpush1.bf16.msra.mxu0 %v558
    %9112 = vmatprep.subr.bf16.mxu0 %v567
    %9113 = vmatpush1.bf16.msra.mxu0 %v566
    %9114 = vmatprep.subr.bf16.mxu0 %v575
    %9115 = vmatpush1.bf16.msra.mxu0 %v574
    %9116 = vmatprep.subr.bf16.mxu0 %v583
    %9117 = vmatpush1.bf16.msra.mxu0 %v582
    %9118 = vmatprep.subr.bf16.mxu0 %v591
    %9119 = vmatpush1.bf16.msra.mxu0 %v590
    %9120 = vmatprep.subr.bf16.mxu0 %v599
    %9121 = vmatpush1.bf16.msra.mxu0 %v598
    %9122 = vmatprep.subr.bf16.mxu0 %v607
    %9123 = vmatpush1.bf16.msra.mxu0 %v606
    %9124 = vmatprep.subr.bf16.mxu0 %v615
    %9125 = vmatpush1.bf16.msra.mxu0 %v614
    %9126 = vmatprep.subr.bf16.mxu0 %v623
    %9127 = vmatpush1.bf16.msra.mxu0 %v622
    %9128 = vmatprep.subr.bf16.mxu0 0
    %9129 = vmatpush1.bf16.msra.mxu0 0
    %9130 = vmatprep.subr.bf16.mxu0 0
    %9131 = vmatpush1.bf16.msra.mxu0 0
    %9132 = vmatprep.subr.bf16.mxu0 0
    %9133 = vmatpush1.bf16.msra.mxu0 0
    %9134 = vmatprep.subr.bf16.mxu0 0
    %9135 = vmatpush1.bf16.msra.mxu0 0
    %9136 = vmatprep.mubr.bf16.mxu0 %v8775
    %9137 = vmatmul.mubr.bf16.gmra.mrb[0].mxu0 %v8753
    %v9138 = vpop.f32.mrb[0].mxu0
    %v9139 = vadd.f32 %v164, %v9138
    %v9140 = vpop.f32.mrb[0].mxu0
    %v9141 = vadd.f32 %v168, %v9140
    %v9142 = vpop.f32.mrb[0].mxu0
    %v9143 = vadd.f32 %v164, %v9142
    %v9144 = vpop.f32.mrb[0].mxu0
    %v9145 = vadd.f32 %v168, %v9144
    %9146 = vmatprep.mubr.bf16.mxu0 %v8778
    %9147 = vmatmul.mubr.bf16.gmra.mrb[0].mxu0 %v8755
    %v9148 = vpop.f32.mrb[0].mxu0
    %v9149 = vadd.f32 %v164, %v9148
    %v9150 = vpop.f32.mrb[0].mxu0
    %v9151 = vadd.f32 %v168, %v9150
    %v9152 = vpop.f32.mrb[0].mxu0
    %v9153 = vadd.f32 %v164, %v9152
    %v9154 = vpop.f32.mrb[0].mxu0
    %v9155 = vadd.f32 %v168, %v9154
    %9156 = vmatprep.mubr.bf16.mxu0 %v8781
    %9157 = vmatmul.mubr.bf16.gmra.mrb[0].mxu0 %v8757
    %v9158 = vpop.f32.mrb[0].mxu0
    %v9159 = vadd.f32 %v164, %v9158
    %v9160 = vpop.f32.mrb[0].mxu0
    %v9161 = vadd.f32 %v168, %v9160
    %v9162 = vpop.f32.mrb[0].mxu0
    %v9163 = vadd.f32 %v164, %v9162
    %v9164 = vpop.f32.mrb[0].mxu0
    %v9165 = vadd.f32 %v168, %v9164
    %9166 = vmatprep.mubr.bf16.mxu0 %v8784
    %9167 = vmatmul.mubr.bf16.gmra.mrb[0].mxu0 %v8759
    %v9168 = vpop.f32.mrb[0].mxu0
    %v9169 = vadd.f32 %v164, %v9168
    %v9170 = vpop.f32.mrb[0].mxu0
    %v9171 = vadd.f32 %v168, %v9170
    %v9172 = vpop.f32.mrb[0].mxu0
    %v9173 = vadd.f32 %v164, %v9172
    %v9174 = vpop.f32.mrb[0].mxu0
    %v9175 = vadd.f32 %v168, %v9174
    %9176 = vmatprep.mubr.bf16.mxu0 %v8787
    %9177 = vmatmul.mubr.bf16.gmra.mrb[0].mxu0 %v8761
    %v9178 = vpop.f32.mrb[0].mxu0
    %v9179 = vadd.f32 %v164, %v9178
    %v9180 = vpop.f32.mrb[0].mxu0
    %v9181 = vadd.f32 %v168, %v9180
    %v9182 = vpop.f32.mrb[0].mxu0
    %v9183 = vadd.f32 %v164, %v9182
    %v9184 = vpop.f32.mrb[0].mxu0
    %v9185 = vadd.f32 %v168, %v9184
    %9186 = vmatprep.mubr.bf16.mxu0 %v8790
    %9187 = vmatmul.mubr.bf16.gmra.mrb[0].mxu0 %v8763
    %v9188 = vpop.f32.mrb[0].mxu0
    %v9189 = vadd.f32 %v164, %v9188
    %v9190 = vpop.f32.mrb[0].mxu0
    %v9191 = vadd.f32 %v168, %v9190
    %v9192 = vpop.f32.mrb[0].mxu0
    %v9193 = vadd.f32 %v164, %v9192
    %v9194 = vpop.f32.mrb[0].mxu0
    %v9195 = vadd.f32 %v168, %v9194
    %9196 = vmatprep.mubr.bf16.mxu0 %v8793
    %9197 = vmatmul.mubr.bf16.gmra.mrb[0].mxu0 %v8765
    %v9198 = vpop.f32.mrb[0].mxu0
    %v9199 = vadd.f32 %v164, %v9198
    %v9200 = vpop.f32.mrb[0].mxu0
    %v9201 = vadd.f32 %v168, %v9200
    %v9202 = vpop.f32.mrb[0].mxu0
    %v9203 = vadd.f32 %v164, %v9202
    %v9204 = vpop.f32.mrb[0].mxu0
    %v9205 = vadd.f32 %v168, %v9204
    %9206 = vdwg.mxu0
    %v9207 = vmax.f32 %v8830, 0.0
    %v9208 = vmax.f32 %v8832, 0.0
    %v9209 = vmax.f32 %v8933, 0.0
    %v9210 = vmax.f32 %v8935, 0.0
    %v9211 = vmax.f32 %v9036, 0.0
    %v9212 = vmax.f32 %v9038, 0.0
    %v9213 = vmax.f32 %v9139, 0.0
    %v9214 = vmax.f32 %v9141, 0.0
    %v9215 = vmax.f32 %v8834, 0.0
    %v9216 = vmax.f32 %v8836, 0.0
    %v9217 = vmax.f32 %v8937, 0.0
    %v9218 = vmax.f32 %v8939, 0.0
    %v9219 = vmax.f32 %v9040, 0.0
    %v9220 = vmax.f32 %v9042, 0.0
    %v9221 = vmax.f32 %v9143, 0.0
    %v9222 = vmax.f32 %v9145, 0.0
    %v9223 = vmax.f32 %v8840, 0.0
    %v9224 = vmax.f32 %v8842, 0.0
    %v9225 = vmax.f32 %v8943, 0.0
    %v9226 = vmax.f32 %v8945, 0.0
    %v9227 = vmax.f32 %v9046, 0.0
    %v9228 = vmax.f32 %v9048, 0.0
    %v9229 = vmax.f32 %v9149, 0.0
    %v9230 = vmax.f32 %v9151, 0.0
    %v9231 = vmax.f32 %v8844, 0.0
    %v9232 = vmax.f32 %v8846, 0.0
    %v9233 = vmax.f32 %v8947, 0.0
    %v9234 = vmax.f32 %v8949, 0.0
    %v9235 = vmax.f32 %v9050, 0.0
    %v9236 = vmax.f32 %v9052, 0.0
    %v9237 = vmax.f32 %v9153, 0.0
    %v9238 = vmax.f32 %v9155, 0.0
    %v9239 = vmax.f32 %v8850, 0.0
    %v9240 = vmax.f32 %v8852, 0.0
    %v9241 = vmax.f32 %v8953, 0.0
    %v9242 = vmax.f32 %v8955, 0.0
    %v9243 = vmax.f32 %v9056, 0.0
    %v9244 = vmax.f32 %v9058, 0.0
    %v9245 = vmax.f32 %v9159, 0.0
    %v9246 = vmax.f32 %v9161, 0.0
    %v9247 = vmax.f32 %v8854, 0.0
    %v9248 = vmax.f32 %v8856, 0.0
    %v9249 = vmax.f32 %v8957, 0.0
    %v9250 = vmax.f32 %v8959, 0.0
    %v9251 = vmax.f32 %v9060, 0.0
    %v9252 = vmax.f32 %v9062, 0.0
    %v9253 = vmax.f32 %v9163, 0.0
    %v9254 = vmax.f32 %v9165, 0.0
    %v9255 = vmax.f32 %v8860, 0.0
    %v9256 = vmax.f32 %v8862, 0.0
    %v9257 = vmax.f32 %v8963, 0.0
    %v9258 = vmax.f32 %v8965, 0.0
    %v9259 = vmax.f32 %v9066, 0.0
    %v9260 = vmax.f32 %v9068, 0.0
    %v9261 = vmax.f32 %v9169, 0.0
    %v9262 = vmax.f32 %v9171, 0.0
    %v9263 = vmax.f32 %v8864, 0.0
    %v9264 = vmax.f32 %v8866, 0.0
    %v9265 = vmax.f32 %v8967, 0.0
    %v9266 = vmax.f32 %v8969, 0.0
    %v9267 = vmax.f32 %v9070, 0.0
    %v9268 = vmax.f32 %v9072, 0.0
    %v9269 = vmax.f32 %v9173, 0.0
    %v9270 = vmax.f32 %v9175, 0.0
    %v9271 = vmax.f32 %v8870, 0.0
    %v9272 = vmax.f32 %v8872, 0.0
    %v9273 = vmax.f32 %v8973, 0.0
    %v9274 = vmax.f32 %v8975, 0.0
    %v9275 = vmax.f32 %v9076, 0.0
    %v9276 = vmax.f32 %v9078, 0.0
    %v9277 = vmax.f32 %v9179, 0.0
    %v9278 = vmax.f32 %v9181, 0.0
    %v9279 = vmax.f32 %v8874, 0.0
    %v9280 = vmax.f32 %v8876, 0.0
    %v9281 = vmax.f32 %v8977, 0.0
    %v9282 = vmax.f32 %v8979, 0.0
    %v9283 = vmax.f32 %v9080, 0.0
    %v9284 = vmax.f32 %v9082, 0.0
    %v9285 = vmax.f32 %v9183, 0.0
    %v9286 = vmax.f32 %v9185, 0.0
    %v9287 = vmax.f32 %v8880, 0.0
    %v9288 = vmax.f32 %v8882, 0.0
    %v9289 = vmax.f32 %v8983, 0.0
    %v9290 = vmax.f32 %v8985, 0.0
    %v9291 = vmax.f32 %v9086, 0.0
    %v9292 = vmax.f32 %v9088, 0.0
    %v9293 = vmax.f32 %v9189, 0.0
    %v9294 = vmax.f32 %v9191, 0.0
    %v9295 = vmax.f32 %v8884, 0.0
    %v9296 = vmax.f32 %v8886, 0.0
    %v9297 = vmax.f32 %v8987, 0.0
    %v9298 = vmax.f32 %v8989, 0.0
    %v9299 = vmax.f32 %v9090, 0.0
    %v9300 = vmax.f32 %v9092, 0.0
    %v9301 = vmax.f32 %v9193, 0.0
    %v9302 = vmax.f32 %v9195, 0.0
    %v9303 = vmax.f32 %v8890, 0.0
    %v9304 = vmax.f32 %v8892, 0.0
    %v9305 = vmax.f32 %v8993, 0.0
    %v9306 = vmax.f32 %v8995, 0.0
    %v9307 = vmax.f32 %v9096, 0.0
    %v9308 = vmax.f32 %v9098, 0.0
    %v9309 = vmax.f32 %v9199, 0.0
    %v9310 = vmax.f32 %v9201, 0.0
    %v9311 = vmax.f32 %v8894, 0.0
    %v9312 = vmax.f32 %v8896, 0.0
    %v9313 = vmax.f32 %v8997, 0.0
    %v9314 = vmax.f32 %v8999, 0.0
    %v9315 = vmax.f32 %v9100, 0.0
    %v9316 = vmax.f32 %v9102, 0.0
    %v9317 = vmax.f32 %v9203, 0.0
    %v9318 = vmax.f32 %v9205, 0.0
    %v9319 = vadd.f32 %v9207, %v9223
    %v9320 = vadd.f32 %v9208, %v9224
    %v9321 = vadd.f32 %v9209, %v9225
    %v9322 = vadd.f32 %v9210, %v9226
    %v9323 = vadd.f32 %v9211, %v9227
    %v9324 = vadd.f32 %v9212, %v9228
    %v9325 = vadd.f32 %v9213, %v9229
    %v9326 = vadd.f32 %v9214, %v9230
    %v9327 = vadd.f32 %v9215, %v9231
    %v9328 = vadd.f32 %v9216, %v9232
    %v9329 = vadd.f32 %v9217, %v9233
    %v9330 = vadd.f32 %v9218, %v9234
    %v9331 = vadd.f32 %v9219, %v9235
    %v9332 = vadd.f32 %v9220, %v9236
    %v9333 = vadd.f32 %v9221, %v9237
    %v9334 = vadd.f32 %v9222, %v9238
    %v9335 = vadd.f32 %v9319, %v9239
    %v9336 = vadd.f32 %v9320, %v9240
    %v9337 = vadd.f32 %v9321, %v9241
    %v9338 = vadd.f32 %v9322, %v9242
    %v9339 = vadd.f32 %v9323, %v9243
    %v9340 = vadd.f32 %v9324, %v9244
    %v9341 = vadd.f32 %v9325, %v9245
    %v9342 = vadd.f32 %v9326, %v9246
    %v9343 = vadd.f32 %v9327, %v9247
    %v9344 = vadd.f32 %v9328, %v9248
    %v9345 = vadd.f32 %v9329, %v9249
    %v9346 = vadd.f32 %v9330, %v9250
    %v9347 = vadd.f32 %v9331, %v9251
    %v9348 = vadd.f32 %v9332, %v9252
    %v9349 = vadd.f32 %v9333, %v9253
    %v9350 = vadd.f32 %v9334, %v9254
    %v9351 = vadd.f32 %v9335, %v9255
    %v9352 = vadd.f32 %v9336, %v9256
    %v9353 = vadd.f32 %v9337, %v9257
    %v9354 = vadd.f32 %v9338, %v9258
    %v9355 = vadd.f32 %v9339, %v9259
    %v9356 = vadd.f32 %v9340, %v9260
    %v9357 = vadd.f32 %v9341, %v9261
    %v9358 = vadd.f32 %v9342, %v9262
    %v9359 = vadd.f32 %v9343, %v9263
    %v9360 = vadd.f32 %v9344, %v9264
    %v9361 = vadd.f32 %v9345, %v9265
    %v9362 = vadd.f32 %v9346, %v9266
    %v9363 = vadd.f32 %v9347, %v9267
    %v9364 = vadd.f32 %v9348, %v9268
    %v9365 = vadd.f32 %v9349, %v9269
    %v9366 = vadd.f32 %v9350, %v9270
    %v9367 = vadd.f32 %v9351, %v9271
    %v9368 = vadd.f32 %v9352, %v9272
    %v9369 = vadd.f32 %v9353, %v9273
    %v9370 = vadd.f32 %v9354, %v9274
    %v9371 = vadd.f32 %v9355, %v9275
    %v9372 = vadd.f32 %v9356, %v9276
    %v9373 = vadd.f32 %v9357, %v9277
    %v9374 = vadd.f32 %v9358, %v9278
    %v9375 = vadd.f32 %v9359, %v9279
    %v9376 = vadd.f32 %v9360, %v9280
    %v9377 = vadd.f32 %v9361, %v9281
    %v9378 = vadd.f32 %v9362, %v9282
    %v9379 = vadd.f32 %v9363, %v9283
    %v9380 = vadd.f32 %v9364, %v9284
    %v9381 = vadd.f32 %v9365, %v9285
    %v9382 = vadd.f32 %v9366, %v9286
    %v9383 = vadd.f32 %v9367, %v9287
    %v9384 = vadd.f32 %v9368, %v9288
    %v9385 = vadd.f32 %v9369, %v9289
    %v9386 = vadd.f32 %v9370, %v9290
    %v9387 = vadd.f32 %v9371, %v9291
    %v9388 = vadd.f32 %v9372, %v9292
    %v9389 = vadd.f32 %v9373, %v9293
    %v9390 = vadd.f32 %v9374, %v9294
    %v9391 = vadd.f32 %v9375, %v9295
    %v9392 = vadd.f32 %v9376, %v9296
    %v9393 = vadd.f32 %v9377, %v9297
    %v9394 = vadd.f32 %v9378, %v9298
    %v9395 = vadd.f32 %v9379, %v9299
    %v9396 = vadd.f32 %v9380, %v9300
    %v9397 = vadd.f32 %v9381, %v9301
    %v9398 = vadd.f32 %v9382, %v9302
    %v9399 = vadd.f32 %v9383, %v9303
    %v9400 = vadd.f32 %v9384, %v9304
    %v9401 = vadd.f32 %v9385, %v9305
    %v9402 = vadd.f32 %v9386, %v9306
    %v9403 = vadd.f32 %v9387, %v9307
    %v9404 = vadd.f32 %v9388, %v9308
    %v9405 = vadd.f32 %v9389, %v9309
    %v9406 = vadd.f32 %v9390, %v9310
    %v9407 = vadd.f32 %v9391, %v9311
    %v9408 = vadd.f32 %v9392, %v9312
    %v9409 = vadd.f32 %v9393, %v9313
    %v9410 = vadd.f32 %v9394, %v9314
    %v9411 = vadd.f32 %v9395, %v9315
    %v9412 = vadd.f32 %v9396, %v9316
    %v9413 = vadd.f32 %v9397, %v9317
    %v9414 = vadd.f32 %v9398, %v9318
    %v9415 = vadd.f32 %v8680, %v9399
    %v9416 = vadd.f32 %v8681, %v9400
    %v9417 = vadd.f32 %v8682, %v9401
    %v9418 = vadd.f32 %v8683, %v9402
    %v9419 = vadd.f32 %v8684, %v9403
    %v9420 = vadd.f32 %v8685, %v9404
    %v9421 = vadd.f32 %v8686, %v9405
    %v9422 = vadd.f32 %v8687, %v9406
    %v9423 = vadd.f32 %v8688, %v9407
    %v9424 = vadd.f32 %v8689, %v9408
    %v9425 = vadd.f32 %v8690, %v9409
    %v9426 = vadd.f32 %v8691, %v9410
    %v9427 = vadd.f32 %v8692, %v9411
    %v9428 = vadd.f32 %v8693, %v9412
    %v9429 = vadd.f32 %v8694, %v9413
    %v9430 = vadd.f32 %v8695, %v9414
    %s9431 = scalar_lea.vmem %s0, 1344
    %v9432 = vld [vmem:[%s9431] sm:$0xff]
    %v9433 = vld [vmem:[%s9431 + $0x8] sm:$0xff]
    %v9434 = vld [vmem:[%s9431 + $0x10] sm:$0xff]
    %v9435 = vld [vmem:[%s9431 + $0x18] sm:$0xff]
    %v9436 = vld [vmem:[%s9431 + $0x20] sm:$0xff]
    %v9437 = vld [vmem:[%s9431 + $0x28] sm:$0xff]
    %v9438 = vld [vmem:[%s9431 + $0x30] sm:$0xff]
    %v9439 = vld [vmem:[%s9431 + $0x38] sm:$0xff]
    %v9440 = vld [vmem:[%s9431 + $0x40] sm:$0xff]
    %v9441 = vld [vmem:[%s9431 + $0x48] sm:$0xff]
    %v9442 = vld [vmem:[%s9431 + $0x50] sm:$0xff]
    %v9443 = vld [vmem:[%s9431 + $0x58] sm:$0xff]
    %v9444 = vld [vmem:[%s9431 + $0x60] sm:$0xff]
    %v9445 = vld [vmem:[%s9431 + $0x68] sm:$0xff]
    %v9460 = vunpack.c.l.b16 %v9432
    %v9461 = vunpack.c.h.b16 %v9432
    %v9462 = vunpack.c.l.b16 %v9433
    %v9463 = vunpack.c.h.b16 %v9433
    %v9464 = vunpack.c.l.b16 %v9434
    %v9465 = vunpack.c.h.b16 %v9434
    %v9466 = vunpack.c.l.b16 %v9435
    %v9467 = vunpack.c.h.b16 %v9435
    %v9468 = vunpack.c.l.b16 %v9436
    %v9469 = vunpack.c.h.b16 %v9436
    %v9470 = vunpack.c.l.b16 %v9437
    %v9471 = vunpack.c.h.b16 %v9437
    %v9472 = vunpack.c.l.b16 %v9438
    %v9473 = vunpack.c.h.b16 %v9438
    %v9474 = vunpack.c.l.b16 %v9439
    %v9475 = vunpack.c.h.b16 %v9439
    %v9476 = vunpack.c.l.b16 %v9440
    %v9477 = vunpack.c.h.b16 %v9440
    %v9478 = vunpack.c.l.b16 %v9441
    %v9479 = vunpack.c.h.b16 %v9441
    %v9480 = vunpack.c.l.b16 %v9442
    %v9481 = vunpack.c.h.b16 %v9442
    %v9482 = vunpack.c.l.b16 %v9443
    %v9483 = vunpack.c.h.b16 %v9443
    %v9484 = vunpack.c.l.b16 %v9444
    %v9485 = vunpack.c.h.b16 %v9444
    %v9486 = vunpack.c.l.b16 %v9445
    %v9487 = vunpack.c.h.b16 %v9445
    %v9488 = vpack.c.b16 %v9462, %v9460
    %v9489 = vpack.c.b16 %v9463, %v9461
    %v9490 = vpack.c.b16 %v9466, %v9464
    %v9491 = vpack.c.b16 %v9467, %v9465
    %v9492 = vpack.c.b16 %v9470, %v9468
    %v9493 = vpack.c.b16 %v9471, %v9469
    %v9494 = vpack.c.b16 %v9474, %v9472
    %v9495 = vpack.c.b16 %v9475, %v9473
    %v9496 = vpack.c.b16 %v9478, %v9476
    %v9497 = vpack.c.b16 %v9479, %v9477
    %v9498 = vpack.c.b16 %v9482, %v9480
    %v9499 = vpack.c.b16 %v9483, %v9481
    %v9500 = vpack.c.b16 %v9486, %v9484
    %v9501 = vpack.c.b16 %v9487, %v9485
    %v9510 = vsel %vm720, %v9489, 0
    %v9513 = vsel %vm720, %v9491, 0
    %v9516 = vsel %vm720, %v9493, 0
    %v9519 = vsel %vm720, %v9495, 0
    %v9522 = vsel %vm720, %v9497, 0
    %v9525 = vsel %vm720, %v9499, 0
    %v9528 = vsel %vm720, %v9501, 0
    %9530 = vmatprep.subr.bf16.mxu0 %v529
    %9531 = vmatpush1.bf16.msra.mxu0 %v528
    %9532 = vmatprep.subr.bf16.mxu0 %v537
    %9533 = vmatpush1.bf16.msra.mxu0 %v536
    %9534 = vmatprep.subr.bf16.mxu0 %v545
    %9535 = vmatpush1.bf16.msra.mxu0 %v544
    %9536 = vmatprep.subr.bf16.mxu0 %v553
    %9537 = vmatpush1.bf16.msra.mxu0 %v552
    %9538 = vmatprep.subr.bf16.mxu0 %v561
    %9539 = vmatpush1.bf16.msra.mxu0 %v560
    %9540 = vmatprep.subr.bf16.mxu0 %v569
    %9541 = vmatpush1.bf16.msra.mxu0 %v568
    %9542 = vmatprep.subr.bf16.mxu0 %v577
    %9543 = vmatpush1.bf16.msra.mxu0 %v576
    %9544 = vmatprep.subr.bf16.mxu0 %v585
    %9545 = vmatpush1.bf16.msra.mxu0 %v584
    %9546 = vmatprep.subr.bf16.mxu0 %v593
    %9547 = vmatpush1.bf16.msra.mxu0 %v592
    %9548 = vmatprep.subr.bf16.mxu0 %v601
    %9549 = vmatpush1.bf16.msra.mxu0 %v600
    %9550 = vmatprep.subr.bf16.mxu0 %v609
    %9551 = vmatpush1.bf16.msra.mxu0 %v608
    %9552 = vmatprep.subr.bf16.mxu0 %v617
    %9553 = vmatpush1.bf16.msra.mxu0 %v616
    %9554 = vmatprep.subr.bf16.mxu0 0
    %9555 = vmatpush1.bf16.msra.mxu0 0
    %9556 = vmatprep.subr.bf16.mxu0 0
    %9557 = vmatpush1.bf16.msra.mxu0 0
    %9558 = vmatprep.subr.bf16.mxu0 0
    %9559 = vmatpush1.bf16.msra.mxu0 0
    %9560 = vmatprep.subr.bf16.mxu0 0
    %9561 = vmatpush1.bf16.msra.mxu0 0
    %9562 = vmatprep.mubr.bf16.mxu0 %v9510
    %9563 = vmatmul.mubr.bf16.gmra.mrb[0].mxu0 %v9488
    %v9564 = vpop.f32.mrb[0].mxu0
    %v9565 = vadd.f32 %v140, %v9564
    %v9566 = vpop.f32.mrb[0].mxu0
    %v9567 = vadd.f32 %v144, %v9566
    %v9568 = vpop.f32.mrb[0].mxu0
    %v9569 = vadd.f32 %v140, %v9568
    %v9570 = vpop.f32.mrb[0].mxu0
    %v9571 = vadd.f32 %v144, %v9570
    %9572 = vmatprep.mubr.bf16.mxu0 %v9513
    %9573 = vmatmul.mubr.bf16.gmra.mrb[0].mxu0 %v9490
    %v9574 = vpop.f32.mrb[0].mxu0
    %v9575 = vadd.f32 %v140, %v9574
    %v9576 = vpop.f32.mrb[0].mxu0
    %v9577 = vadd.f32 %v144, %v9576
    %v9578 = vpop.f32.mrb[0].mxu0
    %v9579 = vadd.f32 %v140, %v9578
    %v9580 = vpop.f32.mrb[0].mxu0
    %v9581 = vadd.f32 %v144, %v9580
    %9582 = vmatprep.mubr.bf16.mxu0 %v9516
    %9583 = vmatmul.mubr.bf16.gmra.mrb[0].mxu0 %v9492
    %v9584 = vpop.f32.mrb[0].mxu0
    %v9585 = vadd.f32 %v140, %v9584
    %v9586 = vpop.f32.mrb[0].mxu0
    %v9587 = vadd.f32 %v144, %v9586
    %v9588 = vpop.f32.mrb[0].mxu0
    %v9589 = vadd.f32 %v140, %v9588
    %v9590 = vpop.f32.mrb[0].mxu0
    %v9591 = vadd.f32 %v144, %v9590
    %9592 = vmatprep.mubr.bf16.mxu0 %v9519
    %9593 = vmatmul.mubr.bf16.gmra.mrb[0].mxu0 %v9494
    %v9594 = vpop.f32.mrb[0].mxu0
    %v9595 = vadd.f32 %v140, %v9594
    %v9596 = vpop.f32.mrb[0].mxu0
    %v9597 = vadd.f32 %v144, %v9596
    %v9598 = vpop.f32.mrb[0].mxu0
    %v9599 = vadd.f32 %v140, %v9598
    %v9600 = vpop.f32.mrb[0].mxu0
    %v9601 = vadd.f32 %v144, %v9600
    %9602 = vmatprep.mubr.bf16.mxu0 %v9522
    %9603 = vmatmul.mubr.bf16.gmra.mrb[0].mxu0 %v9496
    %v9604 = vpop.f32.mrb[0].mxu0
    %v9605 = vadd.f32 %v140, %v9604
    %v9606 = vpop.f32.mrb[0].mxu0
    %v9607 = vadd.f32 %v144, %v9606
    %v9608 = vpop.f32.mrb[0].mxu0
    %v9609 = vadd.f32 %v140, %v9608
    %v9610 = vpop.f32.mrb[0].mxu0
    %v9611 = vadd.f32 %v144, %v9610
    %9612 = vmatprep.mubr.bf16.mxu0 %v9525
    %9613 = vmatmul.mubr.bf16.gmra.mrb[0].mxu0 %v9498
    %v9614 = vpop.f32.mrb[0].mxu0
    %v9615 = vadd.f32 %v140, %v9614
    %v9616 = vpop.f32.mrb[0].mxu0
    %v9617 = vadd.f32 %v144, %v9616
    %v9618 = vpop.f32.mrb[0].mxu0
    %v9619 = vadd.f32 %v140, %v9618
    %v9620 = vpop.f32.mrb[0].mxu0
    %v9621 = vadd.f32 %v144, %v9620
    %9622 = vmatprep.mubr.bf16.mxu0 %v9528
    %9623 = vmatmul.mubr.bf16.gmra.mrb[0].mxu0 %v9500
    %v9624 = vpop.f32.mrb[0].mxu0
    %v9625 = vadd.f32 %v140, %v9624
    %v9626 = vpop.f32.mrb[0].mxu0
    %v9627 = vadd.f32 %v144, %v9626
    %v9628 = vpop.f32.mrb[0].mxu0
    %v9629 = vadd.f32 %v140, %v9628
    %v9630 = vpop.f32.mrb[0].mxu0
    %v9631 = vadd.f32 %v144, %v9630
    %9632 = vdwg.mxu0
    %9633 = vmatprep.subr.bf16.mxu0 %v531
    %9634 = vmatpush1.bf16.msra.mxu0 %v530
    %9635 = vmatprep.subr.bf16.mxu0 %v539
    %9636 = vmatpush1.bf16.msra.mxu0 %v538
    %9637 = vmatprep.subr.bf16.mxu0 %v547
    %9638 = vmatpush1.bf16.msra.mxu0 %v546
    %9639 = vmatprep.subr.bf16.mxu0 %v555
    %9640 = vmatpush1.bf16.msra.mxu0 %v554
    %9641 = vmatprep.subr.bf16.mxu0 %v563
    %9642 = vmatpush1.bf16.msra.mxu0 %v562
    %9643 = vmatprep.subr.bf16.mxu0 %v571
    %9644 = vmatpush1.bf16.msra.mxu0 %v570
    %9645 = vmatprep.subr.bf16.mxu0 %v579
    %9646 = vmatpush1.bf16.msra.mxu0 %v578
    %9647 = vmatprep.subr.bf16.mxu0 %v587
    %9648 = vmatpush1.bf16.msra.mxu0 %v586
    %9649 = vmatprep.subr.bf16.mxu0 %v595
    %9650 = vmatpush1.bf16.msra.mxu0 %v594
    %9651 = vmatprep.subr.bf16.mxu0 %v603
    %9652 = vmatpush1.bf16.msra.mxu0 %v602
    %9653 = vmatprep.subr.bf16.mxu0 %v611
    %9654 = vmatpush1.bf16.msra.mxu0 %v610
    %9655 = vmatprep.subr.bf16.mxu0 %v619
    %9656 = vmatpush1.bf16.msra.mxu0 %v618
    %9657 = vmatprep.subr.bf16.mxu0 0
    %9658 = vmatpush1.bf16.msra.mxu0 0
    %9659 = vmatprep.subr.bf16.mxu0 0
    %9660 = vmatpush1.bf16.msra.mxu0 0
    %9661 = vmatprep.subr.bf16.mxu0 0
    %9662 = vmatpush1.bf16.msra.mxu0 0
    %9663 = vmatprep.subr.bf16.mxu0 0
    %9664 = vmatpush1.bf16.msra.mxu0 0
    %9665 = vmatprep.mubr.bf16.mxu0 %v9510
    %9666 = vmatmul.mubr.bf16.gmra.mrb[0].mxu0 %v9488
    %v9667 = vpop.f32.mrb[0].mxu0
    %v9668 = vadd.f32 %v148, %v9667
    %v9669 = vpop.f32.mrb[0].mxu0
    %v9670 = vadd.f32 %v152, %v9669
    %v9671 = vpop.f32.mrb[0].mxu0
    %v9672 = vadd.f32 %v148, %v9671
    %v9673 = vpop.f32.mrb[0].mxu0
    %v9674 = vadd.f32 %v152, %v9673
    %9675 = vmatprep.mubr.bf16.mxu0 %v9513
    %9676 = vmatmul.mubr.bf16.gmra.mrb[0].mxu0 %v9490
    %v9677 = vpop.f32.mrb[0].mxu0
    %v9678 = vadd.f32 %v148, %v9677
    %v9679 = vpop.f32.mrb[0].mxu0
    %v9680 = vadd.f32 %v152, %v9679
    %v9681 = vpop.f32.mrb[0].mxu0
    %v9682 = vadd.f32 %v148, %v9681
    %v9683 = vpop.f32.mrb[0].mxu0
    %v9684 = vadd.f32 %v152, %v9683
    %9685 = vmatprep.mubr.bf16.mxu0 %v9516
    %9686 = vmatmul.mubr.bf16.gmra.mrb[0].mxu0 %v9492
    %v9687 = vpop.f32.mrb[0].mxu0
    %v9688 = vadd.f32 %v148, %v9687
    %v9689 = vpop.f32.mrb[0].mxu0
    %v9690 = vadd.f32 %v152, %v9689
    %v9691 = vpop.f32.mrb[0].mxu0
    %v9692 = vadd.f32 %v148, %v9691
    %v9693 = vpop.f32.mrb[0].mxu0
    %v9694 = vadd.f32 %v152, %v9693
    %9695 = vmatprep.mubr.bf16.mxu0 %v9519
    %9696 = vmatmul.mubr.bf16.gmra.mrb[0].mxu0 %v9494
    %v9697 = vpop.f32.mrb[0].mxu0
    %v9698 = vadd.f32 %v148, %v9697
    %v9699 = vpop.f32.mrb[0].mxu0
    %v9700 = vadd.f32 %v152, %v9699
    %v9701 = vpop.f32.mrb[0].mxu0
    %v9702 = vadd.f32 %v148, %v9701
    %v9703 = vpop.f32.mrb[0].mxu0
    %v9704 = vadd.f32 %v152, %v9703
    %9705 = vmatprep.mubr.bf16.mxu0 %v9522
    %9706 = vmatmul.mubr.bf16.gmra.mrb[0].mxu0 %v9496
    %v9707 = vpop.f32.mrb[0].mxu0
    %v9708 = vadd.f32 %v148, %v9707
    %v9709 = vpop.f32.mrb[0].mxu0
    %v9710 = vadd.f32 %v152, %v9709
    %v9711 = vpop.f32.mrb[0].mxu0
    %v9712 = vadd.f32 %v148, %v9711
    %v9713 = vpop.f32.mrb[0].mxu0
    %v9714 = vadd.f32 %v152, %v9713
    %9715 = vmatprep.mubr.bf16.mxu0 %v9525
    %9716 = vmatmul.mubr.bf16.gmra.mrb[0].mxu0 %v9498
    %v9717 = vpop.f32.mrb[0].mxu0
    %v9718 = vadd.f32 %v148, %v9717
    %v9719 = vpop.f32.mrb[0].mxu0
    %v9720 = vadd.f32 %v152, %v9719
    %v9721 = vpop.f32.mrb[0].mxu0
    %v9722 = vadd.f32 %v148, %v9721
    %v9723 = vpop.f32.mrb[0].mxu0
    %v9724 = vadd.f32 %v152, %v9723
    %9725 = vmatprep.mubr.bf16.mxu0 %v9528
    %9726 = vmatmul.mubr.bf16.gmra.mrb[0].mxu0 %v9500
    %v9727 = vpop.f32.mrb[0].mxu0
    %v9728 = vadd.f32 %v148, %v9727
    %v9729 = vpop.f32.mrb[0].mxu0
    %v9730 = vadd.f32 %v152, %v9729
    %v9731 = vpop.f32.mrb[0].mxu0
    %v9732 = vadd.f32 %v148, %v9731
    %v9733 = vpop.f32.mrb[0].mxu0
    %v9734 = vadd.f32 %v152, %v9733
    %9735 = vdwg.mxu0
    %9736 = vmatprep.subr.bf16.mxu0 %v533
    %9737 = vmatpush1.bf16.msra.mxu0 %v532
    %9738 = vmatprep.subr.bf16.mxu0 %v541
    %9739 = vmatpush1.bf16.msra.mxu0 %v540
    %9740 = vmatprep.subr.bf16.mxu0 %v549
    %9741 = vmatpush1.bf16.msra.mxu0 %v548
    %9742 = vmatprep.subr.bf16.mxu0 %v557
    %9743 = vmatpush1.bf16.msra.mxu0 %v556
    %9744 = vmatprep.subr.bf16.mxu0 %v565
    %9745 = vmatpush1.bf16.msra.mxu0 %v564
    %9746 = vmatprep.subr.bf16.mxu0 %v573
    %9747 = vmatpush1.bf16.msra.mxu0 %v572
    %9748 = vmatprep.subr.bf16.mxu0 %v581
    %9749 = vmatpush1.bf16.msra.mxu0 %v580
    %9750 = vmatprep.subr.bf16.mxu0 %v589
    %9751 = vmatpush1.bf16.msra.mxu0 %v588
    %9752 = vmatprep.subr.bf16.mxu0 %v597
    %9753 = vmatpush1.bf16.msra.mxu0 %v596
    %9754 = vmatprep.subr.bf16.mxu0 %v605
    %9755 = vmatpush1.bf16.msra.mxu0 %v604
    %9756 = vmatprep.subr.bf16.mxu0 %v613
    %9757 = vmatpush1.bf16.msra.mxu0 %v612
    %9758 = vmatprep.subr.bf16.mxu0 %v621
    %9759 = vmatpush1.bf16.msra.mxu0 %v620
    %9760 = vmatprep.subr.bf16.mxu0 0
    %9761 = vmatpush1.bf16.msra.mxu0 0
    %9762 = vmatprep.subr.bf16.mxu0 0
    %9763 = vmatpush1.bf16.msra.mxu0 0
    %9764 = vmatprep.subr.bf16.mxu0 0
    %9765 = vmatpush1.bf16.msra.mxu0 0
    %9766 = vmatprep.subr.bf16.mxu0 0
    %9767 = vmatpush1.bf16.msra.mxu0 0
    %9768 = vmatprep.mubr.bf16.mxu0 %v9510
    %9769 = vmatmul.mubr.bf16.gmra.mrb[0].mxu0 %v9488
    %v9770 = vpop.f32.mrb[0].mxu0
    %v9771 = vadd.f32 %v156, %v9770
    %v9772 = vpop.f32.mrb[0].mxu0
    %v9773 = vadd.f32 %v160, %v9772
    %v9774 = vpop.f32.mrb[0].mxu0
    %v9775 = vadd.f32 %v156, %v9774
    %v9776 = vpop.f32.mrb[0].mxu0
    %v9777 = vadd.f32 %v160, %v9776
    %9778 = vmatprep.mubr.bf16.mxu0 %v9513
    %9779 = vmatmul.mubr.bf16.gmra.mrb[0].mxu0 %v9490
    %v9780 = vpop.f32.mrb[0].mxu0
    %v9781 = vadd.f32 %v156, %v9780
    %v9782 = vpop.f32.mrb[0].mxu0
    %v9783 = vadd.f32 %v160, %v9782
    %v9784 = vpop.f32.mrb[0].mxu0
    %v9785 = vadd.f32 %v156, %v9784
    %v9786 = vpop.f32.mrb[0].mxu0
    %v9787 = vadd.f32 %v160, %v9786
    %9788 = vmatprep.mubr.bf16.mxu0 %v9516
    %9789 = vmatmul.mubr.bf16.gmra.mrb[0].mxu0 %v9492
    %v9790 = vpop.f32.mrb[0].mxu0
    %v9791 = vadd.f32 %v156, %v9790
    %v9792 = vpop.f32.mrb[0].mxu0
    %v9793 = vadd.f32 %v160, %v9792
    %v9794 = vpop.f32.mrb[0].mxu0
    %v9795 = vadd.f32 %v156, %v9794
    %v9796 = vpop.f32.mrb[0].mxu0
    %v9797 = vadd.f32 %v160, %v9796
    %9798 = vmatprep.mubr.bf16.mxu0 %v9519
    %9799 = vmatmul.mubr.bf16.gmra.mrb[0].mxu0 %v9494
    %v9800 = vpop.f32.mrb[0].mxu0
    %v9801 = vadd.f32 %v156, %v9800
    %v9802 = vpop.f32.mrb[0].mxu0
    %v9803 = vadd.f32 %v160, %v9802
    %v9804 = vpop.f32.mrb[0].mxu0
    %v9805 = vadd.f32 %v156, %v9804
    %v9806 = vpop.f32.mrb[0].mxu0
    %v9807 = vadd.f32 %v160, %v9806
    %9808 = vmatprep.mubr.bf16.mxu0 %v9522
    %9809 = vmatmul.mubr.bf16.gmra.mrb[0].mxu0 %v9496
    %v9810 = vpop.f32.mrb[0].mxu0
    %v9811 = vadd.f32 %v156, %v9810
    %v9812 = vpop.f32.mrb[0].mxu0
    %v9813 = vadd.f32 %v160, %v9812
    %v9814 = vpop.f32.mrb[0].mxu0
    %v9815 = vadd.f32 %v156, %v9814
    %v9816 = vpop.f32.mrb[0].mxu0
    %v9817 = vadd.f32 %v160, %v9816
    %9818 = vmatprep.mubr.bf16.mxu0 %v9525
    %9819 = vmatmul.mubr.bf16.gmra.mrb[0].mxu0 %v9498
    %v9820 = vpop.f32.mrb[0].mxu0
    %v9821 = vadd.f32 %v156, %v9820
    %v9822 = vpop.f32.mrb[0].mxu0
    %v9823 = vadd.f32 %v160, %v9822
    %v9824 = vpop.f32.mrb[0].mxu0
    %v9825 = vadd.f32 %v156, %v9824
    %v9826 = vpop.f32.mrb[0].mxu0
    %v9827 = vadd.f32 %v160, %v9826
    %9828 = vmatprep.mubr.bf16.mxu0 %v9528
    %9829 = vmatmul.mubr.bf16.gmra.mrb[0].mxu0 %v9500
    %v9830 = vpop.f32.mrb[0].mxu0
    %v9831 = vadd.f32 %v156, %v9830
    %v9832 = vpop.f32.mrb[0].mxu0
    %v9833 = vadd.f32 %v160, %v9832
    %v9834 = vpop.f32.mrb[0].mxu0
    %v9835 = vadd.f32 %v156, %v9834
    %v9836 = vpop.f32.mrb[0].mxu0
    %v9837 = vadd.f32 %v160, %v9836
    %9838 = vdwg.mxu0
    %9839 = vmatprep.subr.bf16.mxu0 %v535
    %9840 = vmatpush1.bf16.msra.mxu0 %v534
    %9841 = vmatprep.subr.bf16.mxu0 %v543
    %9842 = vmatpush1.bf16.msra.mxu0 %v542
    %9843 = vmatprep.subr.bf16.mxu0 %v551
    %9844 = vmatpush1.bf16.msra.mxu0 %v550
    %9845 = vmatprep.subr.bf16.mxu0 %v559
    %9846 = vmatpush1.bf16.msra.mxu0 %v558
    %9847 = vmatprep.subr.bf16.mxu0 %v567
    %9848 = vmatpush1.bf16.msra.mxu0 %v566
    %9849 = vmatprep.subr.bf16.mxu0 %v575
    %9850 = vmatpush1.bf16.msra.mxu0 %v574
    %9851 = vmatprep.subr.bf16.mxu0 %v583
    %9852 = vmatpush1.bf16.msra.mxu0 %v582
    %9853 = vmatprep.subr.bf16.mxu0 %v591
    %9854 = vmatpush1.bf16.msra.mxu0 %v590
    %9855 = vmatprep.subr.bf16.mxu0 %v599
    %9856 = vmatpush1.bf16.msra.mxu0 %v598
    %9857 = vmatprep.subr.bf16.mxu0 %v607
    %9858 = vmatpush1.bf16.msra.mxu0 %v606
    %9859 = vmatprep.subr.bf16.mxu0 %v615
    %9860 = vmatpush1.bf16.msra.mxu0 %v614
    %9861 = vmatprep.subr.bf16.mxu0 %v623
    %9862 = vmatpush1.bf16.msra.mxu0 %v622
    %9863 = vmatprep.subr.bf16.mxu0 0
    %9864 = vmatpush1.bf16.msra.mxu0 0
    %9865 = vmatprep.subr.bf16.mxu0 0
    %9866 = vmatpush1.bf16.msra.mxu0 0
    %9867 = vmatprep.subr.bf16.mxu0 0
    %9868 = vmatpush1.bf16.msra.mxu0 0
    %9869 = vmatprep.subr.bf16.mxu0 0
    %9870 = vmatpush1.bf16.msra.mxu0 0
    %9871 = vmatprep.mubr.bf16.mxu0 %v9510
    %9872 = vmatmul.mubr.bf16.gmra.mrb[0].mxu0 %v9488
    %v9873 = vpop.f32.mrb[0].mxu0
    %v9874 = vadd.f32 %v164, %v9873
    %v9875 = vpop.f32.mrb[0].mxu0
    %v9876 = vadd.f32 %v168, %v9875
    %v9877 = vpop.f32.mrb[0].mxu0
    %v9878 = vadd.f32 %v164, %v9877
    %v9879 = vpop.f32.mrb[0].mxu0
    %v9880 = vadd.f32 %v168, %v9879
    %9881 = vmatprep.mubr.bf16.mxu0 %v9513
    %9882 = vmatmul.mubr.bf16.gmra.mrb[0].mxu0 %v9490
    %v9883 = vpop.f32.mrb[0].mxu0
    %v9884 = vadd.f32 %v164, %v9883
    %v9885 = vpop.f32.mrb[0].mxu0
    %v9886 = vadd.f32 %v168, %v9885
    %v9887 = vpop.f32.mrb[0].mxu0
    %v9888 = vadd.f32 %v164, %v9887
    %v9889 = vpop.f32.mrb[0].mxu0
    %v9890 = vadd.f32 %v168, %v9889
    %9891 = vmatprep.mubr.bf16.mxu0 %v9516
    %9892 = vmatmul.mubr.bf16.gmra.mrb[0].mxu0 %v9492
    %v9893 = vpop.f32.mrb[0].mxu0
    %v9894 = vadd.f32 %v164, %v9893
    %v9895 = vpop.f32.mrb[0].mxu0
    %v9896 = vadd.f32 %v168, %v9895
    %v9897 = vpop.f32.mrb[0].mxu0
    %v9898 = vadd.f32 %v164, %v9897
    %v9899 = vpop.f32.mrb[0].mxu0
    %v9900 = vadd.f32 %v168, %v9899
    %9901 = vmatprep.mubr.bf16.mxu0 %v9519
    %9902 = vmatmul.mubr.bf16.gmra.mrb[0].mxu0 %v9494
    %v9903 = vpop.f32.mrb[0].mxu0
    %v9904 = vadd.f32 %v164, %v9903
    %v9905 = vpop.f32.mrb[0].mxu0
    %v9906 = vadd.f32 %v168, %v9905
    %v9907 = vpop.f32.mrb[0].mxu0
    %v9908 = vadd.f32 %v164, %v9907
    %v9909 = vpop.f32.mrb[0].mxu0
    %v9910 = vadd.f32 %v168, %v9909
    %9911 = vmatprep.mubr.bf16.mxu0 %v9522
    %9912 = vmatmul.mubr.bf16.gmra.mrb[0].mxu0 %v9496
    %v9913 = vpop.f32.mrb[0].mxu0
    %v9914 = vadd.f32 %v164, %v9913
    %v9915 = vpop.f32.mrb[0].mxu0
    %v9916 = vadd.f32 %v168, %v9915
    %v9917 = vpop.f32.mrb[0].mxu0
    %v9918 = vadd.f32 %v164, %v9917
    %v9919 = vpop.f32.mrb[0].mxu0
    %v9920 = vadd.f32 %v168, %v9919
    %9921 = vmatprep.mubr.bf16.mxu0 %v9525
    %9922 = vmatmul.mubr.bf16.gmra.mrb[0].mxu0 %v9498
    %v9923 = vpop.f32.mrb[0].mxu0
    %v9924 = vadd.f32 %v164, %v9923
    %v9925 = vpop.f32.mrb[0].mxu0
    %v9926 = vadd.f32 %v168, %v9925
    %v9927 = vpop.f32.mrb[0].mxu0
    %v9928 = vadd.f32 %v164, %v9927
    %v9929 = vpop.f32.mrb[0].mxu0
    %v9930 = vadd.f32 %v168, %v9929
    %9931 = vmatprep.mubr.bf16.mxu0 %v9528
    %9932 = vmatmul.mubr.bf16.gmra.mrb[0].mxu0 %v9500
    %v9933 = vpop.f32.mrb[0].mxu0
    %v9934 = vadd.f32 %v164, %v9933
    %v9935 = vpop.f32.mrb[0].mxu0
    %v9936 = vadd.f32 %v168, %v9935
    %v9937 = vpop.f32.mrb[0].mxu0
    %v9938 = vadd.f32 %v164, %v9937
    %v9939 = vpop.f32.mrb[0].mxu0
    %v9940 = vadd.f32 %v168, %v9939
    %9941 = vdwg.mxu0
    %v9942 = vmax.f32 %v9565, 0.0
    %v9943 = vmax.f32 %v9567, 0.0
    %v9944 = vmax.f32 %v9668, 0.0
    %v9945 = vmax.f32 %v9670, 0.0
    %v9946 = vmax.f32 %v9771, 0.0
    %v9947 = vmax.f32 %v9773, 0.0
    %v9948 = vmax.f32 %v9874, 0.0
    %v9949 = vmax.f32 %v9876, 0.0
    %v9950 = vmax.f32 %v9569, 0.0
    %v9951 = vmax.f32 %v9571, 0.0
    %v9952 = vmax.f32 %v9672, 0.0
    %v9953 = vmax.f32 %v9674, 0.0
    %v9954 = vmax.f32 %v9775, 0.0
    %v9955 = vmax.f32 %v9777, 0.0
    %v9956 = vmax.f32 %v9878, 0.0
    %v9957 = vmax.f32 %v9880, 0.0
    %v9958 = vmax.f32 %v9575, 0.0
    %v9959 = vmax.f32 %v9577, 0.0
    %v9960 = vmax.f32 %v9678, 0.0
    %v9961 = vmax.f32 %v9680, 0.0
    %v9962 = vmax.f32 %v9781, 0.0
    %v9963 = vmax.f32 %v9783, 0.0
    %v9964 = vmax.f32 %v9884, 0.0
    %v9965 = vmax.f32 %v9886, 0.0
    %v9966 = vmax.f32 %v9579, 0.0
    %v9967 = vmax.f32 %v9581, 0.0
    %v9968 = vmax.f32 %v9682, 0.0
    %v9969 = vmax.f32 %v9684, 0.0
    %v9970 = vmax.f32 %v9785, 0.0
    %v9971 = vmax.f32 %v9787, 0.0
    %v9972 = vmax.f32 %v9888, 0.0
    %v9973 = vmax.f32 %v9890, 0.0
    %v9974 = vmax.f32 %v9585, 0.0
    %v9975 = vmax.f32 %v9587, 0.0
    %v9976 = vmax.f32 %v9688, 0.0
    %v9977 = vmax.f32 %v9690, 0.0
    %v9978 = vmax.f32 %v9791, 0.0
    %v9979 = vmax.f32 %v9793, 0.0
    %v9980 = vmax.f32 %v9894, 0.0
    %v9981 = vmax.f32 %v9896, 0.0
    %v9982 = vmax.f32 %v9589, 0.0
    %v9983 = vmax.f32 %v9591, 0.0
    %v9984 = vmax.f32 %v9692, 0.0
    %v9985 = vmax.f32 %v9694, 0.0
    %v9986 = vmax.f32 %v9795, 0.0
    %v9987 = vmax.f32 %v9797, 0.0
    %v9988 = vmax.f32 %v9898, 0.0
    %v9989 = vmax.f32 %v9900, 0.0
    %v9990 = vmax.f32 %v9595, 0.0
    %v9991 = vmax.f32 %v9597, 0.0
    %v9992 = vmax.f32 %v9698, 0.0
    %v9993 = vmax.f32 %v9700, 0.0
    %v9994 = vmax.f32 %v9801, 0.0
    %v9995 = vmax.f32 %v9803, 0.0
    %v9996 = vmax.f32 %v9904, 0.0
    %v9997 = vmax.f32 %v9906, 0.0
    %v9998 = vmax.f32 %v9599, 0.0
    %v9999 = vmax.f32 %v9601, 0.0
    %v10000 = vmax.f32 %v9702, 0.0
    %v10001 = vmax.f32 %v9704, 0.0
    %v10002 = vmax.f32 %v9805, 0.0
    %v10003 = vmax.f32 %v9807, 0.0
    %v10004 = vmax.f32 %v9908, 0.0
    %v10005 = vmax.f32 %v9910, 0.0
    %v10006 = vmax.f32 %v9605, 0.0
    %v10007 = vmax.f32 %v9607, 0.0
    %v10008 = vmax.f32 %v9708, 0.0
    %v10009 = vmax.f32 %v9710, 0.0
    %v10010 = vmax.f32 %v9811, 0.0
    %v10011 = vmax.f32 %v9813, 0.0
    %v10012 = vmax.f32 %v9914, 0.0
    %v10013 = vmax.f32 %v9916, 0.0
    %v10014 = vmax.f32 %v9609, 0.0
    %v10015 = vmax.f32 %v9611, 0.0
    %v10016 = vmax.f32 %v9712, 0.0
    %v10017 = vmax.f32 %v9714, 0.0
    %v10018 = vmax.f32 %v9815, 0.0
    %v10019 = vmax.f32 %v9817, 0.0
    %v10020 = vmax.f32 %v9918, 0.0
    %v10021 = vmax.f32 %v9920, 0.0
    %v10022 = vmax.f32 %v9615, 0.0
    %v10023 = vmax.f32 %v9617, 0.0
    %v10024 = vmax.f32 %v9718, 0.0
    %v10025 = vmax.f32 %v9720, 0.0
    %v10026 = vmax.f32 %v9821, 0.0
    %v10027 = vmax.f32 %v9823, 0.0
    %v10028 = vmax.f32 %v9924, 0.0
    %v10029 = vmax.f32 %v9926, 0.0
    %v10030 = vmax.f32 %v9619, 0.0
    %v10031 = vmax.f32 %v9621, 0.0
    %v10032 = vmax.f32 %v9722, 0.0
    %v10033 = vmax.f32 %v9724, 0.0
    %v10034 = vmax.f32 %v9825, 0.0
    %v10035 = vmax.f32 %v9827, 0.0
    %v10036 = vmax.f32 %v9928, 0.0
    %v10037 = vmax.f32 %v9930, 0.0
    %v10038 = vmax.f32 %v9625, 0.0
    %v10039 = vmax.f32 %v9627, 0.0
    %v10040 = vmax.f32 %v9728, 0.0
    %v10041 = vmax.f32 %v9730, 0.0
    %v10042 = vmax.f32 %v9831, 0.0
    %v10043 = vmax.f32 %v9833, 0.0
    %v10044 = vmax.f32 %v9934, 0.0
    %v10045 = vmax.f32 %v9936, 0.0
    %v10046 = vmax.f32 %v9629, 0.0
    %v10047 = vmax.f32 %v9631, 0.0
    %v10048 = vmax.f32 %v9732, 0.0
    %v10049 = vmax.f32 %v9734, 0.0
    %v10050 = vmax.f32 %v9835, 0.0
    %v10051 = vmax.f32 %v9837, 0.0
    %v10052 = vmax.f32 %v9938, 0.0
    %v10053 = vmax.f32 %v9940, 0.0
    %v10054 = vadd.f32 %v9942, %v9958
    %v10055 = vadd.f32 %v9943, %v9959
    %v10056 = vadd.f32 %v9944, %v9960
    %v10057 = vadd.f32 %v9945, %v9961
    %v10058 = vadd.f32 %v9946, %v9962
    %v10059 = vadd.f32 %v9947, %v9963
    %v10060 = vadd.f32 %v9948, %v9964
    %v10061 = vadd.f32 %v9949, %v9965
    %v10062 = vadd.f32 %v9950, %v9966
    %v10063 = vadd.f32 %v9951, %v9967
    %v10064 = vadd.f32 %v9952, %v9968
    %v10065 = vadd.f32 %v9953, %v9969
    %v10066 = vadd.f32 %v9954, %v9970
    %v10067 = vadd.f32 %v9955, %v9971
    %v10068 = vadd.f32 %v9956, %v9972
    %v10069 = vadd.f32 %v9957, %v9973
    %v10070 = vadd.f32 %v10054, %v9974
    %v10071 = vadd.f32 %v10055, %v9975
    %v10072 = vadd.f32 %v10056, %v9976
    %v10073 = vadd.f32 %v10057, %v9977
    %v10074 = vadd.f32 %v10058, %v9978
    %v10075 = vadd.f32 %v10059, %v9979
    %v10076 = vadd.f32 %v10060, %v9980
    %v10077 = vadd.f32 %v10061, %v9981
    %v10078 = vadd.f32 %v10062, %v9982
    %v10079 = vadd.f32 %v10063, %v9983
    %v10080 = vadd.f32 %v10064, %v9984
    %v10081 = vadd.f32 %v10065, %v9985
    %v10082 = vadd.f32 %v10066, %v9986
    %v10083 = vadd.f32 %v10067, %v9987
    %v10084 = vadd.f32 %v10068, %v9988
    %v10085 = vadd.f32 %v10069, %v9989
    %v10086 = vadd.f32 %v10070, %v9990
    %v10087 = vadd.f32 %v10071, %v9991
    %v10088 = vadd.f32 %v10072, %v9992
    %v10089 = vadd.f32 %v10073, %v9993
    %v10090 = vadd.f32 %v10074, %v9994
    %v10091 = vadd.f32 %v10075, %v9995
    %v10092 = vadd.f32 %v10076, %v9996
    %v10093 = vadd.f32 %v10077, %v9997
    %v10094 = vadd.f32 %v10078, %v9998
    %v10095 = vadd.f32 %v10079, %v9999
    %v10096 = vadd.f32 %v10080, %v10000
    %v10097 = vadd.f32 %v10081, %v10001
    %v10098 = vadd.f32 %v10082, %v10002
    %v10099 = vadd.f32 %v10083, %v10003
    %v10100 = vadd.f32 %v10084, %v10004
    %v10101 = vadd.f32 %v10085, %v10005
    %v10102 = vadd.f32 %v10086, %v10006
    %v10103 = vadd.f32 %v10087, %v10007
    %v10104 = vadd.f32 %v10088, %v10008
    %v10105 = vadd.f32 %v10089, %v10009
    %v10106 = vadd.f32 %v10090, %v10010
    %v10107 = vadd.f32 %v10091, %v10011
    %v10108 = vadd.f32 %v10092, %v10012
    %v10109 = vadd.f32 %v10093, %v10013
    %v10110 = vadd.f32 %v10094, %v10014
    %v10111 = vadd.f32 %v10095, %v10015
    %v10112 = vadd.f32 %v10096, %v10016
    %v10113 = vadd.f32 %v10097, %v10017
    %v10114 = vadd.f32 %v10098, %v10018
    %v10115 = vadd.f32 %v10099, %v10019
    %v10116 = vadd.f32 %v10100, %v10020
    %v10117 = vadd.f32 %v10101, %v10021
    %v10118 = vadd.f32 %v10102, %v10022
    %v10119 = vadd.f32 %v10103, %v10023
    %v10120 = vadd.f32 %v10104, %v10024
    %v10121 = vadd.f32 %v10105, %v10025
    %v10122 = vadd.f32 %v10106, %v10026
    %v10123 = vadd.f32 %v10107, %v10027
    %v10124 = vadd.f32 %v10108, %v10028
    %v10125 = vadd.f32 %v10109, %v10029
    %v10126 = vadd.f32 %v10110, %v10030
    %v10127 = vadd.f32 %v10111, %v10031
    %v10128 = vadd.f32 %v10112, %v10032
    %v10129 = vadd.f32 %v10113, %v10033
    %v10130 = vadd.f32 %v10114, %v10034
    %v10131 = vadd.f32 %v10115, %v10035
    %v10132 = vadd.f32 %v10116, %v10036
    %v10133 = vadd.f32 %v10117, %v10037
    %v10134 = vadd.f32 %v10118, %v10038
    %v10135 = vadd.f32 %v10119, %v10039
    %v10136 = vadd.f32 %v10120, %v10040
    %v10137 = vadd.f32 %v10121, %v10041
    %v10138 = vadd.f32 %v10122, %v10042
    %v10139 = vadd.f32 %v10123, %v10043
    %v10140 = vadd.f32 %v10124, %v10044
    %v10141 = vadd.f32 %v10125, %v10045
    %v10142 = vadd.f32 %v10126, %v10046
    %v10143 = vadd.f32 %v10127, %v10047
    %v10144 = vadd.f32 %v10128, %v10048
    %v10145 = vadd.f32 %v10129, %v10049
    %v10146 = vadd.f32 %v10130, %v10050
    %v10147 = vadd.f32 %v10131, %v10051
    %v10148 = vadd.f32 %v10132, %v10052
    %v10149 = vadd.f32 %v10133, %v10053
    %v10150 = vadd.f32 %v9415, %v10134
    %v10151 = vadd.f32 %v9416, %v10135
    %v10152 = vadd.f32 %v9417, %v10136
    %v10153 = vadd.f32 %v9418, %v10137
    %v10154 = vadd.f32 %v9419, %v10138
    %v10155 = vadd.f32 %v9420, %v10139
    %v10156 = vadd.f32 %v9421, %v10140
    %v10157 = vadd.f32 %v9422, %v10141
    %v10158 = vadd.f32 %v9423, %v10142
    %v10159 = vadd.f32 %v9424, %v10143
    %v10160 = vadd.f32 %v9425, %v10144
    %v10161 = vadd.f32 %v9426, %v10145
    %v10162 = vadd.f32 %v9427, %v10146
    %v10163 = vadd.f32 %v9428, %v10147
    %v10164 = vadd.f32 %v9429, %v10148
    %v10165 = vadd.f32 %v9430, %v10149
    %s10166 = scalar_lea.vmem %s0, 1456
    %v10167 = vld [vmem:[%s10166] sm:$0xff]
    %v10168 = vld [vmem:[%s10166 + $0x8] sm:$0xff]
    %v10169 = vld [vmem:[%s10166 + $0x10] sm:$0xff]
    %v10170 = vld [vmem:[%s10166 + $0x18] sm:$0xff]
    %v10171 = vld [vmem:[%s10166 + $0x20] sm:$0xff]
    %v10172 = vld [vmem:[%s10166 + $0x28] sm:$0xff]
    %v10173 = vld [vmem:[%s10166 + $0x30] sm:$0xff]
    %v10174 = vld [vmem:[%s10166 + $0x38] sm:$0xff]
    %v10175 = vld [vmem:[%s10166 + $0x40] sm:$0xff]
    %v10176 = vld [vmem:[%s10166 + $0x48] sm:$0xff]
    %v10177 = vld [vmem:[%s10166 + $0x50] sm:$0xff]
    %v10178 = vld [vmem:[%s10166 + $0x58] sm:$0xff]
    %v10179 = vld [vmem:[%s10166 + $0x60] sm:$0xff]
    %v10180 = vld [vmem:[%s10166 + $0x68] sm:$0xff]
    %v10195 = vunpack.c.l.b16 %v10167
    %v10196 = vunpack.c.h.b16 %v10167
    %v10197 = vunpack.c.l.b16 %v10168
    %v10198 = vunpack.c.h.b16 %v10168
    %v10199 = vunpack.c.l.b16 %v10169
    %v10200 = vunpack.c.h.b16 %v10169
    %v10201 = vunpack.c.l.b16 %v10170
    %v10202 = vunpack.c.h.b16 %v10170
    %v10203 = vunpack.c.l.b16 %v10171
    %v10204 = vunpack.c.h.b16 %v10171
    %v10205 = vunpack.c.l.b16 %v10172
    %v10206 = vunpack.c.h.b16 %v10172
    %v10207 = vunpack.c.l.b16 %v10173
    %v10208 = vunpack.c.h.b16 %v10173
    %v10209 = vunpack.c.l.b16 %v10174
    %v10210 = vunpack.c.h.b16 %v10174
    %v10211 = vunpack.c.l.b16 %v10175
    %v10212 = vunpack.c.h.b16 %v10175
    %v10213 = vunpack.c.l.b16 %v10176
    %v10214 = vunpack.c.h.b16 %v10176
    %v10215 = vunpack.c.l.b16 %v10177
    %v10216 = vunpack.c.h.b16 %v10177
    %v10217 = vunpack.c.l.b16 %v10178
    %v10218 = vunpack.c.h.b16 %v10178
    %v10219 = vunpack.c.l.b16 %v10179
    %v10220 = vunpack.c.h.b16 %v10179
    %v10221 = vunpack.c.l.b16 %v10180
    %v10222 = vunpack.c.h.b16 %v10180
    %v10223 = vpack.c.b16 %v10197, %v10195
    %v10224 = vpack.c.b16 %v10198, %v10196
    %v10225 = vpack.c.b16 %v10201, %v10199
    %v10226 = vpack.c.b16 %v10202, %v10200
    %v10227 = vpack.c.b16 %v10205, %v10203
    %v10228 = vpack.c.b16 %v10206, %v10204
    %v10229 = vpack.c.b16 %v10209, %v10207
    %v10230 = vpack.c.b16 %v10210, %v10208
    %v10231 = vpack.c.b16 %v10213, %v10211
    %v10232 = vpack.c.b16 %v10214, %v10212
    %v10233 = vpack.c.b16 %v10217, %v10215
    %v10234 = vpack.c.b16 %v10218, %v10216
    %v10235 = vpack.c.b16 %v10221, %v10219
    %v10236 = vpack.c.b16 %v10222, %v10220
    %v10245 = vsel %vm720, %v10224, 0
    %v10248 = vsel %vm720, %v10226, 0
    %v10251 = vsel %vm720, %v10228, 0
    %v10254 = vsel %vm720, %v10230, 0
    %v10257 = vsel %vm720, %v10232, 0
    %v10260 = vsel %vm720, %v10234, 0
    %v10263 = vsel %vm720, %v10236, 0
    %10265 = vmatprep.subr.bf16.mxu0 %v529
    %10266 = vmatpush1.bf16.msra.mxu0 %v528
    %10267 = vmatprep.subr.bf16.mxu0 %v537
    %10268 = vmatpush1.bf16.msra.mxu0 %v536
    %10269 = vmatprep.subr.bf16.mxu0 %v545
    %10270 = vmatpush1.bf16.msra.mxu0 %v544
    %10271 = vmatprep.subr.bf16.mxu0 %v553
    %10272 = vmatpush1.bf16.msra.mxu0 %v552
    %10273 = vmatprep.subr.bf16.mxu0 %v561
    %10274 = vmatpush1.bf16.msra.mxu0 %v560
    %10275 = vmatprep.subr.bf16.mxu0 %v569
    %10276 = vmatpush1.bf16.msra.mxu0 %v568
    %10277 = vmatprep.subr.bf16.mxu0 %v577
    %10278 = vmatpush1.bf16.msra.mxu0 %v576
    %10279 = vmatprep.subr.bf16.mxu0 %v585
    %10280 = vmatpush1.bf16.msra.mxu0 %v584
    %10281 = vmatprep.subr.bf16.mxu0 %v593
    %10282 = vmatpush1.bf16.msra.mxu0 %v592
    %10283 = vmatprep.subr.bf16.mxu0 %v601
    %10284 = vmatpush1.bf16.msra.mxu0 %v600
    %10285 = vmatprep.subr.bf16.mxu0 %v609
    %10286 = vmatpush1.bf16.msra.mxu0 %v608
    %10287 = vmatprep.subr.bf16.mxu0 %v617
    %10288 = vmatpush1.bf16.msra.mxu0 %v616
    %10289 = vmatprep.subr.bf16.mxu0 0
    %10290 = vmatpush1.bf16.msra.mxu0 0
    %10291 = vmatprep.subr.bf16.mxu0 0
    %10292 = vmatpush1.bf16.msra.mxu0 0
    %10293 = vmatprep.subr.bf16.mxu0 0
    %10294 = vmatpush1.bf16.msra.mxu0 0
    %10295 = vmatprep.subr.bf16.mxu0 0
    %10296 = vmatpush1.bf16.msra.mxu0 0
    %10297 = vmatprep.mubr.bf16.mxu0 %v10245
    %10298 = vmatmul.mubr.bf16.gmra.mrb[0].mxu0 %v10223
    %v10299 = vpop.f32.mrb[0].mxu0
    %v10300 = vadd.f32 %v140, %v10299
    %v10301 = vpop.f32.mrb[0].mxu0
    %v10302 = vadd.f32 %v144, %v10301
    %v10303 = vpop.f32.mrb[0].mxu0
    %v10304 = vadd.f32 %v140, %v10303
    %v10305 = vpop.f32.mrb[0].mxu0
    %v10306 = vadd.f32 %v144, %v10305
    %10307 = vmatprep.mubr.bf16.mxu0 %v10248
    %10308 = vmatmul.mubr.bf16.gmra.mrb[0].mxu0 %v10225
    %v10309 = vpop.f32.mrb[0].mxu0
    %v10310 = vadd.f32 %v140, %v10309
    %v10311 = vpop.f32.mrb[0].mxu0
    %v10312 = vadd.f32 %v144, %v10311
    %v10313 = vpop.f32.mrb[0].mxu0
    %v10314 = vadd.f32 %v140, %v10313
    %v10315 = vpop.f32.mrb[0].mxu0
    %v10316 = vadd.f32 %v144, %v10315
    %10317 = vmatprep.mubr.bf16.mxu0 %v10251
    %10318 = vmatmul.mubr.bf16.gmra.mrb[0].mxu0 %v10227
    %v10319 = vpop.f32.mrb[0].mxu0
    %v10320 = vadd.f32 %v140, %v10319
    %v10321 = vpop.f32.mrb[0].mxu0
    %v10322 = vadd.f32 %v144, %v10321
    %v10323 = vpop.f32.mrb[0].mxu0
    %v10324 = vadd.f32 %v140, %v10323
    %v10325 = vpop.f32.mrb[0].mxu0
    %v10326 = vadd.f32 %v144, %v10325
    %10327 = vmatprep.mubr.bf16.mxu0 %v10254
    %10328 = vmatmul.mubr.bf16.gmra.mrb[0].mxu0 %v10229
    %v10329 = vpop.f32.mrb[0].mxu0
    %v10330 = vadd.f32 %v140, %v10329
    %v10331 = vpop.f32.mrb[0].mxu0
    %v10332 = vadd.f32 %v144, %v10331
    %v10333 = vpop.f32.mrb[0].mxu0
    %v10334 = vadd.f32 %v140, %v10333
    %v10335 = vpop.f32.mrb[0].mxu0
    %v10336 = vadd.f32 %v144, %v10335
    %10337 = vmatprep.mubr.bf16.mxu0 %v10257
    %10338 = vmatmul.mubr.bf16.gmra.mrb[0].mxu0 %v10231
    %v10339 = vpop.f32.mrb[0].mxu0
    %v10340 = vadd.f32 %v140, %v10339
    %v10341 = vpop.f32.mrb[0].mxu0
    %v10342 = vadd.f32 %v144, %v10341
    %v10343 = vpop.f32.mrb[0].mxu0
    %v10344 = vadd.f32 %v140, %v10343
    %v10345 = vpop.f32.mrb[0].mxu0
    %v10346 = vadd.f32 %v144, %v10345
    %10347 = vmatprep.mubr.bf16.mxu0 %v10260
    %10348 = vmatmul.mubr.bf16.gmra.mrb[0].mxu0 %v10233
    %v10349 = vpop.f32.mrb[0].mxu0
    %v10350 = vadd.f32 %v140, %v10349
    %v10351 = vpop.f32.mrb[0].mxu0
    %v10352 = vadd.f32 %v144, %v10351
    %v10353 = vpop.f32.mrb[0].mxu0
    %v10354 = vadd.f32 %v140, %v10353
    %v10355 = vpop.f32.mrb[0].mxu0
    %v10356 = vadd.f32 %v144, %v10355
    %10357 = vmatprep.mubr.bf16.mxu0 %v10263
    %10358 = vmatmul.mubr.bf16.gmra.mrb[0].mxu0 %v10235
    %v10359 = vpop.f32.mrb[0].mxu0
    %v10360 = vadd.f32 %v140, %v10359
    %v10361 = vpop.f32.mrb[0].mxu0
    %v10362 = vadd.f32 %v144, %v10361
    %v10363 = vpop.f32.mrb[0].mxu0
    %v10364 = vadd.f32 %v140, %v10363
    %v10365 = vpop.f32.mrb[0].mxu0
    %v10366 = vadd.f32 %v144, %v10365
    %10367 = vdwg.mxu0
    %10368 = vmatprep.subr.bf16.mxu0 %v531
    %10369 = vmatpush1.bf16.msra.mxu0 %v530
    %10370 = vmatprep.subr.bf16.mxu0 %v539
    %10371 = vmatpush1.bf16.msra.mxu0 %v538
    %10372 = vmatprep.subr.bf16.mxu0 %v547
    %10373 = vmatpush1.bf16.msra.mxu0 %v546
    %10374 = vmatprep.subr.bf16.mxu0 %v555
    %10375 = vmatpush1.bf16.msra.mxu0 %v554
    %10376 = vmatprep.subr.bf16.mxu0 %v563
    %10377 = vmatpush1.bf16.msra.mxu0 %v562
    %10378 = vmatprep.subr.bf16.mxu0 %v571
    %10379 = vmatpush1.bf16.msra.mxu0 %v570
    %10380 = vmatprep.subr.bf16.mxu0 %v579
    %10381 = vmatpush1.bf16.msra.mxu0 %v578
    %10382 = vmatprep.subr.bf16.mxu0 %v587
    %10383 = vmatpush1.bf16.msra.mxu0 %v586
    %10384 = vmatprep.subr.bf16.mxu0 %v595
    %10385 = vmatpush1.bf16.msra.mxu0 %v594
    %10386 = vmatprep.subr.bf16.mxu0 %v603
    %10387 = vmatpush1.bf16.msra.mxu0 %v602
    %10388 = vmatprep.subr.bf16.mxu0 %v611
    %10389 = vmatpush1.bf16.msra.mxu0 %v610
    %10390 = vmatprep.subr.bf16.mxu0 %v619
    %10391 = vmatpush1.bf16.msra.mxu0 %v618
    %10392 = vmatprep.subr.bf16.mxu0 0
    %10393 = vmatpush1.bf16.msra.mxu0 0
    %10394 = vmatprep.subr.bf16.mxu0 0
    %10395 = vmatpush1.bf16.msra.mxu0 0
    %10396 = vmatprep.subr.bf16.mxu0 0
    %10397 = vmatpush1.bf16.msra.mxu0 0
    %10398 = vmatprep.subr.bf16.mxu0 0
    %10399 = vmatpush1.bf16.msra.mxu0 0
    %10400 = vmatprep.mubr.bf16.mxu0 %v10245
    %10401 = vmatmul.mubr.bf16.gmra.mrb[0].mxu0 %v10223
    %v10402 = vpop.f32.mrb[0].mxu0
    %v10403 = vadd.f32 %v148, %v10402
    %v10404 = vpop.f32.mrb[0].mxu0
    %v10405 = vadd.f32 %v152, %v10404
    %v10406 = vpop.f32.mrb[0].mxu0
    %v10407 = vadd.f32 %v148, %v10406
    %v10408 = vpop.f32.mrb[0].mxu0
    %v10409 = vadd.f32 %v152, %v10408
    %10410 = vmatprep.mubr.bf16.mxu0 %v10248
    %10411 = vmatmul.mubr.bf16.gmra.mrb[0].mxu0 %v10225
    %v10412 = vpop.f32.mrb[0].mxu0
    %v10413 = vadd.f32 %v148, %v10412
    %v10414 = vpop.f32.mrb[0].mxu0
    %v10415 = vadd.f32 %v152, %v10414
    %v10416 = vpop.f32.mrb[0].mxu0
    %v10417 = vadd.f32 %v148, %v10416
    %v10418 = vpop.f32.mrb[0].mxu0
    %v10419 = vadd.f32 %v152, %v10418
    %10420 = vmatprep.mubr.bf16.mxu0 %v10251
    %10421 = vmatmul.mubr.bf16.gmra.mrb[0].mxu0 %v10227
    %v10422 = vpop.f32.mrb[0].mxu0
    %v10423 = vadd.f32 %v148, %v10422
    %v10424 = vpop.f32.mrb[0].mxu0
    %v10425 = vadd.f32 %v152, %v10424
    %v10426 = vpop.f32.mrb[0].mxu0
    %v10427 = vadd.f32 %v148, %v10426
    %v10428 = vpop.f32.mrb[0].mxu0
    %v10429 = vadd.f32 %v152, %v10428
    %10430 = vmatprep.mubr.bf16.mxu0 %v10254
    %10431 = vmatmul.mubr.bf16.gmra.mrb[0].mxu0 %v10229
    %v10432 = vpop.f32.mrb[0].mxu0
    %v10433 = vadd.f32 %v148, %v10432
    %v10434 = vpop.f32.mrb[0].mxu0
    %v10435 = vadd.f32 %v152, %v10434
    %v10436 = vpop.f32.mrb[0].mxu0
    %v10437 = vadd.f32 %v148, %v10436
    %v10438 = vpop.f32.mrb[0].mxu0
    %v10439 = vadd.f32 %v152, %v10438
    %10440 = vmatprep.mubr.bf16.mxu0 %v10257
    %10441 = vmatmul.mubr.bf16.gmra.mrb[0].mxu0 %v10231
    %v10442 = vpop.f32.mrb[0].mxu0
    %v10443 = vadd.f32 %v148, %v10442
    %v10444 = vpop.f32.mrb[0].mxu0
    %v10445 = vadd.f32 %v152, %v10444
    %v10446 = vpop.f32.mrb[0].mxu0
    %v10447 = vadd.f32 %v148, %v10446
    %v10448 = vpop.f32.mrb[0].mxu0
    %v10449 = vadd.f32 %v152, %v10448
    %10450 = vmatprep.mubr.bf16.mxu0 %v10260
    %10451 = vmatmul.mubr.bf16.gmra.mrb[0].mxu0 %v10233
    %v10452 = vpop.f32.mrb[0].mxu0
    %v10453 = vadd.f32 %v148, %v10452
    %v10454 = vpop.f32.mrb[0].mxu0
    %v10455 = vadd.f32 %v152, %v10454
    %v10456 = vpop.f32.mrb[0].mxu0
    %v10457 = vadd.f32 %v148, %v10456
    %v10458 = vpop.f32.mrb[0].mxu0
    %v10459 = vadd.f32 %v152, %v10458
    %10460 = vmatprep.mubr.bf16.mxu0 %v10263
    %10461 = vmatmul.mubr.bf16.gmra.mrb[0].mxu0 %v10235
    %v10462 = vpop.f32.mrb[0].mxu0
    %v10463 = vadd.f32 %v148, %v10462
    %v10464 = vpop.f32.mrb[0].mxu0
    %v10465 = vadd.f32 %v152, %v10464
    %v10466 = vpop.f32.mrb[0].mxu0
    %v10467 = vadd.f32 %v148, %v10466
    %v10468 = vpop.f32.mrb[0].mxu0
    %v10469 = vadd.f32 %v152, %v10468
    %10470 = vdwg.mxu0
    %10471 = vmatprep.subr.bf16.mxu0 %v533
    %10472 = vmatpush1.bf16.msra.mxu0 %v532
    %10473 = vmatprep.subr.bf16.mxu0 %v541
    %10474 = vmatpush1.bf16.msra.mxu0 %v540
    %10475 = vmatprep.subr.bf16.mxu0 %v549
    %10476 = vmatpush1.bf16.msra.mxu0 %v548
    %10477 = vmatprep.subr.bf16.mxu0 %v557
    %10478 = vmatpush1.bf16.msra.mxu0 %v556
    %10479 = vmatprep.subr.bf16.mxu0 %v565
    %10480 = vmatpush1.bf16.msra.mxu0 %v564
    %10481 = vmatprep.subr.bf16.mxu0 %v573
    %10482 = vmatpush1.bf16.msra.mxu0 %v572
    %10483 = vmatprep.subr.bf16.mxu0 %v581
    %10484 = vmatpush1.bf16.msra.mxu0 %v580
    %10485 = vmatprep.subr.bf16.mxu0 %v589
    %10486 = vmatpush1.bf16.msra.mxu0 %v588
    %10487 = vmatprep.subr.bf16.mxu0 %v597
    %10488 = vmatpush1.bf16.msra.mxu0 %v596
    %10489 = vmatprep.subr.bf16.mxu0 %v605
    %10490 = vmatpush1.bf16.msra.mxu0 %v604
    %10491 = vmatprep.subr.bf16.mxu0 %v613
    %10492 = vmatpush1.bf16.msra.mxu0 %v612
    %10493 = vmatprep.subr.bf16.mxu0 %v621
    %10494 = vmatpush1.bf16.msra.mxu0 %v620
    %10495 = vmatprep.subr.bf16.mxu0 0
    %10496 = vmatpush1.bf16.msra.mxu0 0
    %10497 = vmatprep.subr.bf16.mxu0 0
    %10498 = vmatpush1.bf16.msra.mxu0 0
    %10499 = vmatprep.subr.bf16.mxu0 0
    %10500 = vmatpush1.bf16.msra.mxu0 0
    %10501 = vmatprep.subr.bf16.mxu0 0
    %10502 = vmatpush1.bf16.msra.mxu0 0
    %10503 = vmatprep.mubr.bf16.mxu0 %v10245
    %10504 = vmatmul.mubr.bf16.gmra.mrb[0].mxu0 %v10223
    %v10505 = vpop.f32.mrb[0].mxu0
    %v10506 = vadd.f32 %v156, %v10505
    %v10507 = vpop.f32.mrb[0].mxu0
    %v10508 = vadd.f32 %v160, %v10507
    %v10509 = vpop.f32.mrb[0].mxu0
    %v10510 = vadd.f32 %v156, %v10509
    %v10511 = vpop.f32.mrb[0].mxu0
    %v10512 = vadd.f32 %v160, %v10511
    %10513 = vmatprep.mubr.bf16.mxu0 %v10248
    %10514 = vmatmul.mubr.bf16.gmra.mrb[0].mxu0 %v10225
    %v10515 = vpop.f32.mrb[0].mxu0
    %v10516 = vadd.f32 %v156, %v10515
    %v10517 = vpop.f32.mrb[0].mxu0
    %v10518 = vadd.f32 %v160, %v10517
    %v10519 = vpop.f32.mrb[0].mxu0
    %v10520 = vadd.f32 %v156, %v10519
    %v10521 = vpop.f32.mrb[0].mxu0
    %v10522 = vadd.f32 %v160, %v10521
    %10523 = vmatprep.mubr.bf16.mxu0 %v10251
    %10524 = vmatmul.mubr.bf16.gmra.mrb[0].mxu0 %v10227
    %v10525 = vpop.f32.mrb[0].mxu0
    %v10526 = vadd.f32 %v156, %v10525
    %v10527 = vpop.f32.mrb[0].mxu0
    %v10528 = vadd.f32 %v160, %v10527
    %v10529 = vpop.f32.mrb[0].mxu0
    %v10530 = vadd.f32 %v156, %v10529
    %v10531 = vpop.f32.mrb[0].mxu0
    %v10532 = vadd.f32 %v160, %v10531
    %10533 = vmatprep.mubr.bf16.mxu0 %v10254
    %10534 = vmatmul.mubr.bf16.gmra.mrb[0].mxu0 %v10229
    %v10535 = vpop.f32.mrb[0].mxu0
    %v10536 = vadd.f32 %v156, %v10535
    %v10537 = vpop.f32.mrb[0].mxu0
    %v10538 = vadd.f32 %v160, %v10537
    %v10539 = vpop.f32.mrb[0].mxu0
    %v10540 = vadd.f32 %v156, %v10539
    %v10541 = vpop.f32.mrb[0].mxu0
    %v10542 = vadd.f32 %v160, %v10541
    %10543 = vmatprep.mubr.bf16.mxu0 %v10257
    %10544 = vmatmul.mubr.bf16.gmra.mrb[0].mxu0 %v10231
    %v10545 = vpop.f32.mrb[0].mxu0
    %v10546 = vadd.f32 %v156, %v10545
    %v10547 = vpop.f32.mrb[0].mxu0
    %v10548 = vadd.f32 %v160, %v10547
    %v10549 = vpop.f32.mrb[0].mxu0
    %v10550 = vadd.f32 %v156, %v10549
    %v10551 = vpop.f32.mrb[0].mxu0
    %v10552 = vadd.f32 %v160, %v10551
    %10553 = vmatprep.mubr.bf16.mxu0 %v10260
    %10554 = vmatmul.mubr.bf16.gmra.mrb[0].mxu0 %v10233
    %v10555 = vpop.f32.mrb[0].mxu0
    %v10556 = vadd.f32 %v156, %v10555
    %v10557 = vpop.f32.mrb[0].mxu0
    %v10558 = vadd.f32 %v160, %v10557
    %v10559 = vpop.f32.mrb[0].mxu0
    %v10560 = vadd.f32 %v156, %v10559
    %v10561 = vpop.f32.mrb[0].mxu0
    %v10562 = vadd.f32 %v160, %v10561
    %10563 = vmatprep.mubr.bf16.mxu0 %v10263
    %10564 = vmatmul.mubr.bf16.gmra.mrb[0].mxu0 %v10235
    %v10565 = vpop.f32.mrb[0].mxu0
    %v10566 = vadd.f32 %v156, %v10565
    %v10567 = vpop.f32.mrb[0].mxu0
    %v10568 = vadd.f32 %v160, %v10567
    %v10569 = vpop.f32.mrb[0].mxu0
    %v10570 = vadd.f32 %v156, %v10569
    %v10571 = vpop.f32.mrb[0].mxu0
    %v10572 = vadd.f32 %v160, %v10571
    %10573 = vdwg.mxu0
    %10574 = vmatprep.subr.bf16.mxu0 %v535
    %10575 = vmatpush1.bf16.msra.mxu0 %v534
    %10576 = vmatprep.subr.bf16.mxu0 %v543
    %10577 = vmatpush1.bf16.msra.mxu0 %v542
    %10578 = vmatprep.subr.bf16.mxu0 %v551
    %10579 = vmatpush1.bf16.msra.mxu0 %v550
    %10580 = vmatprep.subr.bf16.mxu0 %v559
    %10581 = vmatpush1.bf16.msra.mxu0 %v558
    %10582 = vmatprep.subr.bf16.mxu0 %v567
    %10583 = vmatpush1.bf16.msra.mxu0 %v566
    %10584 = vmatprep.subr.bf16.mxu0 %v575
    %10585 = vmatpush1.bf16.msra.mxu0 %v574
    %10586 = vmatprep.subr.bf16.mxu0 %v583
    %10587 = vmatpush1.bf16.msra.mxu0 %v582
    %10588 = vmatprep.subr.bf16.mxu0 %v591
    %10589 = vmatpush1.bf16.msra.mxu0 %v590
    %10590 = vmatprep.subr.bf16.mxu0 %v599
    %10591 = vmatpush1.bf16.msra.mxu0 %v598
    %10592 = vmatprep.subr.bf16.mxu0 %v607
    %10593 = vmatpush1.bf16.msra.mxu0 %v606
    %10594 = vmatprep.subr.bf16.mxu0 %v615
    %10595 = vmatpush1.bf16.msra.mxu0 %v614
    %10596 = vmatprep.subr.bf16.mxu0 %v623
    %10597 = vmatpush1.bf16.msra.mxu0 %v622
    %10598 = vmatprep.subr.bf16.mxu0 0
    %10599 = vmatpush1.bf16.msra.mxu0 0
    %10600 = vmatprep.subr.bf16.mxu0 0
    %10601 = vmatpush1.bf16.msra.mxu0 0
    %10602 = vmatprep.subr.bf16.mxu0 0
    %10603 = vmatpush1.bf16.msra.mxu0 0
    %10604 = vmatprep.subr.bf16.mxu0 0
    %10605 = vmatpush1.bf16.msra.mxu0 0
    %10606 = vmatprep.mubr.bf16.mxu0 %v10245
    %10607 = vmatmul.mubr.bf16.gmra.mrb[0].mxu0 %v10223
    %v10608 = vpop.f32.mrb[0].mxu0
    %v10609 = vadd.f32 %v164, %v10608
    %v10610 = vpop.f32.mrb[0].mxu0
    %v10611 = vadd.f32 %v168, %v10610
    %v10612 = vpop.f32.mrb[0].mxu0
    %v10613 = vadd.f32 %v164, %v10612
    %v10614 = vpop.f32.mrb[0].mxu0
    %v10615 = vadd.f32 %v168, %v10614
    %10616 = vmatprep.mubr.bf16.mxu0 %v10248
    %10617 = vmatmul.mubr.bf16.gmra.mrb[0].mxu0 %v10225
    %v10618 = vpop.f32.mrb[0].mxu0
    %v10619 = vadd.f32 %v164, %v10618
    %v10620 = vpop.f32.mrb[0].mxu0
    %v10621 = vadd.f32 %v168, %v10620
    %v10622 = vpop.f32.mrb[0].mxu0
    %v10623 = vadd.f32 %v164, %v10622
    %v10624 = vpop.f32.mrb[0].mxu0
    %v10625 = vadd.f32 %v168, %v10624
    %10626 = vmatprep.mubr.bf16.mxu0 %v10251
    %10627 = vmatmul.mubr.bf16.gmra.mrb[0].mxu0 %v10227
    %v10628 = vpop.f32.mrb[0].mxu0
    %v10629 = vadd.f32 %v164, %v10628
    %v10630 = vpop.f32.mrb[0].mxu0
    %v10631 = vadd.f32 %v168, %v10630
    %v10632 = vpop.f32.mrb[0].mxu0
    %v10633 = vadd.f32 %v164, %v10632
    %v10634 = vpop.f32.mrb[0].mxu0
    %v10635 = vadd.f32 %v168, %v10634
    %10636 = vmatprep.mubr.bf16.mxu0 %v10254
    %10637 = vmatmul.mubr.bf16.gmra.mrb[0].mxu0 %v10229
    %v10638 = vpop.f32.mrb[0].mxu0
    %v10639 = vadd.f32 %v164, %v10638
    %v10640 = vpop.f32.mrb[0].mxu0
    %v10641 = vadd.f32 %v168, %v10640
    %v10642 = vpop.f32.mrb[0].mxu0
    %v10643 = vadd.f32 %v164, %v10642
    %v10644 = vpop.f32.mrb[0].mxu0
    %v10645 = vadd.f32 %v168, %v10644
    %10646 = vmatprep.mubr.bf16.mxu0 %v10257
    %10647 = vmatmul.mubr.bf16.gmra.mrb[0].mxu0 %v10231
    %v10648 = vpop.f32.mrb[0].mxu0
    %v10649 = vadd.f32 %v164, %v10648
    %v10650 = vpop.f32.mrb[0].mxu0
    %v10651 = vadd.f32 %v168, %v10650
    %v10652 = vpop.f32.mrb[0].mxu0
    %v10653 = vadd.f32 %v164, %v10652
    %v10654 = vpop.f32.mrb[0].mxu0
    %v10655 = vadd.f32 %v168, %v10654
    %10656 = vmatprep.mubr.bf16.mxu0 %v10260
    %10657 = vmatmul.mubr.bf16.gmra.mrb[0].mxu0 %v10233
    %v10658 = vpop.f32.mrb[0].mxu0
    %v10659 = vadd.f32 %v164, %v10658
    %v10660 = vpop.f32.mrb[0].mxu0
    %v10661 = vadd.f32 %v168, %v10660
    %v10662 = vpop.f32.mrb[0].mxu0
    %v10663 = vadd.f32 %v164, %v10662
    %v10664 = vpop.f32.mrb[0].mxu0
    %v10665 = vadd.f32 %v168, %v10664
    %10666 = vmatprep.mubr.bf16.mxu0 %v10263
    %10667 = vmatmul.mubr.bf16.gmra.mrb[0].mxu0 %v10235
    %v10668 = vpop.f32.mrb[0].mxu0
    %v10669 = vadd.f32 %v164, %v10668
    %v10670 = vpop.f32.mrb[0].mxu0
    %v10671 = vadd.f32 %v168, %v10670
    %v10672 = vpop.f32.mrb[0].mxu0
    %v10673 = vadd.f32 %v164, %v10672
    %v10674 = vpop.f32.mrb[0].mxu0
    %v10675 = vadd.f32 %v168, %v10674
    %10676 = vdwg.mxu0
    %v10677 = vmax.f32 %v10300, 0.0
    %v10678 = vmax.f32 %v10302, 0.0
    %v10679 = vmax.f32 %v10403, 0.0
    %v10680 = vmax.f32 %v10405, 0.0
    %v10681 = vmax.f32 %v10506, 0.0
    %v10682 = vmax.f32 %v10508, 0.0
    %v10683 = vmax.f32 %v10609, 0.0
    %v10684 = vmax.f32 %v10611, 0.0
    %v10685 = vmax.f32 %v10304, 0.0
    %v10686 = vmax.f32 %v10306, 0.0
    %v10687 = vmax.f32 %v10407, 0.0
    %v10688 = vmax.f32 %v10409, 0.0
    %v10689 = vmax.f32 %v10510, 0.0
    %v10690 = vmax.f32 %v10512, 0.0
    %v10691 = vmax.f32 %v10613, 0.0
    %v10692 = vmax.f32 %v10615, 0.0
    %v10693 = vmax.f32 %v10310, 0.0
    %v10694 = vmax.f32 %v10312, 0.0
    %v10695 = vmax.f32 %v10413, 0.0
    %v10696 = vmax.f32 %v10415, 0.0
    %v10697 = vmax.f32 %v10516, 0.0
    %v10698 = vmax.f32 %v10518, 0.0
    %v10699 = vmax.f32 %v10619, 0.0
    %v10700 = vmax.f32 %v10621, 0.0
    %v10701 = vmax.f32 %v10314, 0.0
    %v10702 = vmax.f32 %v10316, 0.0
    %v10703 = vmax.f32 %v10417, 0.0
    %v10704 = vmax.f32 %v10419, 0.0
    %v10705 = vmax.f32 %v10520, 0.0
    %v10706 = vmax.f32 %v10522, 0.0
    %v10707 = vmax.f32 %v10623, 0.0
    %v10708 = vmax.f32 %v10625, 0.0
    %v10709 = vmax.f32 %v10320, 0.0
    %v10710 = vmax.f32 %v10322, 0.0
    %v10711 = vmax.f32 %v10423, 0.0
    %v10712 = vmax.f32 %v10425, 0.0
    %v10713 = vmax.f32 %v10526, 0.0
    %v10714 = vmax.f32 %v10528, 0.0
    %v10715 = vmax.f32 %v10629, 0.0
    %v10716 = vmax.f32 %v10631, 0.0
    %v10717 = vmax.f32 %v10324, 0.0
    %v10718 = vmax.f32 %v10326, 0.0
    %v10719 = vmax.f32 %v10427, 0.0
    %v10720 = vmax.f32 %v10429, 0.0
    %v10721 = vmax.f32 %v10530, 0.0
    %v10722 = vmax.f32 %v10532, 0.0
    %v10723 = vmax.f32 %v10633, 0.0
    %v10724 = vmax.f32 %v10635, 0.0
    %v10725 = vmax.f32 %v10330, 0.0
    %v10726 = vmax.f32 %v10332, 0.0
    %v10727 = vmax.f32 %v10433, 0.0
    %v10728 = vmax.f32 %v10435, 0.0
    %v10729 = vmax.f32 %v10536, 0.0
    %v10730 = vmax.f32 %v10538, 0.0
    %v10731 = vmax.f32 %v10639, 0.0
    %v10732 = vmax.f32 %v10641, 0.0
    %v10733 = vmax.f32 %v10334, 0.0
    %v10734 = vmax.f32 %v10336, 0.0
    %v10735 = vmax.f32 %v10437, 0.0
    %v10736 = vmax.f32 %v10439, 0.0
    %v10737 = vmax.f32 %v10540, 0.0
    %v10738 = vmax.f32 %v10542, 0.0
    %v10739 = vmax.f32 %v10643, 0.0
    %v10740 = vmax.f32 %v10645, 0.0
    %v10741 = vmax.f32 %v10340, 0.0
    %v10742 = vmax.f32 %v10342, 0.0
    %v10743 = vmax.f32 %v10443, 0.0
    %v10744 = vmax.f32 %v10445, 0.0
    %v10745 = vmax.f32 %v10546, 0.0
    %v10746 = vmax.f32 %v10548, 0.0
    %v10747 = vmax.f32 %v10649, 0.0
    %v10748 = vmax.f32 %v10651, 0.0
    %v10749 = vmax.f32 %v10344, 0.0
    %v10750 = vmax.f32 %v10346, 0.0
    %v10751 = vmax.f32 %v10447, 0.0
    %v10752 = vmax.f32 %v10449, 0.0
    %v10753 = vmax.f32 %v10550, 0.0
    %v10754 = vmax.f32 %v10552, 0.0
    %v10755 = vmax.f32 %v10653, 0.0
    %v10756 = vmax.f32 %v10655, 0.0
    %v10757 = vmax.f32 %v10350, 0.0
    %v10758 = vmax.f32 %v10352, 0.0
    %v10759 = vmax.f32 %v10453, 0.0
    %v10760 = vmax.f32 %v10455, 0.0
    %v10761 = vmax.f32 %v10556, 0.0
    %v10762 = vmax.f32 %v10558, 0.0
    %v10763 = vmax.f32 %v10659, 0.0
    %v10764 = vmax.f32 %v10661, 0.0
    %v10765 = vmax.f32 %v10354, 0.0
    %v10766 = vmax.f32 %v10356, 0.0
    %v10767 = vmax.f32 %v10457, 0.0
    %v10768 = vmax.f32 %v10459, 0.0
    %v10769 = vmax.f32 %v10560, 0.0
    %v10770 = vmax.f32 %v10562, 0.0
    %v10771 = vmax.f32 %v10663, 0.0
    %v10772 = vmax.f32 %v10665, 0.0
    %v10773 = vmax.f32 %v10360, 0.0
    %v10774 = vmax.f32 %v10362, 0.0
    %v10775 = vmax.f32 %v10463, 0.0
    %v10776 = vmax.f32 %v10465, 0.0
    %v10777 = vmax.f32 %v10566, 0.0
    %v10778 = vmax.f32 %v10568, 0.0
    %v10779 = vmax.f32 %v10669, 0.0
    %v10780 = vmax.f32 %v10671, 0.0
    %v10781 = vmax.f32 %v10364, 0.0
    %v10782 = vmax.f32 %v10366, 0.0
    %v10783 = vmax.f32 %v10467, 0.0
    %v10784 = vmax.f32 %v10469, 0.0
    %v10785 = vmax.f32 %v10570, 0.0
    %v10786 = vmax.f32 %v10572, 0.0
    %v10787 = vmax.f32 %v10673, 0.0
    %v10788 = vmax.f32 %v10675, 0.0
    %v10789 = vadd.f32 %v10677, %v10693
    %v10790 = vadd.f32 %v10678, %v10694
    %v10791 = vadd.f32 %v10679, %v10695
    %v10792 = vadd.f32 %v10680, %v10696
    %v10793 = vadd.f32 %v10681, %v10697
    %v10794 = vadd.f32 %v10682, %v10698
    %v10795 = vadd.f32 %v10683, %v10699
    %v10796 = vadd.f32 %v10684, %v10700
    %v10797 = vadd.f32 %v10685, %v10701
    %v10798 = vadd.f32 %v10686, %v10702
    %v10799 = vadd.f32 %v10687, %v10703
    %v10800 = vadd.f32 %v10688, %v10704
    %v10801 = vadd.f32 %v10689, %v10705
    %v10802 = vadd.f32 %v10690, %v10706
    %v10803 = vadd.f32 %v10691, %v10707
    %v10804 = vadd.f32 %v10692, %v10708
    %v10805 = vadd.f32 %v10789, %v10709
    %v10806 = vadd.f32 %v10790, %v10710
    %v10807 = vadd.f32 %v10791, %v10711
    %v10808 = vadd.f32 %v10792, %v10712
    %v10809 = vadd.f32 %v10793, %v10713
    %v10810 = vadd.f32 %v10794, %v10714
    %v10811 = vadd.f32 %v10795, %v10715
    %v10812 = vadd.f32 %v10796, %v10716
    %v10813 = vadd.f32 %v10797, %v10717
    %v10814 = vadd.f32 %v10798, %v10718
    %v10815 = vadd.f32 %v10799, %v10719
    %v10816 = vadd.f32 %v10800, %v10720
    %v10817 = vadd.f32 %v10801, %v10721
    %v10818 = vadd.f32 %v10802, %v10722
    %v10819 = vadd.f32 %v10803, %v10723
    %v10820 = vadd.f32 %v10804, %v10724
    %v10821 = vadd.f32 %v10805, %v10725
    %v10822 = vadd.f32 %v10806, %v10726
    %v10823 = vadd.f32 %v10807, %v10727
    %v10824 = vadd.f32 %v10808, %v10728
    %v10825 = vadd.f32 %v10809, %v10729
    %v10826 = vadd.f32 %v10810, %v10730
    %v10827 = vadd.f32 %v10811, %v10731
    %v10828 = vadd.f32 %v10812, %v10732
    %v10829 = vadd.f32 %v10813, %v10733
    %v10830 = vadd.f32 %v10814, %v10734
    %v10831 = vadd.f32 %v10815, %v10735
    %v10832 = vadd.f32 %v10816, %v10736
    %v10833 = vadd.f32 %v10817, %v10737
    %v10834 = vadd.f32 %v10818, %v10738
    %v10835 = vadd.f32 %v10819, %v10739
    %v10836 = vadd.f32 %v10820, %v10740
    %v10837 = vadd.f32 %v10821, %v10741
    %v10838 = vadd.f32 %v10822, %v10742
    %v10839 = vadd.f32 %v10823, %v10743
    %v10840 = vadd.f32 %v10824, %v10744
    %v10841 = vadd.f32 %v10825, %v10745
    %v10842 = vadd.f32 %v10826, %v10746
    %v10843 = vadd.f32 %v10827, %v10747
    %v10844 = vadd.f32 %v10828, %v10748
    %v10845 = vadd.f32 %v10829, %v10749
    %v10846 = vadd.f32 %v10830, %v10750
    %v10847 = vadd.f32 %v10831, %v10751
    %v10848 = vadd.f32 %v10832, %v10752
    %v10849 = vadd.f32 %v10833, %v10753
    %v10850 = vadd.f32 %v10834, %v10754
    %v10851 = vadd.f32 %v10835, %v10755
    %v10852 = vadd.f32 %v10836, %v10756
    %v10853 = vadd.f32 %v10837, %v10757
    %v10854 = vadd.f32 %v10838, %v10758
    %v10855 = vadd.f32 %v10839, %v10759
    %v10856 = vadd.f32 %v10840, %v10760
    %v10857 = vadd.f32 %v10841, %v10761
    %v10858 = vadd.f32 %v10842, %v10762
    %v10859 = vadd.f32 %v10843, %v10763
    %v10860 = vadd.f32 %v10844, %v10764
    %v10861 = vadd.f32 %v10845, %v10765
    %v10862 = vadd.f32 %v10846, %v10766
    %v10863 = vadd.f32 %v10847, %v10767
    %v10864 = vadd.f32 %v10848, %v10768
    %v10865 = vadd.f32 %v10849, %v10769
    %v10866 = vadd.f32 %v10850, %v10770
    %v10867 = vadd.f32 %v10851, %v10771
    %v10868 = vadd.f32 %v10852, %v10772
    %v10869 = vadd.f32 %v10853, %v10773
    %v10870 = vadd.f32 %v10854, %v10774
    %v10871 = vadd.f32 %v10855, %v10775
    %v10872 = vadd.f32 %v10856, %v10776
    %v10873 = vadd.f32 %v10857, %v10777
    %v10874 = vadd.f32 %v10858, %v10778
    %v10875 = vadd.f32 %v10859, %v10779
    %v10876 = vadd.f32 %v10860, %v10780
    %v10877 = vadd.f32 %v10861, %v10781
    %v10878 = vadd.f32 %v10862, %v10782
    %v10879 = vadd.f32 %v10863, %v10783
    %v10880 = vadd.f32 %v10864, %v10784
    %v10881 = vadd.f32 %v10865, %v10785
    %v10882 = vadd.f32 %v10866, %v10786
    %v10883 = vadd.f32 %v10867, %v10787
    %v10884 = vadd.f32 %v10868, %v10788
    %v10885 = vadd.f32 %v10150, %v10869
    %v10886 = vadd.f32 %v10151, %v10870
    %v10887 = vadd.f32 %v10152, %v10871
    %v10888 = vadd.f32 %v10153, %v10872
    %v10889 = vadd.f32 %v10154, %v10873
    %v10890 = vadd.f32 %v10155, %v10874
    %v10891 = vadd.f32 %v10156, %v10875
    %v10892 = vadd.f32 %v10157, %v10876
    %v10893 = vadd.f32 %v10158, %v10877
    %v10894 = vadd.f32 %v10159, %v10878
    %v10895 = vadd.f32 %v10160, %v10879
    %v10896 = vadd.f32 %v10161, %v10880
    %v10897 = vadd.f32 %v10162, %v10881
    %v10898 = vadd.f32 %v10163, %v10882
    %v10899 = vadd.f32 %v10164, %v10883
    %v10900 = vadd.f32 %v10165, %v10884
    %v10901 = vld [vmem:[%s3] sm:$0xff]
    %v10902 = vld [vmem:[%s3 + $0x8] sm:$0xff]
    %v10903 = vld [vmem:[%s3 + $0x10] sm:$0xff]
    %v10904 = vld [vmem:[%s3 + $0x18] sm:$0xff]
    %v10905 = vld [vmem:[%s3 + $0x20] sm:$0xff]
    %v10906 = vld [vmem:[%s3 + $0x28] sm:$0xff]
    %v10907 = vld [vmem:[%s3 + $0x30] sm:$0xff]
    %v10908 = vld [vmem:[%s3 + $0x38] sm:$0xff]
    %v10909 = vld [vmem:[%s3 + $0x40] sm:$0xff]
    %v10910 = vld [vmem:[%s3 + $0x48] sm:$0xff]
    %v10911 = vld [vmem:[%s3 + $0x50] sm:$0xff]
    %v10912 = vld [vmem:[%s3 + $0x58] sm:$0xff]
    %v10913 = vld [vmem:[%s3 + $0x60] sm:$0xff]
    %v10914 = vld [vmem:[%s3 + $0x68] sm:$0xff]
    %v10915 = vld [vmem:[%s3 + $0x70] sm:$0xff]
    %v10916 = vld [vmem:[%s3 + $0x78] sm:$0xff]
    %v10917 = vld [vmem:[%s3 + $0x80] sm:$0xff]
    %v10918 = vld [vmem:[%s3 + $0x88] sm:$0xff]
    %v10919 = vld [vmem:[%s3 + $0x90] sm:$0xff]
    %v10920 = vld [vmem:[%s3 + $0x98] sm:$0xff]
    %v10921 = vld [vmem:[%s3 + $0xa0] sm:$0xff]
    %v10922 = vld [vmem:[%s3 + $0xa8] sm:$0xff]
    %v10923 = vld [vmem:[%s3 + $0xb0] sm:$0xff]
    %v10924 = vld [vmem:[%s3 + $0xb8] sm:$0xff]
    %v10925 = vld [vmem:[%s3 + $0xc0] sm:$0xff]
    %v10926 = vld [vmem:[%s3 + $0xc8] sm:$0xff]
    %v10927 = vld [vmem:[%s3 + $0xd0] sm:$0xff]
    %v10928 = vld [vmem:[%s3 + $0xd8] sm:$0xff]
    %v10929 = vld [vmem:[%s3 + $0xe0] sm:$0xff]
    %v10930 = vld [vmem:[%s3 + $0xe8] sm:$0xff]
    %v10931 = vld [vmem:[%s3 + $0xf0] sm:$0xff]
    %v10932 = vld [vmem:[%s3 + $0xf8] sm:$0xff]
    %v10933 = vld [vmem:[%s3 + $0x100] sm:$0xff]
    %v10934 = vld [vmem:[%s3 + $0x108] sm:$0xff]
    %v10935 = vld [vmem:[%s3 + $0x110] sm:$0xff]
    %v10936 = vld [vmem:[%s3 + $0x118] sm:$0xff]
    %v10937 = vld [vmem:[%s3 + $0x120] sm:$0xff]
    %v10938 = vld [vmem:[%s3 + $0x128] sm:$0xff]
    %v10939 = vld [vmem:[%s3 + $0x130] sm:$0xff]
    %v10940 = vld [vmem:[%s3 + $0x138] sm:$0xff]
    %v10941 = vld [vmem:[%s3 + $0x140] sm:$0xff]
    %v10942 = vld [vmem:[%s3 + $0x148] sm:$0xff]
    %v10943 = vld [vmem:[%s3 + $0x150] sm:$0xff]
    %v10944 = vld [vmem:[%s3 + $0x158] sm:$0xff]
    %v10945 = vld [vmem:[%s3 + $0x160] sm:$0xff]
    %v10946 = vld [vmem:[%s3 + $0x168] sm:$0xff]
    %v10947 = vld [vmem:[%s3 + $0x170] sm:$0xff]
    %v10948 = vld [vmem:[%s3 + $0x178] sm:$0xff]
    %v10949 = vld [vmem:[%s3 + $0x180] sm:$0xff]
    %v10950 = vld [vmem:[%s3 + $0x188] sm:$0xff]
    %v10951 = vld [vmem:[%s3 + $0x190] sm:$0xff]
    %v10952 = vld [vmem:[%s3 + $0x198] sm:$0xff]
    %v10953 = vld [vmem:[%s3 + $0x1a0] sm:$0xff]
    %v10954 = vld [vmem:[%s3 + $0x1a8] sm:$0xff]
    %v10955 = vld [vmem:[%s3 + $0x1b0] sm:$0xff]
    %v10956 = vld [vmem:[%s3 + $0x1b8] sm:$0xff]
    %v10957 = vld [vmem:[%s3 + $0x1c0] sm:$0xff]
    %v10958 = vld [vmem:[%s3 + $0x1c8] sm:$0xff]
    %v10959 = vld [vmem:[%s3 + $0x1d0] sm:$0xff]
    %v10960 = vld [vmem:[%s3 + $0x1d8] sm:$0xff]
    %v10961 = vld [vmem:[%s3 + $0x1e0] sm:$0xff]
    %v10962 = vld [vmem:[%s3 + $0x1e8] sm:$0xff]
    %v10963 = vld [vmem:[%s3 + $0x1f0] sm:$0xff]
    %v10964 = vld [vmem:[%s3 + $0x1f8] sm:$0xff]
    %v10965 = vld [vmem:[%s3 + $0x200] sm:$0xff]
    %v10966 = vld [vmem:[%s3 + $0x208] sm:$0xff]
    %v10967 = vld [vmem:[%s3 + $0x210] sm:$0xff]
    %v10968 = vld [vmem:[%s3 + $0x218] sm:$0xff]
    %v10969 = vld [vmem:[%s3 + $0x220] sm:$0xff]
    %v10970 = vld [vmem:[%s3 + $0x228] sm:$0xff]
    %v10971 = vld [vmem:[%s3 + $0x230] sm:$0xff]
    %v10972 = vld [vmem:[%s3 + $0x238] sm:$0xff]
    %v10973 = vld [vmem:[%s3 + $0x240] sm:$0xff]
    %v10974 = vld [vmem:[%s3 + $0x248] sm:$0xff]
    %v10975 = vld [vmem:[%s3 + $0x250] sm:$0xff]
    %v10976 = vld [vmem:[%s3 + $0x258] sm:$0xff]
    %v10977 = vld [vmem:[%s3 + $0x260] sm:$0xff]
    %v10978 = vld [vmem:[%s3 + $0x268] sm:$0xff]
    %v10979 = vld [vmem:[%s3 + $0x270] sm:$0xff]
    %v10980 = vld [vmem:[%s3 + $0x278] sm:$0xff]
    %v10981 = vld [vmem:[%s3 + $0x280] sm:$0xff]
    %v10982 = vld [vmem:[%s3 + $0x288] sm:$0xff]
    %v10983 = vld [vmem:[%s3 + $0x290] sm:$0xff]
    %v10984 = vld [vmem:[%s3 + $0x298] sm:$0xff]
    %v10985 = vld [vmem:[%s3 + $0x2a0] sm:$0xff]
    %v10986 = vld [vmem:[%s3 + $0x2a8] sm:$0xff]
    %v10987 = vld [vmem:[%s3 + $0x2b0] sm:$0xff]
    %v10988 = vld [vmem:[%s3 + $0x2b8] sm:$0xff]
    %v10989 = vld [vmem:[%s3 + $0x2c0] sm:$0xff]
    %v10990 = vld [vmem:[%s3 + $0x2c8] sm:$0xff]
    %v10991 = vld [vmem:[%s3 + $0x2d0] sm:$0xff]
    %v10992 = vld [vmem:[%s3 + $0x2d8] sm:$0xff]
    %v10993 = vld [vmem:[%s3 + $0x2e0] sm:$0xff]
    %v10994 = vld [vmem:[%s3 + $0x2e8] sm:$0xff]
    %v10995 = vld [vmem:[%s3 + $0x2f0] sm:$0xff]
    %v10996 = vld [vmem:[%s3 + $0x2f8] sm:$0xff]
    %v10997 = vld [vmem:[%s3 + $0x300] sm:$0xff]
    %v10998 = vld [vmem:[%s3 + $0x308] sm:$0xff]
    %v10999 = vld [vmem:[%s3 + $0x310] sm:$0xff]
    %v11000 = vld [vmem:[%s3 + $0x318] sm:$0xff]
    %v11001 = vld [vmem:[%s3 + $0x320] sm:$0xff]
    %v11002 = vld [vmem:[%s3 + $0x328] sm:$0xff]
    %v11003 = vld [vmem:[%s3 + $0x330] sm:$0xff]
    %v11004 = vld [vmem:[%s3 + $0x338] sm:$0xff]
    %v11005 = vld [vmem:[%s3 + $0x340] sm:$0xff]
    %v11006 = vld [vmem:[%s3 + $0x348] sm:$0xff]
    %v11007 = vld [vmem:[%s3 + $0x350] sm:$0xff]
    %v11008 = vld [vmem:[%s3 + $0x358] sm:$0xff]
    %v11009 = vld [vmem:[%s3 + $0x360] sm:$0xff]
    %v11010 = vld [vmem:[%s3 + $0x368] sm:$0xff]
    %v11011 = vld [vmem:[%s3 + $0x370] sm:$0xff]
    %v11012 = vld [vmem:[%s3 + $0x378] sm:$0xff]
    %v11013 = vld [vmem:[%s3 + $0x380] sm:$0xff]
    %v11014 = vld [vmem:[%s3 + $0x388] sm:$0xff]
    %v11015 = vld [vmem:[%s3 + $0x390] sm:$0xff]
    %v11016 = vld [vmem:[%s3 + $0x398] sm:$0xff]
    %v11017 = vld [vmem:[%s3 + $0x3a0] sm:$0xff]
    %v11018 = vld [vmem:[%s3 + $0x3a8] sm:$0xff]
    %v11019 = vld [vmem:[%s3 + $0x3b0] sm:$0xff]
    %v11020 = vld [vmem:[%s3 + $0x3b8] sm:$0xff]
    %v11021 = vld [vmem:[%s3 + $0x3c0] sm:$0xff]
    %v11022 = vld [vmem:[%s3 + $0x3c8] sm:$0xff]
    %v11023 = vld [vmem:[%s3 + $0x3d0] sm:$0xff]
    %v11024 = vld [vmem:[%s3 + $0x3d8] sm:$0xff]
    %v11025 = vld [vmem:[%s3 + $0x3e0] sm:$0xff]
    %v11026 = vld [vmem:[%s3 + $0x3e8] sm:$0xff]
    %v11027 = vld [vmem:[%s3 + $0x3f0] sm:$0xff]
    %v11028 = vld [vmem:[%s3 + $0x3f8] sm:$0xff]
    %v11029 = vld [vmem:[%s4] sm:$0xff]
    %v11030 = vld [vmem:[%s4 + $0x8] sm:$0xff]
    %v11031 = vld [vmem:[%s4 + $0x10] sm:$0xff]
    %v11032 = vld [vmem:[%s4 + $0x18] sm:$0xff]
    %v11033 = vld [vmem:[%s4 + $0x20] sm:$0xff]
    %v11034 = vld [vmem:[%s4 + $0x28] sm:$0xff]
    %v11035 = vld [vmem:[%s4 + $0x30] sm:$0xff]
    %v11036 = vld [vmem:[%s4 + $0x38] sm:$0xff]
    %v11037 = vld [vmem:[%s4 + $0x40] sm:$0xff]
    %v11038 = vld [vmem:[%s4 + $0x48] sm:$0xff]
    %v11039 = vld [vmem:[%s4 + $0x50] sm:$0xff]
    %v11040 = vld [vmem:[%s4 + $0x58] sm:$0xff]
    %v11041 = vld [vmem:[%s4 + $0x60] sm:$0xff]
    %v11042 = vld [vmem:[%s4 + $0x68] sm:$0xff]
    %v11043 = vld [vmem:[%s4 + $0x70] sm:$0xff]
    %v11044 = vld [vmem:[%s4 + $0x78] sm:$0xff]
    %v11045 = vld [vmem:[%s4 + $0x80] sm:$0xff]
    %v11046 = vld [vmem:[%s4 + $0x88] sm:$0xff]
    %v11047 = vld [vmem:[%s4 + $0x90] sm:$0xff]
    %v11048 = vld [vmem:[%s4 + $0x98] sm:$0xff]
    %v11049 = vld [vmem:[%s4 + $0xa0] sm:$0xff]
    %v11050 = vld [vmem:[%s4 + $0xa8] sm:$0xff]
    %v11051 = vld [vmem:[%s4 + $0xb0] sm:$0xff]
    %v11052 = vld [vmem:[%s4 + $0xb8] sm:$0xff]
    %v11053 = vld [vmem:[%s4 + $0xc0] sm:$0xff]
    %v11054 = vld [vmem:[%s4 + $0xc8] sm:$0xff]
    %v11055 = vld [vmem:[%s4 + $0xd0] sm:$0xff]
    %v11056 = vld [vmem:[%s4 + $0xd8] sm:$0xff]
    %v11057 = vld [vmem:[%s4 + $0xe0] sm:$0xff]
    %v11058 = vld [vmem:[%s4 + $0xe8] sm:$0xff]
    %v11059 = vld [vmem:[%s4 + $0xf0] sm:$0xff]
    %v11060 = vld [vmem:[%s4 + $0xf8] sm:$0xff]
    %v11061 = vld [vmem:[%s4 + $0x100] sm:$0xff]
    %v11062 = vld [vmem:[%s4 + $0x108] sm:$0xff]
    %v11063 = vld [vmem:[%s4 + $0x110] sm:$0xff]
    %v11064 = vld [vmem:[%s4 + $0x118] sm:$0xff]
    %v11065 = vld [vmem:[%s4 + $0x120] sm:$0xff]
    %v11066 = vld [vmem:[%s4 + $0x128] sm:$0xff]
    %v11067 = vld [vmem:[%s4 + $0x130] sm:$0xff]
    %v11068 = vld [vmem:[%s4 + $0x138] sm:$0xff]
    %v11069 = vld [vmem:[%s4 + $0x140] sm:$0xff]
    %v11070 = vld [vmem:[%s4 + $0x148] sm:$0xff]
    %v11071 = vld [vmem:[%s4 + $0x150] sm:$0xff]
    %v11072 = vld [vmem:[%s4 + $0x158] sm:$0xff]
    %v11073 = vld [vmem:[%s4 + $0x160] sm:$0xff]
    %v11074 = vld [vmem:[%s4 + $0x168] sm:$0xff]
    %v11075 = vld [vmem:[%s4 + $0x170] sm:$0xff]
    %v11076 = vld [vmem:[%s4 + $0x178] sm:$0xff]
    %v11077 = vld [vmem:[%s4 + $0x180] sm:$0xff]
    %v11078 = vld [vmem:[%s4 + $0x188] sm:$0xff]
    %v11079 = vld [vmem:[%s4 + $0x190] sm:$0xff]
    %v11080 = vld [vmem:[%s4 + $0x198] sm:$0xff]
    %v11081 = vld [vmem:[%s4 + $0x1a0] sm:$0xff]
    %v11082 = vld [vmem:[%s4 + $0x1a8] sm:$0xff]
    %v11083 = vld [vmem:[%s4 + $0x1b0] sm:$0xff]
    %v11084 = vld [vmem:[%s4 + $0x1b8] sm:$0xff]
    %v11085 = vld [vmem:[%s4 + $0x1c0] sm:$0xff]
    %v11086 = vld [vmem:[%s4 + $0x1c8] sm:$0xff]
    %v11087 = vld [vmem:[%s4 + $0x1d0] sm:$0xff]
    %v11088 = vld [vmem:[%s4 + $0x1d8] sm:$0xff]
    %v11089 = vld [vmem:[%s4 + $0x1e0] sm:$0xff]
    %v11090 = vld [vmem:[%s4 + $0x1e8] sm:$0xff]
    %v11091 = vld [vmem:[%s4 + $0x1f0] sm:$0xff]
    %v11092 = vld [vmem:[%s4 + $0x1f8] sm:$0xff]
    %v11093 = vld [vmem:[%s4 + $0x200] sm:$0xff]
    %v11094 = vld [vmem:[%s4 + $0x208] sm:$0xff]
    %v11095 = vld [vmem:[%s4 + $0x210] sm:$0xff]
    %v11096 = vld [vmem:[%s4 + $0x218] sm:$0xff]
    %v11097 = vld [vmem:[%s4 + $0x220] sm:$0xff]
    %v11098 = vld [vmem:[%s4 + $0x228] sm:$0xff]
    %v11099 = vld [vmem:[%s4 + $0x230] sm:$0xff]
    %v11100 = vld [vmem:[%s4 + $0x238] sm:$0xff]
    %v11101 = vld [vmem:[%s4 + $0x240] sm:$0xff]
    %v11102 = vld [vmem:[%s4 + $0x248] sm:$0xff]
    %v11103 = vld [vmem:[%s4 + $0x250] sm:$0xff]
    %v11104 = vld [vmem:[%s4 + $0x258] sm:$0xff]
    %v11105 = vld [vmem:[%s4 + $0x260] sm:$0xff]
    %v11106 = vld [vmem:[%s4 + $0x268] sm:$0xff]
    %v11107 = vld [vmem:[%s4 + $0x270] sm:$0xff]
    %v11108 = vld [vmem:[%s4 + $0x278] sm:$0xff]
    %v11109 = vld [vmem:[%s4 + $0x280] sm:$0xff]
    %v11110 = vld [vmem:[%s4 + $0x288] sm:$0xff]
    %v11111 = vld [vmem:[%s4 + $0x290] sm:$0xff]
    %v11112 = vld [vmem:[%s4 + $0x298] sm:$0xff]
    %v11113 = vld [vmem:[%s4 + $0x2a0] sm:$0xff]
    %v11114 = vld [vmem:[%s4 + $0x2a8] sm:$0xff]
    %v11115 = vld [vmem:[%s4 + $0x2b0] sm:$0xff]
    %v11116 = vld [vmem:[%s4 + $0x2b8] sm:$0xff]
    %v11117 = vld [vmem:[%s4 + $0x2c0] sm:$0xff]
    %v11118 = vld [vmem:[%s4 + $0x2c8] sm:$0xff]
    %v11119 = vld [vmem:[%s4 + $0x2d0] sm:$0xff]
    %v11120 = vld [vmem:[%s4 + $0x2d8] sm:$0xff]
    %v11121 = vld [vmem:[%s4 + $0x2e0] sm:$0xff]
    %v11122 = vld [vmem:[%s4 + $0x2e8] sm:$0xff]
    %v11123 = vld [vmem:[%s4 + $0x2f0] sm:$0xff]
    %v11124 = vld [vmem:[%s4 + $0x2f8] sm:$0xff]
    %v11125 = vld [vmem:[%s4 + $0x300] sm:$0xff]
    %v11126 = vld [vmem:[%s4 + $0x308] sm:$0xff]
    %v11127 = vld [vmem:[%s4 + $0x310] sm:$0xff]
    %v11128 = vld [vmem:[%s4 + $0x318] sm:$0xff]
    %v11129 = vld [vmem:[%s4 + $0x320] sm:$0xff]
    %v11130 = vld [vmem:[%s4 + $0x328] sm:$0xff]
    %v11131 = vld [vmem:[%s4 + $0x330] sm:$0xff]
    %v11132 = vld [vmem:[%s4 + $0x338] sm:$0xff]
    %v11133 = vld [vmem:[%s4 + $0x340] sm:$0xff]
    %v11134 = vld [vmem:[%s4 + $0x348] sm:$0xff]
    %v11135 = vld [vmem:[%s4 + $0x350] sm:$0xff]
    %v11136 = vld [vmem:[%s4 + $0x358] sm:$0xff]
    %v11137 = vld [vmem:[%s4 + $0x360] sm:$0xff]
    %v11138 = vld [vmem:[%s4 + $0x368] sm:$0xff]
    %v11139 = vld [vmem:[%s4 + $0x370] sm:$0xff]
    %v11140 = vld [vmem:[%s4 + $0x378] sm:$0xff]
    %v11141 = vld [vmem:[%s4 + $0x380] sm:$0xff]
    %v11142 = vld [vmem:[%s4 + $0x388] sm:$0xff]
    %v11143 = vld [vmem:[%s4 + $0x390] sm:$0xff]
    %v11144 = vld [vmem:[%s4 + $0x398] sm:$0xff]
    %v11145 = vld [vmem:[%s4 + $0x3a0] sm:$0xff]
    %v11146 = vld [vmem:[%s4 + $0x3a8] sm:$0xff]
    %v11147 = vld [vmem:[%s4 + $0x3b0] sm:$0xff]
    %v11148 = vld [vmem:[%s4 + $0x3b8] sm:$0xff]
    %v11149 = vld [vmem:[%s4 + $0x3c0] sm:$0xff]
    %v11150 = vld [vmem:[%s4 + $0x3c8] sm:$0xff]
    %v11151 = vld [vmem:[%s4 + $0x3d0] sm:$0xff]
    %v11152 = vld [vmem:[%s4 + $0x3d8] sm:$0xff]
    %v11153 = vld [vmem:[%s4 + $0x3e0] sm:$0xff]
    %v11154 = vld [vmem:[%s4 + $0x3e8] sm:$0xff]
    %v11155 = vld [vmem:[%s4 + $0x3f0] sm:$0xff]
    %v11156 = vld [vmem:[%s4 + $0x3f8] sm:$0xff]
    %11157 = vmatprep.subr.mxu0 0.0
    %11158 = vmatpush1.msra.mxu0 %v11029
    %11159 = vmatprep.subr.mxu0 0.0
    %11160 = vmatpush1.msra.mxu0 %v11030
    %11161 = vmatprep.subr.mxu0 0.0
    %11162 = vmatpush1.msra.mxu0 %v11031
    %11163 = vmatprep.subr.mxu0 0.0
    %11164 = vmatpush1.msra.mxu0 %v11032
    %11165 = vmatprep.subr.mxu0 0.0
    %11166 = vmatpush1.msra.mxu0 %v11033
    %11167 = vmatprep.subr.mxu0 0.0
    %11168 = vmatpush1.msra.mxu0 %v11034
    %11169 = vmatprep.subr.mxu0 0.0
    %11170 = vmatpush1.msra.mxu0 %v11035
    %11171 = vmatprep.subr.mxu0 0.0
    %11172 = vmatpush1.msra.mxu0 %v11036
    %11173 = vmatprep.subr.mxu0 0.0
    %11174 = vmatpush1.msra.mxu0 %v11037
    %11175 = vmatprep.subr.mxu0 0.0
    %11176 = vmatpush1.msra.mxu0 %v11038
    %11177 = vmatprep.subr.mxu0 0.0
    %11178 = vmatpush1.msra.mxu0 %v11039
    %11179 = vmatprep.subr.mxu0 0.0
    %11180 = vmatpush1.msra.mxu0 %v11040
    %11181 = vmatprep.subr.mxu0 0.0
    %11182 = vmatpush1.msra.mxu0 %v11041
    %11183 = vmatprep.subr.mxu0 0.0
    %11184 = vmatpush1.msra.mxu0 %v11042
    %11185 = vmatprep.subr.mxu0 0.0
    %11186 = vmatpush1.msra.mxu0 %v11043
    %11187 = vmatprep.subr.mxu0 0.0
    %11188 = vmatpush1.msra.mxu0 %v11044
    %11189 = vmatprep.subr.mxu0 0.0
    %11190 = vmatpush1.msra.mxu0 %v11045
    %11191 = vmatprep.subr.mxu0 0.0
    %11192 = vmatpush1.msra.mxu0 %v11046
    %11193 = vmatprep.subr.mxu0 0.0
    %11194 = vmatpush1.msra.mxu0 %v11047
    %11195 = vmatprep.subr.mxu0 0.0
    %11196 = vmatpush1.msra.mxu0 %v11048
    %11197 = vmatprep.subr.mxu0 0.0
    %11198 = vmatpush1.msra.mxu0 %v11049
    %11199 = vmatprep.subr.mxu0 0.0
    %11200 = vmatpush1.msra.mxu0 %v11050
    %11201 = vmatprep.subr.mxu0 0.0
    %11202 = vmatpush1.msra.mxu0 %v11051
    %11203 = vmatprep.subr.mxu0 0.0
    %11204 = vmatpush1.msra.mxu0 %v11052
    %11205 = vmatprep.subr.mxu0 0.0
    %11206 = vmatpush1.msra.mxu0 %v11053
    %11207 = vmatprep.subr.mxu0 0.0
    %11208 = vmatpush1.msra.mxu0 %v11054
    %11209 = vmatprep.subr.mxu0 0.0
    %11210 = vmatpush1.msra.mxu0 %v11055
    %11211 = vmatprep.subr.mxu0 0.0
    %11212 = vmatpush1.msra.mxu0 %v11056
    %11213 = vmatprep.subr.mxu0 0.0
    %11214 = vmatpush1.msra.mxu0 %v11057
    %11215 = vmatprep.subr.mxu0 0.0
    %11216 = vmatpush1.msra.mxu0 %v11058
    %11217 = vmatprep.subr.mxu0 0.0
    %11218 = vmatpush1.msra.mxu0 %v11059
    %11219 = vmatprep.subr.mxu0 0.0
    %11220 = vmatpush1.msra.mxu0 %v11060
    %11221 = vmatprep.mubr.f32.mxu0 %v10886
    %11222 = vmatmul.mubr.f32.gmra.mrb[0].mxu0 %v10885
    %v11223 = vpop.f32.mrb[0].mxu0
    %v11224 = vadd.f32 0.0, %v11223
    %v11225 = vpop.f32.mrb[0].mxu0
    %11226 = vmatprep.mubr.f32.mxu0 %v10894
    %11227 = vmatmul.mubr.f32.gmra.mrb[0].mxu0 %v10893
    %v11228 = vpop.f32.mrb[0].mxu0
    %v11229 = vadd.f32 0.0, %v11228
    %v11230 = vpop.f32.mrb[0].mxu0
    %11231 = vdwg.mxu0
    %11232 = vmatprep.subr.mxu0 0.0
    %11233 = vmatpush1.msra.mxu0 %v11061
    %11234 = vmatprep.subr.mxu0 0.0
    %11235 = vmatpush1.msra.mxu0 %v11062
    %11236 = vmatprep.subr.mxu0 0.0
    %11237 = vmatpush1.msra.mxu0 %v11063
    %11238 = vmatprep.subr.mxu0 0.0
    %11239 = vmatpush1.msra.mxu0 %v11064
    %11240 = vmatprep.subr.mxu0 0.0
    %11241 = vmatpush1.msra.mxu0 %v11065
    %11242 = vmatprep.subr.mxu0 0.0
    %11243 = vmatpush1.msra.mxu0 %v11066
    %11244 = vmatprep.subr.mxu0 0.0
    %11245 = vmatpush1.msra.mxu0 %v11067
    %11246 = vmatprep.subr.mxu0 0.0
    %11247 = vmatpush1.msra.mxu0 %v11068
    %11248 = vmatprep.subr.mxu0 0.0
    %11249 = vmatpush1.msra.mxu0 %v11069
    %11250 = vmatprep.subr.mxu0 0.0
    %11251 = vmatpush1.msra.mxu0 %v11070
    %11252 = vmatprep.subr.mxu0 0.0
    %11253 = vmatpush1.msra.mxu0 %v11071
    %11254 = vmatprep.subr.mxu0 0.0
    %11255 = vmatpush1.msra.mxu0 %v11072
    %11256 = vmatprep.subr.mxu0 0.0
    %11257 = vmatpush1.msra.mxu0 %v11073
    %11258 = vmatprep.subr.mxu0 0.0
    %11259 = vmatpush1.msra.mxu0 %v11074
    %11260 = vmatprep.subr.mxu0 0.0
    %11261 = vmatpush1.msra.mxu0 %v11075
    %11262 = vmatprep.subr.mxu0 0.0
    %11263 = vmatpush1.msra.mxu0 %v11076
    %11264 = vmatprep.subr.mxu0 0.0
    %11265 = vmatpush1.msra.mxu0 %v11077
    %11266 = vmatprep.subr.mxu0 0.0
    %11267 = vmatpush1.msra.mxu0 %v11078
    %11268 = vmatprep.subr.mxu0 0.0
    %11269 = vmatpush1.msra.mxu0 %v11079
    %11270 = vmatprep.subr.mxu0 0.0
    %11271 = vmatpush1.msra.mxu0 %v11080
    %11272 = vmatprep.subr.mxu0 0.0
    %11273 = vmatpush1.msra.mxu0 %v11081
    %11274 = vmatprep.subr.mxu0 0.0
    %11275 = vmatpush1.msra.mxu0 %v11082
    %11276 = vmatprep.subr.mxu0 0.0
    %11277 = vmatpush1.msra.mxu0 %v11083
    %11278 = vmatprep.subr.mxu0 0.0
    %11279 = vmatpush1.msra.mxu0 %v11084
    %11280 = vmatprep.subr.mxu0 0.0
    %11281 = vmatpush1.msra.mxu0 %v11085
    %11282 = vmatprep.subr.mxu0 0.0
    %11283 = vmatpush1.msra.mxu0 %v11086
    %11284 = vmatprep.subr.mxu0 0.0
    %11285 = vmatpush1.msra.mxu0 %v11087
    %11286 = vmatprep.subr.mxu0 0.0
    %11287 = vmatpush1.msra.mxu0 %v11088
    %11288 = vmatprep.subr.mxu0 0.0
    %11289 = vmatpush1.msra.mxu0 %v11089
    %11290 = vmatprep.subr.mxu0 0.0
    %11291 = vmatpush1.msra.mxu0 %v11090
    %11292 = vmatprep.subr.mxu0 0.0
    %11293 = vmatpush1.msra.mxu0 %v11091
    %11294 = vmatprep.subr.mxu0 0.0
    %11295 = vmatpush1.msra.mxu0 %v11092
    %11296 = vmatprep.mubr.f32.mxu0 %v10888
    %11297 = vmatmul.mubr.f32.gmra.mrb[0].mxu0 %v10887
    %v11298 = vpop.f32.mrb[0].mxu0
    %v11299 = vadd.f32 %v11224, %v11298
    %v11300 = vpop.f32.mrb[0].mxu0
    %11301 = vmatprep.mubr.f32.mxu0 %v10896
    %11302 = vmatmul.mubr.f32.gmra.mrb[0].mxu0 %v10895
    %v11303 = vpop.f32.mrb[0].mxu0
    %v11304 = vadd.f32 %v11229, %v11303
    %v11305 = vpop.f32.mrb[0].mxu0
    %11306 = vdwg.mxu0
    %11307 = vmatprep.subr.mxu0 0.0
    %11308 = vmatpush1.msra.mxu0 %v11093
    %11309 = vmatprep.subr.mxu0 0.0
    %11310 = vmatpush1.msra.mxu0 %v11094
    %11311 = vmatprep.subr.mxu0 0.0
    %11312 = vmatpush1.msra.mxu0 %v11095
    %11313 = vmatprep.subr.mxu0 0.0
    %11314 = vmatpush1.msra.mxu0 %v11096
    %11315 = vmatprep.subr.mxu0 0.0
    %11316 = vmatpush1.msra.mxu0 %v11097
    %11317 = vmatprep.subr.mxu0 0.0
    %11318 = vmatpush1.msra.mxu0 %v11098
    %11319 = vmatprep.subr.mxu0 0.0
    %11320 = vmatpush1.msra.mxu0 %v11099
    %11321 = vmatprep.subr.mxu0 0.0
    %11322 = vmatpush1.msra.mxu0 %v11100
    %11323 = vmatprep.subr.mxu0 0.0
    %11324 = vmatpush1.msra.mxu0 %v11101
    %11325 = vmatprep.subr.mxu0 0.0
    %11326 = vmatpush1.msra.mxu0 %v11102
    %11327 = vmatprep.subr.mxu0 0.0
    %11328 = vmatpush1.msra.mxu0 %v11103
    %11329 = vmatprep.subr.mxu0 0.0
    %11330 = vmatpush1.msra.mxu0 %v11104
    %11331 = vmatprep.subr.mxu0 0.0
    %11332 = vmatpush1.msra.mxu0 %v11105
    %11333 = vmatprep.subr.mxu0 0.0
    %11334 = vmatpush1.msra.mxu0 %v11106
    %11335 = vmatprep.subr.mxu0 0.0
    %11336 = vmatpush1.msra.mxu0 %v11107
    %11337 = vmatprep.subr.mxu0 0.0
    %11338 = vmatpush1.msra.mxu0 %v11108
    %11339 = vmatprep.subr.mxu0 0.0
    %11340 = vmatpush1.msra.mxu0 %v11109
    %11341 = vmatprep.subr.mxu0 0.0
    %11342 = vmatpush1.msra.mxu0 %v11110
    %11343 = vmatprep.subr.mxu0 0.0
    %11344 = vmatpush1.msra.mxu0 %v11111
    %11345 = vmatprep.subr.mxu0 0.0
    %11346 = vmatpush1.msra.mxu0 %v11112
    %11347 = vmatprep.subr.mxu0 0.0
    %11348 = vmatpush1.msra.mxu0 %v11113
    %11349 = vmatprep.subr.mxu0 0.0
    %11350 = vmatpush1.msra.mxu0 %v11114
    %11351 = vmatprep.subr.mxu0 0.0
    %11352 = vmatpush1.msra.mxu0 %v11115
    %11353 = vmatprep.subr.mxu0 0.0
    %11354 = vmatpush1.msra.mxu0 %v11116
    %11355 = vmatprep.subr.mxu0 0.0
    %11356 = vmatpush1.msra.mxu0 %v11117
    %11357 = vmatprep.subr.mxu0 0.0
    %11358 = vmatpush1.msra.mxu0 %v11118
    %11359 = vmatprep.subr.mxu0 0.0
    %11360 = vmatpush1.msra.mxu0 %v11119
    %11361 = vmatprep.subr.mxu0 0.0
    %11362 = vmatpush1.msra.mxu0 %v11120
    %11363 = vmatprep.subr.mxu0 0.0
    %11364 = vmatpush1.msra.mxu0 %v11121
    %11365 = vmatprep.subr.mxu0 0.0
    %11366 = vmatpush1.msra.mxu0 %v11122
    %11367 = vmatprep.subr.mxu0 0.0
    %11368 = vmatpush1.msra.mxu0 %v11123
    %11369 = vmatprep.subr.mxu0 0.0
    %11370 = vmatpush1.msra.mxu0 %v11124
    %11371 = vmatprep.mubr.f32.mxu0 %v10890
    %11372 = vmatmul.mubr.f32.gmra.mrb[0].mxu0 %v10889
    %v11373 = vpop.f32.mrb[0].mxu0
    %v11374 = vadd.f32 %v11299, %v11373
    %v11375 = vpop.f32.mrb[0].mxu0
    %11376 = vmatprep.mubr.f32.mxu0 %v10898
    %11377 = vmatmul.mubr.f32.gmra.mrb[0].mxu0 %v10897
    %v11378 = vpop.f32.mrb[0].mxu0
    %v11379 = vadd.f32 %v11304, %v11378
    %v11380 = vpop.f32.mrb[0].mxu0
    %11381 = vdwg.mxu0
    %11382 = vmatprep.subr.mxu0 0.0
    %11383 = vmatpush1.msra.mxu0 %v11125
    %11384 = vmatprep.subr.mxu0 0.0
    %11385 = vmatpush1.msra.mxu0 %v11126
    %11386 = vmatprep.subr.mxu0 0.0
    %11387 = vmatpush1.msra.mxu0 %v11127
    %11388 = vmatprep.subr.mxu0 0.0
    %11389 = vmatpush1.msra.mxu0 %v11128
    %11390 = vmatprep.subr.mxu0 0.0
    %11391 = vmatpush1.msra.mxu0 %v11129
    %11392 = vmatprep.subr.mxu0 0.0
    %11393 = vmatpush1.msra.mxu0 %v11130
    %11394 = vmatprep.subr.mxu0 0.0
    %11395 = vmatpush1.msra.mxu0 %v11131
    %11396 = vmatprep.subr.mxu0 0.0
    %11397 = vmatpush1.msra.mxu0 %v11132
    %11398 = vmatprep.subr.mxu0 0.0
    %11399 = vmatpush1.msra.mxu0 %v11133
    %11400 = vmatprep.subr.mxu0 0.0
    %11401 = vmatpush1.msra.mxu0 %v11134
    %11402 = vmatprep.subr.mxu0 0.0
    %11403 = vmatpush1.msra.mxu0 %v11135
    %11404 = vmatprep.subr.mxu0 0.0
    %11405 = vmatpush1.msra.mxu0 %v11136
    %11406 = vmatprep.subr.mxu0 0.0
    %11407 = vmatpush1.msra.mxu0 %v11137
    %11408 = vmatprep.subr.mxu0 0.0
    %11409 = vmatpush1.msra.mxu0 %v11138
    %11410 = vmatprep.subr.mxu0 0.0
    %11411 = vmatpush1.msra.mxu0 %v11139
    %11412 = vmatprep.subr.mxu0 0.0
    %11413 = vmatpush1.msra.mxu0 %v11140
    %11414 = vmatprep.subr.mxu0 0.0
    %11415 = vmatpush1.msra.mxu0 %v11141
    %11416 = vmatprep.subr.mxu0 0.0
    %11417 = vmatpush1.msra.mxu0 %v11142
    %11418 = vmatprep.subr.mxu0 0.0
    %11419 = vmatpush1.msra.mxu0 %v11143
    %11420 = vmatprep.subr.mxu0 0.0
    %11421 = vmatpush1.msra.mxu0 %v11144
    %11422 = vmatprep.subr.mxu0 0.0
    %11423 = vmatpush1.msra.mxu0 %v11145
    %11424 = vmatprep.subr.mxu0 0.0
    %11425 = vmatpush1.msra.mxu0 %v11146
    %11426 = vmatprep.subr.mxu0 0.0
    %11427 = vmatpush1.msra.mxu0 %v11147
    %11428 = vmatprep.subr.mxu0 0.0
    %11429 = vmatpush1.msra.mxu0 %v11148
    %11430 = vmatprep.subr.mxu0 0.0
    %11431 = vmatpush1.msra.mxu0 %v11149
    %11432 = vmatprep.subr.mxu0 0.0
    %11433 = vmatpush1.msra.mxu0 %v11150
    %11434 = vmatprep.subr.mxu0 0.0
    %11435 = vmatpush1.msra.mxu0 %v11151
    %11436 = vmatprep.subr.mxu0 0.0
    %11437 = vmatpush1.msra.mxu0 %v11152
    %11438 = vmatprep.subr.mxu0 0.0
    %11439 = vmatpush1.msra.mxu0 %v11153
    %11440 = vmatprep.subr.mxu0 0.0
    %11441 = vmatpush1.msra.mxu0 %v11154
    %11442 = vmatprep.subr.mxu0 0.0
    %11443 = vmatpush1.msra.mxu0 %v11155
    %11444 = vmatprep.subr.mxu0 0.0
    %11445 = vmatpush1.msra.mxu0 %v11156
    %11446 = vmatprep.mubr.f32.mxu0 %v10892
    %11447 = vmatmul.mubr.f32.gmra.mrb[0].mxu0 %v10891
    %v11448 = vpop.f32.mrb[0].mxu0
    %v11449 = vadd.f32 %v11374, %v11448
    %v11450 = vpop.f32.mrb[0].mxu0
    %11451 = vmatprep.mubr.f32.mxu0 %v10900
    %11452 = vmatmul.mubr.f32.gmra.mrb[0].mxu0 %v10899
    %v11453 = vpop.f32.mrb[0].mxu0
    %v11454 = vadd.f32 %v11379, %v11453
    %v11455 = vpop.f32.mrb[0].mxu0
    %11456 = vdwg.mxu0
    %11457 = vmatprep.subr.mxu0 0.0
    %11458 = vmatpush1.msra.mxu0 %v10901
    %11459 = vmatprep.subr.mxu0 0.0
    %11460 = vmatpush1.msra.mxu0 %v10902
    %11461 = vmatprep.subr.mxu0 0.0
    %11462 = vmatpush1.msra.mxu0 %v10903
    %11463 = vmatprep.subr.mxu0 0.0
    %11464 = vmatpush1.msra.mxu0 %v10904
    %11465 = vmatprep.subr.mxu0 0.0
    %11466 = vmatpush1.msra.mxu0 %v10905
    %11467 = vmatprep.subr.mxu0 0.0
    %11468 = vmatpush1.msra.mxu0 %v10906
    %11469 = vmatprep.subr.mxu0 0.0
    %11470 = vmatpush1.msra.mxu0 %v10907
    %11471 = vmatprep.subr.mxu0 0.0
    %11472 = vmatpush1.msra.mxu0 %v10908
    %11473 = vmatprep.subr.mxu0 0.0
    %11474 = vmatpush1.msra.mxu0 %v10909
    %11475 = vmatprep.subr.mxu0 0.0
    %11476 = vmatpush1.msra.mxu0 %v10910
    %11477 = vmatprep.subr.mxu0 0.0
    %11478 = vmatpush1.msra.mxu0 %v10911
    %11479 = vmatprep.subr.mxu0 0.0
    %11480 = vmatpush1.msra.mxu0 %v10912
    %11481 = vmatprep.subr.mxu0 0.0
    %11482 = vmatpush1.msra.mxu0 %v10913
    %11483 = vmatprep.subr.mxu0 0.0
    %11484 = vmatpush1.msra.mxu0 %v10914
    %11485 = vmatprep.subr.mxu0 0.0
    %11486 = vmatpush1.msra.mxu0 %v10915
    %11487 = vmatprep.subr.mxu0 0.0
    %11488 = vmatpush1.msra.mxu0 %v10916
    %11489 = vmatprep.subr.mxu0 0.0
    %11490 = vmatpush1.msra.mxu0 %v10917
    %11491 = vmatprep.subr.mxu0 0.0
    %11492 = vmatpush1.msra.mxu0 %v10918
    %11493 = vmatprep.subr.mxu0 0.0
    %11494 = vmatpush1.msra.mxu0 %v10919
    %11495 = vmatprep.subr.mxu0 0.0
    %11496 = vmatpush1.msra.mxu0 %v10920
    %11497 = vmatprep.subr.mxu0 0.0
    %11498 = vmatpush1.msra.mxu0 %v10921
    %11499 = vmatprep.subr.mxu0 0.0
    %11500 = vmatpush1.msra.mxu0 %v10922
    %11501 = vmatprep.subr.mxu0 0.0
    %11502 = vmatpush1.msra.mxu0 %v10923
    %11503 = vmatprep.subr.mxu0 0.0
    %11504 = vmatpush1.msra.mxu0 %v10924
    %11505 = vmatprep.subr.mxu0 0.0
    %11506 = vmatpush1.msra.mxu0 %v10925
    %11507 = vmatprep.subr.mxu0 0.0
    %11508 = vmatpush1.msra.mxu0 %v10926
    %11509 = vmatprep.subr.mxu0 0.0
    %11510 = vmatpush1.msra.mxu0 %v10927
    %11511 = vmatprep.subr.mxu0 0.0
    %11512 = vmatpush1.msra.mxu0 %v10928
    %11513 = vmatprep.subr.mxu0 0.0
    %11514 = vmatpush1.msra.mxu0 %v10929
    %11515 = vmatprep.subr.mxu0 0.0
    %11516 = vmatpush1.msra.mxu0 %v10930
    %11517 = vmatprep.subr.mxu0 0.0
    %11518 = vmatpush1.msra.mxu0 %v10931
    %11519 = vmatprep.subr.mxu0 0.0
    %11520 = vmatpush1.msra.mxu0 %v10932
    %11521 = vmatprep.mubr.f32.mxu0 %v5757
    %11522 = vmatmul.mubr.f32.gmra.mrb[0].mxu0 %v5756
    %v11523 = vpop.f32.mrb[0].mxu0
    %v11524 = vadd.f32 %v11449, %v11523
    %v11525 = vpop.f32.mrb[0].mxu0
    %11526 = vmatprep.mubr.f32.mxu0 %v5765
    %11527 = vmatmul.mubr.f32.gmra.mrb[0].mxu0 %v5764
    %v11528 = vpop.f32.mrb[0].mxu0
    %v11529 = vadd.f32 %v11454, %v11528
    %v11530 = vpop.f32.mrb[0].mxu0
    %11531 = vdwg.mxu0
    %11532 = vmatprep.subr.mxu0 0.0
    %11533 = vmatpush1.msra.mxu0 %v10933
    %11534 = vmatprep.subr.mxu0 0.0
    %11535 = vmatpush1.msra.mxu0 %v10934
    %11536 = vmatprep.subr.mxu0 0.0
    %11537 = vmatpush1.msra.mxu0 %v10935
    %11538 = vmatprep.subr.mxu0 0.0
    %11539 = vmatpush1.msra.mxu0 %v10936
    %11540 = vmatprep.subr.mxu0 0.0
    %11541 = vmatpush1.msra.mxu0 %v10937
    %11542 = vmatprep.subr.mxu0 0.0
    %11543 = vmatpush1.msra.mxu0 %v10938
    %11544 = vmatprep.subr.mxu0 0.0
    %11545 = vmatpush1.msra.mxu0 %v10939
    %11546 = vmatprep.subr.mxu0 0.0
    %11547 = vmatpush1.msra.mxu0 %v10940
    %11548 = vmatprep.subr.mxu0 0.0
    %11549 = vmatpush1.msra.mxu0 %v10941
    %11550 = vmatprep.subr.mxu0 0.0
    %11551 = vmatpush1.msra.mxu0 %v10942
    %11552 = vmatprep.subr.mxu0 0.0
    %11553 = vmatpush1.msra.mxu0 %v10943
    %11554 = vmatprep.subr.mxu0 0.0
    %11555 = vmatpush1.msra.mxu0 %v10944
    %11556 = vmatprep.subr.mxu0 0.0
    %11557 = vmatpush1.msra.mxu0 %v10945
    %11558 = vmatprep.subr.mxu0 0.0
    %11559 = vmatpush1.msra.mxu0 %v10946
    %11560 = vmatprep.subr.mxu0 0.0
    %11561 = vmatpush1.msra.mxu0 %v10947
    %11562 = vmatprep.subr.mxu0 0.0
    %11563 = vmatpush1.msra.mxu0 %v10948
    %11564 = vmatprep.subr.mxu0 0.0
    %11565 = vmatpush1.msra.mxu0 %v10949
    %11566 = vmatprep.subr.mxu0 0.0
    %11567 = vmatpush1.msra.mxu0 %v10950
    %11568 = vmatprep.subr.mxu0 0.0
    %11569 = vmatpush1.msra.mxu0 %v10951
    %11570 = vmatprep.subr.mxu0 0.0
    %11571 = vmatpush1.msra.mxu0 %v10952
    %11572 = vmatprep.subr.mxu0 0.0
    %11573 = vmatpush1.msra.mxu0 %v10953
    %11574 = vmatprep.subr.mxu0 0.0
    %11575 = vmatpush1.msra.mxu0 %v10954
    %11576 = vmatprep.subr.mxu0 0.0
    %11577 = vmatpush1.msra.mxu0 %v10955
    %11578 = vmatprep.subr.mxu0 0.0
    %11579 = vmatpush1.msra.mxu0 %v10956
    %11580 = vmatprep.subr.mxu0 0.0
    %11581 = vmatpush1.msra.mxu0 %v10957
    %11582 = vmatprep.subr.mxu0 0.0
    %11583 = vmatpush1.msra.mxu0 %v10958
    %11584 = vmatprep.subr.mxu0 0.0
    %11585 = vmatpush1.msra.mxu0 %v10959
    %11586 = vmatprep.subr.mxu0 0.0
    %11587 = vmatpush1.msra.mxu0 %v10960
    %11588 = vmatprep.subr.mxu0 0.0
    %11589 = vmatpush1.msra.mxu0 %v10961
    %11590 = vmatprep.subr.mxu0 0.0
    %11591 = vmatpush1.msra.mxu0 %v10962
    %11592 = vmatprep.subr.mxu0 0.0
    %11593 = vmatpush1.msra.mxu0 %v10963
    %11594 = vmatprep.subr.mxu0 0.0
    %11595 = vmatpush1.msra.mxu0 %v10964
    %11596 = vmatprep.mubr.f32.mxu0 %v5759
    %11597 = vmatmul.mubr.f32.gmra.mrb[0].mxu0 %v5758
    %v11598 = vpop.f32.mrb[0].mxu0
    %v11599 = vadd.f32 %v11524, %v11598
    %v11600 = vpop.f32.mrb[0].mxu0
    %11601 = vmatprep.mubr.f32.mxu0 %v5767
    %11602 = vmatmul.mubr.f32.gmra.mrb[0].mxu0 %v5766
    %v11603 = vpop.f32.mrb[0].mxu0
    %v11604 = vadd.f32 %v11529, %v11603
    %v11605 = vpop.f32.mrb[0].mxu0
    %11606 = vdwg.mxu0
    %11607 = vmatprep.subr.mxu0 0.0
    %11608 = vmatpush1.msra.mxu0 %v10965
    %11609 = vmatprep.subr.mxu0 0.0
    %11610 = vmatpush1.msra.mxu0 %v10966
    %11611 = vmatprep.subr.mxu0 0.0
    %11612 = vmatpush1.msra.mxu0 %v10967
    %11613 = vmatprep.subr.mxu0 0.0
    %11614 = vmatpush1.msra.mxu0 %v10968
    %11615 = vmatprep.subr.mxu0 0.0
    %11616 = vmatpush1.msra.mxu0 %v10969
    %11617 = vmatprep.subr.mxu0 0.0
    %11618 = vmatpush1.msra.mxu0 %v10970
    %11619 = vmatprep.subr.mxu0 0.0
    %11620 = vmatpush1.msra.mxu0 %v10971
    %11621 = vmatprep.subr.mxu0 0.0
    %11622 = vmatpush1.msra.mxu0 %v10972
    %11623 = vmatprep.subr.mxu0 0.0
    %11624 = vmatpush1.msra.mxu0 %v10973
    %11625 = vmatprep.subr.mxu0 0.0
    %11626 = vmatpush1.msra.mxu0 %v10974
    %11627 = vmatprep.subr.mxu0 0.0
    %11628 = vmatpush1.msra.mxu0 %v10975
    %11629 = vmatprep.subr.mxu0 0.0
    %11630 = vmatpush1.msra.mxu0 %v10976
    %11631 = vmatprep.subr.mxu0 0.0
    %11632 = vmatpush1.msra.mxu0 %v10977
    %11633 = vmatprep.subr.mxu0 0.0
    %11634 = vmatpush1.msra.mxu0 %v10978
    %11635 = vmatprep.subr.mxu0 0.0
    %11636 = vmatpush1.msra.mxu0 %v10979
    %11637 = vmatprep.subr.mxu0 0.0
    %11638 = vmatpush1.msra.mxu0 %v10980
    %11639 = vmatprep.subr.mxu0 0.0
    %11640 = vmatpush1.msra.mxu0 %v10981
    %11641 = vmatprep.subr.mxu0 0.0
    %11642 = vmatpush1.msra.mxu0 %v10982
    %11643 = vmatprep.subr.mxu0 0.0
    %11644 = vmatpush1.msra.mxu0 %v10983
    %11645 = vmatprep.subr.mxu0 0.0
    %11646 = vmatpush1.msra.mxu0 %v10984
    %11647 = vmatprep.subr.mxu0 0.0
    %11648 = vmatpush1.msra.mxu0 %v10985
    %11649 = vmatprep.subr.mxu0 0.0
    %11650 = vmatpush1.msra.mxu0 %v10986
    %11651 = vmatprep.subr.mxu0 0.0
    %11652 = vmatpush1.msra.mxu0 %v10987
    %11653 = vmatprep.subr.mxu0 0.0
    %11654 = vmatpush1.msra.mxu0 %v10988
    %11655 = vmatprep.subr.mxu0 0.0
    %11656 = vmatpush1.msra.mxu0 %v10989
    %11657 = vmatprep.subr.mxu0 0.0
    %11658 = vmatpush1.msra.mxu0 %v10990
    %11659 = vmatprep.subr.mxu0 0.0
    %11660 = vmatpush1.msra.mxu0 %v10991
    %11661 = vmatprep.subr.mxu0 0.0
    %11662 = vmatpush1.msra.mxu0 %v10992
    %11663 = vmatprep.subr.mxu0 0.0
    %11664 = vmatpush1.msra.mxu0 %v10993
    %11665 = vmatprep.subr.mxu0 0.0
    %11666 = vmatpush1.msra.mxu0 %v10994
    %11667 = vmatprep.subr.mxu0 0.0
    %11668 = vmatpush1.msra.mxu0 %v10995
    %11669 = vmatprep.subr.mxu0 0.0
    %11670 = vmatpush1.msra.mxu0 %v10996
    %11671 = vmatprep.mubr.f32.mxu0 %v5761
    %11672 = vmatmul.mubr.f32.gmra.mrb[0].mxu0 %v5760
    %v11673 = vpop.f32.mrb[0].mxu0
    %v11674 = vadd.f32 %v11599, %v11673
    %v11675 = vpop.f32.mrb[0].mxu0
    %11676 = vmatprep.mubr.f32.mxu0 %v5769
    %11677 = vmatmul.mubr.f32.gmra.mrb[0].mxu0 %v5768
    %v11678 = vpop.f32.mrb[0].mxu0
    %v11679 = vadd.f32 %v11604, %v11678
    %v11680 = vpop.f32.mrb[0].mxu0
    %11681 = vdwg.mxu0
    %11682 = vmatprep.subr.mxu0 0.0
    %11683 = vmatpush1.msra.mxu0 %v10997
    %11684 = vmatprep.subr.mxu0 0.0
    %11685 = vmatpush1.msra.mxu0 %v10998
    %11686 = vmatprep.subr.mxu0 0.0
    %11687 = vmatpush1.msra.mxu0 %v10999
    %11688 = vmatprep.subr.mxu0 0.0
    %11689 = vmatpush1.msra.mxu0 %v11000
    %11690 = vmatprep.subr.mxu0 0.0
    %11691 = vmatpush1.msra.mxu0 %v11001
    %11692 = vmatprep.subr.mxu0 0.0
    %11693 = vmatpush1.msra.mxu0 %v11002
    %11694 = vmatprep.subr.mxu0 0.0
    %11695 = vmatpush1.msra.mxu0 %v11003
    %11696 = vmatprep.subr.mxu0 0.0
    %11697 = vmatpush1.msra.mxu0 %v11004
    %11698 = vmatprep.subr.mxu0 0.0
    %11699 = vmatpush1.msra.mxu0 %v11005
    %11700 = vmatprep.subr.mxu0 0.0
    %11701 = vmatpush1.msra.mxu0 %v11006
    %11702 = vmatprep.subr.mxu0 0.0
    %11703 = vmatpush1.msra.mxu0 %v11007
    %11704 = vmatprep.subr.mxu0 0.0
    %11705 = vmatpush1.msra.mxu0 %v11008
    %11706 = vmatprep.subr.mxu0 0.0
    %11707 = vmatpush1.msra.mxu0 %v11009
    %11708 = vmatprep.subr.mxu0 0.0
    %11709 = vmatpush1.msra.mxu0 %v11010
    %11710 = vmatprep.subr.mxu0 0.0
    %11711 = vmatpush1.msra.mxu0 %v11011
    %11712 = vmatprep.subr.mxu0 0.0
    %11713 = vmatpush1.msra.mxu0 %v11012
    %11714 = vmatprep.subr.mxu0 0.0
    %11715 = vmatpush1.msra.mxu0 %v11013
    %11716 = vmatprep.subr.mxu0 0.0
    %11717 = vmatpush1.msra.mxu0 %v11014
    %11718 = vmatprep.subr.mxu0 0.0
    %11719 = vmatpush1.msra.mxu0 %v11015
    %11720 = vmatprep.subr.mxu0 0.0
    %11721 = vmatpush1.msra.mxu0 %v11016
    %11722 = vmatprep.subr.mxu0 0.0
    %11723 = vmatpush1.msra.mxu0 %v11017
    %11724 = vmatprep.subr.mxu0 0.0
    %11725 = vmatpush1.msra.mxu0 %v11018
    %11726 = vmatprep.subr.mxu0 0.0
    %11727 = vmatpush1.msra.mxu0 %v11019
    %11728 = vmatprep.subr.mxu0 0.0
    %11729 = vmatpush1.msra.mxu0 %v11020
    %11730 = vmatprep.subr.mxu0 0.0
    %11731 = vmatpush1.msra.mxu0 %v11021
    %11732 = vmatprep.subr.mxu0 0.0
    %11733 = vmatpush1.msra.mxu0 %v11022
    %11734 = vmatprep.subr.mxu0 0.0
    %11735 = vmatpush1.msra.mxu0 %v11023
    %11736 = vmatprep.subr.mxu0 0.0
    %11737 = vmatpush1.msra.mxu0 %v11024
    %11738 = vmatprep.subr.mxu0 0.0
    %11739 = vmatpush1.msra.mxu0 %v11025
    %11740 = vmatprep.subr.mxu0 0.0
    %11741 = vmatpush1.msra.mxu0 %v11026
    %11742 = vmatprep.subr.mxu0 0.0
    %11743 = vmatpush1.msra.mxu0 %v11027
    %11744 = vmatprep.subr.mxu0 0.0
    %11745 = vmatpush1.msra.mxu0 %v11028
    %11746 = vmatprep.mubr.f32.mxu0 %v5763
    %11747 = vmatmul.mubr.f32.gmra.mrb[0].mxu0 %v5762
    %v11748 = vpop.f32.mrb[0].mxu0
    %v11749 = vadd.f32 %v11674, %v11748
    %v11750 = vpop.f32.mrb[0].mxu0
    %11751 = vmatprep.mubr.f32.mxu0 %v5771
    %11752 = vmatmul.mubr.f32.gmra.mrb[0].mxu0 %v5770
    %v11753 = vpop.f32.mrb[0].mxu0
    %v11754 = vadd.f32 %v11679, %v11753
    %v11755 = vpop.f32.mrb[0].mxu0
    %11756 = vdwg.mxu0
    %v11757 = vld [vmem:[%s5] sm:$0x1]
    %v11759 = vlaneseq
    %v11760 = vshrl.u32 %v11759, 7
    %v11761 = vsub.s32 0, %v11760
    %v11762 = vrot.slane %v11757, %v11761
    %v11764 = vadd.f32 %v11749, %v11762
    %v11765 = vadd.f32 %v11754, %v11762
    %11766 = vst [vmem:[#allocation2] sm:$0xff] %v11764
    %11767 = vst [vmem:[#allocation2 + $0x8] sm:$0xff] %v11765
    // Predicated region
    $region26: #{tpu_custom_call.1} parent=1 // pred_check
      _
    $region27: #{tpu_custom_call.1} parent=1 // pred_check_branch
      %11769 = sbr.rel (0) target = $region29
    $region28: #{tpu_custom_call.1} parent=1 // pred_region
      %s11771 = ssub.s32 256, 256
      %11772 = vsyncadd [#allocation3], %s11771
      %s11773 = sshll.u32 [#allocation2], 4
      %s11774 = int_to_ptr.vmem [resolvable:$true] %s11773
      %11779 = dma.vmem_to_hbm [thread:$0]  %s11774, 256, %s6, [#allocation3], 128, 128, 8
    $region29: #{tpu_custom_call.1} parent=1 // pred_fallthru
      _
    // Predicated region
    $region30: #{tpu_custom_call.1} parent=1 // pred_check
      _
    $region31: #{tpu_custom_call.1} parent=1 // pred_check_branch
      %11781 = sbr.rel (0) target = $region33
    $region32: #{tpu_custom_call.1} parent=1 // pred_region
      %11782 = dma.done [#allocation3], 256
    $region33: #{tpu_custom_call.1} parent=1 // pred_fallthru
      _
    %11783 = vsyncpa [#allocation3], 1

</llo_original>
